<compile_context>
chip_gen: v7x
topology: tpu7x:2x2x1
jax: 0.10.0
libtpu: 0.0.40
codegen_flags: <defaults>
</compile_context>

<pallas_src>
import functools

import jax
import jax.numpy as jnp
from jax import lax
from jax.experimental import pallas as pl
from jax.experimental.pallas import tpu as pltpu

_LANE = 128
_SUBLANE = 8
_GATE_PERM = (0, 1, 3, 2)   # PyTorch [i, f, g, o] -> kernel [i, f, o, g]


def _round_up(n, m):
    return ((n + m - 1) // m) * m


# ----------------------------------------------------------------------------
# Fused kernel: all LSTM layers + FC head (one batch block per grid step)
# ----------------------------------------------------------------------------
def _fused_rnn_kernel(x_ref, w_ih_ref, w_hh_ref, b_ref, h0_ref, c0_ref,
                      w_fc_ref, b_fc_ref,
                      out_ref, h_n_ref, c_n_ref,
                      seq_buf, gates_buf,
                      *, seq_len, batch_blk, seq_chunk, unroll):
    """Fused stacked-LSTM + Linear forward for one batch block.

    x_ref:     (S, Tb, P)   time-major input block (zero-padded features/batch)
    w_ih_ref:  (L, P, 4P)   input->gate weights (transposed, gate-padded, compute dtype)
    w_hh_ref:  (L, P, 4P)   hidden->gate weights (f32, serial critical path)
    b_ref:     (L, 1, 4P)   b_ih + b_hh (f32; padded entries are exactly 0)
    h0_ref/c0_ref: (L, Tb, P) initial states (f32, padded columns exactly 0)
    w_fc_ref:  (P, Op)      FC weight (transposed, padded, compute dtype)
    b_fc_ref:  (1, Op)      FC bias (f32)
    out_ref:   (S, Tb, Op)  FC output for every timestep (lane-dense)
    h_n_ref/c_n_ref: (L, Tb, P) final states
    seq_buf:   (S*Tb, P)    VMEM scratch: current layer's output sequence
    gates_buf: (Tc*Tb, 4P)  VMEM scratch: one chunk of precomputed input projections
    Gate order in the 4P axis: [i, f, o, g], one P-lane slab each.
    """
    num_layers, P, _ = w_hh_ref.shape
    S, Tb, Tc = seq_len, batch_blk, seq_chunk
    n_chunks = (S + Tc - 1) // Tc

    for layer in range(num_layers):
        h = h0_ref[layer]                                        # (Tb, P) f32
        c = c0_ref[layer]

        for ci in range(n_chunks):
            t0 = ci * Tc                                         # static
            tca = min(Tc, S - t0)                                # static
            rows = tca * Tb                                      # multiple of 8

            # ---- Chunked hoisted input projection: one MXU matmul + bias ----
            if layer == 0:
                xc = x_ref[pl.ds(t0, tca), :, :].reshape(rows, P)
            else:
                xc = seq_buf[pl.ds(t0 * Tb, rows), :]
            gates_buf[pl.ds(0, rows), :] = (
                jnp.dot(xc, w_ih_ref[layer],
                        preferred_element_type=jnp.float32) + b_ref[layer])

            # ---- Serial recurrence over this chunk (only h @ W_hh inside) ----
            def step(t, carry):
                h, c = carry
                row = pl.multiple_of(t * Tb, Tb)                 # 8-aligned
                pre = gates_buf[pl.ds(row, Tb), :] + jnp.dot(
                    h, w_hh_ref[layer], preferred_element_type=jnp.float32)
                # sigmoid(x) == 0.5*tanh(0.5*x)+0.5 ; i,f,o are one contiguous slab
                sig = 0.5 * jnp.tanh(0.5 * pre[:, :3 * P]) + 0.5
                i_g = sig[:, 0 * P:1 * P]
                f_g = sig[:, 1 * P:2 * P]
                o_g = sig[:, 2 * P:3 * P]
                g_g = jnp.tanh(pre[:, 3 * P:4 * P])
                c_new = f_g * c + i_g * g_g
                h_new = o_g * jnp.tanh(c_new)
                out_row = pl.multiple_of(t0 * Tb + t * Tb, Tb)
                seq_buf[pl.ds(out_row, Tb), :] = h_new.astype(seq_buf.dtype)
                return (h_new, c_new)

            u = max(1, min(unroll, tca))
            h, c = lax.fori_loop(0, tca, step, (h, c), unroll=u)

        h_n_ref[layer] = h
        c_n_ref[layer] = c

    # ---- Fused FC head over all timesteps (lane-dense Op-wide store) ---------
    Op = out_ref.shape[-1]
    out = jnp.dot(seq_buf[...], w_fc_ref[...],
                  preferred_element_type=jnp.float32) + b_fc_ref[...]
    out_ref[...] = out.reshape(S, Tb, Op)


# ----------------------------------------------------------------------------
# Parameter preparation (once): transpose, gate-reorder, pad, stack
# ----------------------------------------------------------------------------
def prepare_params(params, input_size, hidden_size, output_size,
                   compute_dtype=jnp.bfloat16):
    H = hidden_size
    P = _round_up(max(input_size, H), _LANE)
    Op = _round_up(output_size, _LANE)
    perm = jnp.array(_GATE_PERM)

    def pack_gate_weight(w_t, in_dim, dtype):
        # w_t: (in_dim, 4H) PyTorch order [i,f,g,o] -> (P, 4P) order [i,f,o,g];
        # gate k occupies cols [k*P, k*P+H), padded entries are exactly 0.
        w3 = w_t.reshape(in_dim, 4, H)[:, perm, :]
        w3 = jnp.pad(w3, ((0, P - in_dim), (0, 0), (0, P - H)))
        return w3.reshape(P, 4 * P).astype(dtype)

    w_ih_list, w_hh_list, b_list = [], [], []
    for layer, p in enumerate(params["lstm"]):
        in_dim = input_size if layer == 0 else H
        w_ih_list.append(pack_gate_weight(p["w_ih"].T, in_dim, compute_dtype))
        # W_hh stays f32: it multiplies the f32 recurrent state every serial step.
        w_hh_list.append(pack_gate_weight(p["w_hh"].T, H, jnp.float32))
        b = (p["b_ih"] + p["b_hh"]).reshape(4, H)[perm, :]
        # NOTE: padded bias entries MUST stay exactly 0 so padded h/c columns
        # remain 0 through the recurrence (zero-padding correctness argument).
        b = jnp.pad(b, ((0, 0), (0, P - H))).reshape(1, 4 * P).astype(jnp.float32)
        b_list.append(b)

    w_fc = jnp.pad(params["fc"]["w"].T,
                   ((0, P - H), (0, Op - output_size))).astype(compute_dtype)
    b_fc = jnp.pad(params["fc"]["b"],
                   (0, Op - output_size)).reshape(1, Op).astype(jnp.float32)

    return {
        "w_ih": jnp.stack(w_ih_list),   # (L, P, 4P) compute dtype
        "w_hh": jnp.stack(w_hh_list),   # (L, P, 4P) f32
        "b": jnp.stack(b_list),         # (L, 1, 4P) f32
        "w_fc": w_fc,                   # (P, Op)    compute dtype
        "b_fc": b_fc,                   # (1, Op)    f32
    }


# ----------------------------------------------------------------------------
# Forward wrapper
# ----------------------------------------------------------------------------
def _forward_impl(x, prep, h0, c0, hidden_size, output_size,
                  seq_chunk, batch_block, unroll):
    B, S, I = x.shape
    L, P, _ = prep["w_hh"].shape
    Op = prep["w_fc"].shape[1]
    H, O = hidden_size, output_size
    cdtype = prep["w_ih"].dtype
    itm = cdtype.itemsize

    # Batch block (grid axis, "parallel" for megacore) and chunk sizes.
    Tb = min(_round_up(B, _SUBLANE), _round_up(batch_block, _SUBLANE))
    Bp = _round_up(B, Tb)
    n_bblk = Bp // Tb
    Tc = max(1, min(seq_chunk, S))

    # Time-major, pad batch -> Bp, features -> P.
    x_t = jnp.transpose(x, (1, 0, 2))
    x_p = jnp.pad(x_t, ((0, 0), (0, Bp - B), (0, P - I))).astype(cdtype)
    h0_p = jnp.pad(h0, ((0, 0), (0, Bp - B), (0, P - H))).astype(jnp.float32)
    c0_p = jnp.pad(c0, ((0, 0), (0, Bp - B), (0, P - H))).astype(jnp.float32)

    kernel = functools.partial(_fused_rnn_kernel, seq_len=S, batch_blk=Tb,
                               seq_chunk=Tc, unroll=unroll)

    in_specs = [
        pl.BlockSpec((S, Tb, P), lambda b: (0, b, 0)),          # x
        pl.BlockSpec((L, P, 4 * P), lambda b: (0, 0, 0)),       # w_ih
        pl.BlockSpec((L, P, 4 * P), lambda b: (0, 0, 0)),       # w_hh
        pl.BlockSpec((L, 1, 4 * P), lambda b: (0, 0, 0)),       # b
        pl.BlockSpec((L, Tb, P), lambda b: (0, b, 0)),          # h0
        pl.BlockSpec((L, Tb, P), lambda b: (0, b, 0)),          # c0
        pl.BlockSpec((P, Op), lambda b: (0, 0)),                # w_fc
        pl.BlockSpec((1, Op), lambda b: (0, 0)),                # b_fc
    ]
    out_specs = (
        pl.BlockSpec((S, Tb, Op), lambda b: (0, b, 0)),         # out
        pl.BlockSpec((L, Tb, P), lambda b: (0, b, 0)),          # h_n
        pl.BlockSpec((L, Tb, P), lambda b: (0, b, 0)),          # c_n
    )
    out_shapes = (
        jax.ShapeDtypeStruct((S, Bp, Op), jnp.float32),
        jax.ShapeDtypeStruct((L, Bp, P), jnp.float32),
        jax.ShapeDtypeStruct((L, Bp, P), jnp.float32),
    )
    scratch_shapes = [
        pltpu.VMEM((S * Tb, P), cdtype),             # seq_buf (layer output seq)
        pltpu.VMEM((Tc * Tb, 4 * P), jnp.float32),   # gates chunk buffer
    ]

    # VMEM budget (with double-buffering of blocked operands) + headroom.
    in_bytes = (S * Tb * P * itm + L * P * 4 * P * itm + L * P * 4 * P * 4
                + L * 4 * P * 4 + 2 * L * Tb * P * 4 + P * Op * itm + Op * 4)
    out_bytes = S * Tb * Op * 4 + 2 * L * Tb * P * 4
    scratch_bytes = S * Tb * P * itm + Tc * Tb * 4 * P * 4
    need = 2 * (in_bytes + out_bytes) + scratch_bytes
    vmem_limit = int(min(max(need * 3 // 2, 32 * 2 ** 20), 64 * 2 ** 20))

    flops = 2 * (2 * S * Bp * P * 4 * P * L) + 2 * S * Bp * P * Op
    transcendentals = S * Bp * L * 5 * P
    bytes_accessed = int(x_p.size * itm
                         + 2 * L * P * 4 * P * (itm + 4) // 2
                         + 2 * L * Bp * P * 4 * 2
                         + P * Op * itm + S * Bp * Op * 4)

    out_p, h_n_p, c_n_p = pl.pallas_call(
        kernel,
        out_shape=out_shapes,
        grid=(n_bblk,),
        in_specs=in_specs,
        out_specs=out_specs,
        scratch_shapes=scratch_shapes,
        compiler_params=pltpu.CompilerParams(
            dimension_semantics=("parallel",),
            vmem_limit_bytes=vmem_limit),
        cost_estimate=pl.CostEstimate(flops=flops,
                                      transcendentals=transcendentals,
                                      bytes_accessed=bytes_accessed),
    )(x_p, prep["w_ih"], prep["w_hh"], prep["b"], h0_p, c0_p,
      prep["w_fc"], prep["b_fc"])

    out = jnp.transpose(out_p[:, :B, :O], (1, 0, 2))   # (B, S, O)
    h_n = h_n_p[:, :B, :H]
    c_n = c_n_p[:, :B, :H]
    return out, (h_n, c_n)


_forward_jit = jax.jit(_forward_impl, static_argnums=(4, 5, 6, 7, 8))


def environmental_rnn_forward(x, prep, hidden=None, *, hidden_size, output_size,
                              seq_chunk=64, batch_block=64, unroll=8):
    """Matches EnvironmentalRNN.forward (inference semantics).

    x: (batch, seq, input_size). Returns (out, (h_n, c_n)) with
    out: (batch, seq, output_size), h_n/c_n: (num_layers, batch, hidden).
    """
    L = prep["w_hh"].shape[0]
    B = x.shape[0]
    if hidden is None:
        h0 = jnp.zeros((L, B, hidden_size), jnp.float32)
        c0 = jnp.zeros((L, B, hidden_size), jnp.float32)
    else:
        h0, c0 = hidden
    return _forward_jit(x, prep, h0, c0, hidden_size, output_size,
                        seq_chunk, batch_block, unroll)


# ----------------------------------------------------------------------------
# Deterministic parameter construction (PyTorch-style uniform(-k, k) init)
# ----------------------------------------------------------------------------
def make_params(key, input_size, hidden_size, num_layers, output_size,
                dtype=jnp.float32):
    k_lstm = 1.0 / jnp.sqrt(hidden_size)
    params = {"lstm": [], "fc": {}}
    for layer in range(num_layers):
        in_dim = input_size if layer == 0 else hidden_size
        key, k1, k2, k3, k4 = jax.random.split(key, 5)
        params["lstm"].append({
            "w_ih": jax.random.uniform(k1, (4 * hidden_size, in_dim),
                                       dtype, -k_lstm, k_lstm),
            "w_hh": jax.random.uniform(k2, (4 * hidden_size, hidden_size),
                                       dtype, -k_lstm, k_lstm),
            "b_ih": jax.random.uniform(k3, (4 * hidden_size,), dtype,
                                       -k_lstm, k_lstm),
            "b_hh": jax.random.uniform(k4, (4 * hidden_size,), dtype,
                                       -k_lstm, k_lstm),
        })
    k_fc = 1.0 / jnp.sqrt(hidden_size)
    key, k5, k6 = jax.random.split(key, 3)
    params["fc"]["w"] = jax.random.uniform(k5, (output_size, hidden_size),
                                           dtype, -k_fc, k_fc)
    params["fc"]["b"] = jax.random.uniform(k6, (output_size,), dtype,
                                           -k_fc, k_fc)
    return params


# ----------------------------------------------------------------------------
# Pure-JAX reference for validation (PyTorch LSTM semantics)
# ----------------------------------------------------------------------------
def reference_forward(x, params, h0, c0):
    inp = x
    hs, cs = [], []
    for layer, p in enumerate(params["lstm"]):
        w_ih, w_hh = p["w_ih"], p["w_hh"]
        bias = p["b_ih"] + p["b_hh"]
        hidden = w_hh.shape[1]

        def step(carry, x_t, w_ih=w_ih, w_hh=w_hh, bias=bias, hidden=hidden):
            h, c = carry
            gates = x_t @ w_ih.T + h @ w_hh.T + bias
            i_g = jax.nn.sigmoid(gates[:, 0 * hidden:1 * hidden])
            f_g = jax.nn.sigmoid(gates[:, 1 * hidden:2 * hidden])
            g_g = jnp.tanh(gates[:, 2 * hidden:3 * hidden])
            o_g = jax.nn.sigmoid(gates[:, 3 * hidden:4 * hidden])
            c = f_g * c + i_g * g_g
            h = o_g * jnp.tanh(c)
            return (h, c), h

        (h_f, c_f), ys = lax.scan(step, (h0[layer], c0[layer]),
                                  jnp.transpose(inp, (1, 0, 2)))
        inp = jnp.transpose(ys, (1, 0, 2))
        hs.append(h_f)
        cs.append(c_f)
    out = inp @ params["fc"]["w"].T + params["fc"]["b"]
    return out, (jnp.stack(hs), jnp.stack(cs))


# ----------------------------------------------------------------------------
if __name__ == "__main__":
    input_size, hidden_size, num_layers, output_size = 8, 32, 2, 4
    key = jax.random.PRNGKey(0)
    key, kx = jax.random.split(key)
    params = make_params(key, input_size, hidden_size, num_layers, output_size)

    # ---- Run 1: f32 path, exercises the multi-chunk sequence pipeline -------
    batch, seq_len = 2, 8
    x = jax.random.normal(kx, (batch, seq_len, input_size), jnp.float32)
    prep_f32 = prepare_params(params, input_size, hidden_size, output_size,
                              compute_dtype=jnp.float32)
    out, (h_n, c_n) = environmental_rnn_forward(
        x, prep_f32, hidden_size=hidden_size, output_size=output_size,
        seq_chunk=4, batch_block=64, unroll=8)
    jax.block_until_ready((out, h_n, c_n))

    h0 = jnp.zeros((num_layers, batch, hidden_size), jnp.float32)
    c0 = jnp.zeros((num_layers, batch, hidden_size), jnp.float32)
    ref_out, (ref_h, ref_c) = reference_forward(x, params, h0, c0)

    assert out.shape == (batch, seq_len, output_size)
    assert h_n.shape == (num_layers, batch, hidden_size)
    assert c_n.shape == (num_layers, batch, hidden_size)
    assert jnp.allclose(out, ref_out, atol=2e-4, rtol=2e-4)
    assert jnp.allclose(h_n, ref_h, atol=2e-4, rtol=2e-4)
    assert jnp.allclose(c_n, ref_c, atol=2e-4, rtol=2e-4)

    # ---- Run 2: bf16 path, two batch blocks (parallel grid axis) ------------
    batch2 = 10
    key, kx2 = jax.random.split(key)
    x2 = jax.random.normal(kx2, (batch2, seq_len, input_size), jnp.float32)
    prep_bf16 = prepare_params(params, input_size, hidden_size, output_size,
                               compute_dtype=jnp.bfloat16)
    out2, (h_n2, c_n2) = environmental_rnn_forward(
        x2, prep_bf16, hidden_size=hidden_size, output_size=output_size,
        seq_chunk=64, batch_block=8, unroll=8)
    jax.block_until_ready((out2, h_n2, c_n2))

    h02 = jnp.zeros((num_layers, batch2, hidden_size), jnp.float32)
    c02 = jnp.zeros((num_layers, batch2, hidden_size), jnp.float32)
    ref_out2, (ref_h2, ref_c2) = reference_forward(x2, params, h02, c02)

    assert out2.shape == (batch2, seq_len, output_size)
    assert jnp.allclose(out2, ref_out2, atol=5e-2, rtol=5e-2)
    assert jnp.allclose(h_n2, ref_h2, atol=5e-2, rtol=5e-2)
    assert jnp.allclose(c_n2, ref_c2, atol=5e-2, rtol=5e-2)

    print("KERNEL_OK")
</pallas_src>

<mosaic_0001>
module attributes {stable_mosaic.version = 11 : i64} {
  func.func @_fused_rnn_kernel(%arg0: i32, %arg1: memref<8x8x128xf32, #tpu.memory_space<vmem>>, %arg2: memref<2x128x512xf32, #tpu.memory_space<vmem>>, %arg3: memref<2x128x512xf32, #tpu.memory_space<vmem>>, %arg4: memref<2x1x512xf32, #tpu.memory_space<vmem>>, %arg5: memref<2x8x128xf32, #tpu.memory_space<vmem>>, %arg6: memref<2x8x128xf32, #tpu.memory_space<vmem>>, %arg7: memref<128x128xf32, #tpu.memory_space<vmem>>, %arg8: memref<1x128xf32, #tpu.memory_space<vmem>>, %arg9: memref<8x8x128xf32, #tpu.memory_space<vmem>>, %arg10: memref<2x8x128xf32, #tpu.memory_space<vmem>>, %arg11: memref<2x8x128xf32, #tpu.memory_space<vmem>>, %arg12: memref<64x128xf32, #tpu.memory_space<vmem>>, %arg13: memref<32x512xf32, #tpu.memory_space<vmem>>) attributes {dimension_semantics = [#tpu.dimension_semantics<parallel>], iteration_bounds = array<i64: 1>, scalar_prefetch = 0 : i64, scratch_operands = 2 : i64, tpu.core_type = #tpu.core_type<tc>, window_params = [{transform_indices = @transform_0, window_bounds = array<i64: 8, 8, 128>}, {pipeline_mode = #tpu.pipeline_mode<synchronous>, transform_indices = @transform_1, window_bounds = array<i64: 2, 128, 512>}, {pipeline_mode = #tpu.pipeline_mode<synchronous>, transform_indices = @transform_2, window_bounds = array<i64: 2, 128, 512>}, {pipeline_mode = #tpu.pipeline_mode<synchronous>, transform_indices = @transform_3, window_bounds = array<i64: 2, 1, 512>}, {transform_indices = @transform_4, window_bounds = array<i64: 2, 8, 128>}, {transform_indices = @transform_5, window_bounds = array<i64: 2, 8, 128>}, {pipeline_mode = #tpu.pipeline_mode<synchronous>, transform_indices = @transform_6, window_bounds = array<i64: 128, 128>}, {pipeline_mode = #tpu.pipeline_mode<synchronous>, transform_indices = @transform_7, window_bounds = array<i64: 1, 128>}, {transform_indices = @transform_8, window_bounds = array<i64: 8, 8, 128>}, {transform_indices = @transform_9, window_bounds = array<i64: 2, 8, 128>}, {transform_indices = @transform_10, window_bounds = array<i64: 2, 8, 128>}]} {
    %c0 = arith.constant 0 : index
    %c0_0 = arith.constant 0 : index
    %c0_1 = arith.constant 0 : index
    %0 = vector.load %arg5[%c0, %c0_0, %c0_1] : memref<2x8x128xf32, #tpu.memory_space<vmem>>, vector<1x8x128xf32>
    %1 = vector.shape_cast %0 : vector<1x8x128xf32> to vector<8x128xf32>
    %c0_2 = arith.constant 0 : index
    %c0_3 = arith.constant 0 : index
    %c0_4 = arith.constant 0 : index
    %2 = vector.load %arg6[%c0_2, %c0_3, %c0_4] : memref<2x8x128xf32, #tpu.memory_space<vmem>>, vector<1x8x128xf32>
    %3 = vector.shape_cast %2 : vector<1x8x128xf32> to vector<8x128xf32>
    %c0_5 = arith.constant 0 : index
    %c0_6 = arith.constant 0 : index
    %c0_7 = arith.constant 0 : index
    %4 = vector.load %arg1[%c0_5, %c0_6, %c0_7] : memref<8x8x128xf32, #tpu.memory_space<vmem>>, vector<4x8x128xf32>
    %5 = vector.shape_cast %4 : vector<4x8x128xf32> to vector<32x128xf32>
    %c0_8 = arith.constant 0 : index
    %c0_9 = arith.constant 0 : index
    %c0_10 = arith.constant 0 : index
    %6 = vector.load %arg2[%c0_8, %c0_9, %c0_10] : memref<2x128x512xf32, #tpu.memory_space<vmem>>, vector<1x128x512xf32>
    %7 = vector.shape_cast %6 : vector<1x128x512xf32> to vector<128x512xf32>
    %cst = arith.constant dense<0.000000e+00> : vector<32x512xf32>
    %8 = tpu.matmul %5, %7, %cst {dimension_numbers = #tpu.dot_dimension_numbers<[1], [0], [0], [1], [0, 0, 1, 1], [], []>} : vector<32x128xf32>, vector<128x512xf32>, vector<32x512xf32> -> vector<32x512xf32>
    %c0_11 = arith.constant 0 : index
    %c0_12 = arith.constant 0 : index
    %c0_13 = arith.constant 0 : index
    %9 = vector.load %arg4[%c0_11, %c0_12, %c0_13] : memref<2x1x512xf32, #tpu.memory_space<vmem>>, vector<1x1x512xf32>
    %10 = vector.shape_cast %9 : vector<1x1x512xf32> to vector<1x512xf32>
    %11 = vector.broadcast %10 : vector<1x512xf32> to vector<32x512xf32>
    %12 = arith.addf %8, %11 : vector<32x512xf32>
    %c0_14 = arith.constant 0 : index
    %c0_15 = arith.constant 0 : index
    %13 = vector.load %arg13[%c0_14, %c0_15] : memref<32x512xf32, #tpu.memory_space<vmem>>, vector<32x512xf32>
    tpu.vector_store %arg13[%c0_14, %c0_15], %12 {strides = array<i32>} : memref<32x512xf32, #tpu.memory_space<vmem>>, vector<32x512xf32>,
    %c0_i32 = arith.constant 0 : i32
    %c8_i32 = arith.constant 8 : i32
    %14 = arith.muli %c0_i32, %c8_i32 : i32
    %15 = tpu.assume_multiple %14, 8 : i32
    %16 = arith.index_cast %15 : i32 to index
    %c0_16 = arith.constant 0 : index
    %17 = vector.load %arg13[%16, %c0_16] : memref<32x512xf32, #tpu.memory_space<vmem>>, vector<8x512xf32>
    %c0_17 = arith.constant 0 : index
    %c0_18 = arith.constant 0 : index
    %c0_19 = arith.constant 0 : index
    %18 = vector.load %arg3[%c0_17, %c0_18, %c0_19] : memref<2x128x512xf32, #tpu.memory_space<vmem>>, vector<1x128x512xf32>
    %19 = vector.shape_cast %18 : vector<1x128x512xf32> to vector<128x512xf32>
    %cst_20 = arith.constant dense<0.000000e+00> : vector<8x512xf32>
    %20 = tpu.matmul %1, %19, %cst_20 {dimension_numbers = #tpu.dot_dimension_numbers<[1], [0], [0], [1], [0, 0, 1, 1], [], []>} : vector<8x128xf32>, vector<128x512xf32>, vector<8x512xf32> -> vector<8x512xf32>
    %21 = arith.addf %17, %20 : vector<8x512xf32>
    %22 = vector.extract_strided_slice %21 {offsets = [0, 0], sizes = [8, 384], strides = [1, 1]} : vector<8x512xf32> to vector<8x384xf32>
    %cst_21 = arith.constant 5.000000e-01 : f32
    %23 = vector.broadcast %cst_21 : f32 to vector<8x384xf32>
    %24 = arith.mulf %23, %22 : vector<8x384xf32>
    %25 = math.tanh %24 : vector<8x384xf32>
    %cst_22 = arith.constant 5.000000e-01 : f32
    %26 = vector.broadcast %cst_22 : f32 to vector<8x384xf32>
    %27 = arith.mulf %26, %25 : vector<8x384xf32>
    %cst_23 = arith.constant 5.000000e-01 : f32
    %28 = vector.broadcast %cst_23 : f32 to vector<8x384xf32>
    %29 = arith.addf %27, %28 : vector<8x384xf32>
    %30 = vector.extract_strided_slice %29 {offsets = [0, 0], sizes = [8, 128], strides = [1, 1]} : vector<8x384xf32> to vector<8x128xf32>
    %31 = vector.extract_strided_slice %29 {offsets = [0, 128], sizes = [8, 128], strides = [1, 1]} : vector<8x384xf32> to vector<8x128xf32>
    %32 = vector.extract_strided_slice %29 {offsets = [0, 256], sizes = [8, 128], strides = [1, 1]} : vector<8x384xf32> to vector<8x128xf32>
    %33 = vector.extract_strided_slice %21 {offsets = [0, 384], sizes = [8, 128], strides = [1, 1]} : vector<8x512xf32> to vector<8x128xf32>
    %34 = math.tanh %33 : vector<8x128xf32>
    %35 = arith.mulf %31, %3 : vector<8x128xf32>
    %36 = arith.mulf %30, %34 : vector<8x128xf32>
    %37 = arith.addf %35, %36 : vector<8x128xf32>
    %38 = math.tanh %37 : vector<8x128xf32>
    %39 = arith.mulf %32, %38 : vector<8x128xf32>
    %c8_i32_24 = arith.constant 8 : i32
    %40 = arith.muli %c0_i32, %c8_i32_24 : i32
    %c0_i32_25 = arith.constant 0 : i32
    %41 = arith.addi %c0_i32_25, %40 : i32
    %42 = tpu.assume_multiple %41, 8 : i32
    %43 = arith.index_cast %42 : i32 to index
    %c0_26 = arith.constant 0 : index
    %44 = vector.load %arg12[%43, %c0_26] : memref<64x128xf32, #tpu.memory_space<vmem>>, vector<8x128xf32>
    tpu.vector_store %arg12[%43, %c0_26], %39 {strides = array<i32>} : memref<64x128xf32, #tpu.memory_space<vmem>>, vector<8x128xf32>,
    %c1_i32 = arith.constant 1 : i32
    %c8_i32_27 = arith.constant 8 : i32
    %45 = arith.muli %c1_i32, %c8_i32_27 : i32
    %46 = tpu.assume_multiple %45, 8 : i32
    %47 = arith.index_cast %46 : i32 to index
    %c0_28 = arith.constant 0 : index
    %48 = vector.load %arg13[%47, %c0_28] : memref<32x512xf32, #tpu.memory_space<vmem>>, vector<8x512xf32>
    %c0_29 = arith.constant 0 : index
    %c0_30 = arith.constant 0 : index
    %c0_31 = arith.constant 0 : index
    %49 = vector.load %arg3[%c0_29, %c0_30, %c0_31] : memref<2x128x512xf32, #tpu.memory_space<vmem>>, vector<1x128x512xf32>
    %50 = vector.shape_cast %49 : vector<1x128x512xf32> to vector<128x512xf32>
    %cst_32 = arith.constant dense<0.000000e+00> : vector<8x512xf32>
    %51 = tpu.matmul %39, %50, %cst_32 {dimension_numbers = #tpu.dot_dimension_numbers<[1], [0], [0], [1], [0, 0, 1, 1], [], []>} : vector<8x128xf32>, vector<128x512xf32>, vector<8x512xf32> -> vector<8x512xf32>
    %52 = arith.addf %48, %51 : vector<8x512xf32>
    %53 = vector.extract_strided_slice %52 {offsets = [0, 0], sizes = [8, 384], strides = [1, 1]} : vector<8x512xf32> to vector<8x384xf32>
    %cst_33 = arith.constant 5.000000e-01 : f32
    %54 = vector.broadcast %cst_33 : f32 to vector<8x384xf32>
    %55 = arith.mulf %54, %53 : vector<8x384xf32>
    %56 = math.tanh %55 : vector<8x384xf32>
    %cst_34 = arith.constant 5.000000e-01 : f32
    %57 = vector.broadcast %cst_34 : f32 to vector<8x384xf32>
    %58 = arith.mulf %57, %56 : vector<8x384xf32>
    %cst_35 = arith.constant 5.000000e-01 : f32
    %59 = vector.broadcast %cst_35 : f32 to vector<8x384xf32>
    %60 = arith.addf %58, %59 : vector<8x384xf32>
    %61 = vector.extract_strided_slice %60 {offsets = [0, 0], sizes = [8, 128], strides = [1, 1]} : vector<8x384xf32> to vector<8x128xf32>
    %62 = vector.extract_strided_slice %60 {offsets = [0, 128], sizes = [8, 128], strides = [1, 1]} : vector<8x384xf32> to vector<8x128xf32>
    %63 = vector.extract_strided_slice %60 {offsets = [0, 256], sizes = [8, 128], strides = [1, 1]} : vector<8x384xf32> to vector<8x128xf32>
    %64 = vector.extract_strided_slice %52 {offsets = [0, 384], sizes = [8, 128], strides = [1, 1]} : vector<8x512xf32> to vector<8x128xf32>
    %65 = math.tanh %64 : vector<8x128xf32>
    %66 = arith.mulf %62, %37 : vector<8x128xf32>
    %67 = arith.mulf %61, %65 : vector<8x128xf32>
    %68 = arith.addf %66, %67 : vector<8x128xf32>
    %69 = math.tanh %68 : vector<8x128xf32>
    %70 = arith.mulf %63, %69 : vector<8x128xf32>
    %c8_i32_36 = arith.constant 8 : i32
    %71 = arith.muli %c1_i32, %c8_i32_36 : i32
    %c0_i32_37 = arith.constant 0 : i32
    %72 = arith.addi %c0_i32_37, %71 : i32
    %73 = tpu.assume_multiple %72, 8 : i32
    %74 = arith.index_cast %73 : i32 to index
    %c0_38 = arith.constant 0 : index
    %75 = vector.load %arg12[%74, %c0_38] : memref<64x128xf32, #tpu.memory_space<vmem>>, vector<8x128xf32>
    tpu.vector_store %arg12[%74, %c0_38], %70 {strides = array<i32>} : memref<64x128xf32, #tpu.memory_space<vmem>>, vector<8x128xf32>,
    %c2_i32 = arith.constant 2 : i32
    %c8_i32_39 = arith.constant 8 : i32
    %76 = arith.muli %c2_i32, %c8_i32_39 : i32
    %77 = tpu.assume_multiple %76, 8 : i32
    %78 = arith.index_cast %77 : i32 to index
    %c0_40 = arith.constant 0 : index
    %79 = vector.load %arg13[%78, %c0_40] : memref<32x512xf32, #tpu.memory_space<vmem>>, vector<8x512xf32>
    %c0_41 = arith.constant 0 : index
    %c0_42 = arith.constant 0 : index
    %c0_43 = arith.constant 0 : index
    %80 = vector.load %arg3[%c0_41, %c0_42, %c0_43] : memref<2x128x512xf32, #tpu.memory_space<vmem>>, vector<1x128x512xf32>
    %81 = vector.shape_cast %80 : vector<1x128x512xf32> to vector<128x512xf32>
    %cst_44 = arith.constant dense<0.000000e+00> : vector<8x512xf32>
    %82 = tpu.matmul %70, %81, %cst_44 {dimension_numbers = #tpu.dot_dimension_numbers<[1], [0], [0], [1], [0, 0, 1, 1], [], []>} : vector<8x128xf32>, vector<128x512xf32>, vector<8x512xf32> -> vector<8x512xf32>
    %83 = arith.addf %79, %82 : vector<8x512xf32>
    %84 = vector.extract_strided_slice %83 {offsets = [0, 0], sizes = [8, 384], strides = [1, 1]} : vector<8x512xf32> to vector<8x384xf32>
    %cst_45 = arith.constant 5.000000e-01 : f32
    %85 = vector.broadcast %cst_45 : f32 to vector<8x384xf32>
    %86 = arith.mulf %85, %84 : vector<8x384xf32>
    %87 = math.tanh %86 : vector<8x384xf32>
    %cst_46 = arith.constant 5.000000e-01 : f32
    %88 = vector.broadcast %cst_46 : f32 to vector<8x384xf32>
    %89 = arith.mulf %88, %87 : vector<8x384xf32>
    %cst_47 = arith.constant 5.000000e-01 : f32
    %90 = vector.broadcast %cst_47 : f32 to vector<8x384xf32>
    %91 = arith.addf %89, %90 : vector<8x384xf32>
    %92 = vector.extract_strided_slice %91 {offsets = [0, 0], sizes = [8, 128], strides = [1, 1]} : vector<8x384xf32> to vector<8x128xf32>
    %93 = vector.extract_strided_slice %91 {offsets = [0, 128], sizes = [8, 128], strides = [1, 1]} : vector<8x384xf32> to vector<8x128xf32>
    %94 = vector.extract_strided_slice %91 {offsets = [0, 256], sizes = [8, 128], strides = [1, 1]} : vector<8x384xf32> to vector<8x128xf32>
    %95 = vector.extract_strided_slice %83 {offsets = [0, 384], sizes = [8, 128], strides = [1, 1]} : vector<8x512xf32> to vector<8x128xf32>
    %96 = math.tanh %95 : vector<8x128xf32>
    %97 = arith.mulf %93, %68 : vector<8x128xf32>
    %98 = arith.mulf %92, %96 : vector<8x128xf32>
    %99 = arith.addf %97, %98 : vector<8x128xf32>
    %100 = math.tanh %99 : vector<8x128xf32>
    %101 = arith.mulf %94, %100 : vector<8x128xf32>
    %c8_i32_48 = arith.constant 8 : i32
    %102 = arith.muli %c2_i32, %c8_i32_48 : i32
    %c0_i32_49 = arith.constant 0 : i32
    %103 = arith.addi %c0_i32_49, %102 : i32
    %104 = tpu.assume_multiple %103, 8 : i32
    %105 = arith.index_cast %104 : i32 to index
    %c0_50 = arith.constant 0 : index
    %106 = vector.load %arg12[%105, %c0_50] : memref<64x128xf32, #tpu.memory_space<vmem>>, vector<8x128xf32>
    tpu.vector_store %arg12[%105, %c0_50], %101 {strides = array<i32>} : memref<64x128xf32, #tpu.memory_space<vmem>>, vector<8x128xf32>,
    %c3_i32 = arith.constant 3 : i32
    %c8_i32_51 = arith.constant 8 : i32
    %107 = arith.muli %c3_i32, %c8_i32_51 : i32
    %108 = tpu.assume_multiple %107, 8 : i32
    %109 = arith.index_cast %108 : i32 to index
    %c0_52 = arith.constant 0 : index
    %110 = vector.load %arg13[%109, %c0_52] : memref<32x512xf32, #tpu.memory_space<vmem>>, vector<8x512xf32>
    %c0_53 = arith.constant 0 : index
    %c0_54 = arith.constant 0 : index
    %c0_55 = arith.constant 0 : index
    %111 = vector.load %arg3[%c0_53, %c0_54, %c0_55] : memref<2x128x512xf32, #tpu.memory_space<vmem>>, vector<1x128x512xf32>
    %112 = vector.shape_cast %111 : vector<1x128x512xf32> to vector<128x512xf32>
    %cst_56 = arith.constant dense<0.000000e+00> : vector<8x512xf32>
    %113 = tpu.matmul %101, %112, %cst_56 {dimension_numbers = #tpu.dot_dimension_numbers<[1], [0], [0], [1], [0, 0, 1, 1], [], []>} : vector<8x128xf32>, vector<128x512xf32>, vector<8x512xf32> -> vector<8x512xf32>
    %114 = arith.addf %110, %113 : vector<8x512xf32>
    %115 = vector.extract_strided_slice %114 {offsets = [0, 0], sizes = [8, 384], strides = [1, 1]} : vector<8x512xf32> to vector<8x384xf32>
    %cst_57 = arith.constant 5.000000e-01 : f32
    %116 = vector.broadcast %cst_57 : f32 to vector<8x384xf32>
    %117 = arith.mulf %116, %115 : vector<8x384xf32>
    %118 = math.tanh %117 : vector<8x384xf32>
    %cst_58 = arith.constant 5.000000e-01 : f32
    %119 = vector.broadcast %cst_58 : f32 to vector<8x384xf32>
    %120 = arith.mulf %119, %118 : vector<8x384xf32>
    %cst_59 = arith.constant 5.000000e-01 : f32
    %121 = vector.broadcast %cst_59 : f32 to vector<8x384xf32>
    %122 = arith.addf %120, %121 : vector<8x384xf32>
    %123 = vector.extract_strided_slice %122 {offsets = [0, 0], sizes = [8, 128], strides = [1, 1]} : vector<8x384xf32> to vector<8x128xf32>
    %124 = vector.extract_strided_slice %122 {offsets = [0, 128], sizes = [8, 128], strides = [1, 1]} : vector<8x384xf32> to vector<8x128xf32>
    %125 = vector.extract_strided_slice %122 {offsets = [0, 256], sizes = [8, 128], strides = [1, 1]} : vector<8x384xf32> to vector<8x128xf32>
    %126 = vector.extract_strided_slice %114 {offsets = [0, 384], sizes = [8, 128], strides = [1, 1]} : vector<8x512xf32> to vector<8x128xf32>
    %127 = math.tanh %126 : vector<8x128xf32>
    %128 = arith.mulf %124, %99 : vector<8x128xf32>
    %129 = arith.mulf %123, %127 : vector<8x128xf32>
    %130 = arith.addf %128, %129 : vector<8x128xf32>
    %131 = math.tanh %130 : vector<8x128xf32>
    %132 = arith.mulf %125, %131 : vector<8x128xf32>
    %c8_i32_60 = arith.constant 8 : i32
    %133 = arith.muli %c3_i32, %c8_i32_60 : i32
    %c0_i32_61 = arith.constant 0 : i32
    %134 = arith.addi %c0_i32_61, %133 : i32
    %135 = tpu.assume_multiple %134, 8 : i32
    %136 = arith.index_cast %135 : i32 to index
    %c0_62 = arith.constant 0 : index
    %137 = vector.load %arg12[%136, %c0_62] : memref<64x128xf32, #tpu.memory_space<vmem>>, vector<8x128xf32>
    tpu.vector_store %arg12[%136, %c0_62], %132 {strides = array<i32>} : memref<64x128xf32, #tpu.memory_space<vmem>>, vector<8x128xf32>,
    %c4_i32 = arith.constant 4 : i32
    %c4 = arith.constant 4 : index
    %c0_63 = arith.constant 0 : index
    %c0_64 = arith.constant 0 : index
    %138 = vector.load %arg1[%c4, %c0_63, %c0_64] : memref<8x8x128xf32, #tpu.memory_space<vmem>>, vector<4x8x128xf32>
    %139 = vector.shape_cast %138 : vector<4x8x128xf32> to vector<32x128xf32>
    %c0_65 = arith.constant 0 : index
    %c0_66 = arith.constant 0 : index
    %c0_67 = arith.constant 0 : index
    %140 = vector.load %arg2[%c0_65, %c0_66, %c0_67] : memref<2x128x512xf32, #tpu.memory_space<vmem>>, vector<1x128x512xf32>
    %141 = vector.shape_cast %140 : vector<1x128x512xf32> to vector<128x512xf32>
    %cst_68 = arith.constant dense<0.000000e+00> : vector<32x512xf32>
    %142 = tpu.matmul %139, %141, %cst_68 {dimension_numbers = #tpu.dot_dimension_numbers<[1], [0], [0], [1], [0, 0, 1, 1], [], []>} : vector<32x128xf32>, vector<128x512xf32>, vector<32x512xf32> -> vector<32x512xf32>
    %c0_69 = arith.constant 0 : index
    %c0_70 = arith.constant 0 : index
    %c0_71 = arith.constant 0 : index
    %143 = vector.load %arg4[%c0_69, %c0_70, %c0_71] : memref<2x1x512xf32, #tpu.memory_space<vmem>>, vector<1x1x512xf32>
    %144 = vector.shape_cast %143 : vector<1x1x512xf32> to vector<1x512xf32>
    %145 = vector.broadcast %144 : vector<1x512xf32> to vector<32x512xf32>
    %146 = arith.addf %142, %145 : vector<32x512xf32>
    %c0_72 = arith.constant 0 : index
    %c0_73 = arith.constant 0 : index
    %147 = vector.load %arg13[%c0_72, %c0_73] : memref<32x512xf32, #tpu.memory_space<vmem>>, vector<32x512xf32>
    tpu.vector_store %arg13[%c0_72, %c0_73], %146 {strides = array<i32>} : memref<32x512xf32, #tpu.memory_space<vmem>>, vector<32x512xf32>,
    %c0_i32_74 = arith.constant 0 : i32
    %c8_i32_75 = arith.constant 8 : i32
    %148 = arith.muli %c0_i32_74, %c8_i32_75 : i32
    %149 = tpu.assume_multiple %148, 8 : i32
    %150 = arith.index_cast %149 : i32 to index
    %c0_76 = arith.constant 0 : index
    %151 = vector.load %arg13[%150, %c0_76] : memref<32x512xf32, #tpu.memory_space<vmem>>, vector<8x512xf32>
    %c0_77 = arith.constant 0 : index
    %c0_78 = arith.constant 0 : index
    %c0_79 = arith.constant 0 : index
    %152 = vector.load %arg3[%c0_77, %c0_78, %c0_79] : memref<2x128x512xf32, #tpu.memory_space<vmem>>, vector<1x128x512xf32>
    %153 = vector.shape_cast %152 : vector<1x128x512xf32> to vector<128x512xf32>
    %cst_80 = arith.constant dense<0.000000e+00> : vector<8x512xf32>
    %154 = tpu.matmul %132, %153, %cst_80 {dimension_numbers = #tpu.dot_dimension_numbers<[1], [0], [0], [1], [0, 0, 1, 1], [], []>} : vector<8x128xf32>, vector<128x512xf32>, vector<8x512xf32> -> vector<8x512xf32>
    %155 = arith.addf %151, %154 : vector<8x512xf32>
    %156 = vector.extract_strided_slice %155 {offsets = [0, 0], sizes = [8, 384], strides = [1, 1]} : vector<8x512xf32> to vector<8x384xf32>
    %cst_81 = arith.constant 5.000000e-01 : f32
    %157 = vector.broadcast %cst_81 : f32 to vector<8x384xf32>
    %158 = arith.mulf %157, %156 : vector<8x384xf32>
    %159 = math.tanh %158 : vector<8x384xf32>
    %cst_82 = arith.constant 5.000000e-01 : f32
    %160 = vector.broadcast %cst_82 : f32 to vector<8x384xf32>
    %161 = arith.mulf %160, %159 : vector<8x384xf32>
    %cst_83 = arith.constant 5.000000e-01 : f32
    %162 = vector.broadcast %cst_83 : f32 to vector<8x384xf32>
    %163 = arith.addf %161, %162 : vector<8x384xf32>
    %164 = vector.extract_strided_slice %163 {offsets = [0, 0], sizes = [8, 128], strides = [1, 1]} : vector<8x384xf32> to vector<8x128xf32>
    %165 = vector.extract_strided_slice %163 {offsets = [0, 128], sizes = [8, 128], strides = [1, 1]} : vector<8x384xf32> to vector<8x128xf32>
    %166 = vector.extract_strided_slice %163 {offsets = [0, 256], sizes = [8, 128], strides = [1, 1]} : vector<8x384xf32> to vector<8x128xf32>
    %167 = vector.extract_strided_slice %155 {offsets = [0, 384], sizes = [8, 128], strides = [1, 1]} : vector<8x512xf32> to vector<8x128xf32>
    %168 = math.tanh %167 : vector<8x128xf32>
    %169 = arith.mulf %165, %130 : vector<8x128xf32>
    %170 = arith.mulf %164, %168 : vector<8x128xf32>
    %171 = arith.addf %169, %170 : vector<8x128xf32>
    %172 = math.tanh %171 : vector<8x128xf32>
    %173 = arith.mulf %166, %172 : vector<8x128xf32>
    %c8_i32_84 = arith.constant 8 : i32
    %174 = arith.muli %c0_i32_74, %c8_i32_84 : i32
    %c32_i32 = arith.constant 32 : i32
    %175 = arith.addi %c32_i32, %174 : i32
    %176 = tpu.assume_multiple %175, 8 : i32
    %177 = arith.index_cast %176 : i32 to index
    %c0_85 = arith.constant 0 : index
    %178 = vector.load %arg12[%177, %c0_85] : memref<64x128xf32, #tpu.memory_space<vmem>>, vector<8x128xf32>
    tpu.vector_store %arg12[%177, %c0_85], %173 {strides = array<i32>} : memref<64x128xf32, #tpu.memory_space<vmem>>, vector<8x128xf32>,
    %c1_i32_86 = arith.constant 1 : i32
    %c8_i32_87 = arith.constant 8 : i32
    %179 = arith.muli %c1_i32_86, %c8_i32_87 : i32
    %180 = tpu.assume_multiple %179, 8 : i32
    %181 = arith.index_cast %180 : i32 to index
    %c0_88 = arith.constant 0 : index
    %182 = vector.load %arg13[%181, %c0_88] : memref<32x512xf32, #tpu.memory_space<vmem>>, vector<8x512xf32>
    %c0_89 = arith.constant 0 : index
    %c0_90 = arith.constant 0 : index
    %c0_91 = arith.constant 0 : index
    %183 = vector.load %arg3[%c0_89, %c0_90, %c0_91] : memref<2x128x512xf32, #tpu.memory_space<vmem>>, vector<1x128x512xf32>
    %184 = vector.shape_cast %183 : vector<1x128x512xf32> to vector<128x512xf32>
    %cst_92 = arith.constant dense<0.000000e+00> : vector<8x512xf32>
    %185 = tpu.matmul %173, %184, %cst_92 {dimension_numbers = #tpu.dot_dimension_numbers<[1], [0], [0], [1], [0, 0, 1, 1], [], []>} : vector<8x128xf32>, vector<128x512xf32>, vector<8x512xf32> -> vector<8x512xf32>
    %186 = arith.addf %182, %185 : vector<8x512xf32>
    %187 = vector.extract_strided_slice %186 {offsets = [0, 0], sizes = [8, 384], strides = [1, 1]} : vector<8x512xf32> to vector<8x384xf32>
    %cst_93 = arith.constant 5.000000e-01 : f32
    %188 = vector.broadcast %cst_93 : f32 to vector<8x384xf32>
    %189 = arith.mulf %188, %187 : vector<8x384xf32>
    %190 = math.tanh %189 : vector<8x384xf32>
    %cst_94 = arith.constant 5.000000e-01 : f32
    %191 = vector.broadcast %cst_94 : f32 to vector<8x384xf32>
    %192 = arith.mulf %191, %190 : vector<8x384xf32>
    %cst_95 = arith.constant 5.000000e-01 : f32
    %193 = vector.broadcast %cst_95 : f32 to vector<8x384xf32>
    %194 = arith.addf %192, %193 : vector<8x384xf32>
    %195 = vector.extract_strided_slice %194 {offsets = [0, 0], sizes = [8, 128], strides = [1, 1]} : vector<8x384xf32> to vector<8x128xf32>
    %196 = vector.extract_strided_slice %194 {offsets = [0, 128], sizes = [8, 128], strides = [1, 1]} : vector<8x384xf32> to vector<8x128xf32>
    %197 = vector.extract_strided_slice %194 {offsets = [0, 256], sizes = [8, 128], strides = [1, 1]} : vector<8x384xf32> to vector<8x128xf32>
    %198 = vector.extract_strided_slice %186 {offsets = [0, 384], sizes = [8, 128], strides = [1, 1]} : vector<8x512xf32> to vector<8x128xf32>
    %199 = math.tanh %198 : vector<8x128xf32>
    %200 = arith.mulf %196, %171 : vector<8x128xf32>
    %201 = arith.mulf %195, %199 : vector<8x128xf32>
    %202 = arith.addf %200, %201 : vector<8x128xf32>
    %203 = math.tanh %202 : vector<8x128xf32>
    %204 = arith.mulf %197, %203 : vector<8x128xf32>
    %c8_i32_96 = arith.constant 8 : i32
    %205 = arith.muli %c1_i32_86, %c8_i32_96 : i32
    %c32_i32_97 = arith.constant 32 : i32
    %206 = arith.addi %c32_i32_97, %205 : i32
    %207 = tpu.assume_multiple %206, 8 : i32
    %208 = arith.index_cast %207 : i32 to index
    %c0_98 = arith.constant 0 : index
    %209 = vector.load %arg12[%208, %c0_98] : memref<64x128xf32, #tpu.memory_space<vmem>>, vector<8x128xf32>
    tpu.vector_store %arg12[%208, %c0_98], %204 {strides = array<i32>} : memref<64x128xf32, #tpu.memory_space<vmem>>, vector<8x128xf32>,
    %c2_i32_99 = arith.constant 2 : i32
    %c8_i32_100 = arith.constant 8 : i32
    %210 = arith.muli %c2_i32_99, %c8_i32_100 : i32
    %211 = tpu.assume_multiple %210, 8 : i32
    %212 = arith.index_cast %211 : i32 to index
    %c0_101 = arith.constant 0 : index
    %213 = vector.load %arg13[%212, %c0_101] : memref<32x512xf32, #tpu.memory_space<vmem>>, vector<8x512xf32>
    %c0_102 = arith.constant 0 : index
    %c0_103 = arith.constant 0 : index
    %c0_104 = arith.constant 0 : index
    %214 = vector.load %arg3[%c0_102, %c0_103, %c0_104] : memref<2x128x512xf32, #tpu.memory_space<vmem>>, vector<1x128x512xf32>
    %215 = vector.shape_cast %214 : vector<1x128x512xf32> to vector<128x512xf32>
    %cst_105 = arith.constant dense<0.000000e+00> : vector<8x512xf32>
    %216 = tpu.matmul %204, %215, %cst_105 {dimension_numbers = #tpu.dot_dimension_numbers<[1], [0], [0], [1], [0, 0, 1, 1], [], []>} : vector<8x128xf32>, vector<128x512xf32>, vector<8x512xf32> -> vector<8x512xf32>
    %217 = arith.addf %213, %216 : vector<8x512xf32>
    %218 = vector.extract_strided_slice %217 {offsets = [0, 0], sizes = [8, 384], strides = [1, 1]} : vector<8x512xf32> to vector<8x384xf32>
    %cst_106 = arith.constant 5.000000e-01 : f32
    %219 = vector.broadcast %cst_106 : f32 to vector<8x384xf32>
    %220 = arith.mulf %219, %218 : vector<8x384xf32>
    %221 = math.tanh %220 : vector<8x384xf32>
    %cst_107 = arith.constant 5.000000e-01 : f32
    %222 = vector.broadcast %cst_107 : f32 to vector<8x384xf32>
    %223 = arith.mulf %222, %221 : vector<8x384xf32>
    %cst_108 = arith.constant 5.000000e-01 : f32
    %224 = vector.broadcast %cst_108 : f32 to vector<8x384xf32>
    %225 = arith.addf %223, %224 : vector<8x384xf32>
    %226 = vector.extract_strided_slice %225 {offsets = [0, 0], sizes = [8, 128], strides = [1, 1]} : vector<8x384xf32> to vector<8x128xf32>
    %227 = vector.extract_strided_slice %225 {offsets = [0, 128], sizes = [8, 128], strides = [1, 1]} : vector<8x384xf32> to vector<8x128xf32>
    %228 = vector.extract_strided_slice %225 {offsets = [0, 256], sizes = [8, 128], strides = [1, 1]} : vector<8x384xf32> to vector<8x128xf32>
    %229 = vector.extract_strided_slice %217 {offsets = [0, 384], sizes = [8, 128], strides = [1, 1]} : vector<8x512xf32> to vector<8x128xf32>
    %230 = math.tanh %229 : vector<8x128xf32>
    %231 = arith.mulf %227, %202 : vector<8x128xf32>
    %232 = arith.mulf %226, %230 : vector<8x128xf32>
    %233 = arith.addf %231, %232 : vector<8x128xf32>
    %234 = math.tanh %233 : vector<8x128xf32>
    %235 = arith.mulf %228, %234 : vector<8x128xf32>
    %c8_i32_109 = arith.constant 8 : i32
    %236 = arith.muli %c2_i32_99, %c8_i32_109 : i32
    %c32_i32_110 = arith.constant 32 : i32
    %237 = arith.addi %c32_i32_110, %236 : i32
    %238 = tpu.assume_multiple %237, 8 : i32
    %239 = arith.index_cast %238 : i32 to index
    %c0_111 = arith.constant 0 : index
    %240 = vector.load %arg12[%239, %c0_111] : memref<64x128xf32, #tpu.memory_space<vmem>>, vector<8x128xf32>
    tpu.vector_store %arg12[%239, %c0_111], %235 {strides = array<i32>} : memref<64x128xf32, #tpu.memory_space<vmem>>, vector<8x128xf32>,
    %c3_i32_112 = arith.constant 3 : i32
    %c8_i32_113 = arith.constant 8 : i32
    %241 = arith.muli %c3_i32_112, %c8_i32_113 : i32
    %242 = tpu.assume_multiple %241, 8 : i32
    %243 = arith.index_cast %242 : i32 to index
    %c0_114 = arith.constant 0 : index
    %244 = vector.load %arg13[%243, %c0_114] : memref<32x512xf32, #tpu.memory_space<vmem>>, vector<8x512xf32>
    %c0_115 = arith.constant 0 : index
    %c0_116 = arith.constant 0 : index
    %c0_117 = arith.constant 0 : index
    %245 = vector.load %arg3[%c0_115, %c0_116, %c0_117] : memref<2x128x512xf32, #tpu.memory_space<vmem>>, vector<1x128x512xf32>
    %246 = vector.shape_cast %245 : vector<1x128x512xf32> to vector<128x512xf32>
    %cst_118 = arith.constant dense<0.000000e+00> : vector<8x512xf32>
    %247 = tpu.matmul %235, %246, %cst_118 {dimension_numbers = #tpu.dot_dimension_numbers<[1], [0], [0], [1], [0, 0, 1, 1], [], []>} : vector<8x128xf32>, vector<128x512xf32>, vector<8x512xf32> -> vector<8x512xf32>
    %248 = arith.addf %244, %247 : vector<8x512xf32>
    %249 = vector.extract_strided_slice %248 {offsets = [0, 0], sizes = [8, 384], strides = [1, 1]} : vector<8x512xf32> to vector<8x384xf32>
    %cst_119 = arith.constant 5.000000e-01 : f32
    %250 = vector.broadcast %cst_119 : f32 to vector<8x384xf32>
    %251 = arith.mulf %250, %249 : vector<8x384xf32>
    %252 = math.tanh %251 : vector<8x384xf32>
    %cst_120 = arith.constant 5.000000e-01 : f32
    %253 = vector.broadcast %cst_120 : f32 to vector<8x384xf32>
    %254 = arith.mulf %253, %252 : vector<8x384xf32>
    %cst_121 = arith.constant 5.000000e-01 : f32
    %255 = vector.broadcast %cst_121 : f32 to vector<8x384xf32>
    %256 = arith.addf %254, %255 : vector<8x384xf32>
    %257 = vector.extract_strided_slice %256 {offsets = [0, 0], sizes = [8, 128], strides = [1, 1]} : vector<8x384xf32> to vector<8x128xf32>
    %258 = vector.extract_strided_slice %256 {offsets = [0, 128], sizes = [8, 128], strides = [1, 1]} : vector<8x384xf32> to vector<8x128xf32>
    %259 = vector.extract_strided_slice %256 {offsets = [0, 256], sizes = [8, 128], strides = [1, 1]} : vector<8x384xf32> to vector<8x128xf32>
    %260 = vector.extract_strided_slice %248 {offsets = [0, 384], sizes = [8, 128], strides = [1, 1]} : vector<8x512xf32> to vector<8x128xf32>
    %261 = math.tanh %260 : vector<8x128xf32>
    %262 = arith.mulf %258, %233 : vector<8x128xf32>
    %263 = arith.mulf %257, %261 : vector<8x128xf32>
    %264 = arith.addf %262, %263 : vector<8x128xf32>
    %265 = math.tanh %264 : vector<8x128xf32>
    %266 = arith.mulf %259, %265 : vector<8x128xf32>
    %c8_i32_122 = arith.constant 8 : i32
    %267 = arith.muli %c3_i32_112, %c8_i32_122 : i32
    %c32_i32_123 = arith.constant 32 : i32
    %268 = arith.addi %c32_i32_123, %267 : i32
    %269 = tpu.assume_multiple %268, 8 : i32
    %270 = arith.index_cast %269 : i32 to index
    %c0_124 = arith.constant 0 : index
    %271 = vector.load %arg12[%270, %c0_124] : memref<64x128xf32, #tpu.memory_space<vmem>>, vector<8x128xf32>
    tpu.vector_store %arg12[%270, %c0_124], %266 {strides = array<i32>} : memref<64x128xf32, #tpu.memory_space<vmem>>, vector<8x128xf32>,
    %c4_i32_125 = arith.constant 4 : i32
    %c0_126 = arith.constant 0 : index
    %c0_127 = arith.constant 0 : index
    %c0_128 = arith.constant 0 : index
    %272 = vector.load %arg10[%c0_126, %c0_127, %c0_128] : memref<2x8x128xf32, #tpu.memory_space<vmem>>, vector<1x8x128xf32>
    %273 = vector.shape_cast %272 : vector<1x8x128xf32> to vector<8x128xf32>
    %274 = vector.shape_cast %266 : vector<8x128xf32> to vector<1x8x128xf32>
    tpu.vector_store %arg10[%c0_126, %c0_127, %c0_128], %274 {strides = array<i32>} : memref<2x8x128xf32, #tpu.memory_space<vmem>>, vector<1x8x128xf32>,
    %c0_129 = arith.constant 0 : index
    %c0_130 = arith.constant 0 : index
    %c0_131 = arith.constant 0 : index
    %275 = vector.load %arg11[%c0_129, %c0_130, %c0_131] : memref<2x8x128xf32, #tpu.memory_space<vmem>>, vector<1x8x128xf32>
    %276 = vector.shape_cast %275 : vector<1x8x128xf32> to vector<8x128xf32>
    %277 = vector.shape_cast %264 : vector<8x128xf32> to vector<1x8x128xf32>
    tpu.vector_store %arg11[%c0_129, %c0_130, %c0_131], %277 {strides = array<i32>} : memref<2x8x128xf32, #tpu.memory_space<vmem>>, vector<1x8x128xf32>,
    %c1 = arith.constant 1 : index
    %c0_132 = arith.constant 0 : index
    %c0_133 = arith.constant 0 : index
    %278 = vector.load %arg5[%c1, %c0_132, %c0_133] : memref<2x8x128xf32, #tpu.memory_space<vmem>>, vector<1x8x128xf32>
    %279 = vector.shape_cast %278 : vector<1x8x128xf32> to vector<8x128xf32>
    %c1_134 = arith.constant 1 : index
    %c0_135 = arith.constant 0 : index
    %c0_136 = arith.constant 0 : index
    %280 = vector.load %arg6[%c1_134, %c0_135, %c0_136] : memref<2x8x128xf32, #tpu.memory_space<vmem>>, vector<1x8x128xf32>
    %281 = vector.shape_cast %280 : vector<1x8x128xf32> to vector<8x128xf32>
    %c0_137 = arith.constant 0 : index
    %c0_138 = arith.constant 0 : index
    %282 = vector.load %arg12[%c0_137, %c0_138] : memref<64x128xf32, #tpu.memory_space<vmem>>, vector<32x128xf32>
    %c1_139 = arith.constant 1 : index
    %c0_140 = arith.constant 0 : index
    %c0_141 = arith.constant 0 : index
    %283 = vector.load %arg2[%c1_139, %c0_140, %c0_141] : memref<2x128x512xf32, #tpu.memory_space<vmem>>, vector<1x128x512xf32>
    %284 = vector.shape_cast %283 : vector<1x128x512xf32> to vector<128x512xf32>
    %cst_142 = arith.constant dense<0.000000e+00> : vector<32x512xf32>
    %285 = tpu.matmul %282, %284, %cst_142 {dimension_numbers = #tpu.dot_dimension_numbers<[1], [0], [0], [1], [0, 0, 1, 1], [], []>} : vector<32x128xf32>, vector<128x512xf32>, vector<32x512xf32> -> vector<32x512xf32>
    %c1_143 = arith.constant 1 : index
    %c0_144 = arith.constant 0 : index
    %c0_145 = arith.constant 0 : index
    %286 = vector.load %arg4[%c1_143, %c0_144, %c0_145] : memref<2x1x512xf32, #tpu.memory_space<vmem>>, vector<1x1x512xf32>
    %287 = vector.shape_cast %286 : vector<1x1x512xf32> to vector<1x512xf32>
    %288 = vector.broadcast %287 : vector<1x512xf32> to vector<32x512xf32>
    %289 = arith.addf %285, %288 : vector<32x512xf32>
    %c0_146 = arith.constant 0 : index
    %c0_147 = arith.constant 0 : index
    %290 = vector.load %arg13[%c0_146, %c0_147] : memref<32x512xf32, #tpu.memory_space<vmem>>, vector<32x512xf32>
    tpu.vector_store %arg13[%c0_146, %c0_147], %289 {strides = array<i32>} : memref<32x512xf32, #tpu.memory_space<vmem>>, vector<32x512xf32>,
    %c0_i32_148 = arith.constant 0 : i32
    %c8_i32_149 = arith.constant 8 : i32
    %291 = arith.muli %c0_i32_148, %c8_i32_149 : i32
    %292 = tpu.assume_multiple %291, 8 : i32
    %293 = arith.index_cast %292 : i32 to index
    %c0_150 = arith.constant 0 : index
    %294 = vector.load %arg13[%293, %c0_150] : memref<32x512xf32, #tpu.memory_space<vmem>>, vector<8x512xf32>
    %c1_151 = arith.constant 1 : index
    %c0_152 = arith.constant 0 : index
    %c0_153 = arith.constant 0 : index
    %295 = vector.load %arg3[%c1_151, %c0_152, %c0_153] : memref<2x128x512xf32, #tpu.memory_space<vmem>>, vector<1x128x512xf32>
    %296 = vector.shape_cast %295 : vector<1x128x512xf32> to vector<128x512xf32>
    %cst_154 = arith.constant dense<0.000000e+00> : vector<8x512xf32>
    %297 = tpu.matmul %279, %296, %cst_154 {dimension_numbers = #tpu.dot_dimension_numbers<[1], [0], [0], [1], [0, 0, 1, 1], [], []>} : vector<8x128xf32>, vector<128x512xf32>, vector<8x512xf32> -> vector<8x512xf32>
    %298 = arith.addf %294, %297 : vector<8x512xf32>
    %299 = vector.extract_strided_slice %298 {offsets = [0, 0], sizes = [8, 384], strides = [1, 1]} : vector<8x512xf32> to vector<8x384xf32>
    %cst_155 = arith.constant 5.000000e-01 : f32
    %300 = vector.broadcast %cst_155 : f32 to vector<8x384xf32>
    %301 = arith.mulf %300, %299 : vector<8x384xf32>
    %302 = math.tanh %301 : vector<8x384xf32>
    %cst_156 = arith.constant 5.000000e-01 : f32
    %303 = vector.broadcast %cst_156 : f32 to vector<8x384xf32>
    %304 = arith.mulf %303, %302 : vector<8x384xf32>
    %cst_157 = arith.constant 5.000000e-01 : f32
    %305 = vector.broadcast %cst_157 : f32 to vector<8x384xf32>
    %306 = arith.addf %304, %305 : vector<8x384xf32>
    %307 = vector.extract_strided_slice %306 {offsets = [0, 0], sizes = [8, 128], strides = [1, 1]} : vector<8x384xf32> to vector<8x128xf32>
    %308 = vector.extract_strided_slice %306 {offsets = [0, 128], sizes = [8, 128], strides = [1, 1]} : vector<8x384xf32> to vector<8x128xf32>
    %309 = vector.extract_strided_slice %306 {offsets = [0, 256], sizes = [8, 128], strides = [1, 1]} : vector<8x384xf32> to vector<8x128xf32>
    %310 = vector.extract_strided_slice %298 {offsets = [0, 384], sizes = [8, 128], strides = [1, 1]} : vector<8x512xf32> to vector<8x128xf32>
    %311 = math.tanh %310 : vector<8x128xf32>
    %312 = arith.mulf %308, %281 : vector<8x128xf32>
    %313 = arith.mulf %307, %311 : vector<8x128xf32>
    %314 = arith.addf %312, %313 : vector<8x128xf32>
    %315 = math.tanh %314 : vector<8x128xf32>
    %316 = arith.mulf %309, %315 : vector<8x128xf32>
    %c8_i32_158 = arith.constant 8 : i32
    %317 = arith.muli %c0_i32_148, %c8_i32_158 : i32
    %c0_i32_159 = arith.constant 0 : i32
    %318 = arith.addi %c0_i32_159, %317 : i32
    %319 = tpu.assume_multiple %318, 8 : i32
    %320 = arith.index_cast %319 : i32 to index
    %c0_160 = arith.constant 0 : index
    %321 = vector.load %arg12[%320, %c0_160] : memref<64x128xf32, #tpu.memory_space<vmem>>, vector<8x128xf32>
    tpu.vector_store %arg12[%320, %c0_160], %316 {strides = array<i32>} : memref<64x128xf32, #tpu.memory_space<vmem>>, vector<8x128xf32>,
    %c1_i32_161 = arith.constant 1 : i32
    %c8_i32_162 = arith.constant 8 : i32
    %322 = arith.muli %c1_i32_161, %c8_i32_162 : i32
    %323 = tpu.assume_multiple %322, 8 : i32
    %324 = arith.index_cast %323 : i32 to index
    %c0_163 = arith.constant 0 : index
    %325 = vector.load %arg13[%324, %c0_163] : memref<32x512xf32, #tpu.memory_space<vmem>>, vector<8x512xf32>
    %c1_164 = arith.constant 1 : index
    %c0_165 = arith.constant 0 : index
    %c0_166 = arith.constant 0 : index
    %326 = vector.load %arg3[%c1_164, %c0_165, %c0_166] : memref<2x128x512xf32, #tpu.memory_space<vmem>>, vector<1x128x512xf32>
    %327 = vector.shape_cast %326 : vector<1x128x512xf32> to vector<128x512xf32>
    %cst_167 = arith.constant dense<0.000000e+00> : vector<8x512xf32>
    %328 = tpu.matmul %316, %327, %cst_167 {dimension_numbers = #tpu.dot_dimension_numbers<[1], [0], [0], [1], [0, 0, 1, 1], [], []>} : vector<8x128xf32>, vector<128x512xf32>, vector<8x512xf32> -> vector<8x512xf32>
    %329 = arith.addf %325, %328 : vector<8x512xf32>
    %330 = vector.extract_strided_slice %329 {offsets = [0, 0], sizes = [8, 384], strides = [1, 1]} : vector<8x512xf32> to vector<8x384xf32>
    %cst_168 = arith.constant 5.000000e-01 : f32
    %331 = vector.broadcast %cst_168 : f32 to vector<8x384xf32>
    %332 = arith.mulf %331, %330 : vector<8x384xf32>
    %333 = math.tanh %332 : vector<8x384xf32>
    %cst_169 = arith.constant 5.000000e-01 : f32
    %334 = vector.broadcast %cst_169 : f32 to vector<8x384xf32>
    %335 = arith.mulf %334, %333 : vector<8x384xf32>
    %cst_170 = arith.constant 5.000000e-01 : f32
    %336 = vector.broadcast %cst_170 : f32 to vector<8x384xf32>
    %337 = arith.addf %335, %336 : vector<8x384xf32>
    %338 = vector.extract_strided_slice %337 {offsets = [0, 0], sizes = [8, 128], strides = [1, 1]} : vector<8x384xf32> to vector<8x128xf32>
    %339 = vector.extract_strided_slice %337 {offsets = [0, 128], sizes = [8, 128], strides = [1, 1]} : vector<8x384xf32> to vector<8x128xf32>
    %340 = vector.extract_strided_slice %337 {offsets = [0, 256], sizes = [8, 128], strides = [1, 1]} : vector<8x384xf32> to vector<8x128xf32>
    %341 = vector.extract_strided_slice %329 {offsets = [0, 384], sizes = [8, 128], strides = [1, 1]} : vector<8x512xf32> to vector<8x128xf32>
    %342 = math.tanh %341 : vector<8x128xf32>
    %343 = arith.mulf %339, %314 : vector<8x128xf32>
    %344 = arith.mulf %338, %342 : vector<8x128xf32>
    %345 = arith.addf %343, %344 : vector<8x128xf32>
    %346 = math.tanh %345 : vector<8x128xf32>
    %347 = arith.mulf %340, %346 : vector<8x128xf32>
    %c8_i32_171 = arith.constant 8 : i32
    %348 = arith.muli %c1_i32_161, %c8_i32_171 : i32
    %c0_i32_172 = arith.constant 0 : i32
    %349 = arith.addi %c0_i32_172, %348 : i32
    %350 = tpu.assume_multiple %349, 8 : i32
    %351 = arith.index_cast %350 : i32 to index
    %c0_173 = arith.constant 0 : index
    %352 = vector.load %arg12[%351, %c0_173] : memref<64x128xf32, #tpu.memory_space<vmem>>, vector<8x128xf32>
    tpu.vector_store %arg12[%351, %c0_173], %347 {strides = array<i32>} : memref<64x128xf32, #tpu.memory_space<vmem>>, vector<8x128xf32>,
    %c2_i32_174 = arith.constant 2 : i32
    %c8_i32_175 = arith.constant 8 : i32
    %353 = arith.muli %c2_i32_174, %c8_i32_175 : i32
    %354 = tpu.assume_multiple %353, 8 : i32
    %355 = arith.index_cast %354 : i32 to index
    %c0_176 = arith.constant 0 : index
    %356 = vector.load %arg13[%355, %c0_176] : memref<32x512xf32, #tpu.memory_space<vmem>>, vector<8x512xf32>
    %c1_177 = arith.constant 1 : index
    %c0_178 = arith.constant 0 : index
    %c0_179 = arith.constant 0 : index
    %357 = vector.load %arg3[%c1_177, %c0_178, %c0_179] : memref<2x128x512xf32, #tpu.memory_space<vmem>>, vector<1x128x512xf32>
    %358 = vector.shape_cast %357 : vector<1x128x512xf32> to vector<128x512xf32>
    %cst_180 = arith.constant dense<0.000000e+00> : vector<8x512xf32>
    %359 = tpu.matmul %347, %358, %cst_180 {dimension_numbers = #tpu.dot_dimension_numbers<[1], [0], [0], [1], [0, 0, 1, 1], [], []>} : vector<8x128xf32>, vector<128x512xf32>, vector<8x512xf32> -> vector<8x512xf32>
    %360 = arith.addf %356, %359 : vector<8x512xf32>
    %361 = vector.extract_strided_slice %360 {offsets = [0, 0], sizes = [8, 384], strides = [1, 1]} : vector<8x512xf32> to vector<8x384xf32>
    %cst_181 = arith.constant 5.000000e-01 : f32
    %362 = vector.broadcast %cst_181 : f32 to vector<8x384xf32>
    %363 = arith.mulf %362, %361 : vector<8x384xf32>
    %364 = math.tanh %363 : vector<8x384xf32>
    %cst_182 = arith.constant 5.000000e-01 : f32
    %365 = vector.broadcast %cst_182 : f32 to vector<8x384xf32>
    %366 = arith.mulf %365, %364 : vector<8x384xf32>
    %cst_183 = arith.constant 5.000000e-01 : f32
    %367 = vector.broadcast %cst_183 : f32 to vector<8x384xf32>
    %368 = arith.addf %366, %367 : vector<8x384xf32>
    %369 = vector.extract_strided_slice %368 {offsets = [0, 0], sizes = [8, 128], strides = [1, 1]} : vector<8x384xf32> to vector<8x128xf32>
    %370 = vector.extract_strided_slice %368 {offsets = [0, 128], sizes = [8, 128], strides = [1, 1]} : vector<8x384xf32> to vector<8x128xf32>
    %371 = vector.extract_strided_slice %368 {offsets = [0, 256], sizes = [8, 128], strides = [1, 1]} : vector<8x384xf32> to vector<8x128xf32>
    %372 = vector.extract_strided_slice %360 {offsets = [0, 384], sizes = [8, 128], strides = [1, 1]} : vector<8x512xf32> to vector<8x128xf32>
    %373 = math.tanh %372 : vector<8x128xf32>
    %374 = arith.mulf %370, %345 : vector<8x128xf32>
    %375 = arith.mulf %369, %373 : vector<8x128xf32>
    %376 = arith.addf %374, %375 : vector<8x128xf32>
    %377 = math.tanh %376 : vector<8x128xf32>
    %378 = arith.mulf %371, %377 : vector<8x128xf32>
    %c8_i32_184 = arith.constant 8 : i32
    %379 = arith.muli %c2_i32_174, %c8_i32_184 : i32
    %c0_i32_185 = arith.constant 0 : i32
    %380 = arith.addi %c0_i32_185, %379 : i32
    %381 = tpu.assume_multiple %380, 8 : i32
    %382 = arith.index_cast %381 : i32 to index
    %c0_186 = arith.constant 0 : index
    %383 = vector.load %arg12[%382, %c0_186] : memref<64x128xf32, #tpu.memory_space<vmem>>, vector<8x128xf32>
    tpu.vector_store %arg12[%382, %c0_186], %378 {strides = array<i32>} : memref<64x128xf32, #tpu.memory_space<vmem>>, vector<8x128xf32>,
    %c3_i32_187 = arith.constant 3 : i32
    %c8_i32_188 = arith.constant 8 : i32
    %384 = arith.muli %c3_i32_187, %c8_i32_188 : i32
    %385 = tpu.assume_multiple %384, 8 : i32
    %386 = arith.index_cast %385 : i32 to index
    %c0_189 = arith.constant 0 : index
    %387 = vector.load %arg13[%386, %c0_189] : memref<32x512xf32, #tpu.memory_space<vmem>>, vector<8x512xf32>
    %c1_190 = arith.constant 1 : index
    %c0_191 = arith.constant 0 : index
    %c0_192 = arith.constant 0 : index
    %388 = vector.load %arg3[%c1_190, %c0_191, %c0_192] : memref<2x128x512xf32, #tpu.memory_space<vmem>>, vector<1x128x512xf32>
    %389 = vector.shape_cast %388 : vector<1x128x512xf32> to vector<128x512xf32>
    %cst_193 = arith.constant dense<0.000000e+00> : vector<8x512xf32>
    %390 = tpu.matmul %378, %389, %cst_193 {dimension_numbers = #tpu.dot_dimension_numbers<[1], [0], [0], [1], [0, 0, 1, 1], [], []>} : vector<8x128xf32>, vector<128x512xf32>, vector<8x512xf32> -> vector<8x512xf32>
    %391 = arith.addf %387, %390 : vector<8x512xf32>
    %392 = vector.extract_strided_slice %391 {offsets = [0, 0], sizes = [8, 384], strides = [1, 1]} : vector<8x512xf32> to vector<8x384xf32>
    %cst_194 = arith.constant 5.000000e-01 : f32
    %393 = vector.broadcast %cst_194 : f32 to vector<8x384xf32>
    %394 = arith.mulf %393, %392 : vector<8x384xf32>
    %395 = math.tanh %394 : vector<8x384xf32>
    %cst_195 = arith.constant 5.000000e-01 : f32
    %396 = vector.broadcast %cst_195 : f32 to vector<8x384xf32>
    %397 = arith.mulf %396, %395 : vector<8x384xf32>
    %cst_196 = arith.constant 5.000000e-01 : f32
    %398 = vector.broadcast %cst_196 : f32 to vector<8x384xf32>
    %399 = arith.addf %397, %398 : vector<8x384xf32>
    %400 = vector.extract_strided_slice %399 {offsets = [0, 0], sizes = [8, 128], strides = [1, 1]} : vector<8x384xf32> to vector<8x128xf32>
    %401 = vector.extract_strided_slice %399 {offsets = [0, 128], sizes = [8, 128], strides = [1, 1]} : vector<8x384xf32> to vector<8x128xf32>
    %402 = vector.extract_strided_slice %399 {offsets = [0, 256], sizes = [8, 128], strides = [1, 1]} : vector<8x384xf32> to vector<8x128xf32>
    %403 = vector.extract_strided_slice %391 {offsets = [0, 384], sizes = [8, 128], strides = [1, 1]} : vector<8x512xf32> to vector<8x128xf32>
    %404 = math.tanh %403 : vector<8x128xf32>
    %405 = arith.mulf %401, %376 : vector<8x128xf32>
    %406 = arith.mulf %400, %404 : vector<8x128xf32>
    %407 = arith.addf %405, %406 : vector<8x128xf32>
    %408 = math.tanh %407 : vector<8x128xf32>
    %409 = arith.mulf %402, %408 : vector<8x128xf32>
    %c8_i32_197 = arith.constant 8 : i32
    %410 = arith.muli %c3_i32_187, %c8_i32_197 : i32
    %c0_i32_198 = arith.constant 0 : i32
    %411 = arith.addi %c0_i32_198, %410 : i32
    %412 = tpu.assume_multiple %411, 8 : i32
    %413 = arith.index_cast %412 : i32 to index
    %c0_199 = arith.constant 0 : index
    %414 = vector.load %arg12[%413, %c0_199] : memref<64x128xf32, #tpu.memory_space<vmem>>, vector<8x128xf32>
    tpu.vector_store %arg12[%413, %c0_199], %409 {strides = array<i32>} : memref<64x128xf32, #tpu.memory_space<vmem>>, vector<8x128xf32>,
    %c4_i32_200 = arith.constant 4 : i32
    %c32 = arith.constant 32 : index
    %c0_201 = arith.constant 0 : index
    %415 = vector.load %arg12[%c32, %c0_201] : memref<64x128xf32, #tpu.memory_space<vmem>>, vector<32x128xf32>
    %c1_202 = arith.constant 1 : index
    %c0_203 = arith.constant 0 : index
    %c0_204 = arith.constant 0 : index
    %416 = vector.load %arg2[%c1_202, %c0_203, %c0_204] : memref<2x128x512xf32, #tpu.memory_space<vmem>>, vector<1x128x512xf32>
    %417 = vector.shape_cast %416 : vector<1x128x512xf32> to vector<128x512xf32>
    %cst_205 = arith.constant dense<0.000000e+00> : vector<32x512xf32>
    %418 = tpu.matmul %415, %417, %cst_205 {dimension_numbers = #tpu.dot_dimension_numbers<[1], [0], [0], [1], [0, 0, 1, 1], [], []>} : vector<32x128xf32>, vector<128x512xf32>, vector<32x512xf32> -> vector<32x512xf32>
    %c1_206 = arith.constant 1 : index
    %c0_207 = arith.constant 0 : index
    %c0_208 = arith.constant 0 : index
    %419 = vector.load %arg4[%c1_206, %c0_207, %c0_208] : memref<2x1x512xf32, #tpu.memory_space<vmem>>, vector<1x1x512xf32>
    %420 = vector.shape_cast %419 : vector<1x1x512xf32> to vector<1x512xf32>
    %421 = vector.broadcast %420 : vector<1x512xf32> to vector<32x512xf32>
    %422 = arith.addf %418, %421 : vector<32x512xf32>
    %c0_209 = arith.constant 0 : index
    %c0_210 = arith.constant 0 : index
    %423 = vector.load %arg13[%c0_209, %c0_210] : memref<32x512xf32, #tpu.memory_space<vmem>>, vector<32x512xf32>
    tpu.vector_store %arg13[%c0_209, %c0_210], %422 {strides = array<i32>} : memref<32x512xf32, #tpu.memory_space<vmem>>, vector<32x512xf32>,
    %c0_i32_211 = arith.constant 0 : i32
    %c8_i32_212 = arith.constant 8 : i32
    %424 = arith.muli %c0_i32_211, %c8_i32_212 : i32
    %425 = tpu.assume_multiple %424, 8 : i32
    %426 = arith.index_cast %425 : i32 to index
    %c0_213 = arith.constant 0 : index
    %427 = vector.load %arg13[%426, %c0_213] : memref<32x512xf32, #tpu.memory_space<vmem>>, vector<8x512xf32>
    %c1_214 = arith.constant 1 : index
    %c0_215 = arith.constant 0 : index
    %c0_216 = arith.constant 0 : index
    %428 = vector.load %arg3[%c1_214, %c0_215, %c0_216] : memref<2x128x512xf32, #tpu.memory_space<vmem>>, vector<1x128x512xf32>
    %429 = vector.shape_cast %428 : vector<1x128x512xf32> to vector<128x512xf32>
    %cst_217 = arith.constant dense<0.000000e+00> : vector<8x512xf32>
    %430 = tpu.matmul %409, %429, %cst_217 {dimension_numbers = #tpu.dot_dimension_numbers<[1], [0], [0], [1], [0, 0, 1, 1], [], []>} : vector<8x128xf32>, vector<128x512xf32>, vector<8x512xf32> -> vector<8x512xf32>
    %431 = arith.addf %427, %430 : vector<8x512xf32>
    %432 = vector.extract_strided_slice %431 {offsets = [0, 0], sizes = [8, 384], strides = [1, 1]} : vector<8x512xf32> to vector<8x384xf32>
    %cst_218 = arith.constant 5.000000e-01 : f32
    %433 = vector.broadcast %cst_218 : f32 to vector<8x384xf32>
    %434 = arith.mulf %433, %432 : vector<8x384xf32>
    %435 = math.tanh %434 : vector<8x384xf32>
    %cst_219 = arith.constant 5.000000e-01 : f32
    %436 = vector.broadcast %cst_219 : f32 to vector<8x384xf32>
    %437 = arith.mulf %436, %435 : vector<8x384xf32>
    %cst_220 = arith.constant 5.000000e-01 : f32
    %438 = vector.broadcast %cst_220 : f32 to vector<8x384xf32>
    %439 = arith.addf %437, %438 : vector<8x384xf32>
    %440 = vector.extract_strided_slice %439 {offsets = [0, 0], sizes = [8, 128], strides = [1, 1]} : vector<8x384xf32> to vector<8x128xf32>
    %441 = vector.extract_strided_slice %439 {offsets = [0, 128], sizes = [8, 128], strides = [1, 1]} : vector<8x384xf32> to vector<8x128xf32>
    %442 = vector.extract_strided_slice %439 {offsets = [0, 256], sizes = [8, 128], strides = [1, 1]} : vector<8x384xf32> to vector<8x128xf32>
    %443 = vector.extract_strided_slice %431 {offsets = [0, 384], sizes = [8, 128], strides = [1, 1]} : vector<8x512xf32> to vector<8x128xf32>
    %444 = math.tanh %443 : vector<8x128xf32>
    %445 = arith.mulf %441, %407 : vector<8x128xf32>
    %446 = arith.mulf %440, %444 : vector<8x128xf32>
    %447 = arith.addf %445, %446 : vector<8x128xf32>
    %448 = math.tanh %447 : vector<8x128xf32>
    %449 = arith.mulf %442, %448 : vector<8x128xf32>
    %c8_i32_221 = arith.constant 8 : i32
    %450 = arith.muli %c0_i32_211, %c8_i32_221 : i32
    %c32_i32_222 = arith.constant 32 : i32
    %451 = arith.addi %c32_i32_222, %450 : i32
    %452 = tpu.assume_multiple %451, 8 : i32
    %453 = arith.index_cast %452 : i32 to index
    %c0_223 = arith.constant 0 : index
    %454 = vector.load %arg12[%453, %c0_223] : memref<64x128xf32, #tpu.memory_space<vmem>>, vector<8x128xf32>
    tpu.vector_store %arg12[%453, %c0_223], %449 {strides = array<i32>} : memref<64x128xf32, #tpu.memory_space<vmem>>, vector<8x128xf32>,
    %c1_i32_224 = arith.constant 1 : i32
    %c8_i32_225 = arith.constant 8 : i32
    %455 = arith.muli %c1_i32_224, %c8_i32_225 : i32
    %456 = tpu.assume_multiple %455, 8 : i32
    %457 = arith.index_cast %456 : i32 to index
    %c0_226 = arith.constant 0 : index
    %458 = vector.load %arg13[%457, %c0_226] : memref<32x512xf32, #tpu.memory_space<vmem>>, vector<8x512xf32>
    %c1_227 = arith.constant 1 : index
    %c0_228 = arith.constant 0 : index
    %c0_229 = arith.constant 0 : index
    %459 = vector.load %arg3[%c1_227, %c0_228, %c0_229] : memref<2x128x512xf32, #tpu.memory_space<vmem>>, vector<1x128x512xf32>
    %460 = vector.shape_cast %459 : vector<1x128x512xf32> to vector<128x512xf32>
    %cst_230 = arith.constant dense<0.000000e+00> : vector<8x512xf32>
    %461 = tpu.matmul %449, %460, %cst_230 {dimension_numbers = #tpu.dot_dimension_numbers<[1], [0], [0], [1], [0, 0, 1, 1], [], []>} : vector<8x128xf32>, vector<128x512xf32>, vector<8x512xf32> -> vector<8x512xf32>
    %462 = arith.addf %458, %461 : vector<8x512xf32>
    %463 = vector.extract_strided_slice %462 {offsets = [0, 0], sizes = [8, 384], strides = [1, 1]} : vector<8x512xf32> to vector<8x384xf32>
    %cst_231 = arith.constant 5.000000e-01 : f32
    %464 = vector.broadcast %cst_231 : f32 to vector<8x384xf32>
    %465 = arith.mulf %464, %463 : vector<8x384xf32>
    %466 = math.tanh %465 : vector<8x384xf32>
    %cst_232 = arith.constant 5.000000e-01 : f32
    %467 = vector.broadcast %cst_232 : f32 to vector<8x384xf32>
    %468 = arith.mulf %467, %466 : vector<8x384xf32>
    %cst_233 = arith.constant 5.000000e-01 : f32
    %469 = vector.broadcast %cst_233 : f32 to vector<8x384xf32>
    %470 = arith.addf %468, %469 : vector<8x384xf32>
    %471 = vector.extract_strided_slice %470 {offsets = [0, 0], sizes = [8, 128], strides = [1, 1]} : vector<8x384xf32> to vector<8x128xf32>
    %472 = vector.extract_strided_slice %470 {offsets = [0, 128], sizes = [8, 128], strides = [1, 1]} : vector<8x384xf32> to vector<8x128xf32>
    %473 = vector.extract_strided_slice %470 {offsets = [0, 256], sizes = [8, 128], strides = [1, 1]} : vector<8x384xf32> to vector<8x128xf32>
    %474 = vector.extract_strided_slice %462 {offsets = [0, 384], sizes = [8, 128], strides = [1, 1]} : vector<8x512xf32> to vector<8x128xf32>
    %475 = math.tanh %474 : vector<8x128xf32>
    %476 = arith.mulf %472, %447 : vector<8x128xf32>
    %477 = arith.mulf %471, %475 : vector<8x128xf32>
    %478 = arith.addf %476, %477 : vector<8x128xf32>
    %479 = math.tanh %478 : vector<8x128xf32>
    %480 = arith.mulf %473, %479 : vector<8x128xf32>
    %c8_i32_234 = arith.constant 8 : i32
    %481 = arith.muli %c1_i32_224, %c8_i32_234 : i32
    %c32_i32_235 = arith.constant 32 : i32
    %482 = arith.addi %c32_i32_235, %481 : i32
    %483 = tpu.assume_multiple %482, 8 : i32
    %484 = arith.index_cast %483 : i32 to index
    %c0_236 = arith.constant 0 : index
    %485 = vector.load %arg12[%484, %c0_236] : memref<64x128xf32, #tpu.memory_space<vmem>>, vector<8x128xf32>
    tpu.vector_store %arg12[%484, %c0_236], %480 {strides = array<i32>} : memref<64x128xf32, #tpu.memory_space<vmem>>, vector<8x128xf32>,
    %c2_i32_237 = arith.constant 2 : i32
    %c8_i32_238 = arith.constant 8 : i32
    %486 = arith.muli %c2_i32_237, %c8_i32_238 : i32
    %487 = tpu.assume_multiple %486, 8 : i32
    %488 = arith.index_cast %487 : i32 to index
    %c0_239 = arith.constant 0 : index
    %489 = vector.load %arg13[%488, %c0_239] : memref<32x512xf32, #tpu.memory_space<vmem>>, vector<8x512xf32>
    %c1_240 = arith.constant 1 : index
    %c0_241 = arith.constant 0 : index
    %c0_242 = arith.constant 0 : index
    %490 = vector.load %arg3[%c1_240, %c0_241, %c0_242] : memref<2x128x512xf32, #tpu.memory_space<vmem>>, vector<1x128x512xf32>
    %491 = vector.shape_cast %490 : vector<1x128x512xf32> to vector<128x512xf32>
    %cst_243 = arith.constant dense<0.000000e+00> : vector<8x512xf32>
    %492 = tpu.matmul %480, %491, %cst_243 {dimension_numbers = #tpu.dot_dimension_numbers<[1], [0], [0], [1], [0, 0, 1, 1], [], []>} : vector<8x128xf32>, vector<128x512xf32>, vector<8x512xf32> -> vector<8x512xf32>
    %493 = arith.addf %489, %492 : vector<8x512xf32>
    %494 = vector.extract_strided_slice %493 {offsets = [0, 0], sizes = [8, 384], strides = [1, 1]} : vector<8x512xf32> to vector<8x384xf32>
    %cst_244 = arith.constant 5.000000e-01 : f32
    %495 = vector.broadcast %cst_244 : f32 to vector<8x384xf32>
    %496 = arith.mulf %495, %494 : vector<8x384xf32>
    %497 = math.tanh %496 : vector<8x384xf32>
    %cst_245 = arith.constant 5.000000e-01 : f32
    %498 = vector.broadcast %cst_245 : f32 to vector<8x384xf32>
    %499 = arith.mulf %498, %497 : vector<8x384xf32>
    %cst_246 = arith.constant 5.000000e-01 : f32
    %500 = vector.broadcast %cst_246 : f32 to vector<8x384xf32>
    %501 = arith.addf %499, %500 : vector<8x384xf32>
    %502 = vector.extract_strided_slice %501 {offsets = [0, 0], sizes = [8, 128], strides = [1, 1]} : vector<8x384xf32> to vector<8x128xf32>
    %503 = vector.extract_strided_slice %501 {offsets = [0, 128], sizes = [8, 128], strides = [1, 1]} : vector<8x384xf32> to vector<8x128xf32>
    %504 = vector.extract_strided_slice %501 {offsets = [0, 256], sizes = [8, 128], strides = [1, 1]} : vector<8x384xf32> to vector<8x128xf32>
    %505 = vector.extract_strided_slice %493 {offsets = [0, 384], sizes = [8, 128], strides = [1, 1]} : vector<8x512xf32> to vector<8x128xf32>
    %506 = math.tanh %505 : vector<8x128xf32>
    %507 = arith.mulf %503, %478 : vector<8x128xf32>
    %508 = arith.mulf %502, %506 : vector<8x128xf32>
    %509 = arith.addf %507, %508 : vector<8x128xf32>
    %510 = math.tanh %509 : vector<8x128xf32>
    %511 = arith.mulf %504, %510 : vector<8x128xf32>
    %c8_i32_247 = arith.constant 8 : i32
    %512 = arith.muli %c2_i32_237, %c8_i32_247 : i32
    %c32_i32_248 = arith.constant 32 : i32
    %513 = arith.addi %c32_i32_248, %512 : i32
    %514 = tpu.assume_multiple %513, 8 : i32
    %515 = arith.index_cast %514 : i32 to index
    %c0_249 = arith.constant 0 : index
    %516 = vector.load %arg12[%515, %c0_249] : memref<64x128xf32, #tpu.memory_space<vmem>>, vector<8x128xf32>
    tpu.vector_store %arg12[%515, %c0_249], %511 {strides = array<i32>} : memref<64x128xf32, #tpu.memory_space<vmem>>, vector<8x128xf32>,
    %c3_i32_250 = arith.constant 3 : i32
    %c8_i32_251 = arith.constant 8 : i32
    %517 = arith.muli %c3_i32_250, %c8_i32_251 : i32
    %518 = tpu.assume_multiple %517, 8 : i32
    %519 = arith.index_cast %518 : i32 to index
    %c0_252 = arith.constant 0 : index
    %520 = vector.load %arg13[%519, %c0_252] : memref<32x512xf32, #tpu.memory_space<vmem>>, vector<8x512xf32>
    %c1_253 = arith.constant 1 : index
    %c0_254 = arith.constant 0 : index
    %c0_255 = arith.constant 0 : index
    %521 = vector.load %arg3[%c1_253, %c0_254, %c0_255] : memref<2x128x512xf32, #tpu.memory_space<vmem>>, vector<1x128x512xf32>
    %522 = vector.shape_cast %521 : vector<1x128x512xf32> to vector<128x512xf32>
    %cst_256 = arith.constant dense<0.000000e+00> : vector<8x512xf32>
    %523 = tpu.matmul %511, %522, %cst_256 {dimension_numbers = #tpu.dot_dimension_numbers<[1], [0], [0], [1], [0, 0, 1, 1], [], []>} : vector<8x128xf32>, vector<128x512xf32>, vector<8x512xf32> -> vector<8x512xf32>
    %524 = arith.addf %520, %523 : vector<8x512xf32>
    %525 = vector.extract_strided_slice %524 {offsets = [0, 0], sizes = [8, 384], strides = [1, 1]} : vector<8x512xf32> to vector<8x384xf32>
    %cst_257 = arith.constant 5.000000e-01 : f32
    %526 = vector.broadcast %cst_257 : f32 to vector<8x384xf32>
    %527 = arith.mulf %526, %525 : vector<8x384xf32>
    %528 = math.tanh %527 : vector<8x384xf32>
    %cst_258 = arith.constant 5.000000e-01 : f32
    %529 = vector.broadcast %cst_258 : f32 to vector<8x384xf32>
    %530 = arith.mulf %529, %528 : vector<8x384xf32>
    %cst_259 = arith.constant 5.000000e-01 : f32
    %531 = vector.broadcast %cst_259 : f32 to vector<8x384xf32>
    %532 = arith.addf %530, %531 : vector<8x384xf32>
    %533 = vector.extract_strided_slice %532 {offsets = [0, 0], sizes = [8, 128], strides = [1, 1]} : vector<8x384xf32> to vector<8x128xf32>
    %534 = vector.extract_strided_slice %532 {offsets = [0, 128], sizes = [8, 128], strides = [1, 1]} : vector<8x384xf32> to vector<8x128xf32>
    %535 = vector.extract_strided_slice %532 {offsets = [0, 256], sizes = [8, 128], strides = [1, 1]} : vector<8x384xf32> to vector<8x128xf32>
    %536 = vector.extract_strided_slice %524 {offsets = [0, 384], sizes = [8, 128], strides = [1, 1]} : vector<8x512xf32> to vector<8x128xf32>
    %537 = math.tanh %536 : vector<8x128xf32>
    %538 = arith.mulf %534, %509 : vector<8x128xf32>
    %539 = arith.mulf %533, %537 : vector<8x128xf32>
    %540 = arith.addf %538, %539 : vector<8x128xf32>
    %541 = math.tanh %540 : vector<8x128xf32>
    %542 = arith.mulf %535, %541 : vector<8x128xf32>
    %c8_i32_260 = arith.constant 8 : i32
    %543 = arith.muli %c3_i32_250, %c8_i32_260 : i32
    %c32_i32_261 = arith.constant 32 : i32
    %544 = arith.addi %c32_i32_261, %543 : i32
    %545 = tpu.assume_multiple %544, 8 : i32
    %546 = arith.index_cast %545 : i32 to index
    %c0_262 = arith.constant 0 : index
    %547 = vector.load %arg12[%546, %c0_262] : memref<64x128xf32, #tpu.memory_space<vmem>>, vector<8x128xf32>
    tpu.vector_store %arg12[%546, %c0_262], %542 {strides = array<i32>} : memref<64x128xf32, #tpu.memory_space<vmem>>, vector<8x128xf32>,
    %c4_i32_263 = arith.constant 4 : i32
    %c1_264 = arith.constant 1 : index
    %c0_265 = arith.constant 0 : index
    %c0_266 = arith.constant 0 : index
    %548 = vector.load %arg10[%c1_264, %c0_265, %c0_266] : memref<2x8x128xf32, #tpu.memory_space<vmem>>, vector<1x8x128xf32>
    %549 = vector.shape_cast %548 : vector<1x8x128xf32> to vector<8x128xf32>
    %550 = vector.shape_cast %542 : vector<8x128xf32> to vector<1x8x128xf32>
    tpu.vector_store %arg10[%c1_264, %c0_265, %c0_266], %550 {strides = array<i32>} : memref<2x8x128xf32, #tpu.memory_space<vmem>>, vector<1x8x128xf32>,
    %c1_267 = arith.constant 1 : index
    %c0_268 = arith.constant 0 : index
    %c0_269 = arith.constant 0 : index
    %551 = vector.load %arg11[%c1_267, %c0_268, %c0_269] : memref<2x8x128xf32, #tpu.memory_space<vmem>>, vector<1x8x128xf32>
    %552 = vector.shape_cast %551 : vector<1x8x128xf32> to vector<8x128xf32>
    %553 = vector.shape_cast %540 : vector<8x128xf32> to vector<1x8x128xf32>
    tpu.vector_store %arg11[%c1_267, %c0_268, %c0_269], %553 {strides = array<i32>} : memref<2x8x128xf32, #tpu.memory_space<vmem>>, vector<1x8x128xf32>,
    %c0_270 = arith.constant 0 : index
    %c0_271 = arith.constant 0 : index
    %554 = vector.load %arg12[%c0_270, %c0_271] : memref<64x128xf32, #tpu.memory_space<vmem>>, vector<64x128xf32>
    %c0_272 = arith.constant 0 : index
    %c0_273 = arith.constant 0 : index
    %555 = vector.load %arg7[%c0_272, %c0_273] : memref<128x128xf32, #tpu.memory_space<vmem>>, vector<128x128xf32>
    %cst_274 = arith.constant dense<0.000000e+00> : vector<64x128xf32>
    %556 = tpu.matmul %554, %555, %cst_274 {dimension_numbers = #tpu.dot_dimension_numbers<[1], [0], [0], [1], [0, 0, 1, 1], [], []>} : vector<64x128xf32>, vector<128x128xf32>, vector<64x128xf32> -> vector<64x128xf32>
    %c0_275 = arith.constant 0 : index
    %c0_276 = arith.constant 0 : index
    %557 = vector.load %arg8[%c0_275, %c0_276] : memref<1x128xf32, #tpu.memory_space<vmem>>, vector<1x128xf32>
    %558 = vector.broadcast %557 : vector<1x128xf32> to vector<64x128xf32>
    %559 = arith.addf %556, %558 : vector<64x128xf32>
    %560 = vector.shape_cast %559 : vector<64x128xf32> to vector<8x8x128xf32>
    %c0_277 = arith.constant 0 : index
    %c0_278 = arith.constant 0 : index
    %c0_279 = arith.constant 0 : index
    %561 = vector.load %arg9[%c0_277, %c0_278, %c0_279] : memref<8x8x128xf32, #tpu.memory_space<vmem>>, vector<8x8x128xf32>
    tpu.vector_store %arg9[%c0_277, %c0_278, %c0_279], %560 {strides = array<i32>} : memref<8x8x128xf32, #tpu.memory_space<vmem>>, vector<8x8x128xf32>,
    return
  }
  func.func @transform_0(%arg0: i32) -> (i32, i32, i32) {
    %c0_i32 = arith.constant 0 : i32
    %c0_i32_0 = arith.constant 0 : i32
    %c0_i32_1 = arith.constant 0 : i32
    return %c0_i32, %arg0, %c0_i32_0 : i32, i32, i32
  }
  func.func @transform_1(%arg0: i32) -> (i32, i32, i32) {
    %c0_i32 = arith.constant 0 : i32
    %c0_i32_0 = arith.constant 0 : i32
    %c0_i32_1 = arith.constant 0 : i32
    %c0_i32_2 = arith.constant 0 : i32
    return %c0_i32, %c0_i32_0, %c0_i32_1 : i32, i32, i32
  }
  func.func @transform_2(%arg0: i32) -> (i32, i32, i32) {
    %c0_i32 = arith.constant 0 : i32
    %c0_i32_0 = arith.constant 0 : i32
    %c0_i32_1 = arith.constant 0 : i32
    %c0_i32_2 = arith.constant 0 : i32
    return %c0_i32, %c0_i32_0, %c0_i32_1 : i32, i32, i32
  }
  func.func @transform_3(%arg0: i32) -> (i32, i32, i32) {
    %c0_i32 = arith.constant 0 : i32
    %c0_i32_0 = arith.constant 0 : i32
    %c0_i32_1 = arith.constant 0 : i32
    %c0_i32_2 = arith.constant 0 : i32
    return %c0_i32, %c0_i32_0, %c0_i32_1 : i32, i32, i32
  }
  func.func @transform_4(%arg0: i32) -> (i32, i32, i32) {
    %c0_i32 = arith.constant 0 : i32
    %c0_i32_0 = arith.constant 0 : i32
    %c0_i32_1 = arith.constant 0 : i32
    return %c0_i32, %arg0, %c0_i32_0 : i32, i32, i32
  }
  func.func @transform_5(%arg0: i32) -> (i32, i32, i32) {
    %c0_i32 = arith.constant 0 : i32
    %c0_i32_0 = arith.constant 0 : i32
    %c0_i32_1 = arith.constant 0 : i32
    return %c0_i32, %arg0, %c0_i32_0 : i32, i32, i32
  }
  func.func @transform_6(%arg0: i32) -> (i32, i32) {
    %c0_i32 = arith.constant 0 : i32
    %c0_i32_0 = arith.constant 0 : i32
    %c0_i32_1 = arith.constant 0 : i32
    return %c0_i32, %c0_i32_0 : i32, i32
  }
  func.func @transform_7(%arg0: i32) -> (i32, i32) {
    %c0_i32 = arith.constant 0 : i32
    %c0_i32_0 = arith.constant 0 : i32
    %c0_i32_1 = arith.constant 0 : i32
    return %c0_i32, %c0_i32_0 : i32, i32
  }
  func.func @transform_8(%arg0: i32) -> (i32, i32, i32) {
    %c0_i32 = arith.constant 0 : i32
    %c0_i32_0 = arith.constant 0 : i32
    %c0_i32_1 = arith.constant 0 : i32
    return %c0_i32, %arg0, %c0_i32_0 : i32, i32, i32
  }
  func.func @transform_9(%arg0: i32) -> (i32, i32, i32) {
    %c0_i32 = arith.constant 0 : i32
    %c0_i32_0 = arith.constant 0 : i32
    %c0_i32_1 = arith.constant 0 : i32
    return %c0_i32, %arg0, %c0_i32_0 : i32, i32, i32
  }
  func.func @transform_10(%arg0: i32) -> (i32, i32, i32) {
    %c0_i32 = arith.constant 0 : i32
    %c0_i32_0 = arith.constant 0 : i32
    %c0_i32_1 = arith.constant 0 : i32
    return %c0_i32, %arg0, %c0_i32_0 : i32, i32, i32
  }
}

</mosaic_0001>

<llo_original>
// kernel: _forward_impl.1
$region0: #{_forward_impl.1}
  #allocation0 [shape = 'u32[]', space=smem, size = 0x4, offset = 0x4, fixed_abs, tag = 'smem constant byte address 0x4 - core index']
  #allocation1 [shape = 'u32[144,128]{1,0:T(1,128)}', space=vmem, size = 0x12000, scoped, tag = 'internal scratch']
  #allocation2 [shape = 'f32[64,128]{1,0:T(8,128)}', space=vmem, size = 0x8000, scoped, tag = 'scratch operand']
  #allocation3 [shape = 'f32[32,512]{1,0:T(8,128)}', space=vmem, size = 0x10000, scoped, tag = 'scratch operand']
  %s0 = inlined_call_operand.vmem [shape: f32[8,8,128], index: 0, kind: input, shape index: {}]
  %s1 = inlined_call_operand.hbm [shape: f32[2,128,512], index: 1, kind: input, shape index: {}]
  %s2 = inlined_call_operand.hbm [shape: f32[2,128,512], index: 2, kind: input, shape index: {}]
  %s3 = inlined_call_operand.vmem [shape: f32[2,1,512], index: 3, kind: input, shape index: {}]
  %s4 = inlined_call_operand.vmem [shape: f32[2,8,128], index: 4, kind: input, shape index: {}]
  %s5 = inlined_call_operand.vmem [shape: f32[2,8,128], index: 5, kind: input, shape index: {}]
  %s6 = inlined_call_operand.vmem [shape: f32[128,128], index: 6, kind: input, shape index: {}]
  %s7 = inlined_call_operand.vmem [shape: f32[1,128], index: 7, kind: input, shape index: {}]
  %s8 = inlined_call_operand.vmem [shape: f32[8,8,128], index: 8, kind: output, shape index: {0}]
  %s9 = inlined_call_operand.vmem [shape: f32[2,8,128], index: 9, kind: output, shape index: {1}]
  %s10 = inlined_call_operand.vmem [shape: f32[2,8,128], index: 10, kind: output, shape index: {2}]
  %11 = xla_tuple %s8, %s9, %s10
  %s12 = sld [smem:[#allocation0]]
  $region66: #{_forward_impl.1} parent=0
    _
  %s14 = ssub.s32 1, %s12
  %s15 = scalar_select 0, %s14, %s12
  $region1: #{_forward_impl.1} parent=0
    #allocation4 [shape = 'u8[524288]{0}', space=vmem, size = 0x80000, scoped, tag = 'input window, operand 1, single buffered']
    #allocation5 [shape = 's32[1]{0}', space=sflag, size = 0x4, scoped, tag = 'scoped memory for _forward_impl.1']
    #allocation6 [shape = 'u8[524288]{0}', space=vmem, size = 0x80000, scoped, tag = 'input window, operand 2, single buffered']
    #allocation7 [shape = 's32[1]{0}', space=sflag, size = 0x4, scoped, tag = 'scoped memory for _forward_impl.1']
    %16 = vsyncpa [#allocation5], 0
    %17 = vsyncpa [#allocation7], 0
    // Predicated region
    $region2: #{_forward_impl.1} parent=1 // pred_check
      _
    $region3: #{_forward_impl.1} parent=1 // pred_check_branch
      %19 = sbr.rel (0) target = $region5
    $region4: #{_forward_impl.1} parent=1 // pred_region
      _
    $region5: #{_forward_impl.1} parent=1 // pred_fallthru
      _
    // Predicated region
    $region6: #{_forward_impl.1} parent=1 // pred_check
      _
    $region7: #{_forward_impl.1} parent=1 // pred_check_branch
      %21 = sbr.rel (0) target = $region9
    $region8: #{_forward_impl.1} parent=1 // pred_region
      %s23 = ssub.s32 16384, 16384
      %24 = vsyncadd [#allocation5], %s23
      %s25 = sshll.u32 [#allocation4], 4
      %s26 = int_to_ptr.vmem [resolvable:$true] %s25
      %31 = dma.hbm_to_vmem [thread:$0]  %s1, 16384, %s26, [#allocation5], 512, 512, 32
    $region9: #{_forward_impl.1} parent=1 // pred_fallthru
      _
    // Predicated region
    $region10: #{_forward_impl.1} parent=1 // pred_check
      _
    $region11: #{_forward_impl.1} parent=1 // pred_check_branch
      %33 = sbr.rel (0) target = $region13
    $region12: #{_forward_impl.1} parent=1 // pred_region
      %s35 = ssub.s32 16384, 16384
      %36 = vsyncadd [#allocation7], %s35
      %s37 = sshll.u32 [#allocation6], 4
      %s38 = int_to_ptr.vmem [resolvable:$true] %s37
      %43 = dma.hbm_to_vmem [thread:$0]  %s2, 16384, %s38, [#allocation7], 512, 512, 32
    $region13: #{_forward_impl.1} parent=1 // pred_fallthru
      _
    // Predicated region
    $region14: #{_forward_impl.1} parent=1 // pred_check
      _
    $region15: #{_forward_impl.1} parent=1 // pred_check_branch
      %45 = sbr.rel (0) target = $region17
    $region16: #{_forward_impl.1} parent=1 // pred_region
      _
    $region17: #{_forward_impl.1} parent=1 // pred_fallthru
      _
    // Predicated region
    $region18: #{_forward_impl.1} parent=1 // pred_check
      _
    $region19: #{_forward_impl.1} parent=1 // pred_check_branch
      %47 = sbr.rel (0) target = $region21
    $region20: #{_forward_impl.1} parent=1 // pred_region
      _
    $region21: #{_forward_impl.1} parent=1 // pred_fallthru
      _
    // Predicated region
    $region22: #{_forward_impl.1} parent=1 // pred_check
      _
    $region23: #{_forward_impl.1} parent=1 // pred_check_branch
      %49 = sbr.rel (0) target = $region25
    $region24: #{_forward_impl.1} parent=1 // pred_region
      _
    $region25: #{_forward_impl.1} parent=1 // pred_fallthru
      _
    // Predicated region
    $region26: #{_forward_impl.1} parent=1 // pred_check
      _
    $region27: #{_forward_impl.1} parent=1 // pred_check_branch
      %51 = sbr.rel (0) target = $region29
    $region28: #{_forward_impl.1} parent=1 // pred_region
      _
    $region29: #{_forward_impl.1} parent=1 // pred_fallthru
      _
    // Predicated region
    $region30: #{_forward_impl.1} parent=1 // pred_check
      _
    $region31: #{_forward_impl.1} parent=1 // pred_check_branch
      %53 = sbr.rel (0) target = $region33
    $region32: #{_forward_impl.1} parent=1 // pred_region
      _
    $region33: #{_forward_impl.1} parent=1 // pred_fallthru
      _
    // Predicated region
    $region34: #{_forward_impl.1} parent=1 // pred_check
      _
    $region35: #{_forward_impl.1} parent=1 // pred_check_branch
      %55 = sbr.rel (0) target = $region37
    $region36: #{_forward_impl.1} parent=1 // pred_region
      %56 = dma.done [#allocation5], 16384
    $region37: #{_forward_impl.1} parent=1 // pred_fallthru
      _
    // Predicated region
    $region38: #{_forward_impl.1} parent=1 // pred_check
      _
    $region39: #{_forward_impl.1} parent=1 // pred_check_branch
      %58 = sbr.rel (0) target = $region41
    $region40: #{_forward_impl.1} parent=1 // pred_region
      %59 = dma.done [#allocation7], 16384
    $region41: #{_forward_impl.1} parent=1 // pred_fallthru
      _
    %v60 = vld [vmem:[%s4] sm:$0xff]
    %v61 = vld [vmem:[%s5] sm:$0xff]
    %v62 = vld [vmem:[%s0] sm:$0xff]
    %v63 = vld [vmem:[%s0 + $0x8] sm:$0xff]
    %v64 = vld [vmem:[%s0 + $0x10] sm:$0xff]
    %v65 = vld [vmem:[%s0 + $0x18] sm:$0xff]
    %v66 = vld [vmem:[#allocation4] sm:$0xff]
    %v67 = vld [vmem:[#allocation4 + $0x8] sm:$0xff]
    %v68 = vld [vmem:[#allocation4 + $0x10] sm:$0xff]
    %v69 = vld [vmem:[#allocation4 + $0x18] sm:$0xff]
    %v70 = vld [vmem:[#allocation4 + $0x20] sm:$0xff]
    %v71 = vld [vmem:[#allocation4 + $0x28] sm:$0xff]
    %v72 = vld [vmem:[#allocation4 + $0x30] sm:$0xff]
    %v73 = vld [vmem:[#allocation4 + $0x38] sm:$0xff]
    %v74 = vld [vmem:[#allocation4 + $0x40] sm:$0xff]
    %v75 = vld [vmem:[#allocation4 + $0x48] sm:$0xff]
    %v76 = vld [vmem:[#allocation4 + $0x50] sm:$0xff]
    %v77 = vld [vmem:[#allocation4 + $0x58] sm:$0xff]
    %v78 = vld [vmem:[#allocation4 + $0x60] sm:$0xff]
    %v79 = vld [vmem:[#allocation4 + $0x68] sm:$0xff]
    %v80 = vld [vmem:[#allocation4 + $0x70] sm:$0xff]
    %v81 = vld [vmem:[#allocation4 + $0x78] sm:$0xff]
    %v82 = vld [vmem:[#allocation4 + $0x80] sm:$0xff]
    %v83 = vld [vmem:[#allocation4 + $0x88] sm:$0xff]
    %v84 = vld [vmem:[#allocation4 + $0x90] sm:$0xff]
    %v85 = vld [vmem:[#allocation4 + $0x98] sm:$0xff]
    %v86 = vld [vmem:[#allocation4 + $0xa0] sm:$0xff]
    %v87 = vld [vmem:[#allocation4 + $0xa8] sm:$0xff]
    %v88 = vld [vmem:[#allocation4 + $0xb0] sm:$0xff]
    %v89 = vld [vmem:[#allocation4 + $0xb8] sm:$0xff]
    %v90 = vld [vmem:[#allocation4 + $0xc0] sm:$0xff]
    %v91 = vld [vmem:[#allocation4 + $0xc8] sm:$0xff]
    %v92 = vld [vmem:[#allocation4 + $0xd0] sm:$0xff]
    %v93 = vld [vmem:[#allocation4 + $0xd8] sm:$0xff]
    %v94 = vld [vmem:[#allocation4 + $0xe0] sm:$0xff]
    %v95 = vld [vmem:[#allocation4 + $0xe8] sm:$0xff]
    %v96 = vld [vmem:[#allocation4 + $0xf0] sm:$0xff]
    %v97 = vld [vmem:[#allocation4 + $0xf8] sm:$0xff]
    %v98 = vld [vmem:[#allocation4 + $0x100] sm:$0xff]
    %v99 = vld [vmem:[#allocation4 + $0x108] sm:$0xff]
    %v100 = vld [vmem:[#allocation4 + $0x110] sm:$0xff]
    %v101 = vld [vmem:[#allocation4 + $0x118] sm:$0xff]
    %v102 = vld [vmem:[#allocation4 + $0x120] sm:$0xff]
    %v103 = vld [vmem:[#allocation4 + $0x128] sm:$0xff]
    %v104 = vld [vmem:[#allocation4 + $0x130] sm:$0xff]
    %v105 = vld [vmem:[#allocation4 + $0x138] sm:$0xff]
    %v106 = vld [vmem:[#allocation4 + $0x140] sm:$0xff]
    %v107 = vld [vmem:[#allocation4 + $0x148] sm:$0xff]
    %v108 = vld [vmem:[#allocation4 + $0x150] sm:$0xff]
    %v109 = vld [vmem:[#allocation4 + $0x158] sm:$0xff]
    %v110 = vld [vmem:[#allocation4 + $0x160] sm:$0xff]
    %v111 = vld [vmem:[#allocation4 + $0x168] sm:$0xff]
    %v112 = vld [vmem:[#allocation4 + $0x170] sm:$0xff]
    %v113 = vld [vmem:[#allocation4 + $0x178] sm:$0xff]
    %v114 = vld [vmem:[#allocation4 + $0x180] sm:$0xff]
    %v115 = vld [vmem:[#allocation4 + $0x188] sm:$0xff]
    %v116 = vld [vmem:[#allocation4 + $0x190] sm:$0xff]
    %v117 = vld [vmem:[#allocation4 + $0x198] sm:$0xff]
    %v118 = vld [vmem:[#allocation4 + $0x1a0] sm:$0xff]
    %v119 = vld [vmem:[#allocation4 + $0x1a8] sm:$0xff]
    %v120 = vld [vmem:[#allocation4 + $0x1b0] sm:$0xff]
    %v121 = vld [vmem:[#allocation4 + $0x1b8] sm:$0xff]
    %v122 = vld [vmem:[#allocation4 + $0x1c0] sm:$0xff]
    %v123 = vld [vmem:[#allocation4 + $0x1c8] sm:$0xff]
    %v124 = vld [vmem:[#allocation4 + $0x1d0] sm:$0xff]
    %v125 = vld [vmem:[#allocation4 + $0x1d8] sm:$0xff]
    %v126 = vld [vmem:[#allocation4 + $0x1e0] sm:$0xff]
    %v127 = vld [vmem:[#allocation4 + $0x1e8] sm:$0xff]
    %v128 = vld [vmem:[#allocation4 + $0x1f0] sm:$0xff]
    %v129 = vld [vmem:[#allocation4 + $0x1f8] sm:$0xff]
    %v130 = vld [vmem:[%s3] sm:$0xf]
    %v132 = vlaneseq
    %v133 = vshrl.u32 %v132, 7
    %v134 = vsub.s32 0, %v133
    %v135 = vrot.slane %v130, %v134
    %v136 = vlaneseq
    %v137 = vshrl.u32 %v136, 7
    %v138 = vsub.s32 1, %v137
    %v139 = vrot.slane %v130, %v138
    %v140 = vlaneseq
    %v141 = vshrl.u32 %v140, 7
    %v142 = vsub.s32 2, %v141
    %v143 = vrot.slane %v130, %v142
    %v144 = vlaneseq
    %v145 = vshrl.u32 %v144, 7
    %v146 = vsub.s32 3, %v145
    %v147 = vrot.slane %v130, %v146
    %152 = vmatprep.subr.mxu0 %v67
    %153 = vmatpush1.msra.mxu0 %v66
    %154 = vmatprep.subr.mxu0 %v71
    %155 = vmatpush1.msra.mxu0 %v70
    %156 = vmatprep.subr.mxu0 %v75
    %157 = vmatpush1.msra.mxu0 %v74
    %158 = vmatprep.subr.mxu0 %v79
    %159 = vmatpush1.msra.mxu0 %v78
    %160 = vmatprep.subr.mxu0 %v83
    %161 = vmatpush1.msra.mxu0 %v82
    %162 = vmatprep.subr.mxu0 %v87
    %163 = vmatpush1.msra.mxu0 %v86
    %164 = vmatprep.subr.mxu0 %v91
    %165 = vmatpush1.msra.mxu0 %v90
    %166 = vmatprep.subr.mxu0 %v95
    %167 = vmatpush1.msra.mxu0 %v94
    %168 = vmatprep.subr.mxu0 %v99
    %169 = vmatpush1.msra.mxu0 %v98
    %170 = vmatprep.subr.mxu0 %v103
    %171 = vmatpush1.msra.mxu0 %v102
    %172 = vmatprep.subr.mxu0 %v107
    %173 = vmatpush1.msra.mxu0 %v106
    %174 = vmatprep.subr.mxu0 %v111
    %175 = vmatpush1.msra.mxu0 %v110
    %176 = vmatprep.subr.mxu0 %v115
    %177 = vmatpush1.msra.mxu0 %v114
    %178 = vmatprep.subr.mxu0 %v119
    %179 = vmatpush1.msra.mxu0 %v118
    %180 = vmatprep.subr.mxu0 %v123
    %181 = vmatpush1.msra.mxu0 %v122
    %182 = vmatprep.subr.mxu0 %v127
    %183 = vmatpush1.msra.mxu0 %v126
    %184 = vmatprep.subr.mxu0 0.0
    %185 = vmatpush1.msra.mxu0 0.0
    %186 = vmatprep.subr.mxu0 0.0
    %187 = vmatpush1.msra.mxu0 0.0
    %188 = vmatprep.subr.mxu0 0.0
    %189 = vmatpush1.msra.mxu0 0.0
    %190 = vmatprep.subr.mxu0 0.0
    %191 = vmatpush1.msra.mxu0 0.0
    %192 = vmatprep.subr.mxu0 0.0
    %193 = vmatpush1.msra.mxu0 0.0
    %194 = vmatprep.subr.mxu0 0.0
    %195 = vmatpush1.msra.mxu0 0.0
    %196 = vmatprep.subr.mxu0 0.0
    %197 = vmatpush1.msra.mxu0 0.0
    %198 = vmatprep.subr.mxu0 0.0
    %199 = vmatpush1.msra.mxu0 0.0
    %200 = vmatprep.subr.mxu0 0.0
    %201 = vmatpush1.msra.mxu0 0.0
    %202 = vmatprep.subr.mxu0 0.0
    %203 = vmatpush1.msra.mxu0 0.0
    %204 = vmatprep.subr.mxu0 0.0
    %205 = vmatpush1.msra.mxu0 0.0
    %206 = vmatprep.subr.mxu0 0.0
    %207 = vmatpush1.msra.mxu0 0.0
    %208 = vmatprep.subr.mxu0 0.0
    %209 = vmatpush1.msra.mxu0 0.0
    %210 = vmatprep.subr.mxu0 0.0
    %211 = vmatpush1.msra.mxu0 0.0
    %212 = vmatprep.subr.mxu0 0.0
    %213 = vmatpush1.msra.mxu0 0.0
    %214 = vmatprep.subr.mxu0 0.0
    %215 = vmatpush1.msra.mxu0 0.0
    %216 = vmatprep.mubr.f32.mxu0 0.0
    %217 = vmatmul.mubr.f32.gmra.mrb[0].mxu0 %v62
    %v218 = vpop.f32.mrb[0].mxu0
    %v219 = vadd.f32 %v135, %v218
    %v220 = vpop.f32.mrb[0].mxu0
    %v221 = vadd.f32 %v139, %v220
    %222 = vmatprep.mubr.f32.mxu0 0.0
    %223 = vmatmul.mubr.f32.gmra.mrb[0].mxu0 %v63
    %v224 = vpop.f32.mrb[0].mxu0
    %v225 = vadd.f32 %v135, %v224
    %v226 = vpop.f32.mrb[0].mxu0
    %v227 = vadd.f32 %v139, %v226
    %228 = vmatprep.mubr.f32.mxu0 0.0
    %229 = vmatmul.mubr.f32.gmra.mrb[0].mxu0 %v64
    %v230 = vpop.f32.mrb[0].mxu0
    %v231 = vadd.f32 %v135, %v230
    %v232 = vpop.f32.mrb[0].mxu0
    %v233 = vadd.f32 %v139, %v232
    %234 = vmatprep.mubr.f32.mxu0 0.0
    %235 = vmatmul.mubr.f32.gmra.mrb[0].mxu0 %v65
    %v236 = vpop.f32.mrb[0].mxu0
    %v237 = vadd.f32 %v135, %v236
    %v238 = vpop.f32.mrb[0].mxu0
    %v239 = vadd.f32 %v139, %v238
    %240 = vdwg.mxu0
    %241 = vmatprep.subr.mxu0 %v69
    %242 = vmatpush1.msra.mxu0 %v68
    %243 = vmatprep.subr.mxu0 %v73
    %244 = vmatpush1.msra.mxu0 %v72
    %245 = vmatprep.subr.mxu0 %v77
    %246 = vmatpush1.msra.mxu0 %v76
    %247 = vmatprep.subr.mxu0 %v81
    %248 = vmatpush1.msra.mxu0 %v80
    %249 = vmatprep.subr.mxu0 %v85
    %250 = vmatpush1.msra.mxu0 %v84
    %251 = vmatprep.subr.mxu0 %v89
    %252 = vmatpush1.msra.mxu0 %v88
    %253 = vmatprep.subr.mxu0 %v93
    %254 = vmatpush1.msra.mxu0 %v92
    %255 = vmatprep.subr.mxu0 %v97
    %256 = vmatpush1.msra.mxu0 %v96
    %257 = vmatprep.subr.mxu0 %v101
    %258 = vmatpush1.msra.mxu0 %v100
    %259 = vmatprep.subr.mxu0 %v105
    %260 = vmatpush1.msra.mxu0 %v104
    %261 = vmatprep.subr.mxu0 %v109
    %262 = vmatpush1.msra.mxu0 %v108
    %263 = vmatprep.subr.mxu0 %v113
    %264 = vmatpush1.msra.mxu0 %v112
    %265 = vmatprep.subr.mxu0 %v117
    %266 = vmatpush1.msra.mxu0 %v116
    %267 = vmatprep.subr.mxu0 %v121
    %268 = vmatpush1.msra.mxu0 %v120
    %269 = vmatprep.subr.mxu0 %v125
    %270 = vmatpush1.msra.mxu0 %v124
    %271 = vmatprep.subr.mxu0 %v129
    %272 = vmatpush1.msra.mxu0 %v128
    %273 = vmatprep.subr.mxu0 0.0
    %274 = vmatpush1.msra.mxu0 0.0
    %275 = vmatprep.subr.mxu0 0.0
    %276 = vmatpush1.msra.mxu0 0.0
    %277 = vmatprep.subr.mxu0 0.0
    %278 = vmatpush1.msra.mxu0 0.0
    %279 = vmatprep.subr.mxu0 0.0
    %280 = vmatpush1.msra.mxu0 0.0
    %281 = vmatprep.subr.mxu0 0.0
    %282 = vmatpush1.msra.mxu0 0.0
    %283 = vmatprep.subr.mxu0 0.0
    %284 = vmatpush1.msra.mxu0 0.0
    %285 = vmatprep.subr.mxu0 0.0
    %286 = vmatpush1.msra.mxu0 0.0
    %287 = vmatprep.subr.mxu0 0.0
    %288 = vmatpush1.msra.mxu0 0.0
    %289 = vmatprep.subr.mxu0 0.0
    %290 = vmatpush1.msra.mxu0 0.0
    %291 = vmatprep.subr.mxu0 0.0
    %292 = vmatpush1.msra.mxu0 0.0
    %293 = vmatprep.subr.mxu0 0.0
    %294 = vmatpush1.msra.mxu0 0.0
    %295 = vmatprep.subr.mxu0 0.0
    %296 = vmatpush1.msra.mxu0 0.0
    %297 = vmatprep.subr.mxu0 0.0
    %298 = vmatpush1.msra.mxu0 0.0
    %299 = vmatprep.subr.mxu0 0.0
    %300 = vmatpush1.msra.mxu0 0.0
    %301 = vmatprep.subr.mxu0 0.0
    %302 = vmatpush1.msra.mxu0 0.0
    %303 = vmatprep.subr.mxu0 0.0
    %304 = vmatpush1.msra.mxu0 0.0
    %305 = vmatprep.mubr.f32.mxu0 0.0
    %306 = vmatmul.mubr.f32.gmra.mrb[0].mxu0 %v62
    %v307 = vpop.f32.mrb[0].mxu0
    %v308 = vadd.f32 %v143, %v307
    %v309 = vpop.f32.mrb[0].mxu0
    %v310 = vadd.f32 %v147, %v309
    %311 = vmatprep.mubr.f32.mxu0 0.0
    %312 = vmatmul.mubr.f32.gmra.mrb[0].mxu0 %v63
    %v313 = vpop.f32.mrb[0].mxu0
    %v314 = vadd.f32 %v143, %v313
    %v315 = vpop.f32.mrb[0].mxu0
    %v316 = vadd.f32 %v147, %v315
    %317 = vmatprep.mubr.f32.mxu0 0.0
    %318 = vmatmul.mubr.f32.gmra.mrb[0].mxu0 %v64
    %v319 = vpop.f32.mrb[0].mxu0
    %v320 = vadd.f32 %v143, %v319
    %v321 = vpop.f32.mrb[0].mxu0
    %v322 = vadd.f32 %v147, %v321
    %323 = vmatprep.mubr.f32.mxu0 0.0
    %324 = vmatmul.mubr.f32.gmra.mrb[0].mxu0 %v65
    %v325 = vpop.f32.mrb[0].mxu0
    %v326 = vadd.f32 %v143, %v325
    %v327 = vpop.f32.mrb[0].mxu0
    %v328 = vadd.f32 %v147, %v327
    %329 = vdwg.mxu0
    %330 = vst [vmem:[#allocation3] sm:$0xff] %v219
    %331 = vst [vmem:[#allocation3 + $0x8] sm:$0xff] %v221
    %332 = vst [vmem:[#allocation3 + $0x10] sm:$0xff] %v308
    %333 = vst [vmem:[#allocation3 + $0x18] sm:$0xff] %v310
    %334 = vst [vmem:[#allocation3 + $0x20] sm:$0xff] %v225
    %335 = vst [vmem:[#allocation3 + $0x28] sm:$0xff] %v227
    %336 = vst [vmem:[#allocation3 + $0x30] sm:$0xff] %v314
    %337 = vst [vmem:[#allocation3 + $0x38] sm:$0xff] %v316
    %338 = vst [vmem:[#allocation3 + $0x40] sm:$0xff] %v231
    %339 = vst [vmem:[#allocation3 + $0x48] sm:$0xff] %v233
    %340 = vst [vmem:[#allocation3 + $0x50] sm:$0xff] %v320
    %341 = vst [vmem:[#allocation3 + $0x58] sm:$0xff] %v322
    %342 = vst [vmem:[#allocation3 + $0x60] sm:$0xff] %v237
    %343 = vst [vmem:[#allocation3 + $0x68] sm:$0xff] %v239
    %344 = vst [vmem:[#allocation3 + $0x70] sm:$0xff] %v326
    %345 = vst [vmem:[#allocation3 + $0x78] sm:$0xff] %v328
    %s346 = smul.u32 0, 4
    %s347 = smul.addr %s346, 8
    %s348 = scalar_lea.vmem [#allocation3], %s347
    %v349 = vld [vmem:[%s348] sm:$0xff]
    %v350 = vld [vmem:[%s348 + $0x8] sm:$0xff]
    %v351 = vld [vmem:[%s348 + $0x10] sm:$0xff]
    %v352 = vld [vmem:[%s348 + $0x18] sm:$0xff]
    %v353 = vld [vmem:[#allocation6] sm:$0xff]
    %v354 = vld [vmem:[#allocation6 + $0x8] sm:$0xff]
    %v355 = vld [vmem:[#allocation6 + $0x10] sm:$0xff]
    %v356 = vld [vmem:[#allocation6 + $0x18] sm:$0xff]
    %v357 = vld [vmem:[#allocation6 + $0x20] sm:$0xff]
    %v358 = vld [vmem:[#allocation6 + $0x28] sm:$0xff]
    %v359 = vld [vmem:[#allocation6 + $0x30] sm:$0xff]
    %v360 = vld [vmem:[#allocation6 + $0x38] sm:$0xff]
    %v361 = vld [vmem:[#allocation6 + $0x40] sm:$0xff]
    %v362 = vld [vmem:[#allocation6 + $0x48] sm:$0xff]
    %v363 = vld [vmem:[#allocation6 + $0x50] sm:$0xff]
    %v364 = vld [vmem:[#allocation6 + $0x58] sm:$0xff]
    %v365 = vld [vmem:[#allocation6 + $0x60] sm:$0xff]
    %v366 = vld [vmem:[#allocation6 + $0x68] sm:$0xff]
    %v367 = vld [vmem:[#allocation6 + $0x70] sm:$0xff]
    %v368 = vld [vmem:[#allocation6 + $0x78] sm:$0xff]
    %v369 = vld [vmem:[#allocation6 + $0x80] sm:$0xff]
    %v370 = vld [vmem:[#allocation6 + $0x88] sm:$0xff]
    %v371 = vld [vmem:[#allocation6 + $0x90] sm:$0xff]
    %v372 = vld [vmem:[#allocation6 + $0x98] sm:$0xff]
    %v373 = vld [vmem:[#allocation6 + $0xa0] sm:$0xff]
    %v374 = vld [vmem:[#allocation6 + $0xa8] sm:$0xff]
    %v375 = vld [vmem:[#allocation6 + $0xb0] sm:$0xff]
    %v376 = vld [vmem:[#allocation6 + $0xb8] sm:$0xff]
    %v377 = vld [vmem:[#allocation6 + $0xc0] sm:$0xff]
    %v378 = vld [vmem:[#allocation6 + $0xc8] sm:$0xff]
    %v379 = vld [vmem:[#allocation6 + $0xd0] sm:$0xff]
    %v380 = vld [vmem:[#allocation6 + $0xd8] sm:$0xff]
    %v381 = vld [vmem:[#allocation6 + $0xe0] sm:$0xff]
    %v382 = vld [vmem:[#allocation6 + $0xe8] sm:$0xff]
    %v383 = vld [vmem:[#allocation6 + $0xf0] sm:$0xff]
    %v384 = vld [vmem:[#allocation6 + $0xf8] sm:$0xff]
    %v385 = vld [vmem:[#allocation6 + $0x100] sm:$0xff]
    %v386 = vld [vmem:[#allocation6 + $0x108] sm:$0xff]
    %v387 = vld [vmem:[#allocation6 + $0x110] sm:$0xff]
    %v388 = vld [vmem:[#allocation6 + $0x118] sm:$0xff]
    %v389 = vld [vmem:[#allocation6 + $0x120] sm:$0xff]
    %v390 = vld [vmem:[#allocation6 + $0x128] sm:$0xff]
    %v391 = vld [vmem:[#allocation6 + $0x130] sm:$0xff]
    %v392 = vld [vmem:[#allocation6 + $0x138] sm:$0xff]
    %v393 = vld [vmem:[#allocation6 + $0x140] sm:$0xff]
    %v394 = vld [vmem:[#allocation6 + $0x148] sm:$0xff]
    %v395 = vld [vmem:[#allocation6 + $0x150] sm:$0xff]
    %v396 = vld [vmem:[#allocation6 + $0x158] sm:$0xff]
    %v397 = vld [vmem:[#allocation6 + $0x160] sm:$0xff]
    %v398 = vld [vmem:[#allocation6 + $0x168] sm:$0xff]
    %v399 = vld [vmem:[#allocation6 + $0x170] sm:$0xff]
    %v400 = vld [vmem:[#allocation6 + $0x178] sm:$0xff]
    %v401 = vld [vmem:[#allocation6 + $0x180] sm:$0xff]
    %v402 = vld [vmem:[#allocation6 + $0x188] sm:$0xff]
    %v403 = vld [vmem:[#allocation6 + $0x190] sm:$0xff]
    %v404 = vld [vmem:[#allocation6 + $0x198] sm:$0xff]
    %v405 = vld [vmem:[#allocation6 + $0x1a0] sm:$0xff]
    %v406 = vld [vmem:[#allocation6 + $0x1a8] sm:$0xff]
    %v407 = vld [vmem:[#allocation6 + $0x1b0] sm:$0xff]
    %v408 = vld [vmem:[#allocation6 + $0x1b8] sm:$0xff]
    %v409 = vld [vmem:[#allocation6 + $0x1c0] sm:$0xff]
    %v410 = vld [vmem:[#allocation6 + $0x1c8] sm:$0xff]
    %v411 = vld [vmem:[#allocation6 + $0x1d0] sm:$0xff]
    %v412 = vld [vmem:[#allocation6 + $0x1d8] sm:$0xff]
    %v413 = vld [vmem:[#allocation6 + $0x1e0] sm:$0xff]
    %v414 = vld [vmem:[#allocation6 + $0x1e8] sm:$0xff]
    %v415 = vld [vmem:[#allocation6 + $0x1f0] sm:$0xff]
    %v416 = vld [vmem:[#allocation6 + $0x1f8] sm:$0xff]
    %417 = vmatprep.subr.mxu0 %v354
    %418 = vmatpush1.msra.mxu0 %v353
    %419 = vmatprep.subr.mxu0 %v358
    %420 = vmatpush1.msra.mxu0 %v357
    %421 = vmatprep.subr.mxu0 %v362
    %422 = vmatpush1.msra.mxu0 %v361
    %423 = vmatprep.subr.mxu0 %v366
    %424 = vmatpush1.msra.mxu0 %v365
    %425 = vmatprep.subr.mxu0 %v370
    %426 = vmatpush1.msra.mxu0 %v369
    %427 = vmatprep.subr.mxu0 %v374
    %428 = vmatpush1.msra.mxu0 %v373
    %429 = vmatprep.subr.mxu0 %v378
    %430 = vmatpush1.msra.mxu0 %v377
    %431 = vmatprep.subr.mxu0 %v382
    %432 = vmatpush1.msra.mxu0 %v381
    %433 = vmatprep.subr.mxu0 %v386
    %434 = vmatpush1.msra.mxu0 %v385
    %435 = vmatprep.subr.mxu0 %v390
    %436 = vmatpush1.msra.mxu0 %v389
    %437 = vmatprep.subr.mxu0 %v394
    %438 = vmatpush1.msra.mxu0 %v393
    %439 = vmatprep.subr.mxu0 %v398
    %440 = vmatpush1.msra.mxu0 %v397
    %441 = vmatprep.subr.mxu0 %v402
    %442 = vmatpush1.msra.mxu0 %v401
    %443 = vmatprep.subr.mxu0 %v406
    %444 = vmatpush1.msra.mxu0 %v405
    %445 = vmatprep.subr.mxu0 %v410
    %446 = vmatpush1.msra.mxu0 %v409
    %447 = vmatprep.subr.mxu0 %v414
    %448 = vmatpush1.msra.mxu0 %v413
    %449 = vmatprep.subr.mxu0 0.0
    %450 = vmatpush1.msra.mxu0 0.0
    %451 = vmatprep.subr.mxu0 0.0
    %452 = vmatpush1.msra.mxu0 0.0
    %453 = vmatprep.subr.mxu0 0.0
    %454 = vmatpush1.msra.mxu0 0.0
    %455 = vmatprep.subr.mxu0 0.0
    %456 = vmatpush1.msra.mxu0 0.0
    %457 = vmatprep.subr.mxu0 0.0
    %458 = vmatpush1.msra.mxu0 0.0
    %459 = vmatprep.subr.mxu0 0.0
    %460 = vmatpush1.msra.mxu0 0.0
    %461 = vmatprep.subr.mxu0 0.0
    %462 = vmatpush1.msra.mxu0 0.0
    %463 = vmatprep.subr.mxu0 0.0
    %464 = vmatpush1.msra.mxu0 0.0
    %465 = vmatprep.subr.mxu0 0.0
    %466 = vmatpush1.msra.mxu0 0.0
    %467 = vmatprep.subr.mxu0 0.0
    %468 = vmatpush1.msra.mxu0 0.0
    %469 = vmatprep.subr.mxu0 0.0
    %470 = vmatpush1.msra.mxu0 0.0
    %471 = vmatprep.subr.mxu0 0.0
    %472 = vmatpush1.msra.mxu0 0.0
    %473 = vmatprep.subr.mxu0 0.0
    %474 = vmatpush1.msra.mxu0 0.0
    %475 = vmatprep.subr.mxu0 0.0
    %476 = vmatpush1.msra.mxu0 0.0
    %477 = vmatprep.subr.mxu0 0.0
    %478 = vmatpush1.msra.mxu0 0.0
    %479 = vmatprep.subr.mxu0 0.0
    %480 = vmatpush1.msra.mxu0 0.0
    %481 = vmatprep.mubr.f32.mxu0 0.0
    %482 = vmatmul.mubr.f32.gmra.mrb[0].mxu0 %v60
    %v483 = vpop.f32.mrb[0].mxu0
    %v484 = vadd.f32 0.0, %v483
    %v485 = vpop.f32.mrb[0].mxu0
    %v486 = vadd.f32 0.0, %v485
    %487 = vdwg.mxu0
    %488 = vmatprep.subr.mxu0 %v356
    %489 = vmatpush1.msra.mxu0 %v355
    %490 = vmatprep.subr.mxu0 %v360
    %491 = vmatpush1.msra.mxu0 %v359
    %492 = vmatprep.subr.mxu0 %v364
    %493 = vmatpush1.msra.mxu0 %v363
    %494 = vmatprep.subr.mxu0 %v368
    %495 = vmatpush1.msra.mxu0 %v367
    %496 = vmatprep.subr.mxu0 %v372
    %497 = vmatpush1.msra.mxu0 %v371
    %498 = vmatprep.subr.mxu0 %v376
    %499 = vmatpush1.msra.mxu0 %v375
    %500 = vmatprep.subr.mxu0 %v380
    %501 = vmatpush1.msra.mxu0 %v379
    %502 = vmatprep.subr.mxu0 %v384
    %503 = vmatpush1.msra.mxu0 %v383
    %504 = vmatprep.subr.mxu0 %v388
    %505 = vmatpush1.msra.mxu0 %v387
    %506 = vmatprep.subr.mxu0 %v392
    %507 = vmatpush1.msra.mxu0 %v391
    %508 = vmatprep.subr.mxu0 %v396
    %509 = vmatpush1.msra.mxu0 %v395
    %510 = vmatprep.subr.mxu0 %v400
    %511 = vmatpush1.msra.mxu0 %v399
    %512 = vmatprep.subr.mxu0 %v404
    %513 = vmatpush1.msra.mxu0 %v403
    %514 = vmatprep.subr.mxu0 %v408
    %515 = vmatpush1.msra.mxu0 %v407
    %516 = vmatprep.subr.mxu0 %v412
    %517 = vmatpush1.msra.mxu0 %v411
    %518 = vmatprep.subr.mxu0 %v416
    %519 = vmatpush1.msra.mxu0 %v415
    %520 = vmatprep.subr.mxu0 0.0
    %521 = vmatpush1.msra.mxu0 0.0
    %522 = vmatprep.subr.mxu0 0.0
    %523 = vmatpush1.msra.mxu0 0.0
    %524 = vmatprep.subr.mxu0 0.0
    %525 = vmatpush1.msra.mxu0 0.0
    %526 = vmatprep.subr.mxu0 0.0
    %527 = vmatpush1.msra.mxu0 0.0
    %528 = vmatprep.subr.mxu0 0.0
    %529 = vmatpush1.msra.mxu0 0.0
    %530 = vmatprep.subr.mxu0 0.0
    %531 = vmatpush1.msra.mxu0 0.0
    %532 = vmatprep.subr.mxu0 0.0
    %533 = vmatpush1.msra.mxu0 0.0
    %534 = vmatprep.subr.mxu0 0.0
    %535 = vmatpush1.msra.mxu0 0.0
    %536 = vmatprep.subr.mxu0 0.0
    %537 = vmatpush1.msra.mxu0 0.0
    %538 = vmatprep.subr.mxu0 0.0
    %539 = vmatpush1.msra.mxu0 0.0
    %540 = vmatprep.subr.mxu0 0.0
    %541 = vmatpush1.msra.mxu0 0.0
    %542 = vmatprep.subr.mxu0 0.0
    %543 = vmatpush1.msra.mxu0 0.0
    %544 = vmatprep.subr.mxu0 0.0
    %545 = vmatpush1.msra.mxu0 0.0
    %546 = vmatprep.subr.mxu0 0.0
    %547 = vmatpush1.msra.mxu0 0.0
    %548 = vmatprep.subr.mxu0 0.0
    %549 = vmatpush1.msra.mxu0 0.0
    %550 = vmatprep.subr.mxu0 0.0
    %551 = vmatpush1.msra.mxu0 0.0
    %552 = vmatprep.mubr.f32.mxu0 0.0
    %553 = vmatmul.mubr.f32.gmra.mrb[0].mxu0 %v60
    %v554 = vpop.f32.mrb[0].mxu0
    %v555 = vadd.f32 0.0, %v554
    %v556 = vpop.f32.mrb[0].mxu0
    %v557 = vadd.f32 0.0, %v556
    %558 = vdwg.mxu0
    %v559 = vadd.f32 %v349, %v484
    %v560 = vadd.f32 %v350, %v486
    %v561 = vadd.f32 %v351, %v555
    %v562 = vadd.f32 %v352, %v557
    %v563 = vmul.f32 %v559, 0.5
    %v564 = vmul.f32 %v560, 0.5
    %v565 = vmul.f32 %v561, 0.5
    %v566 = vtanh.pop %v563
    %v567 = vtanh.pop %v564
    %v568 = vtanh.pop %v565
    %v569 = vmul.f32 %v566, 0.5
    %v570 = vmul.f32 %v567, 0.5
    %v571 = vmul.f32 %v568, 0.5
    %v572 = vadd.f32 %v569, 0.5
    %v573 = vadd.f32 %v570, 0.5
    %v574 = vadd.f32 %v571, 0.5
    %v575 = vtanh.pop %v562
    %v576 = vmul.f32 %v573, %v61
    %v577 = vmul.f32 %v572, %v575
    %v578 = vadd.f32 %v576, %v577
    %v579 = vtanh.pop %v578
    %v580 = vmul.f32 %v574, %v579
    %581 = vst [vmem:[#allocation2] sm:$0xff] %v580
    %s582 = smul.u32 1, 4
    %s583 = smul.addr %s582, 8
    %s584 = scalar_lea.vmem [#allocation3], %s583
    %v585 = vld [vmem:[%s584] sm:$0xff]
    %v586 = vld [vmem:[%s584 + $0x8] sm:$0xff]
    %v587 = vld [vmem:[%s584 + $0x10] sm:$0xff]
    %v588 = vld [vmem:[%s584 + $0x18] sm:$0xff]
    %v589 = vld [vmem:[#allocation6] sm:$0xff]
    %v590 = vld [vmem:[#allocation6 + $0x8] sm:$0xff]
    %v591 = vld [vmem:[#allocation6 + $0x10] sm:$0xff]
    %v592 = vld [vmem:[#allocation6 + $0x18] sm:$0xff]
    %v593 = vld [vmem:[#allocation6 + $0x20] sm:$0xff]
    %v594 = vld [vmem:[#allocation6 + $0x28] sm:$0xff]
    %v595 = vld [vmem:[#allocation6 + $0x30] sm:$0xff]
    %v596 = vld [vmem:[#allocation6 + $0x38] sm:$0xff]
    %v597 = vld [vmem:[#allocation6 + $0x40] sm:$0xff]
    %v598 = vld [vmem:[#allocation6 + $0x48] sm:$0xff]
    %v599 = vld [vmem:[#allocation6 + $0x50] sm:$0xff]
    %v600 = vld [vmem:[#allocation6 + $0x58] sm:$0xff]
    %v601 = vld [vmem:[#allocation6 + $0x60] sm:$0xff]
    %v602 = vld [vmem:[#allocation6 + $0x68] sm:$0xff]
    %v603 = vld [vmem:[#allocation6 + $0x70] sm:$0xff]
    %v604 = vld [vmem:[#allocation6 + $0x78] sm:$0xff]
    %v605 = vld [vmem:[#allocation6 + $0x80] sm:$0xff]
    %v606 = vld [vmem:[#allocation6 + $0x88] sm:$0xff]
    %v607 = vld [vmem:[#allocation6 + $0x90] sm:$0xff]
    %v608 = vld [vmem:[#allocation6 + $0x98] sm:$0xff]
    %v609 = vld [vmem:[#allocation6 + $0xa0] sm:$0xff]
    %v610 = vld [vmem:[#allocation6 + $0xa8] sm:$0xff]
    %v611 = vld [vmem:[#allocation6 + $0xb0] sm:$0xff]
    %v612 = vld [vmem:[#allocation6 + $0xb8] sm:$0xff]
    %v613 = vld [vmem:[#allocation6 + $0xc0] sm:$0xff]
    %v614 = vld [vmem:[#allocation6 + $0xc8] sm:$0xff]
    %v615 = vld [vmem:[#allocation6 + $0xd0] sm:$0xff]
    %v616 = vld [vmem:[#allocation6 + $0xd8] sm:$0xff]
    %v617 = vld [vmem:[#allocation6 + $0xe0] sm:$0xff]
    %v618 = vld [vmem:[#allocation6 + $0xe8] sm:$0xff]
    %v619 = vld [vmem:[#allocation6 + $0xf0] sm:$0xff]
    %v620 = vld [vmem:[#allocation6 + $0xf8] sm:$0xff]
    %v621 = vld [vmem:[#allocation6 + $0x100] sm:$0xff]
    %v622 = vld [vmem:[#allocation6 + $0x108] sm:$0xff]
    %v623 = vld [vmem:[#allocation6 + $0x110] sm:$0xff]
    %v624 = vld [vmem:[#allocation6 + $0x118] sm:$0xff]
    %v625 = vld [vmem:[#allocation6 + $0x120] sm:$0xff]
    %v626 = vld [vmem:[#allocation6 + $0x128] sm:$0xff]
    %v627 = vld [vmem:[#allocation6 + $0x130] sm:$0xff]
    %v628 = vld [vmem:[#allocation6 + $0x138] sm:$0xff]
    %v629 = vld [vmem:[#allocation6 + $0x140] sm:$0xff]
    %v630 = vld [vmem:[#allocation6 + $0x148] sm:$0xff]
    %v631 = vld [vmem:[#allocation6 + $0x150] sm:$0xff]
    %v632 = vld [vmem:[#allocation6 + $0x158] sm:$0xff]
    %v633 = vld [vmem:[#allocation6 + $0x160] sm:$0xff]
    %v634 = vld [vmem:[#allocation6 + $0x168] sm:$0xff]
    %v635 = vld [vmem:[#allocation6 + $0x170] sm:$0xff]
    %v636 = vld [vmem:[#allocation6 + $0x178] sm:$0xff]
    %v637 = vld [vmem:[#allocation6 + $0x180] sm:$0xff]
    %v638 = vld [vmem:[#allocation6 + $0x188] sm:$0xff]
    %v639 = vld [vmem:[#allocation6 + $0x190] sm:$0xff]
    %v640 = vld [vmem:[#allocation6 + $0x198] sm:$0xff]
    %v641 = vld [vmem:[#allocation6 + $0x1a0] sm:$0xff]
    %v642 = vld [vmem:[#allocation6 + $0x1a8] sm:$0xff]
    %v643 = vld [vmem:[#allocation6 + $0x1b0] sm:$0xff]
    %v644 = vld [vmem:[#allocation6 + $0x1b8] sm:$0xff]
    %v645 = vld [vmem:[#allocation6 + $0x1c0] sm:$0xff]
    %v646 = vld [vmem:[#allocation6 + $0x1c8] sm:$0xff]
    %v647 = vld [vmem:[#allocation6 + $0x1d0] sm:$0xff]
    %v648 = vld [vmem:[#allocation6 + $0x1d8] sm:$0xff]
    %v649 = vld [vmem:[#allocation6 + $0x1e0] sm:$0xff]
    %v650 = vld [vmem:[#allocation6 + $0x1e8] sm:$0xff]
    %v651 = vld [vmem:[#allocation6 + $0x1f0] sm:$0xff]
    %v652 = vld [vmem:[#allocation6 + $0x1f8] sm:$0xff]
    %653 = vmatprep.subr.mxu0 %v590
    %654 = vmatpush1.msra.mxu0 %v589
    %655 = vmatprep.subr.mxu0 %v594
    %656 = vmatpush1.msra.mxu0 %v593
    %657 = vmatprep.subr.mxu0 %v598
    %658 = vmatpush1.msra.mxu0 %v597
    %659 = vmatprep.subr.mxu0 %v602
    %660 = vmatpush1.msra.mxu0 %v601
    %661 = vmatprep.subr.mxu0 %v606
    %662 = vmatpush1.msra.mxu0 %v605
    %663 = vmatprep.subr.mxu0 %v610
    %664 = vmatpush1.msra.mxu0 %v609
    %665 = vmatprep.subr.mxu0 %v614
    %666 = vmatpush1.msra.mxu0 %v613
    %667 = vmatprep.subr.mxu0 %v618
    %668 = vmatpush1.msra.mxu0 %v617
    %669 = vmatprep.subr.mxu0 %v622
    %670 = vmatpush1.msra.mxu0 %v621
    %671 = vmatprep.subr.mxu0 %v626
    %672 = vmatpush1.msra.mxu0 %v625
    %673 = vmatprep.subr.mxu0 %v630
    %674 = vmatpush1.msra.mxu0 %v629
    %675 = vmatprep.subr.mxu0 %v634
    %676 = vmatpush1.msra.mxu0 %v633
    %677 = vmatprep.subr.mxu0 %v638
    %678 = vmatpush1.msra.mxu0 %v637
    %679 = vmatprep.subr.mxu0 %v642
    %680 = vmatpush1.msra.mxu0 %v641
    %681 = vmatprep.subr.mxu0 %v646
    %682 = vmatpush1.msra.mxu0 %v645
    %683 = vmatprep.subr.mxu0 %v650
    %684 = vmatpush1.msra.mxu0 %v649
    %685 = vmatprep.subr.mxu0 0.0
    %686 = vmatpush1.msra.mxu0 0.0
    %687 = vmatprep.subr.mxu0 0.0
    %688 = vmatpush1.msra.mxu0 0.0
    %689 = vmatprep.subr.mxu0 0.0
    %690 = vmatpush1.msra.mxu0 0.0
    %691 = vmatprep.subr.mxu0 0.0
    %692 = vmatpush1.msra.mxu0 0.0
    %693 = vmatprep.subr.mxu0 0.0
    %694 = vmatpush1.msra.mxu0 0.0
    %695 = vmatprep.subr.mxu0 0.0
    %696 = vmatpush1.msra.mxu0 0.0
    %697 = vmatprep.subr.mxu0 0.0
    %698 = vmatpush1.msra.mxu0 0.0
    %699 = vmatprep.subr.mxu0 0.0
    %700 = vmatpush1.msra.mxu0 0.0
    %701 = vmatprep.subr.mxu0 0.0
    %702 = vmatpush1.msra.mxu0 0.0
    %703 = vmatprep.subr.mxu0 0.0
    %704 = vmatpush1.msra.mxu0 0.0
    %705 = vmatprep.subr.mxu0 0.0
    %706 = vmatpush1.msra.mxu0 0.0
    %707 = vmatprep.subr.mxu0 0.0
    %708 = vmatpush1.msra.mxu0 0.0
    %709 = vmatprep.subr.mxu0 0.0
    %710 = vmatpush1.msra.mxu0 0.0
    %711 = vmatprep.subr.mxu0 0.0
    %712 = vmatpush1.msra.mxu0 0.0
    %713 = vmatprep.subr.mxu0 0.0
    %714 = vmatpush1.msra.mxu0 0.0
    %715 = vmatprep.subr.mxu0 0.0
    %716 = vmatpush1.msra.mxu0 0.0
    %717 = vmatprep.mubr.f32.mxu0 0.0
    %718 = vmatmul.mubr.f32.gmra.mrb[0].mxu0 %v580
    %v719 = vpop.f32.mrb[0].mxu0
    %v720 = vadd.f32 0.0, %v719
    %v721 = vpop.f32.mrb[0].mxu0
    %v722 = vadd.f32 0.0, %v721
    %723 = vdwg.mxu0
    %724 = vmatprep.subr.mxu0 %v592
    %725 = vmatpush1.msra.mxu0 %v591
    %726 = vmatprep.subr.mxu0 %v596
    %727 = vmatpush1.msra.mxu0 %v595
    %728 = vmatprep.subr.mxu0 %v600
    %729 = vmatpush1.msra.mxu0 %v599
    %730 = vmatprep.subr.mxu0 %v604
    %731 = vmatpush1.msra.mxu0 %v603
    %732 = vmatprep.subr.mxu0 %v608
    %733 = vmatpush1.msra.mxu0 %v607
    %734 = vmatprep.subr.mxu0 %v612
    %735 = vmatpush1.msra.mxu0 %v611
    %736 = vmatprep.subr.mxu0 %v616
    %737 = vmatpush1.msra.mxu0 %v615
    %738 = vmatprep.subr.mxu0 %v620
    %739 = vmatpush1.msra.mxu0 %v619
    %740 = vmatprep.subr.mxu0 %v624
    %741 = vmatpush1.msra.mxu0 %v623
    %742 = vmatprep.subr.mxu0 %v628
    %743 = vmatpush1.msra.mxu0 %v627
    %744 = vmatprep.subr.mxu0 %v632
    %745 = vmatpush1.msra.mxu0 %v631
    %746 = vmatprep.subr.mxu0 %v636
    %747 = vmatpush1.msra.mxu0 %v635
    %748 = vmatprep.subr.mxu0 %v640
    %749 = vmatpush1.msra.mxu0 %v639
    %750 = vmatprep.subr.mxu0 %v644
    %751 = vmatpush1.msra.mxu0 %v643
    %752 = vmatprep.subr.mxu0 %v648
    %753 = vmatpush1.msra.mxu0 %v647
    %754 = vmatprep.subr.mxu0 %v652
    %755 = vmatpush1.msra.mxu0 %v651
    %756 = vmatprep.subr.mxu0 0.0
    %757 = vmatpush1.msra.mxu0 0.0
    %758 = vmatprep.subr.mxu0 0.0
    %759 = vmatpush1.msra.mxu0 0.0
    %760 = vmatprep.subr.mxu0 0.0
    %761 = vmatpush1.msra.mxu0 0.0
    %762 = vmatprep.subr.mxu0 0.0
    %763 = vmatpush1.msra.mxu0 0.0
    %764 = vmatprep.subr.mxu0 0.0
    %765 = vmatpush1.msra.mxu0 0.0
    %766 = vmatprep.subr.mxu0 0.0
    %767 = vmatpush1.msra.mxu0 0.0
    %768 = vmatprep.subr.mxu0 0.0
    %769 = vmatpush1.msra.mxu0 0.0
    %770 = vmatprep.subr.mxu0 0.0
    %771 = vmatpush1.msra.mxu0 0.0
    %772 = vmatprep.subr.mxu0 0.0
    %773 = vmatpush1.msra.mxu0 0.0
    %774 = vmatprep.subr.mxu0 0.0
    %775 = vmatpush1.msra.mxu0 0.0
    %776 = vmatprep.subr.mxu0 0.0
    %777 = vmatpush1.msra.mxu0 0.0
    %778 = vmatprep.subr.mxu0 0.0
    %779 = vmatpush1.msra.mxu0 0.0
    %780 = vmatprep.subr.mxu0 0.0
    %781 = vmatpush1.msra.mxu0 0.0
    %782 = vmatprep.subr.mxu0 0.0
    %783 = vmatpush1.msra.mxu0 0.0
    %784 = vmatprep.subr.mxu0 0.0
    %785 = vmatpush1.msra.mxu0 0.0
    %786 = vmatprep.subr.mxu0 0.0
    %787 = vmatpush1.msra.mxu0 0.0
    %788 = vmatprep.mubr.f32.mxu0 0.0
    %789 = vmatmul.mubr.f32.gmra.mrb[0].mxu0 %v580
    %v790 = vpop.f32.mrb[0].mxu0
    %v791 = vadd.f32 0.0, %v790
    %v792 = vpop.f32.mrb[0].mxu0
    %v793 = vadd.f32 0.0, %v792
    %794 = vdwg.mxu0
    %v795 = vadd.f32 %v585, %v720
    %v796 = vadd.f32 %v586, %v722
    %v797 = vadd.f32 %v587, %v791
    %v798 = vadd.f32 %v588, %v793
    %v799 = vmul.f32 %v795, 0.5
    %v800 = vmul.f32 %v796, 0.5
    %v801 = vmul.f32 %v797, 0.5
    %v802 = vtanh.pop %v799
    %v803 = vtanh.pop %v800
    %v804 = vtanh.pop %v801
    %v805 = vmul.f32 %v802, 0.5
    %v806 = vmul.f32 %v803, 0.5
    %v807 = vmul.f32 %v804, 0.5
    %v808 = vadd.f32 %v805, 0.5
    %v809 = vadd.f32 %v806, 0.5
    %v810 = vadd.f32 %v807, 0.5
    %v811 = vtanh.pop %v798
    %v812 = vmul.f32 %v809, %v578
    %v813 = vmul.f32 %v808, %v811
    %v814 = vadd.f32 %v812, %v813
    %v815 = vtanh.pop %v814
    %v816 = vmul.f32 %v810, %v815
    %s817 = scalar_lea.vmem [#allocation2], 8
    %818 = vst [vmem:[%s817] sm:$0xff] %v816
    %s819 = smul.u32 2, 4
    %s820 = smul.addr %s819, 8
    %s821 = scalar_lea.vmem [#allocation3], %s820
    %v822 = vld [vmem:[%s821] sm:$0xff]
    %v823 = vld [vmem:[%s821 + $0x8] sm:$0xff]
    %v824 = vld [vmem:[%s821 + $0x10] sm:$0xff]
    %v825 = vld [vmem:[%s821 + $0x18] sm:$0xff]
    %v826 = vld [vmem:[#allocation6] sm:$0xff]
    %v827 = vld [vmem:[#allocation6 + $0x8] sm:$0xff]
    %v828 = vld [vmem:[#allocation6 + $0x10] sm:$0xff]
    %v829 = vld [vmem:[#allocation6 + $0x18] sm:$0xff]
    %v830 = vld [vmem:[#allocation6 + $0x20] sm:$0xff]
    %v831 = vld [vmem:[#allocation6 + $0x28] sm:$0xff]
    %v832 = vld [vmem:[#allocation6 + $0x30] sm:$0xff]
    %v833 = vld [vmem:[#allocation6 + $0x38] sm:$0xff]
    %v834 = vld [vmem:[#allocation6 + $0x40] sm:$0xff]
    %v835 = vld [vmem:[#allocation6 + $0x48] sm:$0xff]
    %v836 = vld [vmem:[#allocation6 + $0x50] sm:$0xff]
    %v837 = vld [vmem:[#allocation6 + $0x58] sm:$0xff]
    %v838 = vld [vmem:[#allocation6 + $0x60] sm:$0xff]
    %v839 = vld [vmem:[#allocation6 + $0x68] sm:$0xff]
    %v840 = vld [vmem:[#allocation6 + $0x70] sm:$0xff]
    %v841 = vld [vmem:[#allocation6 + $0x78] sm:$0xff]
    %v842 = vld [vmem:[#allocation6 + $0x80] sm:$0xff]
    %v843 = vld [vmem:[#allocation6 + $0x88] sm:$0xff]
    %v844 = vld [vmem:[#allocation6 + $0x90] sm:$0xff]
    %v845 = vld [vmem:[#allocation6 + $0x98] sm:$0xff]
    %v846 = vld [vmem:[#allocation6 + $0xa0] sm:$0xff]
    %v847 = vld [vmem:[#allocation6 + $0xa8] sm:$0xff]
    %v848 = vld [vmem:[#allocation6 + $0xb0] sm:$0xff]
    %v849 = vld [vmem:[#allocation6 + $0xb8] sm:$0xff]
    %v850 = vld [vmem:[#allocation6 + $0xc0] sm:$0xff]
    %v851 = vld [vmem:[#allocation6 + $0xc8] sm:$0xff]
    %v852 = vld [vmem:[#allocation6 + $0xd0] sm:$0xff]
    %v853 = vld [vmem:[#allocation6 + $0xd8] sm:$0xff]
    %v854 = vld [vmem:[#allocation6 + $0xe0] sm:$0xff]
    %v855 = vld [vmem:[#allocation6 + $0xe8] sm:$0xff]
    %v856 = vld [vmem:[#allocation6 + $0xf0] sm:$0xff]
    %v857 = vld [vmem:[#allocation6 + $0xf8] sm:$0xff]
    %v858 = vld [vmem:[#allocation6 + $0x100] sm:$0xff]
    %v859 = vld [vmem:[#allocation6 + $0x108] sm:$0xff]
    %v860 = vld [vmem:[#allocation6 + $0x110] sm:$0xff]
    %v861 = vld [vmem:[#allocation6 + $0x118] sm:$0xff]
    %v862 = vld [vmem:[#allocation6 + $0x120] sm:$0xff]
    %v863 = vld [vmem:[#allocation6 + $0x128] sm:$0xff]
    %v864 = vld [vmem:[#allocation6 + $0x130] sm:$0xff]
    %v865 = vld [vmem:[#allocation6 + $0x138] sm:$0xff]
    %v866 = vld [vmem:[#allocation6 + $0x140] sm:$0xff]
    %v867 = vld [vmem:[#allocation6 + $0x148] sm:$0xff]
    %v868 = vld [vmem:[#allocation6 + $0x150] sm:$0xff]
    %v869 = vld [vmem:[#allocation6 + $0x158] sm:$0xff]
    %v870 = vld [vmem:[#allocation6 + $0x160] sm:$0xff]
    %v871 = vld [vmem:[#allocation6 + $0x168] sm:$0xff]
    %v872 = vld [vmem:[#allocation6 + $0x170] sm:$0xff]
    %v873 = vld [vmem:[#allocation6 + $0x178] sm:$0xff]
    %v874 = vld [vmem:[#allocation6 + $0x180] sm:$0xff]
    %v875 = vld [vmem:[#allocation6 + $0x188] sm:$0xff]
    %v876 = vld [vmem:[#allocation6 + $0x190] sm:$0xff]
    %v877 = vld [vmem:[#allocation6 + $0x198] sm:$0xff]
    %v878 = vld [vmem:[#allocation6 + $0x1a0] sm:$0xff]
    %v879 = vld [vmem:[#allocation6 + $0x1a8] sm:$0xff]
    %v880 = vld [vmem:[#allocation6 + $0x1b0] sm:$0xff]
    %v881 = vld [vmem:[#allocation6 + $0x1b8] sm:$0xff]
    %v882 = vld [vmem:[#allocation6 + $0x1c0] sm:$0xff]
    %v883 = vld [vmem:[#allocation6 + $0x1c8] sm:$0xff]
    %v884 = vld [vmem:[#allocation6 + $0x1d0] sm:$0xff]
    %v885 = vld [vmem:[#allocation6 + $0x1d8] sm:$0xff]
    %v886 = vld [vmem:[#allocation6 + $0x1e0] sm:$0xff]
    %v887 = vld [vmem:[#allocation6 + $0x1e8] sm:$0xff]
    %v888 = vld [vmem:[#allocation6 + $0x1f0] sm:$0xff]
    %v889 = vld [vmem:[#allocation6 + $0x1f8] sm:$0xff]
    %890 = vmatprep.subr.mxu0 %v827
    %891 = vmatpush1.msra.mxu0 %v826
    %892 = vmatprep.subr.mxu0 %v831
    %893 = vmatpush1.msra.mxu0 %v830
    %894 = vmatprep.subr.mxu0 %v835
    %895 = vmatpush1.msra.mxu0 %v834
    %896 = vmatprep.subr.mxu0 %v839
    %897 = vmatpush1.msra.mxu0 %v838
    %898 = vmatprep.subr.mxu0 %v843
    %899 = vmatpush1.msra.mxu0 %v842
    %900 = vmatprep.subr.mxu0 %v847
    %901 = vmatpush1.msra.mxu0 %v846
    %902 = vmatprep.subr.mxu0 %v851
    %903 = vmatpush1.msra.mxu0 %v850
    %904 = vmatprep.subr.mxu0 %v855
    %905 = vmatpush1.msra.mxu0 %v854
    %906 = vmatprep.subr.mxu0 %v859
    %907 = vmatpush1.msra.mxu0 %v858
    %908 = vmatprep.subr.mxu0 %v863
    %909 = vmatpush1.msra.mxu0 %v862
    %910 = vmatprep.subr.mxu0 %v867
    %911 = vmatpush1.msra.mxu0 %v866
    %912 = vmatprep.subr.mxu0 %v871
    %913 = vmatpush1.msra.mxu0 %v870
    %914 = vmatprep.subr.mxu0 %v875
    %915 = vmatpush1.msra.mxu0 %v874
    %916 = vmatprep.subr.mxu0 %v879
    %917 = vmatpush1.msra.mxu0 %v878
    %918 = vmatprep.subr.mxu0 %v883
    %919 = vmatpush1.msra.mxu0 %v882
    %920 = vmatprep.subr.mxu0 %v887
    %921 = vmatpush1.msra.mxu0 %v886
    %922 = vmatprep.subr.mxu0 0.0
    %923 = vmatpush1.msra.mxu0 0.0
    %924 = vmatprep.subr.mxu0 0.0
    %925 = vmatpush1.msra.mxu0 0.0
    %926 = vmatprep.subr.mxu0 0.0
    %927 = vmatpush1.msra.mxu0 0.0
    %928 = vmatprep.subr.mxu0 0.0
    %929 = vmatpush1.msra.mxu0 0.0
    %930 = vmatprep.subr.mxu0 0.0
    %931 = vmatpush1.msra.mxu0 0.0
    %932 = vmatprep.subr.mxu0 0.0
    %933 = vmatpush1.msra.mxu0 0.0
    %934 = vmatprep.subr.mxu0 0.0
    %935 = vmatpush1.msra.mxu0 0.0
    %936 = vmatprep.subr.mxu0 0.0
    %937 = vmatpush1.msra.mxu0 0.0
    %938 = vmatprep.subr.mxu0 0.0
    %939 = vmatpush1.msra.mxu0 0.0
    %940 = vmatprep.subr.mxu0 0.0
    %941 = vmatpush1.msra.mxu0 0.0
    %942 = vmatprep.subr.mxu0 0.0
    %943 = vmatpush1.msra.mxu0 0.0
    %944 = vmatprep.subr.mxu0 0.0
    %945 = vmatpush1.msra.mxu0 0.0
    %946 = vmatprep.subr.mxu0 0.0
    %947 = vmatpush1.msra.mxu0 0.0
    %948 = vmatprep.subr.mxu0 0.0
    %949 = vmatpush1.msra.mxu0 0.0
    %950 = vmatprep.subr.mxu0 0.0
    %951 = vmatpush1.msra.mxu0 0.0
    %952 = vmatprep.subr.mxu0 0.0
    %953 = vmatpush1.msra.mxu0 0.0
    %954 = vmatprep.mubr.f32.mxu0 0.0
    %955 = vmatmul.mubr.f32.gmra.mrb[0].mxu0 %v816
    %v956 = vpop.f32.mrb[0].mxu0
    %v957 = vadd.f32 0.0, %v956
    %v958 = vpop.f32.mrb[0].mxu0
    %v959 = vadd.f32 0.0, %v958
    %960 = vdwg.mxu0
    %961 = vmatprep.subr.mxu0 %v829
    %962 = vmatpush1.msra.mxu0 %v828
    %963 = vmatprep.subr.mxu0 %v833
    %964 = vmatpush1.msra.mxu0 %v832
    %965 = vmatprep.subr.mxu0 %v837
    %966 = vmatpush1.msra.mxu0 %v836
    %967 = vmatprep.subr.mxu0 %v841
    %968 = vmatpush1.msra.mxu0 %v840
    %969 = vmatprep.subr.mxu0 %v845
    %970 = vmatpush1.msra.mxu0 %v844
    %971 = vmatprep.subr.mxu0 %v849
    %972 = vmatpush1.msra.mxu0 %v848
    %973 = vmatprep.subr.mxu0 %v853
    %974 = vmatpush1.msra.mxu0 %v852
    %975 = vmatprep.subr.mxu0 %v857
    %976 = vmatpush1.msra.mxu0 %v856
    %977 = vmatprep.subr.mxu0 %v861
    %978 = vmatpush1.msra.mxu0 %v860
    %979 = vmatprep.subr.mxu0 %v865
    %980 = vmatpush1.msra.mxu0 %v864
    %981 = vmatprep.subr.mxu0 %v869
    %982 = vmatpush1.msra.mxu0 %v868
    %983 = vmatprep.subr.mxu0 %v873
    %984 = vmatpush1.msra.mxu0 %v872
    %985 = vmatprep.subr.mxu0 %v877
    %986 = vmatpush1.msra.mxu0 %v876
    %987 = vmatprep.subr.mxu0 %v881
    %988 = vmatpush1.msra.mxu0 %v880
    %989 = vmatprep.subr.mxu0 %v885
    %990 = vmatpush1.msra.mxu0 %v884
    %991 = vmatprep.subr.mxu0 %v889
    %992 = vmatpush1.msra.mxu0 %v888
    %993 = vmatprep.subr.mxu0 0.0
    %994 = vmatpush1.msra.mxu0 0.0
    %995 = vmatprep.subr.mxu0 0.0
    %996 = vmatpush1.msra.mxu0 0.0
    %997 = vmatprep.subr.mxu0 0.0
    %998 = vmatpush1.msra.mxu0 0.0
    %999 = vmatprep.subr.mxu0 0.0
    %1000 = vmatpush1.msra.mxu0 0.0
    %1001 = vmatprep.subr.mxu0 0.0
    %1002 = vmatpush1.msra.mxu0 0.0
    %1003 = vmatprep.subr.mxu0 0.0
    %1004 = vmatpush1.msra.mxu0 0.0
    %1005 = vmatprep.subr.mxu0 0.0
    %1006 = vmatpush1.msra.mxu0 0.0
    %1007 = vmatprep.subr.mxu0 0.0
    %1008 = vmatpush1.msra.mxu0 0.0
    %1009 = vmatprep.subr.mxu0 0.0
    %1010 = vmatpush1.msra.mxu0 0.0
    %1011 = vmatprep.subr.mxu0 0.0
    %1012 = vmatpush1.msra.mxu0 0.0
    %1013 = vmatprep.subr.mxu0 0.0
    %1014 = vmatpush1.msra.mxu0 0.0
    %1015 = vmatprep.subr.mxu0 0.0
    %1016 = vmatpush1.msra.mxu0 0.0
    %1017 = vmatprep.subr.mxu0 0.0
    %1018 = vmatpush1.msra.mxu0 0.0
    %1019 = vmatprep.subr.mxu0 0.0
    %1020 = vmatpush1.msra.mxu0 0.0
    %1021 = vmatprep.subr.mxu0 0.0
    %1022 = vmatpush1.msra.mxu0 0.0
    %1023 = vmatprep.subr.mxu0 0.0
    %1024 = vmatpush1.msra.mxu0 0.0
    %1025 = vmatprep.mubr.f32.mxu0 0.0
    %1026 = vmatmul.mubr.f32.gmra.mrb[0].mxu0 %v816
    %v1027 = vpop.f32.mrb[0].mxu0
    %v1028 = vadd.f32 0.0, %v1027
    %v1029 = vpop.f32.mrb[0].mxu0
    %v1030 = vadd.f32 0.0, %v1029
    %1031 = vdwg.mxu0
    %v1032 = vadd.f32 %v822, %v957
    %v1033 = vadd.f32 %v823, %v959
    %v1034 = vadd.f32 %v824, %v1028
    %v1035 = vadd.f32 %v825, %v1030
    %v1036 = vmul.f32 %v1032, 0.5
    %v1037 = vmul.f32 %v1033, 0.5
    %v1038 = vmul.f32 %v1034, 0.5
    %v1039 = vtanh.pop %v1036
    %v1040 = vtanh.pop %v1037
    %v1041 = vtanh.pop %v1038
    %v1042 = vmul.f32 %v1039, 0.5
    %v1043 = vmul.f32 %v1040, 0.5
    %v1044 = vmul.f32 %v1041, 0.5
    %v1045 = vadd.f32 %v1042, 0.5
    %v1046 = vadd.f32 %v1043, 0.5
    %v1047 = vadd.f32 %v1044, 0.5
    %v1048 = vtanh.pop %v1035
    %v1049 = vmul.f32 %v1046, %v814
    %v1050 = vmul.f32 %v1045, %v1048
    %v1051 = vadd.f32 %v1049, %v1050
    %v1052 = vtanh.pop %v1051
    %v1053 = vmul.f32 %v1047, %v1052
    %s1054 = scalar_lea.vmem [#allocation2], 16
    %1055 = vst [vmem:[%s1054] sm:$0xff] %v1053
    %s1056 = smul.u32 3, 4
    %s1057 = smul.addr %s1056, 8
    %s1058 = scalar_lea.vmem [#allocation3], %s1057
    %v1059 = vld [vmem:[%s1058] sm:$0xff]
    %v1060 = vld [vmem:[%s1058 + $0x8] sm:$0xff]
    %v1061 = vld [vmem:[%s1058 + $0x10] sm:$0xff]
    %v1062 = vld [vmem:[%s1058 + $0x18] sm:$0xff]
    %v1063 = vld [vmem:[#allocation6] sm:$0xff]
    %v1064 = vld [vmem:[#allocation6 + $0x8] sm:$0xff]
    %v1065 = vld [vmem:[#allocation6 + $0x10] sm:$0xff]
    %v1066 = vld [vmem:[#allocation6 + $0x18] sm:$0xff]
    %v1067 = vld [vmem:[#allocation6 + $0x20] sm:$0xff]
    %v1068 = vld [vmem:[#allocation6 + $0x28] sm:$0xff]
    %v1069 = vld [vmem:[#allocation6 + $0x30] sm:$0xff]
    %v1070 = vld [vmem:[#allocation6 + $0x38] sm:$0xff]
    %v1071 = vld [vmem:[#allocation6 + $0x40] sm:$0xff]
    %v1072 = vld [vmem:[#allocation6 + $0x48] sm:$0xff]
    %v1073 = vld [vmem:[#allocation6 + $0x50] sm:$0xff]
    %v1074 = vld [vmem:[#allocation6 + $0x58] sm:$0xff]
    %v1075 = vld [vmem:[#allocation6 + $0x60] sm:$0xff]
    %v1076 = vld [vmem:[#allocation6 + $0x68] sm:$0xff]
    %v1077 = vld [vmem:[#allocation6 + $0x70] sm:$0xff]
    %v1078 = vld [vmem:[#allocation6 + $0x78] sm:$0xff]
    %v1079 = vld [vmem:[#allocation6 + $0x80] sm:$0xff]
    %v1080 = vld [vmem:[#allocation6 + $0x88] sm:$0xff]
    %v1081 = vld [vmem:[#allocation6 + $0x90] sm:$0xff]
    %v1082 = vld [vmem:[#allocation6 + $0x98] sm:$0xff]
    %v1083 = vld [vmem:[#allocation6 + $0xa0] sm:$0xff]
    %v1084 = vld [vmem:[#allocation6 + $0xa8] sm:$0xff]
    %v1085 = vld [vmem:[#allocation6 + $0xb0] sm:$0xff]
    %v1086 = vld [vmem:[#allocation6 + $0xb8] sm:$0xff]
    %v1087 = vld [vmem:[#allocation6 + $0xc0] sm:$0xff]
    %v1088 = vld [vmem:[#allocation6 + $0xc8] sm:$0xff]
    %v1089 = vld [vmem:[#allocation6 + $0xd0] sm:$0xff]
    %v1090 = vld [vmem:[#allocation6 + $0xd8] sm:$0xff]
    %v1091 = vld [vmem:[#allocation6 + $0xe0] sm:$0xff]
    %v1092 = vld [vmem:[#allocation6 + $0xe8] sm:$0xff]
    %v1093 = vld [vmem:[#allocation6 + $0xf0] sm:$0xff]
    %v1094 = vld [vmem:[#allocation6 + $0xf8] sm:$0xff]
    %v1095 = vld [vmem:[#allocation6 + $0x100] sm:$0xff]
    %v1096 = vld [vmem:[#allocation6 + $0x108] sm:$0xff]
    %v1097 = vld [vmem:[#allocation6 + $0x110] sm:$0xff]
    %v1098 = vld [vmem:[#allocation6 + $0x118] sm:$0xff]
    %v1099 = vld [vmem:[#allocation6 + $0x120] sm:$0xff]
    %v1100 = vld [vmem:[#allocation6 + $0x128] sm:$0xff]
    %v1101 = vld [vmem:[#allocation6 + $0x130] sm:$0xff]
    %v1102 = vld [vmem:[#allocation6 + $0x138] sm:$0xff]
    %v1103 = vld [vmem:[#allocation6 + $0x140] sm:$0xff]
    %v1104 = vld [vmem:[#allocation6 + $0x148] sm:$0xff]
    %v1105 = vld [vmem:[#allocation6 + $0x150] sm:$0xff]
    %v1106 = vld [vmem:[#allocation6 + $0x158] sm:$0xff]
    %v1107 = vld [vmem:[#allocation6 + $0x160] sm:$0xff]
    %v1108 = vld [vmem:[#allocation6 + $0x168] sm:$0xff]
    %v1109 = vld [vmem:[#allocation6 + $0x170] sm:$0xff]
    %v1110 = vld [vmem:[#allocation6 + $0x178] sm:$0xff]
    %v1111 = vld [vmem:[#allocation6 + $0x180] sm:$0xff]
    %v1112 = vld [vmem:[#allocation6 + $0x188] sm:$0xff]
    %v1113 = vld [vmem:[#allocation6 + $0x190] sm:$0xff]
    %v1114 = vld [vmem:[#allocation6 + $0x198] sm:$0xff]
    %v1115 = vld [vmem:[#allocation6 + $0x1a0] sm:$0xff]
    %v1116 = vld [vmem:[#allocation6 + $0x1a8] sm:$0xff]
    %v1117 = vld [vmem:[#allocation6 + $0x1b0] sm:$0xff]
    %v1118 = vld [vmem:[#allocation6 + $0x1b8] sm:$0xff]
    %v1119 = vld [vmem:[#allocation6 + $0x1c0] sm:$0xff]
    %v1120 = vld [vmem:[#allocation6 + $0x1c8] sm:$0xff]
    %v1121 = vld [vmem:[#allocation6 + $0x1d0] sm:$0xff]
    %v1122 = vld [vmem:[#allocation6 + $0x1d8] sm:$0xff]
    %v1123 = vld [vmem:[#allocation6 + $0x1e0] sm:$0xff]
    %v1124 = vld [vmem:[#allocation6 + $0x1e8] sm:$0xff]
    %v1125 = vld [vmem:[#allocation6 + $0x1f0] sm:$0xff]
    %v1126 = vld [vmem:[#allocation6 + $0x1f8] sm:$0xff]
    %1127 = vmatprep.subr.mxu0 %v1064
    %1128 = vmatpush1.msra.mxu0 %v1063
    %1129 = vmatprep.subr.mxu0 %v1068
    %1130 = vmatpush1.msra.mxu0 %v1067
    %1131 = vmatprep.subr.mxu0 %v1072
    %1132 = vmatpush1.msra.mxu0 %v1071
    %1133 = vmatprep.subr.mxu0 %v1076
    %1134 = vmatpush1.msra.mxu0 %v1075
    %1135 = vmatprep.subr.mxu0 %v1080
    %1136 = vmatpush1.msra.mxu0 %v1079
    %1137 = vmatprep.subr.mxu0 %v1084
    %1138 = vmatpush1.msra.mxu0 %v1083
    %1139 = vmatprep.subr.mxu0 %v1088
    %1140 = vmatpush1.msra.mxu0 %v1087
    %1141 = vmatprep.subr.mxu0 %v1092
    %1142 = vmatpush1.msra.mxu0 %v1091
    %1143 = vmatprep.subr.mxu0 %v1096
    %1144 = vmatpush1.msra.mxu0 %v1095
    %1145 = vmatprep.subr.mxu0 %v1100
    %1146 = vmatpush1.msra.mxu0 %v1099
    %1147 = vmatprep.subr.mxu0 %v1104
    %1148 = vmatpush1.msra.mxu0 %v1103
    %1149 = vmatprep.subr.mxu0 %v1108
    %1150 = vmatpush1.msra.mxu0 %v1107
    %1151 = vmatprep.subr.mxu0 %v1112
    %1152 = vmatpush1.msra.mxu0 %v1111
    %1153 = vmatprep.subr.mxu0 %v1116
    %1154 = vmatpush1.msra.mxu0 %v1115
    %1155 = vmatprep.subr.mxu0 %v1120
    %1156 = vmatpush1.msra.mxu0 %v1119
    %1157 = vmatprep.subr.mxu0 %v1124
    %1158 = vmatpush1.msra.mxu0 %v1123
    %1159 = vmatprep.subr.mxu0 0.0
    %1160 = vmatpush1.msra.mxu0 0.0
    %1161 = vmatprep.subr.mxu0 0.0
    %1162 = vmatpush1.msra.mxu0 0.0
    %1163 = vmatprep.subr.mxu0 0.0
    %1164 = vmatpush1.msra.mxu0 0.0
    %1165 = vmatprep.subr.mxu0 0.0
    %1166 = vmatpush1.msra.mxu0 0.0
    %1167 = vmatprep.subr.mxu0 0.0
    %1168 = vmatpush1.msra.mxu0 0.0
    %1169 = vmatprep.subr.mxu0 0.0
    %1170 = vmatpush1.msra.mxu0 0.0
    %1171 = vmatprep.subr.mxu0 0.0
    %1172 = vmatpush1.msra.mxu0 0.0
    %1173 = vmatprep.subr.mxu0 0.0
    %1174 = vmatpush1.msra.mxu0 0.0
    %1175 = vmatprep.subr.mxu0 0.0
    %1176 = vmatpush1.msra.mxu0 0.0
    %1177 = vmatprep.subr.mxu0 0.0
    %1178 = vmatpush1.msra.mxu0 0.0
    %1179 = vmatprep.subr.mxu0 0.0
    %1180 = vmatpush1.msra.mxu0 0.0
    %1181 = vmatprep.subr.mxu0 0.0
    %1182 = vmatpush1.msra.mxu0 0.0
    %1183 = vmatprep.subr.mxu0 0.0
    %1184 = vmatpush1.msra.mxu0 0.0
    %1185 = vmatprep.subr.mxu0 0.0
    %1186 = vmatpush1.msra.mxu0 0.0
    %1187 = vmatprep.subr.mxu0 0.0
    %1188 = vmatpush1.msra.mxu0 0.0
    %1189 = vmatprep.subr.mxu0 0.0
    %1190 = vmatpush1.msra.mxu0 0.0
    %1191 = vmatprep.mubr.f32.mxu0 0.0
    %1192 = vmatmul.mubr.f32.gmra.mrb[0].mxu0 %v1053
    %v1193 = vpop.f32.mrb[0].mxu0
    %v1194 = vadd.f32 0.0, %v1193
    %v1195 = vpop.f32.mrb[0].mxu0
    %v1196 = vadd.f32 0.0, %v1195
    %1197 = vdwg.mxu0
    %1198 = vmatprep.subr.mxu0 %v1066
    %1199 = vmatpush1.msra.mxu0 %v1065
    %1200 = vmatprep.subr.mxu0 %v1070
    %1201 = vmatpush1.msra.mxu0 %v1069
    %1202 = vmatprep.subr.mxu0 %v1074
    %1203 = vmatpush1.msra.mxu0 %v1073
    %1204 = vmatprep.subr.mxu0 %v1078
    %1205 = vmatpush1.msra.mxu0 %v1077
    %1206 = vmatprep.subr.mxu0 %v1082
    %1207 = vmatpush1.msra.mxu0 %v1081
    %1208 = vmatprep.subr.mxu0 %v1086
    %1209 = vmatpush1.msra.mxu0 %v1085
    %1210 = vmatprep.subr.mxu0 %v1090
    %1211 = vmatpush1.msra.mxu0 %v1089
    %1212 = vmatprep.subr.mxu0 %v1094
    %1213 = vmatpush1.msra.mxu0 %v1093
    %1214 = vmatprep.subr.mxu0 %v1098
    %1215 = vmatpush1.msra.mxu0 %v1097
    %1216 = vmatprep.subr.mxu0 %v1102
    %1217 = vmatpush1.msra.mxu0 %v1101
    %1218 = vmatprep.subr.mxu0 %v1106
    %1219 = vmatpush1.msra.mxu0 %v1105
    %1220 = vmatprep.subr.mxu0 %v1110
    %1221 = vmatpush1.msra.mxu0 %v1109
    %1222 = vmatprep.subr.mxu0 %v1114
    %1223 = vmatpush1.msra.mxu0 %v1113
    %1224 = vmatprep.subr.mxu0 %v1118
    %1225 = vmatpush1.msra.mxu0 %v1117
    %1226 = vmatprep.subr.mxu0 %v1122
    %1227 = vmatpush1.msra.mxu0 %v1121
    %1228 = vmatprep.subr.mxu0 %v1126
    %1229 = vmatpush1.msra.mxu0 %v1125
    %1230 = vmatprep.subr.mxu0 0.0
    %1231 = vmatpush1.msra.mxu0 0.0
    %1232 = vmatprep.subr.mxu0 0.0
    %1233 = vmatpush1.msra.mxu0 0.0
    %1234 = vmatprep.subr.mxu0 0.0
    %1235 = vmatpush1.msra.mxu0 0.0
    %1236 = vmatprep.subr.mxu0 0.0
    %1237 = vmatpush1.msra.mxu0 0.0
    %1238 = vmatprep.subr.mxu0 0.0
    %1239 = vmatpush1.msra.mxu0 0.0
    %1240 = vmatprep.subr.mxu0 0.0
    %1241 = vmatpush1.msra.mxu0 0.0
    %1242 = vmatprep.subr.mxu0 0.0
    %1243 = vmatpush1.msra.mxu0 0.0
    %1244 = vmatprep.subr.mxu0 0.0
    %1245 = vmatpush1.msra.mxu0 0.0
    %1246 = vmatprep.subr.mxu0 0.0
    %1247 = vmatpush1.msra.mxu0 0.0
    %1248 = vmatprep.subr.mxu0 0.0
    %1249 = vmatpush1.msra.mxu0 0.0
    %1250 = vmatprep.subr.mxu0 0.0
    %1251 = vmatpush1.msra.mxu0 0.0
    %1252 = vmatprep.subr.mxu0 0.0
    %1253 = vmatpush1.msra.mxu0 0.0
    %1254 = vmatprep.subr.mxu0 0.0
    %1255 = vmatpush1.msra.mxu0 0.0
    %1256 = vmatprep.subr.mxu0 0.0
    %1257 = vmatpush1.msra.mxu0 0.0
    %1258 = vmatprep.subr.mxu0 0.0
    %1259 = vmatpush1.msra.mxu0 0.0
    %1260 = vmatprep.subr.mxu0 0.0
    %1261 = vmatpush1.msra.mxu0 0.0
    %1262 = vmatprep.mubr.f32.mxu0 0.0
    %1263 = vmatmul.mubr.f32.gmra.mrb[0].mxu0 %v1053
    %v1264 = vpop.f32.mrb[0].mxu0
    %v1265 = vadd.f32 0.0, %v1264
    %v1266 = vpop.f32.mrb[0].mxu0
    %v1267 = vadd.f32 0.0, %v1266
    %1268 = vdwg.mxu0
    %v1269 = vadd.f32 %v1059, %v1194
    %v1270 = vadd.f32 %v1060, %v1196
    %v1271 = vadd.f32 %v1061, %v1265
    %v1272 = vadd.f32 %v1062, %v1267
    %v1273 = vmul.f32 %v1269, 0.5
    %v1274 = vmul.f32 %v1270, 0.5
    %v1275 = vmul.f32 %v1271, 0.5
    %v1276 = vtanh.pop %v1273
    %v1277 = vtanh.pop %v1274
    %v1278 = vtanh.pop %v1275
    %v1279 = vmul.f32 %v1276, 0.5
    %v1280 = vmul.f32 %v1277, 0.5
    %v1281 = vmul.f32 %v1278, 0.5
    %v1282 = vadd.f32 %v1279, 0.5
    %v1283 = vadd.f32 %v1280, 0.5
    %v1284 = vadd.f32 %v1281, 0.5
    %v1285 = vtanh.pop %v1272
    %v1286 = vmul.f32 %v1283, %v1051
    %v1287 = vmul.f32 %v1282, %v1285
    %v1288 = vadd.f32 %v1286, %v1287
    %v1289 = vtanh.pop %v1288
    %v1290 = vmul.f32 %v1284, %v1289
    %s1291 = scalar_lea.vmem [#allocation2], 24
    %1292 = vst [vmem:[%s1291] sm:$0xff] %v1290
    %s1293 = scalar_lea.vmem %s0, 32
    %v1294 = vld [vmem:[%s1293] sm:$0xff]
    %v1295 = vld [vmem:[%s1293 + $0x8] sm:$0xff]
    %v1296 = vld [vmem:[%s1293 + $0x10] sm:$0xff]
    %v1297 = vld [vmem:[%s1293 + $0x18] sm:$0xff]
    %v1298 = vld [vmem:[#allocation4] sm:$0xff]
    %v1299 = vld [vmem:[#allocation4 + $0x8] sm:$0xff]
    %v1300 = vld [vmem:[#allocation4 + $0x10] sm:$0xff]
    %v1301 = vld [vmem:[#allocation4 + $0x18] sm:$0xff]
    %v1302 = vld [vmem:[#allocation4 + $0x20] sm:$0xff]
    %v1303 = vld [vmem:[#allocation4 + $0x28] sm:$0xff]
    %v1304 = vld [vmem:[#allocation4 + $0x30] sm:$0xff]
    %v1305 = vld [vmem:[#allocation4 + $0x38] sm:$0xff]
    %v1306 = vld [vmem:[#allocation4 + $0x40] sm:$0xff]
    %v1307 = vld [vmem:[#allocation4 + $0x48] sm:$0xff]
    %v1308 = vld [vmem:[#allocation4 + $0x50] sm:$0xff]
    %v1309 = vld [vmem:[#allocation4 + $0x58] sm:$0xff]
    %v1310 = vld [vmem:[#allocation4 + $0x60] sm:$0xff]
    %v1311 = vld [vmem:[#allocation4 + $0x68] sm:$0xff]
    %v1312 = vld [vmem:[#allocation4 + $0x70] sm:$0xff]
    %v1313 = vld [vmem:[#allocation4 + $0x78] sm:$0xff]
    %v1314 = vld [vmem:[#allocation4 + $0x80] sm:$0xff]
    %v1315 = vld [vmem:[#allocation4 + $0x88] sm:$0xff]
    %v1316 = vld [vmem:[#allocation4 + $0x90] sm:$0xff]
    %v1317 = vld [vmem:[#allocation4 + $0x98] sm:$0xff]
    %v1318 = vld [vmem:[#allocation4 + $0xa0] sm:$0xff]
    %v1319 = vld [vmem:[#allocation4 + $0xa8] sm:$0xff]
    %v1320 = vld [vmem:[#allocation4 + $0xb0] sm:$0xff]
    %v1321 = vld [vmem:[#allocation4 + $0xb8] sm:$0xff]
    %v1322 = vld [vmem:[#allocation4 + $0xc0] sm:$0xff]
    %v1323 = vld [vmem:[#allocation4 + $0xc8] sm:$0xff]
    %v1324 = vld [vmem:[#allocation4 + $0xd0] sm:$0xff]
    %v1325 = vld [vmem:[#allocation4 + $0xd8] sm:$0xff]
    %v1326 = vld [vmem:[#allocation4 + $0xe0] sm:$0xff]
    %v1327 = vld [vmem:[#allocation4 + $0xe8] sm:$0xff]
    %v1328 = vld [vmem:[#allocation4 + $0xf0] sm:$0xff]
    %v1329 = vld [vmem:[#allocation4 + $0xf8] sm:$0xff]
    %v1330 = vld [vmem:[#allocation4 + $0x100] sm:$0xff]
    %v1331 = vld [vmem:[#allocation4 + $0x108] sm:$0xff]
    %v1332 = vld [vmem:[#allocation4 + $0x110] sm:$0xff]
    %v1333 = vld [vmem:[#allocation4 + $0x118] sm:$0xff]
    %v1334 = vld [vmem:[#allocation4 + $0x120] sm:$0xff]
    %v1335 = vld [vmem:[#allocation4 + $0x128] sm:$0xff]
    %v1336 = vld [vmem:[#allocation4 + $0x130] sm:$0xff]
    %v1337 = vld [vmem:[#allocation4 + $0x138] sm:$0xff]
    %v1338 = vld [vmem:[#allocation4 + $0x140] sm:$0xff]
    %v1339 = vld [vmem:[#allocation4 + $0x148] sm:$0xff]
    %v1340 = vld [vmem:[#allocation4 + $0x150] sm:$0xff]
    %v1341 = vld [vmem:[#allocation4 + $0x158] sm:$0xff]
    %v1342 = vld [vmem:[#allocation4 + $0x160] sm:$0xff]
    %v1343 = vld [vmem:[#allocation4 + $0x168] sm:$0xff]
    %v1344 = vld [vmem:[#allocation4 + $0x170] sm:$0xff]
    %v1345 = vld [vmem:[#allocation4 + $0x178] sm:$0xff]
    %v1346 = vld [vmem:[#allocation4 + $0x180] sm:$0xff]
    %v1347 = vld [vmem:[#allocation4 + $0x188] sm:$0xff]
    %v1348 = vld [vmem:[#allocation4 + $0x190] sm:$0xff]
    %v1349 = vld [vmem:[#allocation4 + $0x198] sm:$0xff]
    %v1350 = vld [vmem:[#allocation4 + $0x1a0] sm:$0xff]
    %v1351 = vld [vmem:[#allocation4 + $0x1a8] sm:$0xff]
    %v1352 = vld [vmem:[#allocation4 + $0x1b0] sm:$0xff]
    %v1353 = vld [vmem:[#allocation4 + $0x1b8] sm:$0xff]
    %v1354 = vld [vmem:[#allocation4 + $0x1c0] sm:$0xff]
    %v1355 = vld [vmem:[#allocation4 + $0x1c8] sm:$0xff]
    %v1356 = vld [vmem:[#allocation4 + $0x1d0] sm:$0xff]
    %v1357 = vld [vmem:[#allocation4 + $0x1d8] sm:$0xff]
    %v1358 = vld [vmem:[#allocation4 + $0x1e0] sm:$0xff]
    %v1359 = vld [vmem:[#allocation4 + $0x1e8] sm:$0xff]
    %v1360 = vld [vmem:[#allocation4 + $0x1f0] sm:$0xff]
    %v1361 = vld [vmem:[#allocation4 + $0x1f8] sm:$0xff]
    %v1362 = vld [vmem:[%s3] sm:$0xf]
    %v1364 = vlaneseq
    %v1365 = vshrl.u32 %v1364, 7
    %v1366 = vsub.s32 0, %v1365
    %v1367 = vrot.slane %v1362, %v1366
    %v1368 = vlaneseq
    %v1369 = vshrl.u32 %v1368, 7
    %v1370 = vsub.s32 1, %v1369
    %v1371 = vrot.slane %v1362, %v1370
    %v1372 = vlaneseq
    %v1373 = vshrl.u32 %v1372, 7
    %v1374 = vsub.s32 2, %v1373
    %v1375 = vrot.slane %v1362, %v1374
    %v1376 = vlaneseq
    %v1377 = vshrl.u32 %v1376, 7
    %v1378 = vsub.s32 3, %v1377
    %v1379 = vrot.slane %v1362, %v1378
    %1384 = vmatprep.subr.mxu0 %v1299
    %1385 = vmatpush1.msra.mxu0 %v1298
    %1386 = vmatprep.subr.mxu0 %v1303
    %1387 = vmatpush1.msra.mxu0 %v1302
    %1388 = vmatprep.subr.mxu0 %v1307
    %1389 = vmatpush1.msra.mxu0 %v1306
    %1390 = vmatprep.subr.mxu0 %v1311
    %1391 = vmatpush1.msra.mxu0 %v1310
    %1392 = vmatprep.subr.mxu0 %v1315
    %1393 = vmatpush1.msra.mxu0 %v1314
    %1394 = vmatprep.subr.mxu0 %v1319
    %1395 = vmatpush1.msra.mxu0 %v1318
    %1396 = vmatprep.subr.mxu0 %v1323
    %1397 = vmatpush1.msra.mxu0 %v1322
    %1398 = vmatprep.subr.mxu0 %v1327
    %1399 = vmatpush1.msra.mxu0 %v1326
    %1400 = vmatprep.subr.mxu0 %v1331
    %1401 = vmatpush1.msra.mxu0 %v1330
    %1402 = vmatprep.subr.mxu0 %v1335
    %1403 = vmatpush1.msra.mxu0 %v1334
    %1404 = vmatprep.subr.mxu0 %v1339
    %1405 = vmatpush1.msra.mxu0 %v1338
    %1406 = vmatprep.subr.mxu0 %v1343
    %1407 = vmatpush1.msra.mxu0 %v1342
    %1408 = vmatprep.subr.mxu0 %v1347
    %1409 = vmatpush1.msra.mxu0 %v1346
    %1410 = vmatprep.subr.mxu0 %v1351
    %1411 = vmatpush1.msra.mxu0 %v1350
    %1412 = vmatprep.subr.mxu0 %v1355
    %1413 = vmatpush1.msra.mxu0 %v1354
    %1414 = vmatprep.subr.mxu0 %v1359
    %1415 = vmatpush1.msra.mxu0 %v1358
    %1416 = vmatprep.subr.mxu0 0.0
    %1417 = vmatpush1.msra.mxu0 0.0
    %1418 = vmatprep.subr.mxu0 0.0
    %1419 = vmatpush1.msra.mxu0 0.0
    %1420 = vmatprep.subr.mxu0 0.0
    %1421 = vmatpush1.msra.mxu0 0.0
    %1422 = vmatprep.subr.mxu0 0.0
    %1423 = vmatpush1.msra.mxu0 0.0
    %1424 = vmatprep.subr.mxu0 0.0
    %1425 = vmatpush1.msra.mxu0 0.0
    %1426 = vmatprep.subr.mxu0 0.0
    %1427 = vmatpush1.msra.mxu0 0.0
    %1428 = vmatprep.subr.mxu0 0.0
    %1429 = vmatpush1.msra.mxu0 0.0
    %1430 = vmatprep.subr.mxu0 0.0
    %1431 = vmatpush1.msra.mxu0 0.0
    %1432 = vmatprep.subr.mxu0 0.0
    %1433 = vmatpush1.msra.mxu0 0.0
    %1434 = vmatprep.subr.mxu0 0.0
    %1435 = vmatpush1.msra.mxu0 0.0
    %1436 = vmatprep.subr.mxu0 0.0
    %1437 = vmatpush1.msra.mxu0 0.0
    %1438 = vmatprep.subr.mxu0 0.0
    %1439 = vmatpush1.msra.mxu0 0.0
    %1440 = vmatprep.subr.mxu0 0.0
    %1441 = vmatpush1.msra.mxu0 0.0
    %1442 = vmatprep.subr.mxu0 0.0
    %1443 = vmatpush1.msra.mxu0 0.0
    %1444 = vmatprep.subr.mxu0 0.0
    %1445 = vmatpush1.msra.mxu0 0.0
    %1446 = vmatprep.subr.mxu0 0.0
    %1447 = vmatpush1.msra.mxu0 0.0
    %1448 = vmatprep.mubr.f32.mxu0 0.0
    %1449 = vmatmul.mubr.f32.gmra.mrb[0].mxu0 %v1294
    %v1450 = vpop.f32.mrb[0].mxu0
    %v1451 = vadd.f32 %v1367, %v1450
    %v1452 = vpop.f32.mrb[0].mxu0
    %v1453 = vadd.f32 %v1371, %v1452
    %1454 = vmatprep.mubr.f32.mxu0 0.0
    %1455 = vmatmul.mubr.f32.gmra.mrb[0].mxu0 %v1295
    %v1456 = vpop.f32.mrb[0].mxu0
    %v1457 = vadd.f32 %v1367, %v1456
    %v1458 = vpop.f32.mrb[0].mxu0
    %v1459 = vadd.f32 %v1371, %v1458
    %1460 = vmatprep.mubr.f32.mxu0 0.0
    %1461 = vmatmul.mubr.f32.gmra.mrb[0].mxu0 %v1296
    %v1462 = vpop.f32.mrb[0].mxu0
    %v1463 = vadd.f32 %v1367, %v1462
    %v1464 = vpop.f32.mrb[0].mxu0
    %v1465 = vadd.f32 %v1371, %v1464
    %1466 = vmatprep.mubr.f32.mxu0 0.0
    %1467 = vmatmul.mubr.f32.gmra.mrb[0].mxu0 %v1297
    %v1468 = vpop.f32.mrb[0].mxu0
    %v1469 = vadd.f32 %v1367, %v1468
    %v1470 = vpop.f32.mrb[0].mxu0
    %v1471 = vadd.f32 %v1371, %v1470
    %1472 = vdwg.mxu0
    %1473 = vmatprep.subr.mxu0 %v1301
    %1474 = vmatpush1.msra.mxu0 %v1300
    %1475 = vmatprep.subr.mxu0 %v1305
    %1476 = vmatpush1.msra.mxu0 %v1304
    %1477 = vmatprep.subr.mxu0 %v1309
    %1478 = vmatpush1.msra.mxu0 %v1308
    %1479 = vmatprep.subr.mxu0 %v1313
    %1480 = vmatpush1.msra.mxu0 %v1312
    %1481 = vmatprep.subr.mxu0 %v1317
    %1482 = vmatpush1.msra.mxu0 %v1316
    %1483 = vmatprep.subr.mxu0 %v1321
    %1484 = vmatpush1.msra.mxu0 %v1320
    %1485 = vmatprep.subr.mxu0 %v1325
    %1486 = vmatpush1.msra.mxu0 %v1324
    %1487 = vmatprep.subr.mxu0 %v1329
    %1488 = vmatpush1.msra.mxu0 %v1328
    %1489 = vmatprep.subr.mxu0 %v1333
    %1490 = vmatpush1.msra.mxu0 %v1332
    %1491 = vmatprep.subr.mxu0 %v1337
    %1492 = vmatpush1.msra.mxu0 %v1336
    %1493 = vmatprep.subr.mxu0 %v1341
    %1494 = vmatpush1.msra.mxu0 %v1340
    %1495 = vmatprep.subr.mxu0 %v1345
    %1496 = vmatpush1.msra.mxu0 %v1344
    %1497 = vmatprep.subr.mxu0 %v1349
    %1498 = vmatpush1.msra.mxu0 %v1348
    %1499 = vmatprep.subr.mxu0 %v1353
    %1500 = vmatpush1.msra.mxu0 %v1352
    %1501 = vmatprep.subr.mxu0 %v1357
    %1502 = vmatpush1.msra.mxu0 %v1356
    %1503 = vmatprep.subr.mxu0 %v1361
    %1504 = vmatpush1.msra.mxu0 %v1360
    %1505 = vmatprep.subr.mxu0 0.0
    %1506 = vmatpush1.msra.mxu0 0.0
    %1507 = vmatprep.subr.mxu0 0.0
    %1508 = vmatpush1.msra.mxu0 0.0
    %1509 = vmatprep.subr.mxu0 0.0
    %1510 = vmatpush1.msra.mxu0 0.0
    %1511 = vmatprep.subr.mxu0 0.0
    %1512 = vmatpush1.msra.mxu0 0.0
    %1513 = vmatprep.subr.mxu0 0.0
    %1514 = vmatpush1.msra.mxu0 0.0
    %1515 = vmatprep.subr.mxu0 0.0
    %1516 = vmatpush1.msra.mxu0 0.0
    %1517 = vmatprep.subr.mxu0 0.0
    %1518 = vmatpush1.msra.mxu0 0.0
    %1519 = vmatprep.subr.mxu0 0.0
    %1520 = vmatpush1.msra.mxu0 0.0
    %1521 = vmatprep.subr.mxu0 0.0
    %1522 = vmatpush1.msra.mxu0 0.0
    %1523 = vmatprep.subr.mxu0 0.0
    %1524 = vmatpush1.msra.mxu0 0.0
    %1525 = vmatprep.subr.mxu0 0.0
    %1526 = vmatpush1.msra.mxu0 0.0
    %1527 = vmatprep.subr.mxu0 0.0
    %1528 = vmatpush1.msra.mxu0 0.0
    %1529 = vmatprep.subr.mxu0 0.0
    %1530 = vmatpush1.msra.mxu0 0.0
    %1531 = vmatprep.subr.mxu0 0.0
    %1532 = vmatpush1.msra.mxu0 0.0
    %1533 = vmatprep.subr.mxu0 0.0
    %1534 = vmatpush1.msra.mxu0 0.0
    %1535 = vmatprep.subr.mxu0 0.0
    %1536 = vmatpush1.msra.mxu0 0.0
    %1537 = vmatprep.mubr.f32.mxu0 0.0
    %1538 = vmatmul.mubr.f32.gmra.mrb[0].mxu0 %v1294
    %v1539 = vpop.f32.mrb[0].mxu0
    %v1540 = vadd.f32 %v1375, %v1539
    %v1541 = vpop.f32.mrb[0].mxu0
    %v1542 = vadd.f32 %v1379, %v1541
    %1543 = vmatprep.mubr.f32.mxu0 0.0
    %1544 = vmatmul.mubr.f32.gmra.mrb[0].mxu0 %v1295
    %v1545 = vpop.f32.mrb[0].mxu0
    %v1546 = vadd.f32 %v1375, %v1545
    %v1547 = vpop.f32.mrb[0].mxu0
    %v1548 = vadd.f32 %v1379, %v1547
    %1549 = vmatprep.mubr.f32.mxu0 0.0
    %1550 = vmatmul.mubr.f32.gmra.mrb[0].mxu0 %v1296
    %v1551 = vpop.f32.mrb[0].mxu0
    %v1552 = vadd.f32 %v1375, %v1551
    %v1553 = vpop.f32.mrb[0].mxu0
    %v1554 = vadd.f32 %v1379, %v1553
    %1555 = vmatprep.mubr.f32.mxu0 0.0
    %1556 = vmatmul.mubr.f32.gmra.mrb[0].mxu0 %v1297
    %v1557 = vpop.f32.mrb[0].mxu0
    %v1558 = vadd.f32 %v1375, %v1557
    %v1559 = vpop.f32.mrb[0].mxu0
    %v1560 = vadd.f32 %v1379, %v1559
    %1561 = vdwg.mxu0
    %1562 = vst [vmem:[#allocation3] sm:$0xff] %v1451
    %1563 = vst [vmem:[#allocation3 + $0x8] sm:$0xff] %v1453
    %1564 = vst [vmem:[#allocation3 + $0x10] sm:$0xff] %v1540
    %1565 = vst [vmem:[#allocation3 + $0x18] sm:$0xff] %v1542
    %1566 = vst [vmem:[#allocation3 + $0x20] sm:$0xff] %v1457
    %1567 = vst [vmem:[#allocation3 + $0x28] sm:$0xff] %v1459
    %1568 = vst [vmem:[#allocation3 + $0x30] sm:$0xff] %v1546
    %1569 = vst [vmem:[#allocation3 + $0x38] sm:$0xff] %v1548
    %1570 = vst [vmem:[#allocation3 + $0x40] sm:$0xff] %v1463
    %1571 = vst [vmem:[#allocation3 + $0x48] sm:$0xff] %v1465
    %1572 = vst [vmem:[#allocation3 + $0x50] sm:$0xff] %v1552
    %1573 = vst [vmem:[#allocation3 + $0x58] sm:$0xff] %v1554
    %1574 = vst [vmem:[#allocation3 + $0x60] sm:$0xff] %v1469
    %1575 = vst [vmem:[#allocation3 + $0x68] sm:$0xff] %v1471
    %1576 = vst [vmem:[#allocation3 + $0x70] sm:$0xff] %v1558
    %1577 = vst [vmem:[#allocation3 + $0x78] sm:$0xff] %v1560
    %v1578 = vld [vmem:[%s348] sm:$0xff]
    %v1579 = vld [vmem:[%s348 + $0x8] sm:$0xff]
    %v1580 = vld [vmem:[%s348 + $0x10] sm:$0xff]
    %v1581 = vld [vmem:[%s348 + $0x18] sm:$0xff]
    %v1582 = vld [vmem:[#allocation6] sm:$0xff]
    %v1583 = vld [vmem:[#allocation6 + $0x8] sm:$0xff]
    %v1584 = vld [vmem:[#allocation6 + $0x10] sm:$0xff]
    %v1585 = vld [vmem:[#allocation6 + $0x18] sm:$0xff]
    %v1586 = vld [vmem:[#allocation6 + $0x20] sm:$0xff]
    %v1587 = vld [vmem:[#allocation6 + $0x28] sm:$0xff]
    %v1588 = vld [vmem:[#allocation6 + $0x30] sm:$0xff]
    %v1589 = vld [vmem:[#allocation6 + $0x38] sm:$0xff]
    %v1590 = vld [vmem:[#allocation6 + $0x40] sm:$0xff]
    %v1591 = vld [vmem:[#allocation6 + $0x48] sm:$0xff]
    %v1592 = vld [vmem:[#allocation6 + $0x50] sm:$0xff]
    %v1593 = vld [vmem:[#allocation6 + $0x58] sm:$0xff]
    %v1594 = vld [vmem:[#allocation6 + $0x60] sm:$0xff]
    %v1595 = vld [vmem:[#allocation6 + $0x68] sm:$0xff]
    %v1596 = vld [vmem:[#allocation6 + $0x70] sm:$0xff]
    %v1597 = vld [vmem:[#allocation6 + $0x78] sm:$0xff]
    %v1598 = vld [vmem:[#allocation6 + $0x80] sm:$0xff]
    %v1599 = vld [vmem:[#allocation6 + $0x88] sm:$0xff]
    %v1600 = vld [vmem:[#allocation6 + $0x90] sm:$0xff]
    %v1601 = vld [vmem:[#allocation6 + $0x98] sm:$0xff]
    %v1602 = vld [vmem:[#allocation6 + $0xa0] sm:$0xff]
    %v1603 = vld [vmem:[#allocation6 + $0xa8] sm:$0xff]
    %v1604 = vld [vmem:[#allocation6 + $0xb0] sm:$0xff]
    %v1605 = vld [vmem:[#allocation6 + $0xb8] sm:$0xff]
    %v1606 = vld [vmem:[#allocation6 + $0xc0] sm:$0xff]
    %v1607 = vld [vmem:[#allocation6 + $0xc8] sm:$0xff]
    %v1608 = vld [vmem:[#allocation6 + $0xd0] sm:$0xff]
    %v1609 = vld [vmem:[#allocation6 + $0xd8] sm:$0xff]
    %v1610 = vld [vmem:[#allocation6 + $0xe0] sm:$0xff]
    %v1611 = vld [vmem:[#allocation6 + $0xe8] sm:$0xff]
    %v1612 = vld [vmem:[#allocation6 + $0xf0] sm:$0xff]
    %v1613 = vld [vmem:[#allocation6 + $0xf8] sm:$0xff]
    %v1614 = vld [vmem:[#allocation6 + $0x100] sm:$0xff]
    %v1615 = vld [vmem:[#allocation6 + $0x108] sm:$0xff]
    %v1616 = vld [vmem:[#allocation6 + $0x110] sm:$0xff]
    %v1617 = vld [vmem:[#allocation6 + $0x118] sm:$0xff]
    %v1618 = vld [vmem:[#allocation6 + $0x120] sm:$0xff]
    %v1619 = vld [vmem:[#allocation6 + $0x128] sm:$0xff]
    %v1620 = vld [vmem:[#allocation6 + $0x130] sm:$0xff]
    %v1621 = vld [vmem:[#allocation6 + $0x138] sm:$0xff]
    %v1622 = vld [vmem:[#allocation6 + $0x140] sm:$0xff]
    %v1623 = vld [vmem:[#allocation6 + $0x148] sm:$0xff]
    %v1624 = vld [vmem:[#allocation6 + $0x150] sm:$0xff]
    %v1625 = vld [vmem:[#allocation6 + $0x158] sm:$0xff]
    %v1626 = vld [vmem:[#allocation6 + $0x160] sm:$0xff]
    %v1627 = vld [vmem:[#allocation6 + $0x168] sm:$0xff]
    %v1628 = vld [vmem:[#allocation6 + $0x170] sm:$0xff]
    %v1629 = vld [vmem:[#allocation6 + $0x178] sm:$0xff]
    %v1630 = vld [vmem:[#allocation6 + $0x180] sm:$0xff]
    %v1631 = vld [vmem:[#allocation6 + $0x188] sm:$0xff]
    %v1632 = vld [vmem:[#allocation6 + $0x190] sm:$0xff]
    %v1633 = vld [vmem:[#allocation6 + $0x198] sm:$0xff]
    %v1634 = vld [vmem:[#allocation6 + $0x1a0] sm:$0xff]
    %v1635 = vld [vmem:[#allocation6 + $0x1a8] sm:$0xff]
    %v1636 = vld [vmem:[#allocation6 + $0x1b0] sm:$0xff]
    %v1637 = vld [vmem:[#allocation6 + $0x1b8] sm:$0xff]
    %v1638 = vld [vmem:[#allocation6 + $0x1c0] sm:$0xff]
    %v1639 = vld [vmem:[#allocation6 + $0x1c8] sm:$0xff]
    %v1640 = vld [vmem:[#allocation6 + $0x1d0] sm:$0xff]
    %v1641 = vld [vmem:[#allocation6 + $0x1d8] sm:$0xff]
    %v1642 = vld [vmem:[#allocation6 + $0x1e0] sm:$0xff]
    %v1643 = vld [vmem:[#allocation6 + $0x1e8] sm:$0xff]
    %v1644 = vld [vmem:[#allocation6 + $0x1f0] sm:$0xff]
    %v1645 = vld [vmem:[#allocation6 + $0x1f8] sm:$0xff]
    %1646 = vmatprep.subr.mxu0 %v1583
    %1647 = vmatpush1.msra.mxu0 %v1582
    %1648 = vmatprep.subr.mxu0 %v1587
    %1649 = vmatpush1.msra.mxu0 %v1586
    %1650 = vmatprep.subr.mxu0 %v1591
    %1651 = vmatpush1.msra.mxu0 %v1590
    %1652 = vmatprep.subr.mxu0 %v1595
    %1653 = vmatpush1.msra.mxu0 %v1594
    %1654 = vmatprep.subr.mxu0 %v1599
    %1655 = vmatpush1.msra.mxu0 %v1598
    %1656 = vmatprep.subr.mxu0 %v1603
    %1657 = vmatpush1.msra.mxu0 %v1602
    %1658 = vmatprep.subr.mxu0 %v1607
    %1659 = vmatpush1.msra.mxu0 %v1606
    %1660 = vmatprep.subr.mxu0 %v1611
    %1661 = vmatpush1.msra.mxu0 %v1610
    %1662 = vmatprep.subr.mxu0 %v1615
    %1663 = vmatpush1.msra.mxu0 %v1614
    %1664 = vmatprep.subr.mxu0 %v1619
    %1665 = vmatpush1.msra.mxu0 %v1618
    %1666 = vmatprep.subr.mxu0 %v1623
    %1667 = vmatpush1.msra.mxu0 %v1622
    %1668 = vmatprep.subr.mxu0 %v1627
    %1669 = vmatpush1.msra.mxu0 %v1626
    %1670 = vmatprep.subr.mxu0 %v1631
    %1671 = vmatpush1.msra.mxu0 %v1630
    %1672 = vmatprep.subr.mxu0 %v1635
    %1673 = vmatpush1.msra.mxu0 %v1634
    %1674 = vmatprep.subr.mxu0 %v1639
    %1675 = vmatpush1.msra.mxu0 %v1638
    %1676 = vmatprep.subr.mxu0 %v1643
    %1677 = vmatpush1.msra.mxu0 %v1642
    %1678 = vmatprep.subr.mxu0 0.0
    %1679 = vmatpush1.msra.mxu0 0.0
    %1680 = vmatprep.subr.mxu0 0.0
    %1681 = vmatpush1.msra.mxu0 0.0
    %1682 = vmatprep.subr.mxu0 0.0
    %1683 = vmatpush1.msra.mxu0 0.0
    %1684 = vmatprep.subr.mxu0 0.0
    %1685 = vmatpush1.msra.mxu0 0.0
    %1686 = vmatprep.subr.mxu0 0.0
    %1687 = vmatpush1.msra.mxu0 0.0
    %1688 = vmatprep.subr.mxu0 0.0
    %1689 = vmatpush1.msra.mxu0 0.0
    %1690 = vmatprep.subr.mxu0 0.0
    %1691 = vmatpush1.msra.mxu0 0.0
    %1692 = vmatprep.subr.mxu0 0.0
    %1693 = vmatpush1.msra.mxu0 0.0
    %1694 = vmatprep.subr.mxu0 0.0
    %1695 = vmatpush1.msra.mxu0 0.0
    %1696 = vmatprep.subr.mxu0 0.0
    %1697 = vmatpush1.msra.mxu0 0.0
    %1698 = vmatprep.subr.mxu0 0.0
    %1699 = vmatpush1.msra.mxu0 0.0
    %1700 = vmatprep.subr.mxu0 0.0
    %1701 = vmatpush1.msra.mxu0 0.0
    %1702 = vmatprep.subr.mxu0 0.0
    %1703 = vmatpush1.msra.mxu0 0.0
    %1704 = vmatprep.subr.mxu0 0.0
    %1705 = vmatpush1.msra.mxu0 0.0
    %1706 = vmatprep.subr.mxu0 0.0
    %1707 = vmatpush1.msra.mxu0 0.0
    %1708 = vmatprep.subr.mxu0 0.0
    %1709 = vmatpush1.msra.mxu0 0.0
    %1710 = vmatprep.mubr.f32.mxu0 0.0
    %1711 = vmatmul.mubr.f32.gmra.mrb[0].mxu0 %v1290
    %v1712 = vpop.f32.mrb[0].mxu0
    %v1713 = vadd.f32 0.0, %v1712
    %v1714 = vpop.f32.mrb[0].mxu0
    %v1715 = vadd.f32 0.0, %v1714
    %1716 = vdwg.mxu0
    %1717 = vmatprep.subr.mxu0 %v1585
    %1718 = vmatpush1.msra.mxu0 %v1584
    %1719 = vmatprep.subr.mxu0 %v1589
    %1720 = vmatpush1.msra.mxu0 %v1588
    %1721 = vmatprep.subr.mxu0 %v1593
    %1722 = vmatpush1.msra.mxu0 %v1592
    %1723 = vmatprep.subr.mxu0 %v1597
    %1724 = vmatpush1.msra.mxu0 %v1596
    %1725 = vmatprep.subr.mxu0 %v1601
    %1726 = vmatpush1.msra.mxu0 %v1600
    %1727 = vmatprep.subr.mxu0 %v1605
    %1728 = vmatpush1.msra.mxu0 %v1604
    %1729 = vmatprep.subr.mxu0 %v1609
    %1730 = vmatpush1.msra.mxu0 %v1608
    %1731 = vmatprep.subr.mxu0 %v1613
    %1732 = vmatpush1.msra.mxu0 %v1612
    %1733 = vmatprep.subr.mxu0 %v1617
    %1734 = vmatpush1.msra.mxu0 %v1616
    %1735 = vmatprep.subr.mxu0 %v1621
    %1736 = vmatpush1.msra.mxu0 %v1620
    %1737 = vmatprep.subr.mxu0 %v1625
    %1738 = vmatpush1.msra.mxu0 %v1624
    %1739 = vmatprep.subr.mxu0 %v1629
    %1740 = vmatpush1.msra.mxu0 %v1628
    %1741 = vmatprep.subr.mxu0 %v1633
    %1742 = vmatpush1.msra.mxu0 %v1632
    %1743 = vmatprep.subr.mxu0 %v1637
    %1744 = vmatpush1.msra.mxu0 %v1636
    %1745 = vmatprep.subr.mxu0 %v1641
    %1746 = vmatpush1.msra.mxu0 %v1640
    %1747 = vmatprep.subr.mxu0 %v1645
    %1748 = vmatpush1.msra.mxu0 %v1644
    %1749 = vmatprep.subr.mxu0 0.0
    %1750 = vmatpush1.msra.mxu0 0.0
    %1751 = vmatprep.subr.mxu0 0.0
    %1752 = vmatpush1.msra.mxu0 0.0
    %1753 = vmatprep.subr.mxu0 0.0
    %1754 = vmatpush1.msra.mxu0 0.0
    %1755 = vmatprep.subr.mxu0 0.0
    %1756 = vmatpush1.msra.mxu0 0.0
    %1757 = vmatprep.subr.mxu0 0.0
    %1758 = vmatpush1.msra.mxu0 0.0
    %1759 = vmatprep.subr.mxu0 0.0
    %1760 = vmatpush1.msra.mxu0 0.0
    %1761 = vmatprep.subr.mxu0 0.0
    %1762 = vmatpush1.msra.mxu0 0.0
    %1763 = vmatprep.subr.mxu0 0.0
    %1764 = vmatpush1.msra.mxu0 0.0
    %1765 = vmatprep.subr.mxu0 0.0
    %1766 = vmatpush1.msra.mxu0 0.0
    %1767 = vmatprep.subr.mxu0 0.0
    %1768 = vmatpush1.msra.mxu0 0.0
    %1769 = vmatprep.subr.mxu0 0.0
    %1770 = vmatpush1.msra.mxu0 0.0
    %1771 = vmatprep.subr.mxu0 0.0
    %1772 = vmatpush1.msra.mxu0 0.0
    %1773 = vmatprep.subr.mxu0 0.0
    %1774 = vmatpush1.msra.mxu0 0.0
    %1775 = vmatprep.subr.mxu0 0.0
    %1776 = vmatpush1.msra.mxu0 0.0
    %1777 = vmatprep.subr.mxu0 0.0
    %1778 = vmatpush1.msra.mxu0 0.0
    %1779 = vmatprep.subr.mxu0 0.0
    %1780 = vmatpush1.msra.mxu0 0.0
    %1781 = vmatprep.mubr.f32.mxu0 0.0
    %1782 = vmatmul.mubr.f32.gmra.mrb[0].mxu0 %v1290
    %v1783 = vpop.f32.mrb[0].mxu0
    %v1784 = vadd.f32 0.0, %v1783
    %v1785 = vpop.f32.mrb[0].mxu0
    %v1786 = vadd.f32 0.0, %v1785
    %1787 = vdwg.mxu0
    %v1788 = vadd.f32 %v1578, %v1713
    %v1789 = vadd.f32 %v1579, %v1715
    %v1790 = vadd.f32 %v1580, %v1784
    %v1791 = vadd.f32 %v1581, %v1786
    %v1792 = vmul.f32 %v1788, 0.5
    %v1793 = vmul.f32 %v1789, 0.5
    %v1794 = vmul.f32 %v1790, 0.5
    %v1795 = vtanh.pop %v1792
    %v1796 = vtanh.pop %v1793
    %v1797 = vtanh.pop %v1794
    %v1798 = vmul.f32 %v1795, 0.5
    %v1799 = vmul.f32 %v1796, 0.5
    %v1800 = vmul.f32 %v1797, 0.5
    %v1801 = vadd.f32 %v1798, 0.5
    %v1802 = vadd.f32 %v1799, 0.5
    %v1803 = vadd.f32 %v1800, 0.5
    %v1804 = vtanh.pop %v1791
    %v1805 = vmul.f32 %v1802, %v1288
    %v1806 = vmul.f32 %v1801, %v1804
    %v1807 = vadd.f32 %v1805, %v1806
    %v1808 = vtanh.pop %v1807
    %v1809 = vmul.f32 %v1803, %v1808
    %s1810 = scalar_lea.vmem [#allocation2], 32
    %1811 = vst [vmem:[%s1810] sm:$0xff] %v1809
    %v1812 = vld [vmem:[%s584] sm:$0xff]
    %v1813 = vld [vmem:[%s584 + $0x8] sm:$0xff]
    %v1814 = vld [vmem:[%s584 + $0x10] sm:$0xff]
    %v1815 = vld [vmem:[%s584 + $0x18] sm:$0xff]
    %v1816 = vld [vmem:[#allocation6] sm:$0xff]
    %v1817 = vld [vmem:[#allocation6 + $0x8] sm:$0xff]
    %v1818 = vld [vmem:[#allocation6 + $0x10] sm:$0xff]
    %v1819 = vld [vmem:[#allocation6 + $0x18] sm:$0xff]
    %v1820 = vld [vmem:[#allocation6 + $0x20] sm:$0xff]
    %v1821 = vld [vmem:[#allocation6 + $0x28] sm:$0xff]
    %v1822 = vld [vmem:[#allocation6 + $0x30] sm:$0xff]
    %v1823 = vld [vmem:[#allocation6 + $0x38] sm:$0xff]
    %v1824 = vld [vmem:[#allocation6 + $0x40] sm:$0xff]
    %v1825 = vld [vmem:[#allocation6 + $0x48] sm:$0xff]
    %v1826 = vld [vmem:[#allocation6 + $0x50] sm:$0xff]
    %v1827 = vld [vmem:[#allocation6 + $0x58] sm:$0xff]
    %v1828 = vld [vmem:[#allocation6 + $0x60] sm:$0xff]
    %v1829 = vld [vmem:[#allocation6 + $0x68] sm:$0xff]
    %v1830 = vld [vmem:[#allocation6 + $0x70] sm:$0xff]
    %v1831 = vld [vmem:[#allocation6 + $0x78] sm:$0xff]
    %v1832 = vld [vmem:[#allocation6 + $0x80] sm:$0xff]
    %v1833 = vld [vmem:[#allocation6 + $0x88] sm:$0xff]
    %v1834 = vld [vmem:[#allocation6 + $0x90] sm:$0xff]
    %v1835 = vld [vmem:[#allocation6 + $0x98] sm:$0xff]
    %v1836 = vld [vmem:[#allocation6 + $0xa0] sm:$0xff]
    %v1837 = vld [vmem:[#allocation6 + $0xa8] sm:$0xff]
    %v1838 = vld [vmem:[#allocation6 + $0xb0] sm:$0xff]
    %v1839 = vld [vmem:[#allocation6 + $0xb8] sm:$0xff]
    %v1840 = vld [vmem:[#allocation6 + $0xc0] sm:$0xff]
    %v1841 = vld [vmem:[#allocation6 + $0xc8] sm:$0xff]
    %v1842 = vld [vmem:[#allocation6 + $0xd0] sm:$0xff]
    %v1843 = vld [vmem:[#allocation6 + $0xd8] sm:$0xff]
    %v1844 = vld [vmem:[#allocation6 + $0xe0] sm:$0xff]
    %v1845 = vld [vmem:[#allocation6 + $0xe8] sm:$0xff]
    %v1846 = vld [vmem:[#allocation6 + $0xf0] sm:$0xff]
    %v1847 = vld [vmem:[#allocation6 + $0xf8] sm:$0xff]
    %v1848 = vld [vmem:[#allocation6 + $0x100] sm:$0xff]
    %v1849 = vld [vmem:[#allocation6 + $0x108] sm:$0xff]
    %v1850 = vld [vmem:[#allocation6 + $0x110] sm:$0xff]
    %v1851 = vld [vmem:[#allocation6 + $0x118] sm:$0xff]
    %v1852 = vld [vmem:[#allocation6 + $0x120] sm:$0xff]
    %v1853 = vld [vmem:[#allocation6 + $0x128] sm:$0xff]
    %v1854 = vld [vmem:[#allocation6 + $0x130] sm:$0xff]
    %v1855 = vld [vmem:[#allocation6 + $0x138] sm:$0xff]
    %v1856 = vld [vmem:[#allocation6 + $0x140] sm:$0xff]
    %v1857 = vld [vmem:[#allocation6 + $0x148] sm:$0xff]
    %v1858 = vld [vmem:[#allocation6 + $0x150] sm:$0xff]
    %v1859 = vld [vmem:[#allocation6 + $0x158] sm:$0xff]
    %v1860 = vld [vmem:[#allocation6 + $0x160] sm:$0xff]
    %v1861 = vld [vmem:[#allocation6 + $0x168] sm:$0xff]
    %v1862 = vld [vmem:[#allocation6 + $0x170] sm:$0xff]
    %v1863 = vld [vmem:[#allocation6 + $0x178] sm:$0xff]
    %v1864 = vld [vmem:[#allocation6 + $0x180] sm:$0xff]
    %v1865 = vld [vmem:[#allocation6 + $0x188] sm:$0xff]
    %v1866 = vld [vmem:[#allocation6 + $0x190] sm:$0xff]
    %v1867 = vld [vmem:[#allocation6 + $0x198] sm:$0xff]
    %v1868 = vld [vmem:[#allocation6 + $0x1a0] sm:$0xff]
    %v1869 = vld [vmem:[#allocation6 + $0x1a8] sm:$0xff]
    %v1870 = vld [vmem:[#allocation6 + $0x1b0] sm:$0xff]
    %v1871 = vld [vmem:[#allocation6 + $0x1b8] sm:$0xff]
    %v1872 = vld [vmem:[#allocation6 + $0x1c0] sm:$0xff]
    %v1873 = vld [vmem:[#allocation6 + $0x1c8] sm:$0xff]
    %v1874 = vld [vmem:[#allocation6 + $0x1d0] sm:$0xff]
    %v1875 = vld [vmem:[#allocation6 + $0x1d8] sm:$0xff]
    %v1876 = vld [vmem:[#allocation6 + $0x1e0] sm:$0xff]
    %v1877 = vld [vmem:[#allocation6 + $0x1e8] sm:$0xff]
    %v1878 = vld [vmem:[#allocation6 + $0x1f0] sm:$0xff]
    %v1879 = vld [vmem:[#allocation6 + $0x1f8] sm:$0xff]
    %1880 = vmatprep.subr.mxu0 %v1817
    %1881 = vmatpush1.msra.mxu0 %v1816
    %1882 = vmatprep.subr.mxu0 %v1821
    %1883 = vmatpush1.msra.mxu0 %v1820
    %1884 = vmatprep.subr.mxu0 %v1825
    %1885 = vmatpush1.msra.mxu0 %v1824
    %1886 = vmatprep.subr.mxu0 %v1829
    %1887 = vmatpush1.msra.mxu0 %v1828
    %1888 = vmatprep.subr.mxu0 %v1833
    %1889 = vmatpush1.msra.mxu0 %v1832
    %1890 = vmatprep.subr.mxu0 %v1837
    %1891 = vmatpush1.msra.mxu0 %v1836
    %1892 = vmatprep.subr.mxu0 %v1841
    %1893 = vmatpush1.msra.mxu0 %v1840
    %1894 = vmatprep.subr.mxu0 %v1845
    %1895 = vmatpush1.msra.mxu0 %v1844
    %1896 = vmatprep.subr.mxu0 %v1849
    %1897 = vmatpush1.msra.mxu0 %v1848
    %1898 = vmatprep.subr.mxu0 %v1853
    %1899 = vmatpush1.msra.mxu0 %v1852
    %1900 = vmatprep.subr.mxu0 %v1857
    %1901 = vmatpush1.msra.mxu0 %v1856
    %1902 = vmatprep.subr.mxu0 %v1861
    %1903 = vmatpush1.msra.mxu0 %v1860
    %1904 = vmatprep.subr.mxu0 %v1865
    %1905 = vmatpush1.msra.mxu0 %v1864
    %1906 = vmatprep.subr.mxu0 %v1869
    %1907 = vmatpush1.msra.mxu0 %v1868
    %1908 = vmatprep.subr.mxu0 %v1873
    %1909 = vmatpush1.msra.mxu0 %v1872
    %1910 = vmatprep.subr.mxu0 %v1877
    %1911 = vmatpush1.msra.mxu0 %v1876
    %1912 = vmatprep.subr.mxu0 0.0
    %1913 = vmatpush1.msra.mxu0 0.0
    %1914 = vmatprep.subr.mxu0 0.0
    %1915 = vmatpush1.msra.mxu0 0.0
    %1916 = vmatprep.subr.mxu0 0.0
    %1917 = vmatpush1.msra.mxu0 0.0
    %1918 = vmatprep.subr.mxu0 0.0
    %1919 = vmatpush1.msra.mxu0 0.0
    %1920 = vmatprep.subr.mxu0 0.0
    %1921 = vmatpush1.msra.mxu0 0.0
    %1922 = vmatprep.subr.mxu0 0.0
    %1923 = vmatpush1.msra.mxu0 0.0
    %1924 = vmatprep.subr.mxu0 0.0
    %1925 = vmatpush1.msra.mxu0 0.0
    %1926 = vmatprep.subr.mxu0 0.0
    %1927 = vmatpush1.msra.mxu0 0.0
    %1928 = vmatprep.subr.mxu0 0.0
    %1929 = vmatpush1.msra.mxu0 0.0
    %1930 = vmatprep.subr.mxu0 0.0
    %1931 = vmatpush1.msra.mxu0 0.0
    %1932 = vmatprep.subr.mxu0 0.0
    %1933 = vmatpush1.msra.mxu0 0.0
    %1934 = vmatprep.subr.mxu0 0.0
    %1935 = vmatpush1.msra.mxu0 0.0
    %1936 = vmatprep.subr.mxu0 0.0
    %1937 = vmatpush1.msra.mxu0 0.0
    %1938 = vmatprep.subr.mxu0 0.0
    %1939 = vmatpush1.msra.mxu0 0.0
    %1940 = vmatprep.subr.mxu0 0.0
    %1941 = vmatpush1.msra.mxu0 0.0
    %1942 = vmatprep.subr.mxu0 0.0
    %1943 = vmatpush1.msra.mxu0 0.0
    %1944 = vmatprep.mubr.f32.mxu0 0.0
    %1945 = vmatmul.mubr.f32.gmra.mrb[0].mxu0 %v1809
    %v1946 = vpop.f32.mrb[0].mxu0
    %v1947 = vadd.f32 0.0, %v1946
    %v1948 = vpop.f32.mrb[0].mxu0
    %v1949 = vadd.f32 0.0, %v1948
    %1950 = vdwg.mxu0
    %1951 = vmatprep.subr.mxu0 %v1819
    %1952 = vmatpush1.msra.mxu0 %v1818
    %1953 = vmatprep.subr.mxu0 %v1823
    %1954 = vmatpush1.msra.mxu0 %v1822
    %1955 = vmatprep.subr.mxu0 %v1827
    %1956 = vmatpush1.msra.mxu0 %v1826
    %1957 = vmatprep.subr.mxu0 %v1831
    %1958 = vmatpush1.msra.mxu0 %v1830
    %1959 = vmatprep.subr.mxu0 %v1835
    %1960 = vmatpush1.msra.mxu0 %v1834
    %1961 = vmatprep.subr.mxu0 %v1839
    %1962 = vmatpush1.msra.mxu0 %v1838
    %1963 = vmatprep.subr.mxu0 %v1843
    %1964 = vmatpush1.msra.mxu0 %v1842
    %1965 = vmatprep.subr.mxu0 %v1847
    %1966 = vmatpush1.msra.mxu0 %v1846
    %1967 = vmatprep.subr.mxu0 %v1851
    %1968 = vmatpush1.msra.mxu0 %v1850
    %1969 = vmatprep.subr.mxu0 %v1855
    %1970 = vmatpush1.msra.mxu0 %v1854
    %1971 = vmatprep.subr.mxu0 %v1859
    %1972 = vmatpush1.msra.mxu0 %v1858
    %1973 = vmatprep.subr.mxu0 %v1863
    %1974 = vmatpush1.msra.mxu0 %v1862
    %1975 = vmatprep.subr.mxu0 %v1867
    %1976 = vmatpush1.msra.mxu0 %v1866
    %1977 = vmatprep.subr.mxu0 %v1871
    %1978 = vmatpush1.msra.mxu0 %v1870
    %1979 = vmatprep.subr.mxu0 %v1875
    %1980 = vmatpush1.msra.mxu0 %v1874
    %1981 = vmatprep.subr.mxu0 %v1879
    %1982 = vmatpush1.msra.mxu0 %v1878
    %1983 = vmatprep.subr.mxu0 0.0
    %1984 = vmatpush1.msra.mxu0 0.0
    %1985 = vmatprep.subr.mxu0 0.0
    %1986 = vmatpush1.msra.mxu0 0.0
    %1987 = vmatprep.subr.mxu0 0.0
    %1988 = vmatpush1.msra.mxu0 0.0
    %1989 = vmatprep.subr.mxu0 0.0
    %1990 = vmatpush1.msra.mxu0 0.0
    %1991 = vmatprep.subr.mxu0 0.0
    %1992 = vmatpush1.msra.mxu0 0.0
    %1993 = vmatprep.subr.mxu0 0.0
    %1994 = vmatpush1.msra.mxu0 0.0
    %1995 = vmatprep.subr.mxu0 0.0
    %1996 = vmatpush1.msra.mxu0 0.0
    %1997 = vmatprep.subr.mxu0 0.0
    %1998 = vmatpush1.msra.mxu0 0.0
    %1999 = vmatprep.subr.mxu0 0.0
    %2000 = vmatpush1.msra.mxu0 0.0
    %2001 = vmatprep.subr.mxu0 0.0
    %2002 = vmatpush1.msra.mxu0 0.0
    %2003 = vmatprep.subr.mxu0 0.0
    %2004 = vmatpush1.msra.mxu0 0.0
    %2005 = vmatprep.subr.mxu0 0.0
    %2006 = vmatpush1.msra.mxu0 0.0
    %2007 = vmatprep.subr.mxu0 0.0
    %2008 = vmatpush1.msra.mxu0 0.0
    %2009 = vmatprep.subr.mxu0 0.0
    %2010 = vmatpush1.msra.mxu0 0.0
    %2011 = vmatprep.subr.mxu0 0.0
    %2012 = vmatpush1.msra.mxu0 0.0
    %2013 = vmatprep.subr.mxu0 0.0
    %2014 = vmatpush1.msra.mxu0 0.0
    %2015 = vmatprep.mubr.f32.mxu0 0.0
    %2016 = vmatmul.mubr.f32.gmra.mrb[0].mxu0 %v1809
    %v2017 = vpop.f32.mrb[0].mxu0
    %v2018 = vadd.f32 0.0, %v2017
    %v2019 = vpop.f32.mrb[0].mxu0
    %v2020 = vadd.f32 0.0, %v2019
    %2021 = vdwg.mxu0
    %v2022 = vadd.f32 %v1812, %v1947
    %v2023 = vadd.f32 %v1813, %v1949
    %v2024 = vadd.f32 %v1814, %v2018
    %v2025 = vadd.f32 %v1815, %v2020
    %v2026 = vmul.f32 %v2022, 0.5
    %v2027 = vmul.f32 %v2023, 0.5
    %v2028 = vmul.f32 %v2024, 0.5
    %v2029 = vtanh.pop %v2026
    %v2030 = vtanh.pop %v2027
    %v2031 = vtanh.pop %v2028
    %v2032 = vmul.f32 %v2029, 0.5
    %v2033 = vmul.f32 %v2030, 0.5
    %v2034 = vmul.f32 %v2031, 0.5
    %v2035 = vadd.f32 %v2032, 0.5
    %v2036 = vadd.f32 %v2033, 0.5
    %v2037 = vadd.f32 %v2034, 0.5
    %v2038 = vtanh.pop %v2025
    %v2039 = vmul.f32 %v2036, %v1807
    %v2040 = vmul.f32 %v2035, %v2038
    %v2041 = vadd.f32 %v2039, %v2040
    %v2042 = vtanh.pop %v2041
    %v2043 = vmul.f32 %v2037, %v2042
    %s2044 = scalar_lea.vmem [#allocation2], 40
    %2045 = vst [vmem:[%s2044] sm:$0xff] %v2043
    %v2046 = vld [vmem:[%s821] sm:$0xff]
    %v2047 = vld [vmem:[%s821 + $0x8] sm:$0xff]
    %v2048 = vld [vmem:[%s821 + $0x10] sm:$0xff]
    %v2049 = vld [vmem:[%s821 + $0x18] sm:$0xff]
    %v2050 = vld [vmem:[#allocation6] sm:$0xff]
    %v2051 = vld [vmem:[#allocation6 + $0x8] sm:$0xff]
    %v2052 = vld [vmem:[#allocation6 + $0x10] sm:$0xff]
    %v2053 = vld [vmem:[#allocation6 + $0x18] sm:$0xff]
    %v2054 = vld [vmem:[#allocation6 + $0x20] sm:$0xff]
    %v2055 = vld [vmem:[#allocation6 + $0x28] sm:$0xff]
    %v2056 = vld [vmem:[#allocation6 + $0x30] sm:$0xff]
    %v2057 = vld [vmem:[#allocation6 + $0x38] sm:$0xff]
    %v2058 = vld [vmem:[#allocation6 + $0x40] sm:$0xff]
    %v2059 = vld [vmem:[#allocation6 + $0x48] sm:$0xff]
    %v2060 = vld [vmem:[#allocation6 + $0x50] sm:$0xff]
    %v2061 = vld [vmem:[#allocation6 + $0x58] sm:$0xff]
    %v2062 = vld [vmem:[#allocation6 + $0x60] sm:$0xff]
    %v2063 = vld [vmem:[#allocation6 + $0x68] sm:$0xff]
    %v2064 = vld [vmem:[#allocation6 + $0x70] sm:$0xff]
    %v2065 = vld [vmem:[#allocation6 + $0x78] sm:$0xff]
    %v2066 = vld [vmem:[#allocation6 + $0x80] sm:$0xff]
    %v2067 = vld [vmem:[#allocation6 + $0x88] sm:$0xff]
    %v2068 = vld [vmem:[#allocation6 + $0x90] sm:$0xff]
    %v2069 = vld [vmem:[#allocation6 + $0x98] sm:$0xff]
    %v2070 = vld [vmem:[#allocation6 + $0xa0] sm:$0xff]
    %v2071 = vld [vmem:[#allocation6 + $0xa8] sm:$0xff]
    %v2072 = vld [vmem:[#allocation6 + $0xb0] sm:$0xff]
    %v2073 = vld [vmem:[#allocation6 + $0xb8] sm:$0xff]
    %v2074 = vld [vmem:[#allocation6 + $0xc0] sm:$0xff]
    %v2075 = vld [vmem:[#allocation6 + $0xc8] sm:$0xff]
    %v2076 = vld [vmem:[#allocation6 + $0xd0] sm:$0xff]
    %v2077 = vld [vmem:[#allocation6 + $0xd8] sm:$0xff]
    %v2078 = vld [vmem:[#allocation6 + $0xe0] sm:$0xff]
    %v2079 = vld [vmem:[#allocation6 + $0xe8] sm:$0xff]
    %v2080 = vld [vmem:[#allocation6 + $0xf0] sm:$0xff]
    %v2081 = vld [vmem:[#allocation6 + $0xf8] sm:$0xff]
    %v2082 = vld [vmem:[#allocation6 + $0x100] sm:$0xff]
    %v2083 = vld [vmem:[#allocation6 + $0x108] sm:$0xff]
    %v2084 = vld [vmem:[#allocation6 + $0x110] sm:$0xff]
    %v2085 = vld [vmem:[#allocation6 + $0x118] sm:$0xff]
    %v2086 = vld [vmem:[#allocation6 + $0x120] sm:$0xff]
    %v2087 = vld [vmem:[#allocation6 + $0x128] sm:$0xff]
    %v2088 = vld [vmem:[#allocation6 + $0x130] sm:$0xff]
    %v2089 = vld [vmem:[#allocation6 + $0x138] sm:$0xff]
    %v2090 = vld [vmem:[#allocation6 + $0x140] sm:$0xff]
    %v2091 = vld [vmem:[#allocation6 + $0x148] sm:$0xff]
    %v2092 = vld [vmem:[#allocation6 + $0x150] sm:$0xff]
    %v2093 = vld [vmem:[#allocation6 + $0x158] sm:$0xff]
    %v2094 = vld [vmem:[#allocation6 + $0x160] sm:$0xff]
    %v2095 = vld [vmem:[#allocation6 + $0x168] sm:$0xff]
    %v2096 = vld [vmem:[#allocation6 + $0x170] sm:$0xff]
    %v2097 = vld [vmem:[#allocation6 + $0x178] sm:$0xff]
    %v2098 = vld [vmem:[#allocation6 + $0x180] sm:$0xff]
    %v2099 = vld [vmem:[#allocation6 + $0x188] sm:$0xff]
    %v2100 = vld [vmem:[#allocation6 + $0x190] sm:$0xff]
    %v2101 = vld [vmem:[#allocation6 + $0x198] sm:$0xff]
    %v2102 = vld [vmem:[#allocation6 + $0x1a0] sm:$0xff]
    %v2103 = vld [vmem:[#allocation6 + $0x1a8] sm:$0xff]
    %v2104 = vld [vmem:[#allocation6 + $0x1b0] sm:$0xff]
    %v2105 = vld [vmem:[#allocation6 + $0x1b8] sm:$0xff]
    %v2106 = vld [vmem:[#allocation6 + $0x1c0] sm:$0xff]
    %v2107 = vld [vmem:[#allocation6 + $0x1c8] sm:$0xff]
    %v2108 = vld [vmem:[#allocation6 + $0x1d0] sm:$0xff]
    %v2109 = vld [vmem:[#allocation6 + $0x1d8] sm:$0xff]
    %v2110 = vld [vmem:[#allocation6 + $0x1e0] sm:$0xff]
    %v2111 = vld [vmem:[#allocation6 + $0x1e8] sm:$0xff]
    %v2112 = vld [vmem:[#allocation6 + $0x1f0] sm:$0xff]
    %v2113 = vld [vmem:[#allocation6 + $0x1f8] sm:$0xff]
    %2114 = vmatprep.subr.mxu0 %v2051
    %2115 = vmatpush1.msra.mxu0 %v2050
    %2116 = vmatprep.subr.mxu0 %v2055
    %2117 = vmatpush1.msra.mxu0 %v2054
    %2118 = vmatprep.subr.mxu0 %v2059
    %2119 = vmatpush1.msra.mxu0 %v2058
    %2120 = vmatprep.subr.mxu0 %v2063
    %2121 = vmatpush1.msra.mxu0 %v2062
    %2122 = vmatprep.subr.mxu0 %v2067
    %2123 = vmatpush1.msra.mxu0 %v2066
    %2124 = vmatprep.subr.mxu0 %v2071
    %2125 = vmatpush1.msra.mxu0 %v2070
    %2126 = vmatprep.subr.mxu0 %v2075
    %2127 = vmatpush1.msra.mxu0 %v2074
    %2128 = vmatprep.subr.mxu0 %v2079
    %2129 = vmatpush1.msra.mxu0 %v2078
    %2130 = vmatprep.subr.mxu0 %v2083
    %2131 = vmatpush1.msra.mxu0 %v2082
    %2132 = vmatprep.subr.mxu0 %v2087
    %2133 = vmatpush1.msra.mxu0 %v2086
    %2134 = vmatprep.subr.mxu0 %v2091
    %2135 = vmatpush1.msra.mxu0 %v2090
    %2136 = vmatprep.subr.mxu0 %v2095
    %2137 = vmatpush1.msra.mxu0 %v2094
    %2138 = vmatprep.subr.mxu0 %v2099
    %2139 = vmatpush1.msra.mxu0 %v2098
    %2140 = vmatprep.subr.mxu0 %v2103
    %2141 = vmatpush1.msra.mxu0 %v2102
    %2142 = vmatprep.subr.mxu0 %v2107
    %2143 = vmatpush1.msra.mxu0 %v2106
    %2144 = vmatprep.subr.mxu0 %v2111
    %2145 = vmatpush1.msra.mxu0 %v2110
    %2146 = vmatprep.subr.mxu0 0.0
    %2147 = vmatpush1.msra.mxu0 0.0
    %2148 = vmatprep.subr.mxu0 0.0
    %2149 = vmatpush1.msra.mxu0 0.0
    %2150 = vmatprep.subr.mxu0 0.0
    %2151 = vmatpush1.msra.mxu0 0.0
    %2152 = vmatprep.subr.mxu0 0.0
    %2153 = vmatpush1.msra.mxu0 0.0
    %2154 = vmatprep.subr.mxu0 0.0
    %2155 = vmatpush1.msra.mxu0 0.0
    %2156 = vmatprep.subr.mxu0 0.0
    %2157 = vmatpush1.msra.mxu0 0.0
    %2158 = vmatprep.subr.mxu0 0.0
    %2159 = vmatpush1.msra.mxu0 0.0
    %2160 = vmatprep.subr.mxu0 0.0
    %2161 = vmatpush1.msra.mxu0 0.0
    %2162 = vmatprep.subr.mxu0 0.0
    %2163 = vmatpush1.msra.mxu0 0.0
    %2164 = vmatprep.subr.mxu0 0.0
    %2165 = vmatpush1.msra.mxu0 0.0
    %2166 = vmatprep.subr.mxu0 0.0
    %2167 = vmatpush1.msra.mxu0 0.0
    %2168 = vmatprep.subr.mxu0 0.0
    %2169 = vmatpush1.msra.mxu0 0.0
    %2170 = vmatprep.subr.mxu0 0.0
    %2171 = vmatpush1.msra.mxu0 0.0
    %2172 = vmatprep.subr.mxu0 0.0
    %2173 = vmatpush1.msra.mxu0 0.0
    %2174 = vmatprep.subr.mxu0 0.0
    %2175 = vmatpush1.msra.mxu0 0.0
    %2176 = vmatprep.subr.mxu0 0.0
    %2177 = vmatpush1.msra.mxu0 0.0
    %2178 = vmatprep.mubr.f32.mxu0 0.0
    %2179 = vmatmul.mubr.f32.gmra.mrb[0].mxu0 %v2043
    %v2180 = vpop.f32.mrb[0].mxu0
    %v2181 = vadd.f32 0.0, %v2180
    %v2182 = vpop.f32.mrb[0].mxu0
    %v2183 = vadd.f32 0.0, %v2182
    %2184 = vdwg.mxu0
    %2185 = vmatprep.subr.mxu0 %v2053
    %2186 = vmatpush1.msra.mxu0 %v2052
    %2187 = vmatprep.subr.mxu0 %v2057
    %2188 = vmatpush1.msra.mxu0 %v2056
    %2189 = vmatprep.subr.mxu0 %v2061
    %2190 = vmatpush1.msra.mxu0 %v2060
    %2191 = vmatprep.subr.mxu0 %v2065
    %2192 = vmatpush1.msra.mxu0 %v2064
    %2193 = vmatprep.subr.mxu0 %v2069
    %2194 = vmatpush1.msra.mxu0 %v2068
    %2195 = vmatprep.subr.mxu0 %v2073
    %2196 = vmatpush1.msra.mxu0 %v2072
    %2197 = vmatprep.subr.mxu0 %v2077
    %2198 = vmatpush1.msra.mxu0 %v2076
    %2199 = vmatprep.subr.mxu0 %v2081
    %2200 = vmatpush1.msra.mxu0 %v2080
    %2201 = vmatprep.subr.mxu0 %v2085
    %2202 = vmatpush1.msra.mxu0 %v2084
    %2203 = vmatprep.subr.mxu0 %v2089
    %2204 = vmatpush1.msra.mxu0 %v2088
    %2205 = vmatprep.subr.mxu0 %v2093
    %2206 = vmatpush1.msra.mxu0 %v2092
    %2207 = vmatprep.subr.mxu0 %v2097
    %2208 = vmatpush1.msra.mxu0 %v2096
    %2209 = vmatprep.subr.mxu0 %v2101
    %2210 = vmatpush1.msra.mxu0 %v2100
    %2211 = vmatprep.subr.mxu0 %v2105
    %2212 = vmatpush1.msra.mxu0 %v2104
    %2213 = vmatprep.subr.mxu0 %v2109
    %2214 = vmatpush1.msra.mxu0 %v2108
    %2215 = vmatprep.subr.mxu0 %v2113
    %2216 = vmatpush1.msra.mxu0 %v2112
    %2217 = vmatprep.subr.mxu0 0.0
    %2218 = vmatpush1.msra.mxu0 0.0
    %2219 = vmatprep.subr.mxu0 0.0
    %2220 = vmatpush1.msra.mxu0 0.0
    %2221 = vmatprep.subr.mxu0 0.0
    %2222 = vmatpush1.msra.mxu0 0.0
    %2223 = vmatprep.subr.mxu0 0.0
    %2224 = vmatpush1.msra.mxu0 0.0
    %2225 = vmatprep.subr.mxu0 0.0
    %2226 = vmatpush1.msra.mxu0 0.0
    %2227 = vmatprep.subr.mxu0 0.0
    %2228 = vmatpush1.msra.mxu0 0.0
    %2229 = vmatprep.subr.mxu0 0.0
    %2230 = vmatpush1.msra.mxu0 0.0
    %2231 = vmatprep.subr.mxu0 0.0
    %2232 = vmatpush1.msra.mxu0 0.0
    %2233 = vmatprep.subr.mxu0 0.0
    %2234 = vmatpush1.msra.mxu0 0.0
    %2235 = vmatprep.subr.mxu0 0.0
    %2236 = vmatpush1.msra.mxu0 0.0
    %2237 = vmatprep.subr.mxu0 0.0
    %2238 = vmatpush1.msra.mxu0 0.0
    %2239 = vmatprep.subr.mxu0 0.0
    %2240 = vmatpush1.msra.mxu0 0.0
    %2241 = vmatprep.subr.mxu0 0.0
    %2242 = vmatpush1.msra.mxu0 0.0
    %2243 = vmatprep.subr.mxu0 0.0
    %2244 = vmatpush1.msra.mxu0 0.0
    %2245 = vmatprep.subr.mxu0 0.0
    %2246 = vmatpush1.msra.mxu0 0.0
    %2247 = vmatprep.subr.mxu0 0.0
    %2248 = vmatpush1.msra.mxu0 0.0
    %2249 = vmatprep.mubr.f32.mxu0 0.0
    %2250 = vmatmul.mubr.f32.gmra.mrb[0].mxu0 %v2043
    %v2251 = vpop.f32.mrb[0].mxu0
    %v2252 = vadd.f32 0.0, %v2251
    %v2253 = vpop.f32.mrb[0].mxu0
    %v2254 = vadd.f32 0.0, %v2253
    %2255 = vdwg.mxu0
    %v2256 = vadd.f32 %v2046, %v2181
    %v2257 = vadd.f32 %v2047, %v2183
    %v2258 = vadd.f32 %v2048, %v2252
    %v2259 = vadd.f32 %v2049, %v2254
    %v2260 = vmul.f32 %v2256, 0.5
    %v2261 = vmul.f32 %v2257, 0.5
    %v2262 = vmul.f32 %v2258, 0.5
    %v2263 = vtanh.pop %v2260
    %v2264 = vtanh.pop %v2261
    %v2265 = vtanh.pop %v2262
    %v2266 = vmul.f32 %v2263, 0.5
    %v2267 = vmul.f32 %v2264, 0.5
    %v2268 = vmul.f32 %v2265, 0.5
    %v2269 = vadd.f32 %v2266, 0.5
    %v2270 = vadd.f32 %v2267, 0.5
    %v2271 = vadd.f32 %v2268, 0.5
    %v2272 = vtanh.pop %v2259
    %v2273 = vmul.f32 %v2270, %v2041
    %v2274 = vmul.f32 %v2269, %v2272
    %v2275 = vadd.f32 %v2273, %v2274
    %v2276 = vtanh.pop %v2275
    %v2277 = vmul.f32 %v2271, %v2276
    %s2278 = scalar_lea.vmem [#allocation2], 48
    %2279 = vst [vmem:[%s2278] sm:$0xff] %v2277
    %v2280 = vld [vmem:[%s1058] sm:$0xff]
    %v2281 = vld [vmem:[%s1058 + $0x8] sm:$0xff]
    %v2282 = vld [vmem:[%s1058 + $0x10] sm:$0xff]
    %v2283 = vld [vmem:[%s1058 + $0x18] sm:$0xff]
    %v2284 = vld [vmem:[#allocation6] sm:$0xff]
    %v2285 = vld [vmem:[#allocation6 + $0x8] sm:$0xff]
    %v2286 = vld [vmem:[#allocation6 + $0x10] sm:$0xff]
    %v2287 = vld [vmem:[#allocation6 + $0x18] sm:$0xff]
    %v2288 = vld [vmem:[#allocation6 + $0x20] sm:$0xff]
    %v2289 = vld [vmem:[#allocation6 + $0x28] sm:$0xff]
    %v2290 = vld [vmem:[#allocation6 + $0x30] sm:$0xff]
    %v2291 = vld [vmem:[#allocation6 + $0x38] sm:$0xff]
    %v2292 = vld [vmem:[#allocation6 + $0x40] sm:$0xff]
    %v2293 = vld [vmem:[#allocation6 + $0x48] sm:$0xff]
    %v2294 = vld [vmem:[#allocation6 + $0x50] sm:$0xff]
    %v2295 = vld [vmem:[#allocation6 + $0x58] sm:$0xff]
    %v2296 = vld [vmem:[#allocation6 + $0x60] sm:$0xff]
    %v2297 = vld [vmem:[#allocation6 + $0x68] sm:$0xff]
    %v2298 = vld [vmem:[#allocation6 + $0x70] sm:$0xff]
    %v2299 = vld [vmem:[#allocation6 + $0x78] sm:$0xff]
    %v2300 = vld [vmem:[#allocation6 + $0x80] sm:$0xff]
    %v2301 = vld [vmem:[#allocation6 + $0x88] sm:$0xff]
    %v2302 = vld [vmem:[#allocation6 + $0x90] sm:$0xff]
    %v2303 = vld [vmem:[#allocation6 + $0x98] sm:$0xff]
    %v2304 = vld [vmem:[#allocation6 + $0xa0] sm:$0xff]
    %v2305 = vld [vmem:[#allocation6 + $0xa8] sm:$0xff]
    %v2306 = vld [vmem:[#allocation6 + $0xb0] sm:$0xff]
    %v2307 = vld [vmem:[#allocation6 + $0xb8] sm:$0xff]
    %v2308 = vld [vmem:[#allocation6 + $0xc0] sm:$0xff]
    %v2309 = vld [vmem:[#allocation6 + $0xc8] sm:$0xff]
    %v2310 = vld [vmem:[#allocation6 + $0xd0] sm:$0xff]
    %v2311 = vld [vmem:[#allocation6 + $0xd8] sm:$0xff]
    %v2312 = vld [vmem:[#allocation6 + $0xe0] sm:$0xff]
    %v2313 = vld [vmem:[#allocation6 + $0xe8] sm:$0xff]
    %v2314 = vld [vmem:[#allocation6 + $0xf0] sm:$0xff]
    %v2315 = vld [vmem:[#allocation6 + $0xf8] sm:$0xff]
    %v2316 = vld [vmem:[#allocation6 + $0x100] sm:$0xff]
    %v2317 = vld [vmem:[#allocation6 + $0x108] sm:$0xff]
    %v2318 = vld [vmem:[#allocation6 + $0x110] sm:$0xff]
    %v2319 = vld [vmem:[#allocation6 + $0x118] sm:$0xff]
    %v2320 = vld [vmem:[#allocation6 + $0x120] sm:$0xff]
    %v2321 = vld [vmem:[#allocation6 + $0x128] sm:$0xff]
    %v2322 = vld [vmem:[#allocation6 + $0x130] sm:$0xff]
    %v2323 = vld [vmem:[#allocation6 + $0x138] sm:$0xff]
    %v2324 = vld [vmem:[#allocation6 + $0x140] sm:$0xff]
    %v2325 = vld [vmem:[#allocation6 + $0x148] sm:$0xff]
    %v2326 = vld [vmem:[#allocation6 + $0x150] sm:$0xff]
    %v2327 = vld [vmem:[#allocation6 + $0x158] sm:$0xff]
    %v2328 = vld [vmem:[#allocation6 + $0x160] sm:$0xff]
    %v2329 = vld [vmem:[#allocation6 + $0x168] sm:$0xff]
    %v2330 = vld [vmem:[#allocation6 + $0x170] sm:$0xff]
    %v2331 = vld [vmem:[#allocation6 + $0x178] sm:$0xff]
    %v2332 = vld [vmem:[#allocation6 + $0x180] sm:$0xff]
    %v2333 = vld [vmem:[#allocation6 + $0x188] sm:$0xff]
    %v2334 = vld [vmem:[#allocation6 + $0x190] sm:$0xff]
    %v2335 = vld [vmem:[#allocation6 + $0x198] sm:$0xff]
    %v2336 = vld [vmem:[#allocation6 + $0x1a0] sm:$0xff]
    %v2337 = vld [vmem:[#allocation6 + $0x1a8] sm:$0xff]
    %v2338 = vld [vmem:[#allocation6 + $0x1b0] sm:$0xff]
    %v2339 = vld [vmem:[#allocation6 + $0x1b8] sm:$0xff]
    %v2340 = vld [vmem:[#allocation6 + $0x1c0] sm:$0xff]
    %v2341 = vld [vmem:[#allocation6 + $0x1c8] sm:$0xff]
    %v2342 = vld [vmem:[#allocation6 + $0x1d0] sm:$0xff]
    %v2343 = vld [vmem:[#allocation6 + $0x1d8] sm:$0xff]
    %v2344 = vld [vmem:[#allocation6 + $0x1e0] sm:$0xff]
    %v2345 = vld [vmem:[#allocation6 + $0x1e8] sm:$0xff]
    %v2346 = vld [vmem:[#allocation6 + $0x1f0] sm:$0xff]
    %v2347 = vld [vmem:[#allocation6 + $0x1f8] sm:$0xff]
    %2348 = vmatprep.subr.mxu0 %v2285
    %2349 = vmatpush1.msra.mxu0 %v2284
    %2350 = vmatprep.subr.mxu0 %v2289
    %2351 = vmatpush1.msra.mxu0 %v2288
    %2352 = vmatprep.subr.mxu0 %v2293
    %2353 = vmatpush1.msra.mxu0 %v2292
    %2354 = vmatprep.subr.mxu0 %v2297
    %2355 = vmatpush1.msra.mxu0 %v2296
    %2356 = vmatprep.subr.mxu0 %v2301
    %2357 = vmatpush1.msra.mxu0 %v2300
    %2358 = vmatprep.subr.mxu0 %v2305
    %2359 = vmatpush1.msra.mxu0 %v2304
    %2360 = vmatprep.subr.mxu0 %v2309
    %2361 = vmatpush1.msra.mxu0 %v2308
    %2362 = vmatprep.subr.mxu0 %v2313
    %2363 = vmatpush1.msra.mxu0 %v2312
    %2364 = vmatprep.subr.mxu0 %v2317
    %2365 = vmatpush1.msra.mxu0 %v2316
    %2366 = vmatprep.subr.mxu0 %v2321
    %2367 = vmatpush1.msra.mxu0 %v2320
    %2368 = vmatprep.subr.mxu0 %v2325
    %2369 = vmatpush1.msra.mxu0 %v2324
    %2370 = vmatprep.subr.mxu0 %v2329
    %2371 = vmatpush1.msra.mxu0 %v2328
    %2372 = vmatprep.subr.mxu0 %v2333
    %2373 = vmatpush1.msra.mxu0 %v2332
    %2374 = vmatprep.subr.mxu0 %v2337
    %2375 = vmatpush1.msra.mxu0 %v2336
    %2376 = vmatprep.subr.mxu0 %v2341
    %2377 = vmatpush1.msra.mxu0 %v2340
    %2378 = vmatprep.subr.mxu0 %v2345
    %2379 = vmatpush1.msra.mxu0 %v2344
    %2380 = vmatprep.subr.mxu0 0.0
    %2381 = vmatpush1.msra.mxu0 0.0
    %2382 = vmatprep.subr.mxu0 0.0
    %2383 = vmatpush1.msra.mxu0 0.0
    %2384 = vmatprep.subr.mxu0 0.0
    %2385 = vmatpush1.msra.mxu0 0.0
    %2386 = vmatprep.subr.mxu0 0.0
    %2387 = vmatpush1.msra.mxu0 0.0
    %2388 = vmatprep.subr.mxu0 0.0
    %2389 = vmatpush1.msra.mxu0 0.0
    %2390 = vmatprep.subr.mxu0 0.0
    %2391 = vmatpush1.msra.mxu0 0.0
    %2392 = vmatprep.subr.mxu0 0.0
    %2393 = vmatpush1.msra.mxu0 0.0
    %2394 = vmatprep.subr.mxu0 0.0
    %2395 = vmatpush1.msra.mxu0 0.0
    %2396 = vmatprep.subr.mxu0 0.0
    %2397 = vmatpush1.msra.mxu0 0.0
    %2398 = vmatprep.subr.mxu0 0.0
    %2399 = vmatpush1.msra.mxu0 0.0
    %2400 = vmatprep.subr.mxu0 0.0
    %2401 = vmatpush1.msra.mxu0 0.0
    %2402 = vmatprep.subr.mxu0 0.0
    %2403 = vmatpush1.msra.mxu0 0.0
    %2404 = vmatprep.subr.mxu0 0.0
    %2405 = vmatpush1.msra.mxu0 0.0
    %2406 = vmatprep.subr.mxu0 0.0
    %2407 = vmatpush1.msra.mxu0 0.0
    %2408 = vmatprep.subr.mxu0 0.0
    %2409 = vmatpush1.msra.mxu0 0.0
    %2410 = vmatprep.subr.mxu0 0.0
    %2411 = vmatpush1.msra.mxu0 0.0
    %2412 = vmatprep.mubr.f32.mxu0 0.0
    %2413 = vmatmul.mubr.f32.gmra.mrb[0].mxu0 %v2277
    %v2414 = vpop.f32.mrb[0].mxu0
    %v2415 = vadd.f32 0.0, %v2414
    %v2416 = vpop.f32.mrb[0].mxu0
    %v2417 = vadd.f32 0.0, %v2416
    %2418 = vdwg.mxu0
    %2419 = vmatprep.subr.mxu0 %v2287
    %2420 = vmatpush1.msra.mxu0 %v2286
    %2421 = vmatprep.subr.mxu0 %v2291
    %2422 = vmatpush1.msra.mxu0 %v2290
    %2423 = vmatprep.subr.mxu0 %v2295
    %2424 = vmatpush1.msra.mxu0 %v2294
    %2425 = vmatprep.subr.mxu0 %v2299
    %2426 = vmatpush1.msra.mxu0 %v2298
    %2427 = vmatprep.subr.mxu0 %v2303
    %2428 = vmatpush1.msra.mxu0 %v2302
    %2429 = vmatprep.subr.mxu0 %v2307
    %2430 = vmatpush1.msra.mxu0 %v2306
    %2431 = vmatprep.subr.mxu0 %v2311
    %2432 = vmatpush1.msra.mxu0 %v2310
    %2433 = vmatprep.subr.mxu0 %v2315
    %2434 = vmatpush1.msra.mxu0 %v2314
    %2435 = vmatprep.subr.mxu0 %v2319
    %2436 = vmatpush1.msra.mxu0 %v2318
    %2437 = vmatprep.subr.mxu0 %v2323
    %2438 = vmatpush1.msra.mxu0 %v2322
    %2439 = vmatprep.subr.mxu0 %v2327
    %2440 = vmatpush1.msra.mxu0 %v2326
    %2441 = vmatprep.subr.mxu0 %v2331
    %2442 = vmatpush1.msra.mxu0 %v2330
    %2443 = vmatprep.subr.mxu0 %v2335
    %2444 = vmatpush1.msra.mxu0 %v2334
    %2445 = vmatprep.subr.mxu0 %v2339
    %2446 = vmatpush1.msra.mxu0 %v2338
    %2447 = vmatprep.subr.mxu0 %v2343
    %2448 = vmatpush1.msra.mxu0 %v2342
    %2449 = vmatprep.subr.mxu0 %v2347
    %2450 = vmatpush1.msra.mxu0 %v2346
    %2451 = vmatprep.subr.mxu0 0.0
    %2452 = vmatpush1.msra.mxu0 0.0
    %2453 = vmatprep.subr.mxu0 0.0
    %2454 = vmatpush1.msra.mxu0 0.0
    %2455 = vmatprep.subr.mxu0 0.0
    %2456 = vmatpush1.msra.mxu0 0.0
    %2457 = vmatprep.subr.mxu0 0.0
    %2458 = vmatpush1.msra.mxu0 0.0
    %2459 = vmatprep.subr.mxu0 0.0
    %2460 = vmatpush1.msra.mxu0 0.0
    %2461 = vmatprep.subr.mxu0 0.0
    %2462 = vmatpush1.msra.mxu0 0.0
    %2463 = vmatprep.subr.mxu0 0.0
    %2464 = vmatpush1.msra.mxu0 0.0
    %2465 = vmatprep.subr.mxu0 0.0
    %2466 = vmatpush1.msra.mxu0 0.0
    %2467 = vmatprep.subr.mxu0 0.0
    %2468 = vmatpush1.msra.mxu0 0.0
    %2469 = vmatprep.subr.mxu0 0.0
    %2470 = vmatpush1.msra.mxu0 0.0
    %2471 = vmatprep.subr.mxu0 0.0
    %2472 = vmatpush1.msra.mxu0 0.0
    %2473 = vmatprep.subr.mxu0 0.0
    %2474 = vmatpush1.msra.mxu0 0.0
    %2475 = vmatprep.subr.mxu0 0.0
    %2476 = vmatpush1.msra.mxu0 0.0
    %2477 = vmatprep.subr.mxu0 0.0
    %2478 = vmatpush1.msra.mxu0 0.0
    %2479 = vmatprep.subr.mxu0 0.0
    %2480 = vmatpush1.msra.mxu0 0.0
    %2481 = vmatprep.subr.mxu0 0.0
    %2482 = vmatpush1.msra.mxu0 0.0
    %2483 = vmatprep.mubr.f32.mxu0 0.0
    %2484 = vmatmul.mubr.f32.gmra.mrb[0].mxu0 %v2277
    %v2485 = vpop.f32.mrb[0].mxu0
    %v2486 = vadd.f32 0.0, %v2485
    %v2487 = vpop.f32.mrb[0].mxu0
    %v2488 = vadd.f32 0.0, %v2487
    %2489 = vdwg.mxu0
    %v2490 = vadd.f32 %v2280, %v2415
    %v2491 = vadd.f32 %v2281, %v2417
    %v2492 = vadd.f32 %v2282, %v2486
    %v2493 = vadd.f32 %v2283, %v2488
    %v2494 = vmul.f32 %v2490, 0.5
    %v2495 = vmul.f32 %v2491, 0.5
    %v2496 = vmul.f32 %v2492, 0.5
    %v2497 = vtanh.pop %v2494
    %v2498 = vtanh.pop %v2495
    %v2499 = vtanh.pop %v2496
    %v2500 = vmul.f32 %v2497, 0.5
    %v2501 = vmul.f32 %v2498, 0.5
    %v2502 = vmul.f32 %v2499, 0.5
    %v2503 = vadd.f32 %v2500, 0.5
    %v2504 = vadd.f32 %v2501, 0.5
    %v2505 = vadd.f32 %v2502, 0.5
    %v2506 = vtanh.pop %v2493
    %v2507 = vmul.f32 %v2504, %v2275
    %v2508 = vmul.f32 %v2503, %v2506
    %v2509 = vadd.f32 %v2507, %v2508
    %v2510 = vtanh.pop %v2509
    %v2511 = vmul.f32 %v2505, %v2510
    %s2512 = scalar_lea.vmem [#allocation2], 56
    %2513 = vst [vmem:[%s2512] sm:$0xff] %v2511
    %2514 = vst [vmem:[%s9] sm:$0xff] %v2511
    %2515 = vst [vmem:[%s10] sm:$0xff] %v2509
    %s2516 = scalar_lea.vmem %s4, 8
    %v2517 = vld [vmem:[%s2516] sm:$0xff]
    %s2518 = scalar_lea.vmem %s5, 8
    %v2519 = vld [vmem:[%s2518] sm:$0xff]
    %v2520 = vld [vmem:[#allocation2] sm:$0xff]
    %v2521 = vld [vmem:[#allocation2 + $0x8] sm:$0xff]
    %v2522 = vld [vmem:[#allocation2 + $0x10] sm:$0xff]
    %v2523 = vld [vmem:[#allocation2 + $0x18] sm:$0xff]
    %s2524 = scalar_lea.vmem [#allocation4], 512
    %v2525 = vld [vmem:[%s2524] sm:$0xff]
    %v2526 = vld [vmem:[%s2524 + $0x8] sm:$0xff]
    %v2527 = vld [vmem:[%s2524 + $0x10] sm:$0xff]
    %v2528 = vld [vmem:[%s2524 + $0x18] sm:$0xff]
    %v2529 = vld [vmem:[%s2524 + $0x20] sm:$0xff]
    %v2530 = vld [vmem:[%s2524 + $0x28] sm:$0xff]
    %v2531 = vld [vmem:[%s2524 + $0x30] sm:$0xff]
    %v2532 = vld [vmem:[%s2524 + $0x38] sm:$0xff]
    %v2533 = vld [vmem:[%s2524 + $0x40] sm:$0xff]
    %v2534 = vld [vmem:[%s2524 + $0x48] sm:$0xff]
    %v2535 = vld [vmem:[%s2524 + $0x50] sm:$0xff]
    %v2536 = vld [vmem:[%s2524 + $0x58] sm:$0xff]
    %v2537 = vld [vmem:[%s2524 + $0x60] sm:$0xff]
    %v2538 = vld [vmem:[%s2524 + $0x68] sm:$0xff]
    %v2539 = vld [vmem:[%s2524 + $0x70] sm:$0xff]
    %v2540 = vld [vmem:[%s2524 + $0x78] sm:$0xff]
    %v2541 = vld [vmem:[%s2524 + $0x80] sm:$0xff]
    %v2542 = vld [vmem:[%s2524 + $0x88] sm:$0xff]
    %v2543 = vld [vmem:[%s2524 + $0x90] sm:$0xff]
    %v2544 = vld [vmem:[%s2524 + $0x98] sm:$0xff]
    %v2545 = vld [vmem:[%s2524 + $0xa0] sm:$0xff]
    %v2546 = vld [vmem:[%s2524 + $0xa8] sm:$0xff]
    %v2547 = vld [vmem:[%s2524 + $0xb0] sm:$0xff]
    %v2548 = vld [vmem:[%s2524 + $0xb8] sm:$0xff]
    %v2549 = vld [vmem:[%s2524 + $0xc0] sm:$0xff]
    %v2550 = vld [vmem:[%s2524 + $0xc8] sm:$0xff]
    %v2551 = vld [vmem:[%s2524 + $0xd0] sm:$0xff]
    %v2552 = vld [vmem:[%s2524 + $0xd8] sm:$0xff]
    %v2553 = vld [vmem:[%s2524 + $0xe0] sm:$0xff]
    %v2554 = vld [vmem:[%s2524 + $0xe8] sm:$0xff]
    %v2555 = vld [vmem:[%s2524 + $0xf0] sm:$0xff]
    %v2556 = vld [vmem:[%s2524 + $0xf8] sm:$0xff]
    %v2557 = vld [vmem:[%s2524 + $0x100] sm:$0xff]
    %v2558 = vld [vmem:[%s2524 + $0x108] sm:$0xff]
    %v2559 = vld [vmem:[%s2524 + $0x110] sm:$0xff]
    %v2560 = vld [vmem:[%s2524 + $0x118] sm:$0xff]
    %v2561 = vld [vmem:[%s2524 + $0x120] sm:$0xff]
    %v2562 = vld [vmem:[%s2524 + $0x128] sm:$0xff]
    %v2563 = vld [vmem:[%s2524 + $0x130] sm:$0xff]
    %v2564 = vld [vmem:[%s2524 + $0x138] sm:$0xff]
    %v2565 = vld [vmem:[%s2524 + $0x140] sm:$0xff]
    %v2566 = vld [vmem:[%s2524 + $0x148] sm:$0xff]
    %v2567 = vld [vmem:[%s2524 + $0x150] sm:$0xff]
    %v2568 = vld [vmem:[%s2524 + $0x158] sm:$0xff]
    %v2569 = vld [vmem:[%s2524 + $0x160] sm:$0xff]
    %v2570 = vld [vmem:[%s2524 + $0x168] sm:$0xff]
    %v2571 = vld [vmem:[%s2524 + $0x170] sm:$0xff]
    %v2572 = vld [vmem:[%s2524 + $0x178] sm:$0xff]
    %v2573 = vld [vmem:[%s2524 + $0x180] sm:$0xff]
    %v2574 = vld [vmem:[%s2524 + $0x188] sm:$0xff]
    %v2575 = vld [vmem:[%s2524 + $0x190] sm:$0xff]
    %v2576 = vld [vmem:[%s2524 + $0x198] sm:$0xff]
    %v2577 = vld [vmem:[%s2524 + $0x1a0] sm:$0xff]
    %v2578 = vld [vmem:[%s2524 + $0x1a8] sm:$0xff]
    %v2579 = vld [vmem:[%s2524 + $0x1b0] sm:$0xff]
    %v2580 = vld [vmem:[%s2524 + $0x1b8] sm:$0xff]
    %v2581 = vld [vmem:[%s2524 + $0x1c0] sm:$0xff]
    %v2582 = vld [vmem:[%s2524 + $0x1c8] sm:$0xff]
    %v2583 = vld [vmem:[%s2524 + $0x1d0] sm:$0xff]
    %v2584 = vld [vmem:[%s2524 + $0x1d8] sm:$0xff]
    %v2585 = vld [vmem:[%s2524 + $0x1e0] sm:$0xff]
    %v2586 = vld [vmem:[%s2524 + $0x1e8] sm:$0xff]
    %v2587 = vld [vmem:[%s2524 + $0x1f0] sm:$0xff]
    %v2588 = vld [vmem:[%s2524 + $0x1f8] sm:$0xff]
    %s2589 = scalar_lea.vmem %s3, 4
    %v2590 = vld [vmem:[%s2589] sm:$0xf]
    %v2592 = vlaneseq
    %v2593 = vshrl.u32 %v2592, 7
    %v2594 = vsub.s32 0, %v2593
    %v2595 = vrot.slane %v2590, %v2594
    %v2596 = vlaneseq
    %v2597 = vshrl.u32 %v2596, 7
    %v2598 = vsub.s32 1, %v2597
    %v2599 = vrot.slane %v2590, %v2598
    %v2600 = vlaneseq
    %v2601 = vshrl.u32 %v2600, 7
    %v2602 = vsub.s32 2, %v2601
    %v2603 = vrot.slane %v2590, %v2602
    %v2604 = vlaneseq
    %v2605 = vshrl.u32 %v2604, 7
    %v2606 = vsub.s32 3, %v2605
    %v2607 = vrot.slane %v2590, %v2606
    %2612 = vmatprep.subr.mxu0 %v2526
    %2613 = vmatpush1.msra.mxu0 %v2525
    %2614 = vmatprep.subr.mxu0 %v2530
    %2615 = vmatpush1.msra.mxu0 %v2529
    %2616 = vmatprep.subr.mxu0 %v2534
    %2617 = vmatpush1.msra.mxu0 %v2533
    %2618 = vmatprep.subr.mxu0 %v2538
    %2619 = vmatpush1.msra.mxu0 %v2537
    %2620 = vmatprep.subr.mxu0 %v2542
    %2621 = vmatpush1.msra.mxu0 %v2541
    %2622 = vmatprep.subr.mxu0 %v2546
    %2623 = vmatpush1.msra.mxu0 %v2545
    %2624 = vmatprep.subr.mxu0 %v2550
    %2625 = vmatpush1.msra.mxu0 %v2549
    %2626 = vmatprep.subr.mxu0 %v2554
    %2627 = vmatpush1.msra.mxu0 %v2553
    %2628 = vmatprep.subr.mxu0 %v2558
    %2629 = vmatpush1.msra.mxu0 %v2557
    %2630 = vmatprep.subr.mxu0 %v2562
    %2631 = vmatpush1.msra.mxu0 %v2561
    %2632 = vmatprep.subr.mxu0 %v2566
    %2633 = vmatpush1.msra.mxu0 %v2565
    %2634 = vmatprep.subr.mxu0 %v2570
    %2635 = vmatpush1.msra.mxu0 %v2569
    %2636 = vmatprep.subr.mxu0 %v2574
    %2637 = vmatpush1.msra.mxu0 %v2573
    %2638 = vmatprep.subr.mxu0 %v2578
    %2639 = vmatpush1.msra.mxu0 %v2577
    %2640 = vmatprep.subr.mxu0 %v2582
    %2641 = vmatpush1.msra.mxu0 %v2581
    %2642 = vmatprep.subr.mxu0 %v2586
    %2643 = vmatpush1.msra.mxu0 %v2585
    %2644 = vmatprep.subr.mxu0 0.0
    %2645 = vmatpush1.msra.mxu0 0.0
    %2646 = vmatprep.subr.mxu0 0.0
    %2647 = vmatpush1.msra.mxu0 0.0
    %2648 = vmatprep.subr.mxu0 0.0
    %2649 = vmatpush1.msra.mxu0 0.0
    %2650 = vmatprep.subr.mxu0 0.0
    %2651 = vmatpush1.msra.mxu0 0.0
    %2652 = vmatprep.subr.mxu0 0.0
    %2653 = vmatpush1.msra.mxu0 0.0
    %2654 = vmatprep.subr.mxu0 0.0
    %2655 = vmatpush1.msra.mxu0 0.0
    %2656 = vmatprep.subr.mxu0 0.0
    %2657 = vmatpush1.msra.mxu0 0.0
    %2658 = vmatprep.subr.mxu0 0.0
    %2659 = vmatpush1.msra.mxu0 0.0
    %2660 = vmatprep.subr.mxu0 0.0
    %2661 = vmatpush1.msra.mxu0 0.0
    %2662 = vmatprep.subr.mxu0 0.0
    %2663 = vmatpush1.msra.mxu0 0.0
    %2664 = vmatprep.subr.mxu0 0.0
    %2665 = vmatpush1.msra.mxu0 0.0
    %2666 = vmatprep.subr.mxu0 0.0
    %2667 = vmatpush1.msra.mxu0 0.0
    %2668 = vmatprep.subr.mxu0 0.0
    %2669 = vmatpush1.msra.mxu0 0.0
    %2670 = vmatprep.subr.mxu0 0.0
    %2671 = vmatpush1.msra.mxu0 0.0
    %2672 = vmatprep.subr.mxu0 0.0
    %2673 = vmatpush1.msra.mxu0 0.0
    %2674 = vmatprep.subr.mxu0 0.0
    %2675 = vmatpush1.msra.mxu0 0.0
    %2676 = vmatprep.mubr.f32.mxu0 0.0
    %2677 = vmatmul.mubr.f32.gmra.mrb[0].mxu0 %v2520
    %v2678 = vpop.f32.mrb[0].mxu0
    %v2679 = vadd.f32 %v2595, %v2678
    %v2680 = vpop.f32.mrb[0].mxu0
    %v2681 = vadd.f32 %v2599, %v2680
    %2682 = vmatprep.mubr.f32.mxu0 0.0
    %2683 = vmatmul.mubr.f32.gmra.mrb[0].mxu0 %v2521
    %v2684 = vpop.f32.mrb[0].mxu0
    %v2685 = vadd.f32 %v2595, %v2684
    %v2686 = vpop.f32.mrb[0].mxu0
    %v2687 = vadd.f32 %v2599, %v2686
    %2688 = vmatprep.mubr.f32.mxu0 0.0
    %2689 = vmatmul.mubr.f32.gmra.mrb[0].mxu0 %v2522
    %v2690 = vpop.f32.mrb[0].mxu0
    %v2691 = vadd.f32 %v2595, %v2690
    %v2692 = vpop.f32.mrb[0].mxu0
    %v2693 = vadd.f32 %v2599, %v2692
    %2694 = vmatprep.mubr.f32.mxu0 0.0
    %2695 = vmatmul.mubr.f32.gmra.mrb[0].mxu0 %v2523
    %v2696 = vpop.f32.mrb[0].mxu0
    %v2697 = vadd.f32 %v2595, %v2696
    %v2698 = vpop.f32.mrb[0].mxu0
    %v2699 = vadd.f32 %v2599, %v2698
    %2700 = vdwg.mxu0
    %2701 = vmatprep.subr.mxu0 %v2528
    %2702 = vmatpush1.msra.mxu0 %v2527
    %2703 = vmatprep.subr.mxu0 %v2532
    %2704 = vmatpush1.msra.mxu0 %v2531
    %2705 = vmatprep.subr.mxu0 %v2536
    %2706 = vmatpush1.msra.mxu0 %v2535
    %2707 = vmatprep.subr.mxu0 %v2540
    %2708 = vmatpush1.msra.mxu0 %v2539
    %2709 = vmatprep.subr.mxu0 %v2544
    %2710 = vmatpush1.msra.mxu0 %v2543
    %2711 = vmatprep.subr.mxu0 %v2548
    %2712 = vmatpush1.msra.mxu0 %v2547
    %2713 = vmatprep.subr.mxu0 %v2552
    %2714 = vmatpush1.msra.mxu0 %v2551
    %2715 = vmatprep.subr.mxu0 %v2556
    %2716 = vmatpush1.msra.mxu0 %v2555
    %2717 = vmatprep.subr.mxu0 %v2560
    %2718 = vmatpush1.msra.mxu0 %v2559
    %2719 = vmatprep.subr.mxu0 %v2564
    %2720 = vmatpush1.msra.mxu0 %v2563
    %2721 = vmatprep.subr.mxu0 %v2568
    %2722 = vmatpush1.msra.mxu0 %v2567
    %2723 = vmatprep.subr.mxu0 %v2572
    %2724 = vmatpush1.msra.mxu0 %v2571
    %2725 = vmatprep.subr.mxu0 %v2576
    %2726 = vmatpush1.msra.mxu0 %v2575
    %2727 = vmatprep.subr.mxu0 %v2580
    %2728 = vmatpush1.msra.mxu0 %v2579
    %2729 = vmatprep.subr.mxu0 %v2584
    %2730 = vmatpush1.msra.mxu0 %v2583
    %2731 = vmatprep.subr.mxu0 %v2588
    %2732 = vmatpush1.msra.mxu0 %v2587
    %2733 = vmatprep.subr.mxu0 0.0
    %2734 = vmatpush1.msra.mxu0 0.0
    %2735 = vmatprep.subr.mxu0 0.0
    %2736 = vmatpush1.msra.mxu0 0.0
    %2737 = vmatprep.subr.mxu0 0.0
    %2738 = vmatpush1.msra.mxu0 0.0
    %2739 = vmatprep.subr.mxu0 0.0
    %2740 = vmatpush1.msra.mxu0 0.0
    %2741 = vmatprep.subr.mxu0 0.0
    %2742 = vmatpush1.msra.mxu0 0.0
    %2743 = vmatprep.subr.mxu0 0.0
    %2744 = vmatpush1.msra.mxu0 0.0
    %2745 = vmatprep.subr.mxu0 0.0
    %2746 = vmatpush1.msra.mxu0 0.0
    %2747 = vmatprep.subr.mxu0 0.0
    %2748 = vmatpush1.msra.mxu0 0.0
    %2749 = vmatprep.subr.mxu0 0.0
    %2750 = vmatpush1.msra.mxu0 0.0
    %2751 = vmatprep.subr.mxu0 0.0
    %2752 = vmatpush1.msra.mxu0 0.0
    %2753 = vmatprep.subr.mxu0 0.0
    %2754 = vmatpush1.msra.mxu0 0.0
    %2755 = vmatprep.subr.mxu0 0.0
    %2756 = vmatpush1.msra.mxu0 0.0
    %2757 = vmatprep.subr.mxu0 0.0
    %2758 = vmatpush1.msra.mxu0 0.0
    %2759 = vmatprep.subr.mxu0 0.0
    %2760 = vmatpush1.msra.mxu0 0.0
    %2761 = vmatprep.subr.mxu0 0.0
    %2762 = vmatpush1.msra.mxu0 0.0
    %2763 = vmatprep.subr.mxu0 0.0
    %2764 = vmatpush1.msra.mxu0 0.0
    %2765 = vmatprep.mubr.f32.mxu0 0.0
    %2766 = vmatmul.mubr.f32.gmra.mrb[0].mxu0 %v2520
    %v2767 = vpop.f32.mrb[0].mxu0
    %v2768 = vadd.f32 %v2603, %v2767
    %v2769 = vpop.f32.mrb[0].mxu0
    %v2770 = vadd.f32 %v2607, %v2769
    %2771 = vmatprep.mubr.f32.mxu0 0.0
    %2772 = vmatmul.mubr.f32.gmra.mrb[0].mxu0 %v2521
    %v2773 = vpop.f32.mrb[0].mxu0
    %v2774 = vadd.f32 %v2603, %v2773
    %v2775 = vpop.f32.mrb[0].mxu0
    %v2776 = vadd.f32 %v2607, %v2775
    %2777 = vmatprep.mubr.f32.mxu0 0.0
    %2778 = vmatmul.mubr.f32.gmra.mrb[0].mxu0 %v2522
    %v2779 = vpop.f32.mrb[0].mxu0
    %v2780 = vadd.f32 %v2603, %v2779
    %v2781 = vpop.f32.mrb[0].mxu0
    %v2782 = vadd.f32 %v2607, %v2781
    %2783 = vmatprep.mubr.f32.mxu0 0.0
    %2784 = vmatmul.mubr.f32.gmra.mrb[0].mxu0 %v2523
    %v2785 = vpop.f32.mrb[0].mxu0
    %v2786 = vadd.f32 %v2603, %v2785
    %v2787 = vpop.f32.mrb[0].mxu0
    %v2788 = vadd.f32 %v2607, %v2787
    %2789 = vdwg.mxu0
    %2790 = vst [vmem:[#allocation3] sm:$0xff] %v2679
    %2791 = vst [vmem:[#allocation3 + $0x8] sm:$0xff] %v2681
    %2792 = vst [vmem:[#allocation3 + $0x10] sm:$0xff] %v2768
    %2793 = vst [vmem:[#allocation3 + $0x18] sm:$0xff] %v2770
    %2794 = vst [vmem:[#allocation3 + $0x20] sm:$0xff] %v2685
    %2795 = vst [vmem:[#allocation3 + $0x28] sm:$0xff] %v2687
    %2796 = vst [vmem:[#allocation3 + $0x30] sm:$0xff] %v2774
    %2797 = vst [vmem:[#allocation3 + $0x38] sm:$0xff] %v2776
    %2798 = vst [vmem:[#allocation3 + $0x40] sm:$0xff] %v2691
    %2799 = vst [vmem:[#allocation3 + $0x48] sm:$0xff] %v2693
    %2800 = vst [vmem:[#allocation3 + $0x50] sm:$0xff] %v2780
    %2801 = vst [vmem:[#allocation3 + $0x58] sm:$0xff] %v2782
    %2802 = vst [vmem:[#allocation3 + $0x60] sm:$0xff] %v2697
    %2803 = vst [vmem:[#allocation3 + $0x68] sm:$0xff] %v2699
    %2804 = vst [vmem:[#allocation3 + $0x70] sm:$0xff] %v2786
    %2805 = vst [vmem:[#allocation3 + $0x78] sm:$0xff] %v2788
    %v2806 = vld [vmem:[%s348] sm:$0xff]
    %v2807 = vld [vmem:[%s348 + $0x8] sm:$0xff]
    %v2808 = vld [vmem:[%s348 + $0x10] sm:$0xff]
    %v2809 = vld [vmem:[%s348 + $0x18] sm:$0xff]
    %s2810 = scalar_lea.vmem [#allocation6], 512
    %v2811 = vld [vmem:[%s2810] sm:$0xff]
    %v2812 = vld [vmem:[%s2810 + $0x8] sm:$0xff]
    %v2813 = vld [vmem:[%s2810 + $0x10] sm:$0xff]
    %v2814 = vld [vmem:[%s2810 + $0x18] sm:$0xff]
    %v2815 = vld [vmem:[%s2810 + $0x20] sm:$0xff]
    %v2816 = vld [vmem:[%s2810 + $0x28] sm:$0xff]
    %v2817 = vld [vmem:[%s2810 + $0x30] sm:$0xff]
    %v2818 = vld [vmem:[%s2810 + $0x38] sm:$0xff]
    %v2819 = vld [vmem:[%s2810 + $0x40] sm:$0xff]
    %v2820 = vld [vmem:[%s2810 + $0x48] sm:$0xff]
    %v2821 = vld [vmem:[%s2810 + $0x50] sm:$0xff]
    %v2822 = vld [vmem:[%s2810 + $0x58] sm:$0xff]
    %v2823 = vld [vmem:[%s2810 + $0x60] sm:$0xff]
    %v2824 = vld [vmem:[%s2810 + $0x68] sm:$0xff]
    %v2825 = vld [vmem:[%s2810 + $0x70] sm:$0xff]
    %v2826 = vld [vmem:[%s2810 + $0x78] sm:$0xff]
    %v2827 = vld [vmem:[%s2810 + $0x80] sm:$0xff]
    %v2828 = vld [vmem:[%s2810 + $0x88] sm:$0xff]
    %v2829 = vld [vmem:[%s2810 + $0x90] sm:$0xff]
    %v2830 = vld [vmem:[%s2810 + $0x98] sm:$0xff]
    %v2831 = vld [vmem:[%s2810 + $0xa0] sm:$0xff]
    %v2832 = vld [vmem:[%s2810 + $0xa8] sm:$0xff]
    %v2833 = vld [vmem:[%s2810 + $0xb0] sm:$0xff]
    %v2834 = vld [vmem:[%s2810 + $0xb8] sm:$0xff]
    %v2835 = vld [vmem:[%s2810 + $0xc0] sm:$0xff]
    %v2836 = vld [vmem:[%s2810 + $0xc8] sm:$0xff]
    %v2837 = vld [vmem:[%s2810 + $0xd0] sm:$0xff]
    %v2838 = vld [vmem:[%s2810 + $0xd8] sm:$0xff]
    %v2839 = vld [vmem:[%s2810 + $0xe0] sm:$0xff]
    %v2840 = vld [vmem:[%s2810 + $0xe8] sm:$0xff]
    %v2841 = vld [vmem:[%s2810 + $0xf0] sm:$0xff]
    %v2842 = vld [vmem:[%s2810 + $0xf8] sm:$0xff]
    %v2843 = vld [vmem:[%s2810 + $0x100] sm:$0xff]
    %v2844 = vld [vmem:[%s2810 + $0x108] sm:$0xff]
    %v2845 = vld [vmem:[%s2810 + $0x110] sm:$0xff]
    %v2846 = vld [vmem:[%s2810 + $0x118] sm:$0xff]
    %v2847 = vld [vmem:[%s2810 + $0x120] sm:$0xff]
    %v2848 = vld [vmem:[%s2810 + $0x128] sm:$0xff]
    %v2849 = vld [vmem:[%s2810 + $0x130] sm:$0xff]
    %v2850 = vld [vmem:[%s2810 + $0x138] sm:$0xff]
    %v2851 = vld [vmem:[%s2810 + $0x140] sm:$0xff]
    %v2852 = vld [vmem:[%s2810 + $0x148] sm:$0xff]
    %v2853 = vld [vmem:[%s2810 + $0x150] sm:$0xff]
    %v2854 = vld [vmem:[%s2810 + $0x158] sm:$0xff]
    %v2855 = vld [vmem:[%s2810 + $0x160] sm:$0xff]
    %v2856 = vld [vmem:[%s2810 + $0x168] sm:$0xff]
    %v2857 = vld [vmem:[%s2810 + $0x170] sm:$0xff]
    %v2858 = vld [vmem:[%s2810 + $0x178] sm:$0xff]
    %v2859 = vld [vmem:[%s2810 + $0x180] sm:$0xff]
    %v2860 = vld [vmem:[%s2810 + $0x188] sm:$0xff]
    %v2861 = vld [vmem:[%s2810 + $0x190] sm:$0xff]
    %v2862 = vld [vmem:[%s2810 + $0x198] sm:$0xff]
    %v2863 = vld [vmem:[%s2810 + $0x1a0] sm:$0xff]
    %v2864 = vld [vmem:[%s2810 + $0x1a8] sm:$0xff]
    %v2865 = vld [vmem:[%s2810 + $0x1b0] sm:$0xff]
    %v2866 = vld [vmem:[%s2810 + $0x1b8] sm:$0xff]
    %v2867 = vld [vmem:[%s2810 + $0x1c0] sm:$0xff]
    %v2868 = vld [vmem:[%s2810 + $0x1c8] sm:$0xff]
    %v2869 = vld [vmem:[%s2810 + $0x1d0] sm:$0xff]
    %v2870 = vld [vmem:[%s2810 + $0x1d8] sm:$0xff]
    %v2871 = vld [vmem:[%s2810 + $0x1e0] sm:$0xff]
    %v2872 = vld [vmem:[%s2810 + $0x1e8] sm:$0xff]
    %v2873 = vld [vmem:[%s2810 + $0x1f0] sm:$0xff]
    %v2874 = vld [vmem:[%s2810 + $0x1f8] sm:$0xff]
    %2875 = vmatprep.subr.mxu0 %v2812
    %2876 = vmatpush1.msra.mxu0 %v2811
    %2877 = vmatprep.subr.mxu0 %v2816
    %2878 = vmatpush1.msra.mxu0 %v2815
    %2879 = vmatprep.subr.mxu0 %v2820
    %2880 = vmatpush1.msra.mxu0 %v2819
    %2881 = vmatprep.subr.mxu0 %v2824
    %2882 = vmatpush1.msra.mxu0 %v2823
    %2883 = vmatprep.subr.mxu0 %v2828
    %2884 = vmatpush1.msra.mxu0 %v2827
    %2885 = vmatprep.subr.mxu0 %v2832
    %2886 = vmatpush1.msra.mxu0 %v2831
    %2887 = vmatprep.subr.mxu0 %v2836
    %2888 = vmatpush1.msra.mxu0 %v2835
    %2889 = vmatprep.subr.mxu0 %v2840
    %2890 = vmatpush1.msra.mxu0 %v2839
    %2891 = vmatprep.subr.mxu0 %v2844
    %2892 = vmatpush1.msra.mxu0 %v2843
    %2893 = vmatprep.subr.mxu0 %v2848
    %2894 = vmatpush1.msra.mxu0 %v2847
    %2895 = vmatprep.subr.mxu0 %v2852
    %2896 = vmatpush1.msra.mxu0 %v2851
    %2897 = vmatprep.subr.mxu0 %v2856
    %2898 = vmatpush1.msra.mxu0 %v2855
    %2899 = vmatprep.subr.mxu0 %v2860
    %2900 = vmatpush1.msra.mxu0 %v2859
    %2901 = vmatprep.subr.mxu0 %v2864
    %2902 = vmatpush1.msra.mxu0 %v2863
    %2903 = vmatprep.subr.mxu0 %v2868
    %2904 = vmatpush1.msra.mxu0 %v2867
    %2905 = vmatprep.subr.mxu0 %v2872
    %2906 = vmatpush1.msra.mxu0 %v2871
    %2907 = vmatprep.subr.mxu0 0.0
    %2908 = vmatpush1.msra.mxu0 0.0
    %2909 = vmatprep.subr.mxu0 0.0
    %2910 = vmatpush1.msra.mxu0 0.0
    %2911 = vmatprep.subr.mxu0 0.0
    %2912 = vmatpush1.msra.mxu0 0.0
    %2913 = vmatprep.subr.mxu0 0.0
    %2914 = vmatpush1.msra.mxu0 0.0
    %2915 = vmatprep.subr.mxu0 0.0
    %2916 = vmatpush1.msra.mxu0 0.0
    %2917 = vmatprep.subr.mxu0 0.0
    %2918 = vmatpush1.msra.mxu0 0.0
    %2919 = vmatprep.subr.mxu0 0.0
    %2920 = vmatpush1.msra.mxu0 0.0
    %2921 = vmatprep.subr.mxu0 0.0
    %2922 = vmatpush1.msra.mxu0 0.0
    %2923 = vmatprep.subr.mxu0 0.0
    %2924 = vmatpush1.msra.mxu0 0.0
    %2925 = vmatprep.subr.mxu0 0.0
    %2926 = vmatpush1.msra.mxu0 0.0
    %2927 = vmatprep.subr.mxu0 0.0
    %2928 = vmatpush1.msra.mxu0 0.0
    %2929 = vmatprep.subr.mxu0 0.0
    %2930 = vmatpush1.msra.mxu0 0.0
    %2931 = vmatprep.subr.mxu0 0.0
    %2932 = vmatpush1.msra.mxu0 0.0
    %2933 = vmatprep.subr.mxu0 0.0
    %2934 = vmatpush1.msra.mxu0 0.0
    %2935 = vmatprep.subr.mxu0 0.0
    %2936 = vmatpush1.msra.mxu0 0.0
    %2937 = vmatprep.subr.mxu0 0.0
    %2938 = vmatpush1.msra.mxu0 0.0
    %2939 = vmatprep.mubr.f32.mxu0 0.0
    %2940 = vmatmul.mubr.f32.gmra.mrb[0].mxu0 %v2517
    %v2941 = vpop.f32.mrb[0].mxu0
    %v2942 = vadd.f32 0.0, %v2941
    %v2943 = vpop.f32.mrb[0].mxu0
    %v2944 = vadd.f32 0.0, %v2943
    %2945 = vdwg.mxu0
    %2946 = vmatprep.subr.mxu0 %v2814
    %2947 = vmatpush1.msra.mxu0 %v2813
    %2948 = vmatprep.subr.mxu0 %v2818
    %2949 = vmatpush1.msra.mxu0 %v2817
    %2950 = vmatprep.subr.mxu0 %v2822
    %2951 = vmatpush1.msra.mxu0 %v2821
    %2952 = vmatprep.subr.mxu0 %v2826
    %2953 = vmatpush1.msra.mxu0 %v2825
    %2954 = vmatprep.subr.mxu0 %v2830
    %2955 = vmatpush1.msra.mxu0 %v2829
    %2956 = vmatprep.subr.mxu0 %v2834
    %2957 = vmatpush1.msra.mxu0 %v2833
    %2958 = vmatprep.subr.mxu0 %v2838
    %2959 = vmatpush1.msra.mxu0 %v2837
    %2960 = vmatprep.subr.mxu0 %v2842
    %2961 = vmatpush1.msra.mxu0 %v2841
    %2962 = vmatprep.subr.mxu0 %v2846
    %2963 = vmatpush1.msra.mxu0 %v2845
    %2964 = vmatprep.subr.mxu0 %v2850
    %2965 = vmatpush1.msra.mxu0 %v2849
    %2966 = vmatprep.subr.mxu0 %v2854
    %2967 = vmatpush1.msra.mxu0 %v2853
    %2968 = vmatprep.subr.mxu0 %v2858
    %2969 = vmatpush1.msra.mxu0 %v2857
    %2970 = vmatprep.subr.mxu0 %v2862
    %2971 = vmatpush1.msra.mxu0 %v2861
    %2972 = vmatprep.subr.mxu0 %v2866
    %2973 = vmatpush1.msra.mxu0 %v2865
    %2974 = vmatprep.subr.mxu0 %v2870
    %2975 = vmatpush1.msra.mxu0 %v2869
    %2976 = vmatprep.subr.mxu0 %v2874
    %2977 = vmatpush1.msra.mxu0 %v2873
    %2978 = vmatprep.subr.mxu0 0.0
    %2979 = vmatpush1.msra.mxu0 0.0
    %2980 = vmatprep.subr.mxu0 0.0
    %2981 = vmatpush1.msra.mxu0 0.0
    %2982 = vmatprep.subr.mxu0 0.0
    %2983 = vmatpush1.msra.mxu0 0.0
    %2984 = vmatprep.subr.mxu0 0.0
    %2985 = vmatpush1.msra.mxu0 0.0
    %2986 = vmatprep.subr.mxu0 0.0
    %2987 = vmatpush1.msra.mxu0 0.0
    %2988 = vmatprep.subr.mxu0 0.0
    %2989 = vmatpush1.msra.mxu0 0.0
    %2990 = vmatprep.subr.mxu0 0.0
    %2991 = vmatpush1.msra.mxu0 0.0
    %2992 = vmatprep.subr.mxu0 0.0
    %2993 = vmatpush1.msra.mxu0 0.0
    %2994 = vmatprep.subr.mxu0 0.0
    %2995 = vmatpush1.msra.mxu0 0.0
    %2996 = vmatprep.subr.mxu0 0.0
    %2997 = vmatpush1.msra.mxu0 0.0
    %2998 = vmatprep.subr.mxu0 0.0
    %2999 = vmatpush1.msra.mxu0 0.0
    %3000 = vmatprep.subr.mxu0 0.0
    %3001 = vmatpush1.msra.mxu0 0.0
    %3002 = vmatprep.subr.mxu0 0.0
    %3003 = vmatpush1.msra.mxu0 0.0
    %3004 = vmatprep.subr.mxu0 0.0
    %3005 = vmatpush1.msra.mxu0 0.0
    %3006 = vmatprep.subr.mxu0 0.0
    %3007 = vmatpush1.msra.mxu0 0.0
    %3008 = vmatprep.subr.mxu0 0.0
    %3009 = vmatpush1.msra.mxu0 0.0
    %3010 = vmatprep.mubr.f32.mxu0 0.0
    %3011 = vmatmul.mubr.f32.gmra.mrb[0].mxu0 %v2517
    %v3012 = vpop.f32.mrb[0].mxu0
    %v3013 = vadd.f32 0.0, %v3012
    %v3014 = vpop.f32.mrb[0].mxu0
    %v3015 = vadd.f32 0.0, %v3014
    %3016 = vdwg.mxu0
    %v3017 = vadd.f32 %v2806, %v2942
    %v3018 = vadd.f32 %v2807, %v2944
    %v3019 = vadd.f32 %v2808, %v3013
    %v3020 = vadd.f32 %v2809, %v3015
    %v3021 = vmul.f32 %v3017, 0.5
    %v3022 = vmul.f32 %v3018, 0.5
    %v3023 = vmul.f32 %v3019, 0.5
    %v3024 = vtanh.pop %v3021
    %v3025 = vtanh.pop %v3022
    %v3026 = vtanh.pop %v3023
    %v3027 = vmul.f32 %v3024, 0.5
    %v3028 = vmul.f32 %v3025, 0.5
    %v3029 = vmul.f32 %v3026, 0.5
    %v3030 = vadd.f32 %v3027, 0.5
    %v3031 = vadd.f32 %v3028, 0.5
    %v3032 = vadd.f32 %v3029, 0.5
    %v3033 = vtanh.pop %v3020
    %v3034 = vmul.f32 %v3031, %v2519
    %v3035 = vmul.f32 %v3030, %v3033
    %v3036 = vadd.f32 %v3034, %v3035
    %v3037 = vtanh.pop %v3036
    %v3038 = vmul.f32 %v3032, %v3037
    %3039 = vst [vmem:[#allocation2] sm:$0xff] %v3038
    %v3040 = vld [vmem:[%s584] sm:$0xff]
    %v3041 = vld [vmem:[%s584 + $0x8] sm:$0xff]
    %v3042 = vld [vmem:[%s584 + $0x10] sm:$0xff]
    %v3043 = vld [vmem:[%s584 + $0x18] sm:$0xff]
    %v3044 = vld [vmem:[%s2810] sm:$0xff]
    %v3045 = vld [vmem:[%s2810 + $0x8] sm:$0xff]
    %v3046 = vld [vmem:[%s2810 + $0x10] sm:$0xff]
    %v3047 = vld [vmem:[%s2810 + $0x18] sm:$0xff]
    %v3048 = vld [vmem:[%s2810 + $0x20] sm:$0xff]
    %v3049 = vld [vmem:[%s2810 + $0x28] sm:$0xff]
    %v3050 = vld [vmem:[%s2810 + $0x30] sm:$0xff]
    %v3051 = vld [vmem:[%s2810 + $0x38] sm:$0xff]
    %v3052 = vld [vmem:[%s2810 + $0x40] sm:$0xff]
    %v3053 = vld [vmem:[%s2810 + $0x48] sm:$0xff]
    %v3054 = vld [vmem:[%s2810 + $0x50] sm:$0xff]
    %v3055 = vld [vmem:[%s2810 + $0x58] sm:$0xff]
    %v3056 = vld [vmem:[%s2810 + $0x60] sm:$0xff]
    %v3057 = vld [vmem:[%s2810 + $0x68] sm:$0xff]
    %v3058 = vld [vmem:[%s2810 + $0x70] sm:$0xff]
    %v3059 = vld [vmem:[%s2810 + $0x78] sm:$0xff]
    %v3060 = vld [vmem:[%s2810 + $0x80] sm:$0xff]
    %v3061 = vld [vmem:[%s2810 + $0x88] sm:$0xff]
    %v3062 = vld [vmem:[%s2810 + $0x90] sm:$0xff]
    %v3063 = vld [vmem:[%s2810 + $0x98] sm:$0xff]
    %v3064 = vld [vmem:[%s2810 + $0xa0] sm:$0xff]
    %v3065 = vld [vmem:[%s2810 + $0xa8] sm:$0xff]
    %v3066 = vld [vmem:[%s2810 + $0xb0] sm:$0xff]
    %v3067 = vld [vmem:[%s2810 + $0xb8] sm:$0xff]
    %v3068 = vld [vmem:[%s2810 + $0xc0] sm:$0xff]
    %v3069 = vld [vmem:[%s2810 + $0xc8] sm:$0xff]
    %v3070 = vld [vmem:[%s2810 + $0xd0] sm:$0xff]
    %v3071 = vld [vmem:[%s2810 + $0xd8] sm:$0xff]
    %v3072 = vld [vmem:[%s2810 + $0xe0] sm:$0xff]
    %v3073 = vld [vmem:[%s2810 + $0xe8] sm:$0xff]
    %v3074 = vld [vmem:[%s2810 + $0xf0] sm:$0xff]
    %v3075 = vld [vmem:[%s2810 + $0xf8] sm:$0xff]
    %v3076 = vld [vmem:[%s2810 + $0x100] sm:$0xff]
    %v3077 = vld [vmem:[%s2810 + $0x108] sm:$0xff]
    %v3078 = vld [vmem:[%s2810 + $0x110] sm:$0xff]
    %v3079 = vld [vmem:[%s2810 + $0x118] sm:$0xff]
    %v3080 = vld [vmem:[%s2810 + $0x120] sm:$0xff]
    %v3081 = vld [vmem:[%s2810 + $0x128] sm:$0xff]
    %v3082 = vld [vmem:[%s2810 + $0x130] sm:$0xff]
    %v3083 = vld [vmem:[%s2810 + $0x138] sm:$0xff]
    %v3084 = vld [vmem:[%s2810 + $0x140] sm:$0xff]
    %v3085 = vld [vmem:[%s2810 + $0x148] sm:$0xff]
    %v3086 = vld [vmem:[%s2810 + $0x150] sm:$0xff]
    %v3087 = vld [vmem:[%s2810 + $0x158] sm:$0xff]
    %v3088 = vld [vmem:[%s2810 + $0x160] sm:$0xff]
    %v3089 = vld [vmem:[%s2810 + $0x168] sm:$0xff]
    %v3090 = vld [vmem:[%s2810 + $0x170] sm:$0xff]
    %v3091 = vld [vmem:[%s2810 + $0x178] sm:$0xff]
    %v3092 = vld [vmem:[%s2810 + $0x180] sm:$0xff]
    %v3093 = vld [vmem:[%s2810 + $0x188] sm:$0xff]
    %v3094 = vld [vmem:[%s2810 + $0x190] sm:$0xff]
    %v3095 = vld [vmem:[%s2810 + $0x198] sm:$0xff]
    %v3096 = vld [vmem:[%s2810 + $0x1a0] sm:$0xff]
    %v3097 = vld [vmem:[%s2810 + $0x1a8] sm:$0xff]
    %v3098 = vld [vmem:[%s2810 + $0x1b0] sm:$0xff]
    %v3099 = vld [vmem:[%s2810 + $0x1b8] sm:$0xff]
    %v3100 = vld [vmem:[%s2810 + $0x1c0] sm:$0xff]
    %v3101 = vld [vmem:[%s2810 + $0x1c8] sm:$0xff]
    %v3102 = vld [vmem:[%s2810 + $0x1d0] sm:$0xff]
    %v3103 = vld [vmem:[%s2810 + $0x1d8] sm:$0xff]
    %v3104 = vld [vmem:[%s2810 + $0x1e0] sm:$0xff]
    %v3105 = vld [vmem:[%s2810 + $0x1e8] sm:$0xff]
    %v3106 = vld [vmem:[%s2810 + $0x1f0] sm:$0xff]
    %v3107 = vld [vmem:[%s2810 + $0x1f8] sm:$0xff]
    %3108 = vmatprep.subr.mxu0 %v3045
    %3109 = vmatpush1.msra.mxu0 %v3044
    %3110 = vmatprep.subr.mxu0 %v3049
    %3111 = vmatpush1.msra.mxu0 %v3048
    %3112 = vmatprep.subr.mxu0 %v3053
    %3113 = vmatpush1.msra.mxu0 %v3052
    %3114 = vmatprep.subr.mxu0 %v3057
    %3115 = vmatpush1.msra.mxu0 %v3056
    %3116 = vmatprep.subr.mxu0 %v3061
    %3117 = vmatpush1.msra.mxu0 %v3060
    %3118 = vmatprep.subr.mxu0 %v3065
    %3119 = vmatpush1.msra.mxu0 %v3064
    %3120 = vmatprep.subr.mxu0 %v3069
    %3121 = vmatpush1.msra.mxu0 %v3068
    %3122 = vmatprep.subr.mxu0 %v3073
    %3123 = vmatpush1.msra.mxu0 %v3072
    %3124 = vmatprep.subr.mxu0 %v3077
    %3125 = vmatpush1.msra.mxu0 %v3076
    %3126 = vmatprep.subr.mxu0 %v3081
    %3127 = vmatpush1.msra.mxu0 %v3080
    %3128 = vmatprep.subr.mxu0 %v3085
    %3129 = vmatpush1.msra.mxu0 %v3084
    %3130 = vmatprep.subr.mxu0 %v3089
    %3131 = vmatpush1.msra.mxu0 %v3088
    %3132 = vmatprep.subr.mxu0 %v3093
    %3133 = vmatpush1.msra.mxu0 %v3092
    %3134 = vmatprep.subr.mxu0 %v3097
    %3135 = vmatpush1.msra.mxu0 %v3096
    %3136 = vmatprep.subr.mxu0 %v3101
    %3137 = vmatpush1.msra.mxu0 %v3100
    %3138 = vmatprep.subr.mxu0 %v3105
    %3139 = vmatpush1.msra.mxu0 %v3104
    %3140 = vmatprep.subr.mxu0 0.0
    %3141 = vmatpush1.msra.mxu0 0.0
    %3142 = vmatprep.subr.mxu0 0.0
    %3143 = vmatpush1.msra.mxu0 0.0
    %3144 = vmatprep.subr.mxu0 0.0
    %3145 = vmatpush1.msra.mxu0 0.0
    %3146 = vmatprep.subr.mxu0 0.0
    %3147 = vmatpush1.msra.mxu0 0.0
    %3148 = vmatprep.subr.mxu0 0.0
    %3149 = vmatpush1.msra.mxu0 0.0
    %3150 = vmatprep.subr.mxu0 0.0
    %3151 = vmatpush1.msra.mxu0 0.0
    %3152 = vmatprep.subr.mxu0 0.0
    %3153 = vmatpush1.msra.mxu0 0.0
    %3154 = vmatprep.subr.mxu0 0.0
    %3155 = vmatpush1.msra.mxu0 0.0
    %3156 = vmatprep.subr.mxu0 0.0
    %3157 = vmatpush1.msra.mxu0 0.0
    %3158 = vmatprep.subr.mxu0 0.0
    %3159 = vmatpush1.msra.mxu0 0.0
    %3160 = vmatprep.subr.mxu0 0.0
    %3161 = vmatpush1.msra.mxu0 0.0
    %3162 = vmatprep.subr.mxu0 0.0
    %3163 = vmatpush1.msra.mxu0 0.0
    %3164 = vmatprep.subr.mxu0 0.0
    %3165 = vmatpush1.msra.mxu0 0.0
    %3166 = vmatprep.subr.mxu0 0.0
    %3167 = vmatpush1.msra.mxu0 0.0
    %3168 = vmatprep.subr.mxu0 0.0
    %3169 = vmatpush1.msra.mxu0 0.0
    %3170 = vmatprep.subr.mxu0 0.0
    %3171 = vmatpush1.msra.mxu0 0.0
    %3172 = vmatprep.mubr.f32.mxu0 0.0
    %3173 = vmatmul.mubr.f32.gmra.mrb[0].mxu0 %v3038
    %v3174 = vpop.f32.mrb[0].mxu0
    %v3175 = vadd.f32 0.0, %v3174
    %v3176 = vpop.f32.mrb[0].mxu0
    %v3177 = vadd.f32 0.0, %v3176
    %3178 = vdwg.mxu0
    %3179 = vmatprep.subr.mxu0 %v3047
    %3180 = vmatpush1.msra.mxu0 %v3046
    %3181 = vmatprep.subr.mxu0 %v3051
    %3182 = vmatpush1.msra.mxu0 %v3050
    %3183 = vmatprep.subr.mxu0 %v3055
    %3184 = vmatpush1.msra.mxu0 %v3054
    %3185 = vmatprep.subr.mxu0 %v3059
    %3186 = vmatpush1.msra.mxu0 %v3058
    %3187 = vmatprep.subr.mxu0 %v3063
    %3188 = vmatpush1.msra.mxu0 %v3062
    %3189 = vmatprep.subr.mxu0 %v3067
    %3190 = vmatpush1.msra.mxu0 %v3066
    %3191 = vmatprep.subr.mxu0 %v3071
    %3192 = vmatpush1.msra.mxu0 %v3070
    %3193 = vmatprep.subr.mxu0 %v3075
    %3194 = vmatpush1.msra.mxu0 %v3074
    %3195 = vmatprep.subr.mxu0 %v3079
    %3196 = vmatpush1.msra.mxu0 %v3078
    %3197 = vmatprep.subr.mxu0 %v3083
    %3198 = vmatpush1.msra.mxu0 %v3082
    %3199 = vmatprep.subr.mxu0 %v3087
    %3200 = vmatpush1.msra.mxu0 %v3086
    %3201 = vmatprep.subr.mxu0 %v3091
    %3202 = vmatpush1.msra.mxu0 %v3090
    %3203 = vmatprep.subr.mxu0 %v3095
    %3204 = vmatpush1.msra.mxu0 %v3094
    %3205 = vmatprep.subr.mxu0 %v3099
    %3206 = vmatpush1.msra.mxu0 %v3098
    %3207 = vmatprep.subr.mxu0 %v3103
    %3208 = vmatpush1.msra.mxu0 %v3102
    %3209 = vmatprep.subr.mxu0 %v3107
    %3210 = vmatpush1.msra.mxu0 %v3106
    %3211 = vmatprep.subr.mxu0 0.0
    %3212 = vmatpush1.msra.mxu0 0.0
    %3213 = vmatprep.subr.mxu0 0.0
    %3214 = vmatpush1.msra.mxu0 0.0
    %3215 = vmatprep.subr.mxu0 0.0
    %3216 = vmatpush1.msra.mxu0 0.0
    %3217 = vmatprep.subr.mxu0 0.0
    %3218 = vmatpush1.msra.mxu0 0.0
    %3219 = vmatprep.subr.mxu0 0.0
    %3220 = vmatpush1.msra.mxu0 0.0
    %3221 = vmatprep.subr.mxu0 0.0
    %3222 = vmatpush1.msra.mxu0 0.0
    %3223 = vmatprep.subr.mxu0 0.0
    %3224 = vmatpush1.msra.mxu0 0.0
    %3225 = vmatprep.subr.mxu0 0.0
    %3226 = vmatpush1.msra.mxu0 0.0
    %3227 = vmatprep.subr.mxu0 0.0
    %3228 = vmatpush1.msra.mxu0 0.0
    %3229 = vmatprep.subr.mxu0 0.0
    %3230 = vmatpush1.msra.mxu0 0.0
    %3231 = vmatprep.subr.mxu0 0.0
    %3232 = vmatpush1.msra.mxu0 0.0
    %3233 = vmatprep.subr.mxu0 0.0
    %3234 = vmatpush1.msra.mxu0 0.0
    %3235 = vmatprep.subr.mxu0 0.0
    %3236 = vmatpush1.msra.mxu0 0.0
    %3237 = vmatprep.subr.mxu0 0.0
    %3238 = vmatpush1.msra.mxu0 0.0
    %3239 = vmatprep.subr.mxu0 0.0
    %3240 = vmatpush1.msra.mxu0 0.0
    %3241 = vmatprep.subr.mxu0 0.0
    %3242 = vmatpush1.msra.mxu0 0.0
    %3243 = vmatprep.mubr.f32.mxu0 0.0
    %3244 = vmatmul.mubr.f32.gmra.mrb[0].mxu0 %v3038
    %v3245 = vpop.f32.mrb[0].mxu0
    %v3246 = vadd.f32 0.0, %v3245
    %v3247 = vpop.f32.mrb[0].mxu0
    %v3248 = vadd.f32 0.0, %v3247
    %3249 = vdwg.mxu0
    %v3250 = vadd.f32 %v3040, %v3175
    %v3251 = vadd.f32 %v3041, %v3177
    %v3252 = vadd.f32 %v3042, %v3246
    %v3253 = vadd.f32 %v3043, %v3248
    %v3254 = vmul.f32 %v3250, 0.5
    %v3255 = vmul.f32 %v3251, 0.5
    %v3256 = vmul.f32 %v3252, 0.5
    %v3257 = vtanh.pop %v3254
    %v3258 = vtanh.pop %v3255
    %v3259 = vtanh.pop %v3256
    %v3260 = vmul.f32 %v3257, 0.5
    %v3261 = vmul.f32 %v3258, 0.5
    %v3262 = vmul.f32 %v3259, 0.5
    %v3263 = vadd.f32 %v3260, 0.5
    %v3264 = vadd.f32 %v3261, 0.5
    %v3265 = vadd.f32 %v3262, 0.5
    %v3266 = vtanh.pop %v3253
    %v3267 = vmul.f32 %v3264, %v3036
    %v3268 = vmul.f32 %v3263, %v3266
    %v3269 = vadd.f32 %v3267, %v3268
    %v3270 = vtanh.pop %v3269
    %v3271 = vmul.f32 %v3265, %v3270
    %3272 = vst [vmem:[%s817] sm:$0xff] %v3271
    %v3273 = vld [vmem:[%s821] sm:$0xff]
    %v3274 = vld [vmem:[%s821 + $0x8] sm:$0xff]
    %v3275 = vld [vmem:[%s821 + $0x10] sm:$0xff]
    %v3276 = vld [vmem:[%s821 + $0x18] sm:$0xff]
    %v3277 = vld [vmem:[%s2810] sm:$0xff]
    %v3278 = vld [vmem:[%s2810 + $0x8] sm:$0xff]
    %v3279 = vld [vmem:[%s2810 + $0x10] sm:$0xff]
    %v3280 = vld [vmem:[%s2810 + $0x18] sm:$0xff]
    %v3281 = vld [vmem:[%s2810 + $0x20] sm:$0xff]
    %v3282 = vld [vmem:[%s2810 + $0x28] sm:$0xff]
    %v3283 = vld [vmem:[%s2810 + $0x30] sm:$0xff]
    %v3284 = vld [vmem:[%s2810 + $0x38] sm:$0xff]
    %v3285 = vld [vmem:[%s2810 + $0x40] sm:$0xff]
    %v3286 = vld [vmem:[%s2810 + $0x48] sm:$0xff]
    %v3287 = vld [vmem:[%s2810 + $0x50] sm:$0xff]
    %v3288 = vld [vmem:[%s2810 + $0x58] sm:$0xff]
    %v3289 = vld [vmem:[%s2810 + $0x60] sm:$0xff]
    %v3290 = vld [vmem:[%s2810 + $0x68] sm:$0xff]
    %v3291 = vld [vmem:[%s2810 + $0x70] sm:$0xff]
    %v3292 = vld [vmem:[%s2810 + $0x78] sm:$0xff]
    %v3293 = vld [vmem:[%s2810 + $0x80] sm:$0xff]
    %v3294 = vld [vmem:[%s2810 + $0x88] sm:$0xff]
    %v3295 = vld [vmem:[%s2810 + $0x90] sm:$0xff]
    %v3296 = vld [vmem:[%s2810 + $0x98] sm:$0xff]
    %v3297 = vld [vmem:[%s2810 + $0xa0] sm:$0xff]
    %v3298 = vld [vmem:[%s2810 + $0xa8] sm:$0xff]
    %v3299 = vld [vmem:[%s2810 + $0xb0] sm:$0xff]
    %v3300 = vld [vmem:[%s2810 + $0xb8] sm:$0xff]
    %v3301 = vld [vmem:[%s2810 + $0xc0] sm:$0xff]
    %v3302 = vld [vmem:[%s2810 + $0xc8] sm:$0xff]
    %v3303 = vld [vmem:[%s2810 + $0xd0] sm:$0xff]
    %v3304 = vld [vmem:[%s2810 + $0xd8] sm:$0xff]
    %v3305 = vld [vmem:[%s2810 + $0xe0] sm:$0xff]
    %v3306 = vld [vmem:[%s2810 + $0xe8] sm:$0xff]
    %v3307 = vld [vmem:[%s2810 + $0xf0] sm:$0xff]
    %v3308 = vld [vmem:[%s2810 + $0xf8] sm:$0xff]
    %v3309 = vld [vmem:[%s2810 + $0x100] sm:$0xff]
    %v3310 = vld [vmem:[%s2810 + $0x108] sm:$0xff]
    %v3311 = vld [vmem:[%s2810 + $0x110] sm:$0xff]
    %v3312 = vld [vmem:[%s2810 + $0x118] sm:$0xff]
    %v3313 = vld [vmem:[%s2810 + $0x120] sm:$0xff]
    %v3314 = vld [vmem:[%s2810 + $0x128] sm:$0xff]
    %v3315 = vld [vmem:[%s2810 + $0x130] sm:$0xff]
    %v3316 = vld [vmem:[%s2810 + $0x138] sm:$0xff]
    %v3317 = vld [vmem:[%s2810 + $0x140] sm:$0xff]
    %v3318 = vld [vmem:[%s2810 + $0x148] sm:$0xff]
    %v3319 = vld [vmem:[%s2810 + $0x150] sm:$0xff]
    %v3320 = vld [vmem:[%s2810 + $0x158] sm:$0xff]
    %v3321 = vld [vmem:[%s2810 + $0x160] sm:$0xff]
    %v3322 = vld [vmem:[%s2810 + $0x168] sm:$0xff]
    %v3323 = vld [vmem:[%s2810 + $0x170] sm:$0xff]
    %v3324 = vld [vmem:[%s2810 + $0x178] sm:$0xff]
    %v3325 = vld [vmem:[%s2810 + $0x180] sm:$0xff]
    %v3326 = vld [vmem:[%s2810 + $0x188] sm:$0xff]
    %v3327 = vld [vmem:[%s2810 + $0x190] sm:$0xff]
    %v3328 = vld [vmem:[%s2810 + $0x198] sm:$0xff]
    %v3329 = vld [vmem:[%s2810 + $0x1a0] sm:$0xff]
    %v3330 = vld [vmem:[%s2810 + $0x1a8] sm:$0xff]
    %v3331 = vld [vmem:[%s2810 + $0x1b0] sm:$0xff]
    %v3332 = vld [vmem:[%s2810 + $0x1b8] sm:$0xff]
    %v3333 = vld [vmem:[%s2810 + $0x1c0] sm:$0xff]
    %v3334 = vld [vmem:[%s2810 + $0x1c8] sm:$0xff]
    %v3335 = vld [vmem:[%s2810 + $0x1d0] sm:$0xff]
    %v3336 = vld [vmem:[%s2810 + $0x1d8] sm:$0xff]
    %v3337 = vld [vmem:[%s2810 + $0x1e0] sm:$0xff]
    %v3338 = vld [vmem:[%s2810 + $0x1e8] sm:$0xff]
    %v3339 = vld [vmem:[%s2810 + $0x1f0] sm:$0xff]
    %v3340 = vld [vmem:[%s2810 + $0x1f8] sm:$0xff]
    %3341 = vmatprep.subr.mxu0 %v3278
    %3342 = vmatpush1.msra.mxu0 %v3277
    %3343 = vmatprep.subr.mxu0 %v3282
    %3344 = vmatpush1.msra.mxu0 %v3281
    %3345 = vmatprep.subr.mxu0 %v3286
    %3346 = vmatpush1.msra.mxu0 %v3285
    %3347 = vmatprep.subr.mxu0 %v3290
    %3348 = vmatpush1.msra.mxu0 %v3289
    %3349 = vmatprep.subr.mxu0 %v3294
    %3350 = vmatpush1.msra.mxu0 %v3293
    %3351 = vmatprep.subr.mxu0 %v3298
    %3352 = vmatpush1.msra.mxu0 %v3297
    %3353 = vmatprep.subr.mxu0 %v3302
    %3354 = vmatpush1.msra.mxu0 %v3301
    %3355 = vmatprep.subr.mxu0 %v3306
    %3356 = vmatpush1.msra.mxu0 %v3305
    %3357 = vmatprep.subr.mxu0 %v3310
    %3358 = vmatpush1.msra.mxu0 %v3309
    %3359 = vmatprep.subr.mxu0 %v3314
    %3360 = vmatpush1.msra.mxu0 %v3313
    %3361 = vmatprep.subr.mxu0 %v3318
    %3362 = vmatpush1.msra.mxu0 %v3317
    %3363 = vmatprep.subr.mxu0 %v3322
    %3364 = vmatpush1.msra.mxu0 %v3321
    %3365 = vmatprep.subr.mxu0 %v3326
    %3366 = vmatpush1.msra.mxu0 %v3325
    %3367 = vmatprep.subr.mxu0 %v3330
    %3368 = vmatpush1.msra.mxu0 %v3329
    %3369 = vmatprep.subr.mxu0 %v3334
    %3370 = vmatpush1.msra.mxu0 %v3333
    %3371 = vmatprep.subr.mxu0 %v3338
    %3372 = vmatpush1.msra.mxu0 %v3337
    %3373 = vmatprep.subr.mxu0 0.0
    %3374 = vmatpush1.msra.mxu0 0.0
    %3375 = vmatprep.subr.mxu0 0.0
    %3376 = vmatpush1.msra.mxu0 0.0
    %3377 = vmatprep.subr.mxu0 0.0
    %3378 = vmatpush1.msra.mxu0 0.0
    %3379 = vmatprep.subr.mxu0 0.0
    %3380 = vmatpush1.msra.mxu0 0.0
    %3381 = vmatprep.subr.mxu0 0.0
    %3382 = vmatpush1.msra.mxu0 0.0
    %3383 = vmatprep.subr.mxu0 0.0
    %3384 = vmatpush1.msra.mxu0 0.0
    %3385 = vmatprep.subr.mxu0 0.0
    %3386 = vmatpush1.msra.mxu0 0.0
    %3387 = vmatprep.subr.mxu0 0.0
    %3388 = vmatpush1.msra.mxu0 0.0
    %3389 = vmatprep.subr.mxu0 0.0
    %3390 = vmatpush1.msra.mxu0 0.0
    %3391 = vmatprep.subr.mxu0 0.0
    %3392 = vmatpush1.msra.mxu0 0.0
    %3393 = vmatprep.subr.mxu0 0.0
    %3394 = vmatpush1.msra.mxu0 0.0
    %3395 = vmatprep.subr.mxu0 0.0
    %3396 = vmatpush1.msra.mxu0 0.0
    %3397 = vmatprep.subr.mxu0 0.0
    %3398 = vmatpush1.msra.mxu0 0.0
    %3399 = vmatprep.subr.mxu0 0.0
    %3400 = vmatpush1.msra.mxu0 0.0
    %3401 = vmatprep.subr.mxu0 0.0
    %3402 = vmatpush1.msra.mxu0 0.0
    %3403 = vmatprep.subr.mxu0 0.0
    %3404 = vmatpush1.msra.mxu0 0.0
    %3405 = vmatprep.mubr.f32.mxu0 0.0
    %3406 = vmatmul.mubr.f32.gmra.mrb[0].mxu0 %v3271
    %v3407 = vpop.f32.mrb[0].mxu0
    %v3408 = vadd.f32 0.0, %v3407
    %v3409 = vpop.f32.mrb[0].mxu0
    %v3410 = vadd.f32 0.0, %v3409
    %3411 = vdwg.mxu0
    %3412 = vmatprep.subr.mxu0 %v3280
    %3413 = vmatpush1.msra.mxu0 %v3279
    %3414 = vmatprep.subr.mxu0 %v3284
    %3415 = vmatpush1.msra.mxu0 %v3283
    %3416 = vmatprep.subr.mxu0 %v3288
    %3417 = vmatpush1.msra.mxu0 %v3287
    %3418 = vmatprep.subr.mxu0 %v3292
    %3419 = vmatpush1.msra.mxu0 %v3291
    %3420 = vmatprep.subr.mxu0 %v3296
    %3421 = vmatpush1.msra.mxu0 %v3295
    %3422 = vmatprep.subr.mxu0 %v3300
    %3423 = vmatpush1.msra.mxu0 %v3299
    %3424 = vmatprep.subr.mxu0 %v3304
    %3425 = vmatpush1.msra.mxu0 %v3303
    %3426 = vmatprep.subr.mxu0 %v3308
    %3427 = vmatpush1.msra.mxu0 %v3307
    %3428 = vmatprep.subr.mxu0 %v3312
    %3429 = vmatpush1.msra.mxu0 %v3311
    %3430 = vmatprep.subr.mxu0 %v3316
    %3431 = vmatpush1.msra.mxu0 %v3315
    %3432 = vmatprep.subr.mxu0 %v3320
    %3433 = vmatpush1.msra.mxu0 %v3319
    %3434 = vmatprep.subr.mxu0 %v3324
    %3435 = vmatpush1.msra.mxu0 %v3323
    %3436 = vmatprep.subr.mxu0 %v3328
    %3437 = vmatpush1.msra.mxu0 %v3327
    %3438 = vmatprep.subr.mxu0 %v3332
    %3439 = vmatpush1.msra.mxu0 %v3331
    %3440 = vmatprep.subr.mxu0 %v3336
    %3441 = vmatpush1.msra.mxu0 %v3335
    %3442 = vmatprep.subr.mxu0 %v3340
    %3443 = vmatpush1.msra.mxu0 %v3339
    %3444 = vmatprep.subr.mxu0 0.0
    %3445 = vmatpush1.msra.mxu0 0.0
    %3446 = vmatprep.subr.mxu0 0.0
    %3447 = vmatpush1.msra.mxu0 0.0
    %3448 = vmatprep.subr.mxu0 0.0
    %3449 = vmatpush1.msra.mxu0 0.0
    %3450 = vmatprep.subr.mxu0 0.0
    %3451 = vmatpush1.msra.mxu0 0.0
    %3452 = vmatprep.subr.mxu0 0.0
    %3453 = vmatpush1.msra.mxu0 0.0
    %3454 = vmatprep.subr.mxu0 0.0
    %3455 = vmatpush1.msra.mxu0 0.0
    %3456 = vmatprep.subr.mxu0 0.0
    %3457 = vmatpush1.msra.mxu0 0.0
    %3458 = vmatprep.subr.mxu0 0.0
    %3459 = vmatpush1.msra.mxu0 0.0
    %3460 = vmatprep.subr.mxu0 0.0
    %3461 = vmatpush1.msra.mxu0 0.0
    %3462 = vmatprep.subr.mxu0 0.0
    %3463 = vmatpush1.msra.mxu0 0.0
    %3464 = vmatprep.subr.mxu0 0.0
    %3465 = vmatpush1.msra.mxu0 0.0
    %3466 = vmatprep.subr.mxu0 0.0
    %3467 = vmatpush1.msra.mxu0 0.0
    %3468 = vmatprep.subr.mxu0 0.0
    %3469 = vmatpush1.msra.mxu0 0.0
    %3470 = vmatprep.subr.mxu0 0.0
    %3471 = vmatpush1.msra.mxu0 0.0
    %3472 = vmatprep.subr.mxu0 0.0
    %3473 = vmatpush1.msra.mxu0 0.0
    %3474 = vmatprep.subr.mxu0 0.0
    %3475 = vmatpush1.msra.mxu0 0.0
    %3476 = vmatprep.mubr.f32.mxu0 0.0
    %3477 = vmatmul.mubr.f32.gmra.mrb[0].mxu0 %v3271
    %v3478 = vpop.f32.mrb[0].mxu0
    %v3479 = vadd.f32 0.0, %v3478
    %v3480 = vpop.f32.mrb[0].mxu0
    %v3481 = vadd.f32 0.0, %v3480
    %3482 = vdwg.mxu0
    %v3483 = vadd.f32 %v3273, %v3408
    %v3484 = vadd.f32 %v3274, %v3410
    %v3485 = vadd.f32 %v3275, %v3479
    %v3486 = vadd.f32 %v3276, %v3481
    %v3487 = vmul.f32 %v3483, 0.5
    %v3488 = vmul.f32 %v3484, 0.5
    %v3489 = vmul.f32 %v3485, 0.5
    %v3490 = vtanh.pop %v3487
    %v3491 = vtanh.pop %v3488
    %v3492 = vtanh.pop %v3489
    %v3493 = vmul.f32 %v3490, 0.5
    %v3494 = vmul.f32 %v3491, 0.5
    %v3495 = vmul.f32 %v3492, 0.5
    %v3496 = vadd.f32 %v3493, 0.5
    %v3497 = vadd.f32 %v3494, 0.5
    %v3498 = vadd.f32 %v3495, 0.5
    %v3499 = vtanh.pop %v3486
    %v3500 = vmul.f32 %v3497, %v3269
    %v3501 = vmul.f32 %v3496, %v3499
    %v3502 = vadd.f32 %v3500, %v3501
    %v3503 = vtanh.pop %v3502
    %v3504 = vmul.f32 %v3498, %v3503
    %3505 = vst [vmem:[%s1054] sm:$0xff] %v3504
    %v3506 = vld [vmem:[%s1058] sm:$0xff]
    %v3507 = vld [vmem:[%s1058 + $0x8] sm:$0xff]
    %v3508 = vld [vmem:[%s1058 + $0x10] sm:$0xff]
    %v3509 = vld [vmem:[%s1058 + $0x18] sm:$0xff]
    %v3510 = vld [vmem:[%s2810] sm:$0xff]
    %v3511 = vld [vmem:[%s2810 + $0x8] sm:$0xff]
    %v3512 = vld [vmem:[%s2810 + $0x10] sm:$0xff]
    %v3513 = vld [vmem:[%s2810 + $0x18] sm:$0xff]
    %v3514 = vld [vmem:[%s2810 + $0x20] sm:$0xff]
    %v3515 = vld [vmem:[%s2810 + $0x28] sm:$0xff]
    %v3516 = vld [vmem:[%s2810 + $0x30] sm:$0xff]
    %v3517 = vld [vmem:[%s2810 + $0x38] sm:$0xff]
    %v3518 = vld [vmem:[%s2810 + $0x40] sm:$0xff]
    %v3519 = vld [vmem:[%s2810 + $0x48] sm:$0xff]
    %v3520 = vld [vmem:[%s2810 + $0x50] sm:$0xff]
    %v3521 = vld [vmem:[%s2810 + $0x58] sm:$0xff]
    %v3522 = vld [vmem:[%s2810 + $0x60] sm:$0xff]
    %v3523 = vld [vmem:[%s2810 + $0x68] sm:$0xff]
    %v3524 = vld [vmem:[%s2810 + $0x70] sm:$0xff]
    %v3525 = vld [vmem:[%s2810 + $0x78] sm:$0xff]
    %v3526 = vld [vmem:[%s2810 + $0x80] sm:$0xff]
    %v3527 = vld [vmem:[%s2810 + $0x88] sm:$0xff]
    %v3528 = vld [vmem:[%s2810 + $0x90] sm:$0xff]
    %v3529 = vld [vmem:[%s2810 + $0x98] sm:$0xff]
    %v3530 = vld [vmem:[%s2810 + $0xa0] sm:$0xff]
    %v3531 = vld [vmem:[%s2810 + $0xa8] sm:$0xff]
    %v3532 = vld [vmem:[%s2810 + $0xb0] sm:$0xff]
    %v3533 = vld [vmem:[%s2810 + $0xb8] sm:$0xff]
    %v3534 = vld [vmem:[%s2810 + $0xc0] sm:$0xff]
    %v3535 = vld [vmem:[%s2810 + $0xc8] sm:$0xff]
    %v3536 = vld [vmem:[%s2810 + $0xd0] sm:$0xff]
    %v3537 = vld [vmem:[%s2810 + $0xd8] sm:$0xff]
    %v3538 = vld [vmem:[%s2810 + $0xe0] sm:$0xff]
    %v3539 = vld [vmem:[%s2810 + $0xe8] sm:$0xff]
    %v3540 = vld [vmem:[%s2810 + $0xf0] sm:$0xff]
    %v3541 = vld [vmem:[%s2810 + $0xf8] sm:$0xff]
    %v3542 = vld [vmem:[%s2810 + $0x100] sm:$0xff]
    %v3543 = vld [vmem:[%s2810 + $0x108] sm:$0xff]
    %v3544 = vld [vmem:[%s2810 + $0x110] sm:$0xff]
    %v3545 = vld [vmem:[%s2810 + $0x118] sm:$0xff]
    %v3546 = vld [vmem:[%s2810 + $0x120] sm:$0xff]
    %v3547 = vld [vmem:[%s2810 + $0x128] sm:$0xff]
    %v3548 = vld [vmem:[%s2810 + $0x130] sm:$0xff]
    %v3549 = vld [vmem:[%s2810 + $0x138] sm:$0xff]
    %v3550 = vld [vmem:[%s2810 + $0x140] sm:$0xff]
    %v3551 = vld [vmem:[%s2810 + $0x148] sm:$0xff]
    %v3552 = vld [vmem:[%s2810 + $0x150] sm:$0xff]
    %v3553 = vld [vmem:[%s2810 + $0x158] sm:$0xff]
    %v3554 = vld [vmem:[%s2810 + $0x160] sm:$0xff]
    %v3555 = vld [vmem:[%s2810 + $0x168] sm:$0xff]
    %v3556 = vld [vmem:[%s2810 + $0x170] sm:$0xff]
    %v3557 = vld [vmem:[%s2810 + $0x178] sm:$0xff]
    %v3558 = vld [vmem:[%s2810 + $0x180] sm:$0xff]
    %v3559 = vld [vmem:[%s2810 + $0x188] sm:$0xff]
    %v3560 = vld [vmem:[%s2810 + $0x190] sm:$0xff]
    %v3561 = vld [vmem:[%s2810 + $0x198] sm:$0xff]
    %v3562 = vld [vmem:[%s2810 + $0x1a0] sm:$0xff]
    %v3563 = vld [vmem:[%s2810 + $0x1a8] sm:$0xff]
    %v3564 = vld [vmem:[%s2810 + $0x1b0] sm:$0xff]
    %v3565 = vld [vmem:[%s2810 + $0x1b8] sm:$0xff]
    %v3566 = vld [vmem:[%s2810 + $0x1c0] sm:$0xff]
    %v3567 = vld [vmem:[%s2810 + $0x1c8] sm:$0xff]
    %v3568 = vld [vmem:[%s2810 + $0x1d0] sm:$0xff]
    %v3569 = vld [vmem:[%s2810 + $0x1d8] sm:$0xff]
    %v3570 = vld [vmem:[%s2810 + $0x1e0] sm:$0xff]
    %v3571 = vld [vmem:[%s2810 + $0x1e8] sm:$0xff]
    %v3572 = vld [vmem:[%s2810 + $0x1f0] sm:$0xff]
    %v3573 = vld [vmem:[%s2810 + $0x1f8] sm:$0xff]
    %3574 = vmatprep.subr.mxu0 %v3511
    %3575 = vmatpush1.msra.mxu0 %v3510
    %3576 = vmatprep.subr.mxu0 %v3515
    %3577 = vmatpush1.msra.mxu0 %v3514
    %3578 = vmatprep.subr.mxu0 %v3519
    %3579 = vmatpush1.msra.mxu0 %v3518
    %3580 = vmatprep.subr.mxu0 %v3523
    %3581 = vmatpush1.msra.mxu0 %v3522
    %3582 = vmatprep.subr.mxu0 %v3527
    %3583 = vmatpush1.msra.mxu0 %v3526
    %3584 = vmatprep.subr.mxu0 %v3531
    %3585 = vmatpush1.msra.mxu0 %v3530
    %3586 = vmatprep.subr.mxu0 %v3535
    %3587 = vmatpush1.msra.mxu0 %v3534
    %3588 = vmatprep.subr.mxu0 %v3539
    %3589 = vmatpush1.msra.mxu0 %v3538
    %3590 = vmatprep.subr.mxu0 %v3543
    %3591 = vmatpush1.msra.mxu0 %v3542
    %3592 = vmatprep.subr.mxu0 %v3547
    %3593 = vmatpush1.msra.mxu0 %v3546
    %3594 = vmatprep.subr.mxu0 %v3551
    %3595 = vmatpush1.msra.mxu0 %v3550
    %3596 = vmatprep.subr.mxu0 %v3555
    %3597 = vmatpush1.msra.mxu0 %v3554
    %3598 = vmatprep.subr.mxu0 %v3559
    %3599 = vmatpush1.msra.mxu0 %v3558
    %3600 = vmatprep.subr.mxu0 %v3563
    %3601 = vmatpush1.msra.mxu0 %v3562
    %3602 = vmatprep.subr.mxu0 %v3567
    %3603 = vmatpush1.msra.mxu0 %v3566
    %3604 = vmatprep.subr.mxu0 %v3571
    %3605 = vmatpush1.msra.mxu0 %v3570
    %3606 = vmatprep.subr.mxu0 0.0
    %3607 = vmatpush1.msra.mxu0 0.0
    %3608 = vmatprep.subr.mxu0 0.0
    %3609 = vmatpush1.msra.mxu0 0.0
    %3610 = vmatprep.subr.mxu0 0.0
    %3611 = vmatpush1.msra.mxu0 0.0
    %3612 = vmatprep.subr.mxu0 0.0
    %3613 = vmatpush1.msra.mxu0 0.0
    %3614 = vmatprep.subr.mxu0 0.0
    %3615 = vmatpush1.msra.mxu0 0.0
    %3616 = vmatprep.subr.mxu0 0.0
    %3617 = vmatpush1.msra.mxu0 0.0
    %3618 = vmatprep.subr.mxu0 0.0
    %3619 = vmatpush1.msra.mxu0 0.0
    %3620 = vmatprep.subr.mxu0 0.0
    %3621 = vmatpush1.msra.mxu0 0.0
    %3622 = vmatprep.subr.mxu0 0.0
    %3623 = vmatpush1.msra.mxu0 0.0
    %3624 = vmatprep.subr.mxu0 0.0
    %3625 = vmatpush1.msra.mxu0 0.0
    %3626 = vmatprep.subr.mxu0 0.0
    %3627 = vmatpush1.msra.mxu0 0.0
    %3628 = vmatprep.subr.mxu0 0.0
    %3629 = vmatpush1.msra.mxu0 0.0
    %3630 = vmatprep.subr.mxu0 0.0
    %3631 = vmatpush1.msra.mxu0 0.0
    %3632 = vmatprep.subr.mxu0 0.0
    %3633 = vmatpush1.msra.mxu0 0.0
    %3634 = vmatprep.subr.mxu0 0.0
    %3635 = vmatpush1.msra.mxu0 0.0
    %3636 = vmatprep.subr.mxu0 0.0
    %3637 = vmatpush1.msra.mxu0 0.0
    %3638 = vmatprep.mubr.f32.mxu0 0.0
    %3639 = vmatmul.mubr.f32.gmra.mrb[0].mxu0 %v3504
    %v3640 = vpop.f32.mrb[0].mxu0
    %v3641 = vadd.f32 0.0, %v3640
    %v3642 = vpop.f32.mrb[0].mxu0
    %v3643 = vadd.f32 0.0, %v3642
    %3644 = vdwg.mxu0
    %3645 = vmatprep.subr.mxu0 %v3513
    %3646 = vmatpush1.msra.mxu0 %v3512
    %3647 = vmatprep.subr.mxu0 %v3517
    %3648 = vmatpush1.msra.mxu0 %v3516
    %3649 = vmatprep.subr.mxu0 %v3521
    %3650 = vmatpush1.msra.mxu0 %v3520
    %3651 = vmatprep.subr.mxu0 %v3525
    %3652 = vmatpush1.msra.mxu0 %v3524
    %3653 = vmatprep.subr.mxu0 %v3529
    %3654 = vmatpush1.msra.mxu0 %v3528
    %3655 = vmatprep.subr.mxu0 %v3533
    %3656 = vmatpush1.msra.mxu0 %v3532
    %3657 = vmatprep.subr.mxu0 %v3537
    %3658 = vmatpush1.msra.mxu0 %v3536
    %3659 = vmatprep.subr.mxu0 %v3541
    %3660 = vmatpush1.msra.mxu0 %v3540
    %3661 = vmatprep.subr.mxu0 %v3545
    %3662 = vmatpush1.msra.mxu0 %v3544
    %3663 = vmatprep.subr.mxu0 %v3549
    %3664 = vmatpush1.msra.mxu0 %v3548
    %3665 = vmatprep.subr.mxu0 %v3553
    %3666 = vmatpush1.msra.mxu0 %v3552
    %3667 = vmatprep.subr.mxu0 %v3557
    %3668 = vmatpush1.msra.mxu0 %v3556
    %3669 = vmatprep.subr.mxu0 %v3561
    %3670 = vmatpush1.msra.mxu0 %v3560
    %3671 = vmatprep.subr.mxu0 %v3565
    %3672 = vmatpush1.msra.mxu0 %v3564
    %3673 = vmatprep.subr.mxu0 %v3569
    %3674 = vmatpush1.msra.mxu0 %v3568
    %3675 = vmatprep.subr.mxu0 %v3573
    %3676 = vmatpush1.msra.mxu0 %v3572
    %3677 = vmatprep.subr.mxu0 0.0
    %3678 = vmatpush1.msra.mxu0 0.0
    %3679 = vmatprep.subr.mxu0 0.0
    %3680 = vmatpush1.msra.mxu0 0.0
    %3681 = vmatprep.subr.mxu0 0.0
    %3682 = vmatpush1.msra.mxu0 0.0
    %3683 = vmatprep.subr.mxu0 0.0
    %3684 = vmatpush1.msra.mxu0 0.0
    %3685 = vmatprep.subr.mxu0 0.0
    %3686 = vmatpush1.msra.mxu0 0.0
    %3687 = vmatprep.subr.mxu0 0.0
    %3688 = vmatpush1.msra.mxu0 0.0
    %3689 = vmatprep.subr.mxu0 0.0
    %3690 = vmatpush1.msra.mxu0 0.0
    %3691 = vmatprep.subr.mxu0 0.0
    %3692 = vmatpush1.msra.mxu0 0.0
    %3693 = vmatprep.subr.mxu0 0.0
    %3694 = vmatpush1.msra.mxu0 0.0
    %3695 = vmatprep.subr.mxu0 0.0
    %3696 = vmatpush1.msra.mxu0 0.0
    %3697 = vmatprep.subr.mxu0 0.0
    %3698 = vmatpush1.msra.mxu0 0.0
    %3699 = vmatprep.subr.mxu0 0.0
    %3700 = vmatpush1.msra.mxu0 0.0
    %3701 = vmatprep.subr.mxu0 0.0
    %3702 = vmatpush1.msra.mxu0 0.0
    %3703 = vmatprep.subr.mxu0 0.0
    %3704 = vmatpush1.msra.mxu0 0.0
    %3705 = vmatprep.subr.mxu0 0.0
    %3706 = vmatpush1.msra.mxu0 0.0
    %3707 = vmatprep.subr.mxu0 0.0
    %3708 = vmatpush1.msra.mxu0 0.0
    %3709 = vmatprep.mubr.f32.mxu0 0.0
    %3710 = vmatmul.mubr.f32.gmra.mrb[0].mxu0 %v3504
    %v3711 = vpop.f32.mrb[0].mxu0
    %v3712 = vadd.f32 0.0, %v3711
    %v3713 = vpop.f32.mrb[0].mxu0
    %v3714 = vadd.f32 0.0, %v3713
    %3715 = vdwg.mxu0
    %v3716 = vadd.f32 %v3506, %v3641
    %v3717 = vadd.f32 %v3507, %v3643
    %v3718 = vadd.f32 %v3508, %v3712
    %v3719 = vadd.f32 %v3509, %v3714
    %v3720 = vmul.f32 %v3716, 0.5
    %v3721 = vmul.f32 %v3717, 0.5
    %v3722 = vmul.f32 %v3718, 0.5
    %v3723 = vtanh.pop %v3720
    %v3724 = vtanh.pop %v3721
    %v3725 = vtanh.pop %v3722
    %v3726 = vmul.f32 %v3723, 0.5
    %v3727 = vmul.f32 %v3724, 0.5
    %v3728 = vmul.f32 %v3725, 0.5
    %v3729 = vadd.f32 %v3726, 0.5
    %v3730 = vadd.f32 %v3727, 0.5
    %v3731 = vadd.f32 %v3728, 0.5
    %v3732 = vtanh.pop %v3719
    %v3733 = vmul.f32 %v3730, %v3502
    %v3734 = vmul.f32 %v3729, %v3732
    %v3735 = vadd.f32 %v3733, %v3734
    %v3736 = vtanh.pop %v3735
    %v3737 = vmul.f32 %v3731, %v3736
    %3738 = vst [vmem:[%s1291] sm:$0xff] %v3737
    %v3739 = vld [vmem:[#allocation2 + $0x20] sm:$0xff]
    %v3740 = vld [vmem:[#allocation2 + $0x28] sm:$0xff]
    %v3741 = vld [vmem:[#allocation2 + $0x30] sm:$0xff]
    %v3742 = vld [vmem:[#allocation2 + $0x38] sm:$0xff]
    %v3743 = vld [vmem:[%s2524] sm:$0xff]
    %v3744 = vld [vmem:[%s2524 + $0x8] sm:$0xff]
    %v3745 = vld [vmem:[%s2524 + $0x10] sm:$0xff]
    %v3746 = vld [vmem:[%s2524 + $0x18] sm:$0xff]
    %v3747 = vld [vmem:[%s2524 + $0x20] sm:$0xff]
    %v3748 = vld [vmem:[%s2524 + $0x28] sm:$0xff]
    %v3749 = vld [vmem:[%s2524 + $0x30] sm:$0xff]
    %v3750 = vld [vmem:[%s2524 + $0x38] sm:$0xff]
    %v3751 = vld [vmem:[%s2524 + $0x40] sm:$0xff]
    %v3752 = vld [vmem:[%s2524 + $0x48] sm:$0xff]
    %v3753 = vld [vmem:[%s2524 + $0x50] sm:$0xff]
    %v3754 = vld [vmem:[%s2524 + $0x58] sm:$0xff]
    %v3755 = vld [vmem:[%s2524 + $0x60] sm:$0xff]
    %v3756 = vld [vmem:[%s2524 + $0x68] sm:$0xff]
    %v3757 = vld [vmem:[%s2524 + $0x70] sm:$0xff]
    %v3758 = vld [vmem:[%s2524 + $0x78] sm:$0xff]
    %v3759 = vld [vmem:[%s2524 + $0x80] sm:$0xff]
    %v3760 = vld [vmem:[%s2524 + $0x88] sm:$0xff]
    %v3761 = vld [vmem:[%s2524 + $0x90] sm:$0xff]
    %v3762 = vld [vmem:[%s2524 + $0x98] sm:$0xff]
    %v3763 = vld [vmem:[%s2524 + $0xa0] sm:$0xff]
    %v3764 = vld [vmem:[%s2524 + $0xa8] sm:$0xff]
    %v3765 = vld [vmem:[%s2524 + $0xb0] sm:$0xff]
    %v3766 = vld [vmem:[%s2524 + $0xb8] sm:$0xff]
    %v3767 = vld [vmem:[%s2524 + $0xc0] sm:$0xff]
    %v3768 = vld [vmem:[%s2524 + $0xc8] sm:$0xff]
    %v3769 = vld [vmem:[%s2524 + $0xd0] sm:$0xff]
    %v3770 = vld [vmem:[%s2524 + $0xd8] sm:$0xff]
    %v3771 = vld [vmem:[%s2524 + $0xe0] sm:$0xff]
    %v3772 = vld [vmem:[%s2524 + $0xe8] sm:$0xff]
    %v3773 = vld [vmem:[%s2524 + $0xf0] sm:$0xff]
    %v3774 = vld [vmem:[%s2524 + $0xf8] sm:$0xff]
    %v3775 = vld [vmem:[%s2524 + $0x100] sm:$0xff]
    %v3776 = vld [vmem:[%s2524 + $0x108] sm:$0xff]
    %v3777 = vld [vmem:[%s2524 + $0x110] sm:$0xff]
    %v3778 = vld [vmem:[%s2524 + $0x118] sm:$0xff]
    %v3779 = vld [vmem:[%s2524 + $0x120] sm:$0xff]
    %v3780 = vld [vmem:[%s2524 + $0x128] sm:$0xff]
    %v3781 = vld [vmem:[%s2524 + $0x130] sm:$0xff]
    %v3782 = vld [vmem:[%s2524 + $0x138] sm:$0xff]
    %v3783 = vld [vmem:[%s2524 + $0x140] sm:$0xff]
    %v3784 = vld [vmem:[%s2524 + $0x148] sm:$0xff]
    %v3785 = vld [vmem:[%s2524 + $0x150] sm:$0xff]
    %v3786 = vld [vmem:[%s2524 + $0x158] sm:$0xff]
    %v3787 = vld [vmem:[%s2524 + $0x160] sm:$0xff]
    %v3788 = vld [vmem:[%s2524 + $0x168] sm:$0xff]
    %v3789 = vld [vmem:[%s2524 + $0x170] sm:$0xff]
    %v3790 = vld [vmem:[%s2524 + $0x178] sm:$0xff]
    %v3791 = vld [vmem:[%s2524 + $0x180] sm:$0xff]
    %v3792 = vld [vmem:[%s2524 + $0x188] sm:$0xff]
    %v3793 = vld [vmem:[%s2524 + $0x190] sm:$0xff]
    %v3794 = vld [vmem:[%s2524 + $0x198] sm:$0xff]
    %v3795 = vld [vmem:[%s2524 + $0x1a0] sm:$0xff]
    %v3796 = vld [vmem:[%s2524 + $0x1a8] sm:$0xff]
    %v3797 = vld [vmem:[%s2524 + $0x1b0] sm:$0xff]
    %v3798 = vld [vmem:[%s2524 + $0x1b8] sm:$0xff]
    %v3799 = vld [vmem:[%s2524 + $0x1c0] sm:$0xff]
    %v3800 = vld [vmem:[%s2524 + $0x1c8] sm:$0xff]
    %v3801 = vld [vmem:[%s2524 + $0x1d0] sm:$0xff]
    %v3802 = vld [vmem:[%s2524 + $0x1d8] sm:$0xff]
    %v3803 = vld [vmem:[%s2524 + $0x1e0] sm:$0xff]
    %v3804 = vld [vmem:[%s2524 + $0x1e8] sm:$0xff]
    %v3805 = vld [vmem:[%s2524 + $0x1f0] sm:$0xff]
    %v3806 = vld [vmem:[%s2524 + $0x1f8] sm:$0xff]
    %v3807 = vld [vmem:[%s2589] sm:$0xf]
    %v3809 = vlaneseq
    %v3810 = vshrl.u32 %v3809, 7
    %v3811 = vsub.s32 0, %v3810
    %v3812 = vrot.slane %v3807, %v3811
    %v3813 = vlaneseq
    %v3814 = vshrl.u32 %v3813, 7
    %v3815 = vsub.s32 1, %v3814
    %v3816 = vrot.slane %v3807, %v3815
    %v3817 = vlaneseq
    %v3818 = vshrl.u32 %v3817, 7
    %v3819 = vsub.s32 2, %v3818
    %v3820 = vrot.slane %v3807, %v3819
    %v3821 = vlaneseq
    %v3822 = vshrl.u32 %v3821, 7
    %v3823 = vsub.s32 3, %v3822
    %v3824 = vrot.slane %v3807, %v3823
    %3829 = vmatprep.subr.mxu0 %v3744
    %3830 = vmatpush1.msra.mxu0 %v3743
    %3831 = vmatprep.subr.mxu0 %v3748
    %3832 = vmatpush1.msra.mxu0 %v3747
    %3833 = vmatprep.subr.mxu0 %v3752
    %3834 = vmatpush1.msra.mxu0 %v3751
    %3835 = vmatprep.subr.mxu0 %v3756
    %3836 = vmatpush1.msra.mxu0 %v3755
    %3837 = vmatprep.subr.mxu0 %v3760
    %3838 = vmatpush1.msra.mxu0 %v3759
    %3839 = vmatprep.subr.mxu0 %v3764
    %3840 = vmatpush1.msra.mxu0 %v3763
    %3841 = vmatprep.subr.mxu0 %v3768
    %3842 = vmatpush1.msra.mxu0 %v3767
    %3843 = vmatprep.subr.mxu0 %v3772
    %3844 = vmatpush1.msra.mxu0 %v3771
    %3845 = vmatprep.subr.mxu0 %v3776
    %3846 = vmatpush1.msra.mxu0 %v3775
    %3847 = vmatprep.subr.mxu0 %v3780
    %3848 = vmatpush1.msra.mxu0 %v3779
    %3849 = vmatprep.subr.mxu0 %v3784
    %3850 = vmatpush1.msra.mxu0 %v3783
    %3851 = vmatprep.subr.mxu0 %v3788
    %3852 = vmatpush1.msra.mxu0 %v3787
    %3853 = vmatprep.subr.mxu0 %v3792
    %3854 = vmatpush1.msra.mxu0 %v3791
    %3855 = vmatprep.subr.mxu0 %v3796
    %3856 = vmatpush1.msra.mxu0 %v3795
    %3857 = vmatprep.subr.mxu0 %v3800
    %3858 = vmatpush1.msra.mxu0 %v3799
    %3859 = vmatprep.subr.mxu0 %v3804
    %3860 = vmatpush1.msra.mxu0 %v3803
    %3861 = vmatprep.subr.mxu0 0.0
    %3862 = vmatpush1.msra.mxu0 0.0
    %3863 = vmatprep.subr.mxu0 0.0
    %3864 = vmatpush1.msra.mxu0 0.0
    %3865 = vmatprep.subr.mxu0 0.0
    %3866 = vmatpush1.msra.mxu0 0.0
    %3867 = vmatprep.subr.mxu0 0.0
    %3868 = vmatpush1.msra.mxu0 0.0
    %3869 = vmatprep.subr.mxu0 0.0
    %3870 = vmatpush1.msra.mxu0 0.0
    %3871 = vmatprep.subr.mxu0 0.0
    %3872 = vmatpush1.msra.mxu0 0.0
    %3873 = vmatprep.subr.mxu0 0.0
    %3874 = vmatpush1.msra.mxu0 0.0
    %3875 = vmatprep.subr.mxu0 0.0
    %3876 = vmatpush1.msra.mxu0 0.0
    %3877 = vmatprep.subr.mxu0 0.0
    %3878 = vmatpush1.msra.mxu0 0.0
    %3879 = vmatprep.subr.mxu0 0.0
    %3880 = vmatpush1.msra.mxu0 0.0
    %3881 = vmatprep.subr.mxu0 0.0
    %3882 = vmatpush1.msra.mxu0 0.0
    %3883 = vmatprep.subr.mxu0 0.0
    %3884 = vmatpush1.msra.mxu0 0.0
    %3885 = vmatprep.subr.mxu0 0.0
    %3886 = vmatpush1.msra.mxu0 0.0
    %3887 = vmatprep.subr.mxu0 0.0
    %3888 = vmatpush1.msra.mxu0 0.0
    %3889 = vmatprep.subr.mxu0 0.0
    %3890 = vmatpush1.msra.mxu0 0.0
    %3891 = vmatprep.subr.mxu0 0.0
    %3892 = vmatpush1.msra.mxu0 0.0
    %3893 = vmatprep.mubr.f32.mxu0 0.0
    %3894 = vmatmul.mubr.f32.gmra.mrb[0].mxu0 %v3739
    %v3895 = vpop.f32.mrb[0].mxu0
    %v3896 = vadd.f32 %v3812, %v3895
    %v3897 = vpop.f32.mrb[0].mxu0
    %v3898 = vadd.f32 %v3816, %v3897
    %3899 = vmatprep.mubr.f32.mxu0 0.0
    %3900 = vmatmul.mubr.f32.gmra.mrb[0].mxu0 %v3740
    %v3901 = vpop.f32.mrb[0].mxu0
    %v3902 = vadd.f32 %v3812, %v3901
    %v3903 = vpop.f32.mrb[0].mxu0
    %v3904 = vadd.f32 %v3816, %v3903
    %3905 = vmatprep.mubr.f32.mxu0 0.0
    %3906 = vmatmul.mubr.f32.gmra.mrb[0].mxu0 %v3741
    %v3907 = vpop.f32.mrb[0].mxu0
    %v3908 = vadd.f32 %v3812, %v3907
    %v3909 = vpop.f32.mrb[0].mxu0
    %v3910 = vadd.f32 %v3816, %v3909
    %3911 = vmatprep.mubr.f32.mxu0 0.0
    %3912 = vmatmul.mubr.f32.gmra.mrb[0].mxu0 %v3742
    %v3913 = vpop.f32.mrb[0].mxu0
    %v3914 = vadd.f32 %v3812, %v3913
    %v3915 = vpop.f32.mrb[0].mxu0
    %v3916 = vadd.f32 %v3816, %v3915
    %3917 = vdwg.mxu0
    %3918 = vmatprep.subr.mxu0 %v3746
    %3919 = vmatpush1.msra.mxu0 %v3745
    %3920 = vmatprep.subr.mxu0 %v3750
    %3921 = vmatpush1.msra.mxu0 %v3749
    %3922 = vmatprep.subr.mxu0 %v3754
    %3923 = vmatpush1.msra.mxu0 %v3753
    %3924 = vmatprep.subr.mxu0 %v3758
    %3925 = vmatpush1.msra.mxu0 %v3757
    %3926 = vmatprep.subr.mxu0 %v3762
    %3927 = vmatpush1.msra.mxu0 %v3761
    %3928 = vmatprep.subr.mxu0 %v3766
    %3929 = vmatpush1.msra.mxu0 %v3765
    %3930 = vmatprep.subr.mxu0 %v3770
    %3931 = vmatpush1.msra.mxu0 %v3769
    %3932 = vmatprep.subr.mxu0 %v3774
    %3933 = vmatpush1.msra.mxu0 %v3773
    %3934 = vmatprep.subr.mxu0 %v3778
    %3935 = vmatpush1.msra.mxu0 %v3777
    %3936 = vmatprep.subr.mxu0 %v3782
    %3937 = vmatpush1.msra.mxu0 %v3781
    %3938 = vmatprep.subr.mxu0 %v3786
    %3939 = vmatpush1.msra.mxu0 %v3785
    %3940 = vmatprep.subr.mxu0 %v3790
    %3941 = vmatpush1.msra.mxu0 %v3789
    %3942 = vmatprep.subr.mxu0 %v3794
    %3943 = vmatpush1.msra.mxu0 %v3793
    %3944 = vmatprep.subr.mxu0 %v3798
    %3945 = vmatpush1.msra.mxu0 %v3797
    %3946 = vmatprep.subr.mxu0 %v3802
    %3947 = vmatpush1.msra.mxu0 %v3801
    %3948 = vmatprep.subr.mxu0 %v3806
    %3949 = vmatpush1.msra.mxu0 %v3805
    %3950 = vmatprep.subr.mxu0 0.0
    %3951 = vmatpush1.msra.mxu0 0.0
    %3952 = vmatprep.subr.mxu0 0.0
    %3953 = vmatpush1.msra.mxu0 0.0
    %3954 = vmatprep.subr.mxu0 0.0
    %3955 = vmatpush1.msra.mxu0 0.0
    %3956 = vmatprep.subr.mxu0 0.0
    %3957 = vmatpush1.msra.mxu0 0.0
    %3958 = vmatprep.subr.mxu0 0.0
    %3959 = vmatpush1.msra.mxu0 0.0
    %3960 = vmatprep.subr.mxu0 0.0
    %3961 = vmatpush1.msra.mxu0 0.0
    %3962 = vmatprep.subr.mxu0 0.0
    %3963 = vmatpush1.msra.mxu0 0.0
    %3964 = vmatprep.subr.mxu0 0.0
    %3965 = vmatpush1.msra.mxu0 0.0
    %3966 = vmatprep.subr.mxu0 0.0
    %3967 = vmatpush1.msra.mxu0 0.0
    %3968 = vmatprep.subr.mxu0 0.0
    %3969 = vmatpush1.msra.mxu0 0.0
    %3970 = vmatprep.subr.mxu0 0.0
    %3971 = vmatpush1.msra.mxu0 0.0
    %3972 = vmatprep.subr.mxu0 0.0
    %3973 = vmatpush1.msra.mxu0 0.0
    %3974 = vmatprep.subr.mxu0 0.0
    %3975 = vmatpush1.msra.mxu0 0.0
    %3976 = vmatprep.subr.mxu0 0.0
    %3977 = vmatpush1.msra.mxu0 0.0
    %3978 = vmatprep.subr.mxu0 0.0
    %3979 = vmatpush1.msra.mxu0 0.0
    %3980 = vmatprep.subr.mxu0 0.0
    %3981 = vmatpush1.msra.mxu0 0.0
    %3982 = vmatprep.mubr.f32.mxu0 0.0
    %3983 = vmatmul.mubr.f32.gmra.mrb[0].mxu0 %v3739
    %v3984 = vpop.f32.mrb[0].mxu0
    %v3985 = vadd.f32 %v3820, %v3984
    %v3986 = vpop.f32.mrb[0].mxu0
    %v3987 = vadd.f32 %v3824, %v3986
    %3988 = vmatprep.mubr.f32.mxu0 0.0
    %3989 = vmatmul.mubr.f32.gmra.mrb[0].mxu0 %v3740
    %v3990 = vpop.f32.mrb[0].mxu0
    %v3991 = vadd.f32 %v3820, %v3990
    %v3992 = vpop.f32.mrb[0].mxu0
    %v3993 = vadd.f32 %v3824, %v3992
    %3994 = vmatprep.mubr.f32.mxu0 0.0
    %3995 = vmatmul.mubr.f32.gmra.mrb[0].mxu0 %v3741
    %v3996 = vpop.f32.mrb[0].mxu0
    %v3997 = vadd.f32 %v3820, %v3996
    %v3998 = vpop.f32.mrb[0].mxu0
    %v3999 = vadd.f32 %v3824, %v3998
    %4000 = vmatprep.mubr.f32.mxu0 0.0
    %4001 = vmatmul.mubr.f32.gmra.mrb[0].mxu0 %v3742
    %v4002 = vpop.f32.mrb[0].mxu0
    %v4003 = vadd.f32 %v3820, %v4002
    %v4004 = vpop.f32.mrb[0].mxu0
    %v4005 = vadd.f32 %v3824, %v4004
    %4006 = vdwg.mxu0
    %4007 = vst [vmem:[#allocation3] sm:$0xff] %v3896
    %4008 = vst [vmem:[#allocation3 + $0x8] sm:$0xff] %v3898
    %4009 = vst [vmem:[#allocation3 + $0x10] sm:$0xff] %v3985
    %4010 = vst [vmem:[#allocation3 + $0x18] sm:$0xff] %v3987
    %4011 = vst [vmem:[#allocation3 + $0x20] sm:$0xff] %v3902
    %4012 = vst [vmem:[#allocation3 + $0x28] sm:$0xff] %v3904
    %4013 = vst [vmem:[#allocation3 + $0x30] sm:$0xff] %v3991
    %4014 = vst [vmem:[#allocation3 + $0x38] sm:$0xff] %v3993
    %4015 = vst [vmem:[#allocation3 + $0x40] sm:$0xff] %v3908
    %4016 = vst [vmem:[#allocation3 + $0x48] sm:$0xff] %v3910
    %4017 = vst [vmem:[#allocation3 + $0x50] sm:$0xff] %v3997
    %4018 = vst [vmem:[#allocation3 + $0x58] sm:$0xff] %v3999
    %4019 = vst [vmem:[#allocation3 + $0x60] sm:$0xff] %v3914
    %4020 = vst [vmem:[#allocation3 + $0x68] sm:$0xff] %v3916
    %4021 = vst [vmem:[#allocation3 + $0x70] sm:$0xff] %v4003
    %4022 = vst [vmem:[#allocation3 + $0x78] sm:$0xff] %v4005
    %v4023 = vld [vmem:[%s348] sm:$0xff]
    %v4024 = vld [vmem:[%s348 + $0x8] sm:$0xff]
    %v4025 = vld [vmem:[%s348 + $0x10] sm:$0xff]
    %v4026 = vld [vmem:[%s348 + $0x18] sm:$0xff]
    %v4027 = vld [vmem:[%s2810] sm:$0xff]
    %v4028 = vld [vmem:[%s2810 + $0x8] sm:$0xff]
    %v4029 = vld [vmem:[%s2810 + $0x10] sm:$0xff]
    %v4030 = vld [vmem:[%s2810 + $0x18] sm:$0xff]
    %v4031 = vld [vmem:[%s2810 + $0x20] sm:$0xff]
    %v4032 = vld [vmem:[%s2810 + $0x28] sm:$0xff]
    %v4033 = vld [vmem:[%s2810 + $0x30] sm:$0xff]
    %v4034 = vld [vmem:[%s2810 + $0x38] sm:$0xff]
    %v4035 = vld [vmem:[%s2810 + $0x40] sm:$0xff]
    %v4036 = vld [vmem:[%s2810 + $0x48] sm:$0xff]
    %v4037 = vld [vmem:[%s2810 + $0x50] sm:$0xff]
    %v4038 = vld [vmem:[%s2810 + $0x58] sm:$0xff]
    %v4039 = vld [vmem:[%s2810 + $0x60] sm:$0xff]
    %v4040 = vld [vmem:[%s2810 + $0x68] sm:$0xff]
    %v4041 = vld [vmem:[%s2810 + $0x70] sm:$0xff]
    %v4042 = vld [vmem:[%s2810 + $0x78] sm:$0xff]
    %v4043 = vld [vmem:[%s2810 + $0x80] sm:$0xff]
    %v4044 = vld [vmem:[%s2810 + $0x88] sm:$0xff]
    %v4045 = vld [vmem:[%s2810 + $0x90] sm:$0xff]
    %v4046 = vld [vmem:[%s2810 + $0x98] sm:$0xff]
    %v4047 = vld [vmem:[%s2810 + $0xa0] sm:$0xff]
    %v4048 = vld [vmem:[%s2810 + $0xa8] sm:$0xff]
    %v4049 = vld [vmem:[%s2810 + $0xb0] sm:$0xff]
    %v4050 = vld [vmem:[%s2810 + $0xb8] sm:$0xff]
    %v4051 = vld [vmem:[%s2810 + $0xc0] sm:$0xff]
    %v4052 = vld [vmem:[%s2810 + $0xc8] sm:$0xff]
    %v4053 = vld [vmem:[%s2810 + $0xd0] sm:$0xff]
    %v4054 = vld [vmem:[%s2810 + $0xd8] sm:$0xff]
    %v4055 = vld [vmem:[%s2810 + $0xe0] sm:$0xff]
    %v4056 = vld [vmem:[%s2810 + $0xe8] sm:$0xff]
    %v4057 = vld [vmem:[%s2810 + $0xf0] sm:$0xff]
    %v4058 = vld [vmem:[%s2810 + $0xf8] sm:$0xff]
    %v4059 = vld [vmem:[%s2810 + $0x100] sm:$0xff]
    %v4060 = vld [vmem:[%s2810 + $0x108] sm:$0xff]
    %v4061 = vld [vmem:[%s2810 + $0x110] sm:$0xff]
    %v4062 = vld [vmem:[%s2810 + $0x118] sm:$0xff]
    %v4063 = vld [vmem:[%s2810 + $0x120] sm:$0xff]
    %v4064 = vld [vmem:[%s2810 + $0x128] sm:$0xff]
    %v4065 = vld [vmem:[%s2810 + $0x130] sm:$0xff]
    %v4066 = vld [vmem:[%s2810 + $0x138] sm:$0xff]
    %v4067 = vld [vmem:[%s2810 + $0x140] sm:$0xff]
    %v4068 = vld [vmem:[%s2810 + $0x148] sm:$0xff]
    %v4069 = vld [vmem:[%s2810 + $0x150] sm:$0xff]
    %v4070 = vld [vmem:[%s2810 + $0x158] sm:$0xff]
    %v4071 = vld [vmem:[%s2810 + $0x160] sm:$0xff]
    %v4072 = vld [vmem:[%s2810 + $0x168] sm:$0xff]
    %v4073 = vld [vmem:[%s2810 + $0x170] sm:$0xff]
    %v4074 = vld [vmem:[%s2810 + $0x178] sm:$0xff]
    %v4075 = vld [vmem:[%s2810 + $0x180] sm:$0xff]
    %v4076 = vld [vmem:[%s2810 + $0x188] sm:$0xff]
    %v4077 = vld [vmem:[%s2810 + $0x190] sm:$0xff]
    %v4078 = vld [vmem:[%s2810 + $0x198] sm:$0xff]
    %v4079 = vld [vmem:[%s2810 + $0x1a0] sm:$0xff]
    %v4080 = vld [vmem:[%s2810 + $0x1a8] sm:$0xff]
    %v4081 = vld [vmem:[%s2810 + $0x1b0] sm:$0xff]
    %v4082 = vld [vmem:[%s2810 + $0x1b8] sm:$0xff]
    %v4083 = vld [vmem:[%s2810 + $0x1c0] sm:$0xff]
    %v4084 = vld [vmem:[%s2810 + $0x1c8] sm:$0xff]
    %v4085 = vld [vmem:[%s2810 + $0x1d0] sm:$0xff]
    %v4086 = vld [vmem:[%s2810 + $0x1d8] sm:$0xff]
    %v4087 = vld [vmem:[%s2810 + $0x1e0] sm:$0xff]
    %v4088 = vld [vmem:[%s2810 + $0x1e8] sm:$0xff]
    %v4089 = vld [vmem:[%s2810 + $0x1f0] sm:$0xff]
    %v4090 = vld [vmem:[%s2810 + $0x1f8] sm:$0xff]
    %4091 = vmatprep.subr.mxu0 %v4028
    %4092 = vmatpush1.msra.mxu0 %v4027
    %4093 = vmatprep.subr.mxu0 %v4032
    %4094 = vmatpush1.msra.mxu0 %v4031
    %4095 = vmatprep.subr.mxu0 %v4036
    %4096 = vmatpush1.msra.mxu0 %v4035
    %4097 = vmatprep.subr.mxu0 %v4040
    %4098 = vmatpush1.msra.mxu0 %v4039
    %4099 = vmatprep.subr.mxu0 %v4044
    %4100 = vmatpush1.msra.mxu0 %v4043
    %4101 = vmatprep.subr.mxu0 %v4048
    %4102 = vmatpush1.msra.mxu0 %v4047
    %4103 = vmatprep.subr.mxu0 %v4052
    %4104 = vmatpush1.msra.mxu0 %v4051
    %4105 = vmatprep.subr.mxu0 %v4056
    %4106 = vmatpush1.msra.mxu0 %v4055
    %4107 = vmatprep.subr.mxu0 %v4060
    %4108 = vmatpush1.msra.mxu0 %v4059
    %4109 = vmatprep.subr.mxu0 %v4064
    %4110 = vmatpush1.msra.mxu0 %v4063
    %4111 = vmatprep.subr.mxu0 %v4068
    %4112 = vmatpush1.msra.mxu0 %v4067
    %4113 = vmatprep.subr.mxu0 %v4072
    %4114 = vmatpush1.msra.mxu0 %v4071
    %4115 = vmatprep.subr.mxu0 %v4076
    %4116 = vmatpush1.msra.mxu0 %v4075
    %4117 = vmatprep.subr.mxu0 %v4080
    %4118 = vmatpush1.msra.mxu0 %v4079
    %4119 = vmatprep.subr.mxu0 %v4084
    %4120 = vmatpush1.msra.mxu0 %v4083
    %4121 = vmatprep.subr.mxu0 %v4088
    %4122 = vmatpush1.msra.mxu0 %v4087
    %4123 = vmatprep.subr.mxu0 0.0
    %4124 = vmatpush1.msra.mxu0 0.0
    %4125 = vmatprep.subr.mxu0 0.0
    %4126 = vmatpush1.msra.mxu0 0.0
    %4127 = vmatprep.subr.mxu0 0.0
    %4128 = vmatpush1.msra.mxu0 0.0
    %4129 = vmatprep.subr.mxu0 0.0
    %4130 = vmatpush1.msra.mxu0 0.0
    %4131 = vmatprep.subr.mxu0 0.0
    %4132 = vmatpush1.msra.mxu0 0.0
    %4133 = vmatprep.subr.mxu0 0.0
    %4134 = vmatpush1.msra.mxu0 0.0
    %4135 = vmatprep.subr.mxu0 0.0
    %4136 = vmatpush1.msra.mxu0 0.0
    %4137 = vmatprep.subr.mxu0 0.0
    %4138 = vmatpush1.msra.mxu0 0.0
    %4139 = vmatprep.subr.mxu0 0.0
    %4140 = vmatpush1.msra.mxu0 0.0
    %4141 = vmatprep.subr.mxu0 0.0
    %4142 = vmatpush1.msra.mxu0 0.0
    %4143 = vmatprep.subr.mxu0 0.0
    %4144 = vmatpush1.msra.mxu0 0.0
    %4145 = vmatprep.subr.mxu0 0.0
    %4146 = vmatpush1.msra.mxu0 0.0
    %4147 = vmatprep.subr.mxu0 0.0
    %4148 = vmatpush1.msra.mxu0 0.0
    %4149 = vmatprep.subr.mxu0 0.0
    %4150 = vmatpush1.msra.mxu0 0.0
    %4151 = vmatprep.subr.mxu0 0.0
    %4152 = vmatpush1.msra.mxu0 0.0
    %4153 = vmatprep.subr.mxu0 0.0
    %4154 = vmatpush1.msra.mxu0 0.0
    %4155 = vmatprep.mubr.f32.mxu0 0.0
    %4156 = vmatmul.mubr.f32.gmra.mrb[0].mxu0 %v3737
    %v4157 = vpop.f32.mrb[0].mxu0
    %v4158 = vadd.f32 0.0, %v4157
    %v4159 = vpop.f32.mrb[0].mxu0
    %v4160 = vadd.f32 0.0, %v4159
    %4161 = vdwg.mxu0
    %4162 = vmatprep.subr.mxu0 %v4030
    %4163 = vmatpush1.msra.mxu0 %v4029
    %4164 = vmatprep.subr.mxu0 %v4034
    %4165 = vmatpush1.msra.mxu0 %v4033
    %4166 = vmatprep.subr.mxu0 %v4038
    %4167 = vmatpush1.msra.mxu0 %v4037
    %4168 = vmatprep.subr.mxu0 %v4042
    %4169 = vmatpush1.msra.mxu0 %v4041
    %4170 = vmatprep.subr.mxu0 %v4046
    %4171 = vmatpush1.msra.mxu0 %v4045
    %4172 = vmatprep.subr.mxu0 %v4050
    %4173 = vmatpush1.msra.mxu0 %v4049
    %4174 = vmatprep.subr.mxu0 %v4054
    %4175 = vmatpush1.msra.mxu0 %v4053
    %4176 = vmatprep.subr.mxu0 %v4058
    %4177 = vmatpush1.msra.mxu0 %v4057
    %4178 = vmatprep.subr.mxu0 %v4062
    %4179 = vmatpush1.msra.mxu0 %v4061
    %4180 = vmatprep.subr.mxu0 %v4066
    %4181 = vmatpush1.msra.mxu0 %v4065
    %4182 = vmatprep.subr.mxu0 %v4070
    %4183 = vmatpush1.msra.mxu0 %v4069
    %4184 = vmatprep.subr.mxu0 %v4074
    %4185 = vmatpush1.msra.mxu0 %v4073
    %4186 = vmatprep.subr.mxu0 %v4078
    %4187 = vmatpush1.msra.mxu0 %v4077
    %4188 = vmatprep.subr.mxu0 %v4082
    %4189 = vmatpush1.msra.mxu0 %v4081
    %4190 = vmatprep.subr.mxu0 %v4086
    %4191 = vmatpush1.msra.mxu0 %v4085
    %4192 = vmatprep.subr.mxu0 %v4090
    %4193 = vmatpush1.msra.mxu0 %v4089
    %4194 = vmatprep.subr.mxu0 0.0
    %4195 = vmatpush1.msra.mxu0 0.0
    %4196 = vmatprep.subr.mxu0 0.0
    %4197 = vmatpush1.msra.mxu0 0.0
    %4198 = vmatprep.subr.mxu0 0.0
    %4199 = vmatpush1.msra.mxu0 0.0
    %4200 = vmatprep.subr.mxu0 0.0
    %4201 = vmatpush1.msra.mxu0 0.0
    %4202 = vmatprep.subr.mxu0 0.0
    %4203 = vmatpush1.msra.mxu0 0.0
    %4204 = vmatprep.subr.mxu0 0.0
    %4205 = vmatpush1.msra.mxu0 0.0
    %4206 = vmatprep.subr.mxu0 0.0
    %4207 = vmatpush1.msra.mxu0 0.0
    %4208 = vmatprep.subr.mxu0 0.0
    %4209 = vmatpush1.msra.mxu0 0.0
    %4210 = vmatprep.subr.mxu0 0.0
    %4211 = vmatpush1.msra.mxu0 0.0
    %4212 = vmatprep.subr.mxu0 0.0
    %4213 = vmatpush1.msra.mxu0 0.0
    %4214 = vmatprep.subr.mxu0 0.0
    %4215 = vmatpush1.msra.mxu0 0.0
    %4216 = vmatprep.subr.mxu0 0.0
    %4217 = vmatpush1.msra.mxu0 0.0
    %4218 = vmatprep.subr.mxu0 0.0
    %4219 = vmatpush1.msra.mxu0 0.0
    %4220 = vmatprep.subr.mxu0 0.0
    %4221 = vmatpush1.msra.mxu0 0.0
    %4222 = vmatprep.subr.mxu0 0.0
    %4223 = vmatpush1.msra.mxu0 0.0
    %4224 = vmatprep.subr.mxu0 0.0
    %4225 = vmatpush1.msra.mxu0 0.0
    %4226 = vmatprep.mubr.f32.mxu0 0.0
    %4227 = vmatmul.mubr.f32.gmra.mrb[0].mxu0 %v3737
    %v4228 = vpop.f32.mrb[0].mxu0
    %v4229 = vadd.f32 0.0, %v4228
    %v4230 = vpop.f32.mrb[0].mxu0
    %v4231 = vadd.f32 0.0, %v4230
    %4232 = vdwg.mxu0
    %v4233 = vadd.f32 %v4023, %v4158
    %v4234 = vadd.f32 %v4024, %v4160
    %v4235 = vadd.f32 %v4025, %v4229
    %v4236 = vadd.f32 %v4026, %v4231
    %v4237 = vmul.f32 %v4233, 0.5
    %v4238 = vmul.f32 %v4234, 0.5
    %v4239 = vmul.f32 %v4235, 0.5
    %v4240 = vtanh.pop %v4237
    %v4241 = vtanh.pop %v4238
    %v4242 = vtanh.pop %v4239
    %v4243 = vmul.f32 %v4240, 0.5
    %v4244 = vmul.f32 %v4241, 0.5
    %v4245 = vmul.f32 %v4242, 0.5
    %v4246 = vadd.f32 %v4243, 0.5
    %v4247 = vadd.f32 %v4244, 0.5
    %v4248 = vadd.f32 %v4245, 0.5
    %v4249 = vtanh.pop %v4236
    %v4250 = vmul.f32 %v4247, %v3735
    %v4251 = vmul.f32 %v4246, %v4249
    %v4252 = vadd.f32 %v4250, %v4251
    %v4253 = vtanh.pop %v4252
    %v4254 = vmul.f32 %v4248, %v4253
    %4255 = vst [vmem:[%s1810] sm:$0xff] %v4254
    %v4256 = vld [vmem:[%s584] sm:$0xff]
    %v4257 = vld [vmem:[%s584 + $0x8] sm:$0xff]
    %v4258 = vld [vmem:[%s584 + $0x10] sm:$0xff]
    %v4259 = vld [vmem:[%s584 + $0x18] sm:$0xff]
    %v4260 = vld [vmem:[%s2810] sm:$0xff]
    %v4261 = vld [vmem:[%s2810 + $0x8] sm:$0xff]
    %v4262 = vld [vmem:[%s2810 + $0x10] sm:$0xff]
    %v4263 = vld [vmem:[%s2810 + $0x18] sm:$0xff]
    %v4264 = vld [vmem:[%s2810 + $0x20] sm:$0xff]
    %v4265 = vld [vmem:[%s2810 + $0x28] sm:$0xff]
    %v4266 = vld [vmem:[%s2810 + $0x30] sm:$0xff]
    %v4267 = vld [vmem:[%s2810 + $0x38] sm:$0xff]
    %v4268 = vld [vmem:[%s2810 + $0x40] sm:$0xff]
    %v4269 = vld [vmem:[%s2810 + $0x48] sm:$0xff]
    %v4270 = vld [vmem:[%s2810 + $0x50] sm:$0xff]
    %v4271 = vld [vmem:[%s2810 + $0x58] sm:$0xff]
    %v4272 = vld [vmem:[%s2810 + $0x60] sm:$0xff]
    %v4273 = vld [vmem:[%s2810 + $0x68] sm:$0xff]
    %v4274 = vld [vmem:[%s2810 + $0x70] sm:$0xff]
    %v4275 = vld [vmem:[%s2810 + $0x78] sm:$0xff]
    %v4276 = vld [vmem:[%s2810 + $0x80] sm:$0xff]
    %v4277 = vld [vmem:[%s2810 + $0x88] sm:$0xff]
    %v4278 = vld [vmem:[%s2810 + $0x90] sm:$0xff]
    %v4279 = vld [vmem:[%s2810 + $0x98] sm:$0xff]
    %v4280 = vld [vmem:[%s2810 + $0xa0] sm:$0xff]
    %v4281 = vld [vmem:[%s2810 + $0xa8] sm:$0xff]
    %v4282 = vld [vmem:[%s2810 + $0xb0] sm:$0xff]
    %v4283 = vld [vmem:[%s2810 + $0xb8] sm:$0xff]
    %v4284 = vld [vmem:[%s2810 + $0xc0] sm:$0xff]
    %v4285 = vld [vmem:[%s2810 + $0xc8] sm:$0xff]
    %v4286 = vld [vmem:[%s2810 + $0xd0] sm:$0xff]
    %v4287 = vld [vmem:[%s2810 + $0xd8] sm:$0xff]
    %v4288 = vld [vmem:[%s2810 + $0xe0] sm:$0xff]
    %v4289 = vld [vmem:[%s2810 + $0xe8] sm:$0xff]
    %v4290 = vld [vmem:[%s2810 + $0xf0] sm:$0xff]
    %v4291 = vld [vmem:[%s2810 + $0xf8] sm:$0xff]
    %v4292 = vld [vmem:[%s2810 + $0x100] sm:$0xff]
    %v4293 = vld [vmem:[%s2810 + $0x108] sm:$0xff]
    %v4294 = vld [vmem:[%s2810 + $0x110] sm:$0xff]
    %v4295 = vld [vmem:[%s2810 + $0x118] sm:$0xff]
    %v4296 = vld [vmem:[%s2810 + $0x120] sm:$0xff]
    %v4297 = vld [vmem:[%s2810 + $0x128] sm:$0xff]
    %v4298 = vld [vmem:[%s2810 + $0x130] sm:$0xff]
    %v4299 = vld [vmem:[%s2810 + $0x138] sm:$0xff]
    %v4300 = vld [vmem:[%s2810 + $0x140] sm:$0xff]
    %v4301 = vld [vmem:[%s2810 + $0x148] sm:$0xff]
    %v4302 = vld [vmem:[%s2810 + $0x150] sm:$0xff]
    %v4303 = vld [vmem:[%s2810 + $0x158] sm:$0xff]
    %v4304 = vld [vmem:[%s2810 + $0x160] sm:$0xff]
    %v4305 = vld [vmem:[%s2810 + $0x168] sm:$0xff]
    %v4306 = vld [vmem:[%s2810 + $0x170] sm:$0xff]
    %v4307 = vld [vmem:[%s2810 + $0x178] sm:$0xff]
    %v4308 = vld [vmem:[%s2810 + $0x180] sm:$0xff]
    %v4309 = vld [vmem:[%s2810 + $0x188] sm:$0xff]
    %v4310 = vld [vmem:[%s2810 + $0x190] sm:$0xff]
    %v4311 = vld [vmem:[%s2810 + $0x198] sm:$0xff]
    %v4312 = vld [vmem:[%s2810 + $0x1a0] sm:$0xff]
    %v4313 = vld [vmem:[%s2810 + $0x1a8] sm:$0xff]
    %v4314 = vld [vmem:[%s2810 + $0x1b0] sm:$0xff]
    %v4315 = vld [vmem:[%s2810 + $0x1b8] sm:$0xff]
    %v4316 = vld [vmem:[%s2810 + $0x1c0] sm:$0xff]
    %v4317 = vld [vmem:[%s2810 + $0x1c8] sm:$0xff]
    %v4318 = vld [vmem:[%s2810 + $0x1d0] sm:$0xff]
    %v4319 = vld [vmem:[%s2810 + $0x1d8] sm:$0xff]
    %v4320 = vld [vmem:[%s2810 + $0x1e0] sm:$0xff]
    %v4321 = vld [vmem:[%s2810 + $0x1e8] sm:$0xff]
    %v4322 = vld [vmem:[%s2810 + $0x1f0] sm:$0xff]
    %v4323 = vld [vmem:[%s2810 + $0x1f8] sm:$0xff]
    %4324 = vmatprep.subr.mxu0 %v4261
    %4325 = vmatpush1.msra.mxu0 %v4260
    %4326 = vmatprep.subr.mxu0 %v4265
    %4327 = vmatpush1.msra.mxu0 %v4264
    %4328 = vmatprep.subr.mxu0 %v4269
    %4329 = vmatpush1.msra.mxu0 %v4268
    %4330 = vmatprep.subr.mxu0 %v4273
    %4331 = vmatpush1.msra.mxu0 %v4272
    %4332 = vmatprep.subr.mxu0 %v4277
    %4333 = vmatpush1.msra.mxu0 %v4276
    %4334 = vmatprep.subr.mxu0 %v4281
    %4335 = vmatpush1.msra.mxu0 %v4280
    %4336 = vmatprep.subr.mxu0 %v4285
    %4337 = vmatpush1.msra.mxu0 %v4284
    %4338 = vmatprep.subr.mxu0 %v4289
    %4339 = vmatpush1.msra.mxu0 %v4288
    %4340 = vmatprep.subr.mxu0 %v4293
    %4341 = vmatpush1.msra.mxu0 %v4292
    %4342 = vmatprep.subr.mxu0 %v4297
    %4343 = vmatpush1.msra.mxu0 %v4296
    %4344 = vmatprep.subr.mxu0 %v4301
    %4345 = vmatpush1.msra.mxu0 %v4300
    %4346 = vmatprep.subr.mxu0 %v4305
    %4347 = vmatpush1.msra.mxu0 %v4304
    %4348 = vmatprep.subr.mxu0 %v4309
    %4349 = vmatpush1.msra.mxu0 %v4308
    %4350 = vmatprep.subr.mxu0 %v4313
    %4351 = vmatpush1.msra.mxu0 %v4312
    %4352 = vmatprep.subr.mxu0 %v4317
    %4353 = vmatpush1.msra.mxu0 %v4316
    %4354 = vmatprep.subr.mxu0 %v4321
    %4355 = vmatpush1.msra.mxu0 %v4320
    %4356 = vmatprep.subr.mxu0 0.0
    %4357 = vmatpush1.msra.mxu0 0.0
    %4358 = vmatprep.subr.mxu0 0.0
    %4359 = vmatpush1.msra.mxu0 0.0
    %4360 = vmatprep.subr.mxu0 0.0
    %4361 = vmatpush1.msra.mxu0 0.0
    %4362 = vmatprep.subr.mxu0 0.0
    %4363 = vmatpush1.msra.mxu0 0.0
    %4364 = vmatprep.subr.mxu0 0.0
    %4365 = vmatpush1.msra.mxu0 0.0
    %4366 = vmatprep.subr.mxu0 0.0
    %4367 = vmatpush1.msra.mxu0 0.0
    %4368 = vmatprep.subr.mxu0 0.0
    %4369 = vmatpush1.msra.mxu0 0.0
    %4370 = vmatprep.subr.mxu0 0.0
    %4371 = vmatpush1.msra.mxu0 0.0
    %4372 = vmatprep.subr.mxu0 0.0
    %4373 = vmatpush1.msra.mxu0 0.0
    %4374 = vmatprep.subr.mxu0 0.0
    %4375 = vmatpush1.msra.mxu0 0.0
    %4376 = vmatprep.subr.mxu0 0.0
    %4377 = vmatpush1.msra.mxu0 0.0
    %4378 = vmatprep.subr.mxu0 0.0
    %4379 = vmatpush1.msra.mxu0 0.0
    %4380 = vmatprep.subr.mxu0 0.0
    %4381 = vmatpush1.msra.mxu0 0.0
    %4382 = vmatprep.subr.mxu0 0.0
    %4383 = vmatpush1.msra.mxu0 0.0
    %4384 = vmatprep.subr.mxu0 0.0
    %4385 = vmatpush1.msra.mxu0 0.0
    %4386 = vmatprep.subr.mxu0 0.0
    %4387 = vmatpush1.msra.mxu0 0.0
    %4388 = vmatprep.mubr.f32.mxu0 0.0
    %4389 = vmatmul.mubr.f32.gmra.mrb[0].mxu0 %v4254
    %v4390 = vpop.f32.mrb[0].mxu0
    %v4391 = vadd.f32 0.0, %v4390
    %v4392 = vpop.f32.mrb[0].mxu0
    %v4393 = vadd.f32 0.0, %v4392
    %4394 = vdwg.mxu0
    %4395 = vmatprep.subr.mxu0 %v4263
    %4396 = vmatpush1.msra.mxu0 %v4262
    %4397 = vmatprep.subr.mxu0 %v4267
    %4398 = vmatpush1.msra.mxu0 %v4266
    %4399 = vmatprep.subr.mxu0 %v4271
    %4400 = vmatpush1.msra.mxu0 %v4270
    %4401 = vmatprep.subr.mxu0 %v4275
    %4402 = vmatpush1.msra.mxu0 %v4274
    %4403 = vmatprep.subr.mxu0 %v4279
    %4404 = vmatpush1.msra.mxu0 %v4278
    %4405 = vmatprep.subr.mxu0 %v4283
    %4406 = vmatpush1.msra.mxu0 %v4282
    %4407 = vmatprep.subr.mxu0 %v4287
    %4408 = vmatpush1.msra.mxu0 %v4286
    %4409 = vmatprep.subr.mxu0 %v4291
    %4410 = vmatpush1.msra.mxu0 %v4290
    %4411 = vmatprep.subr.mxu0 %v4295
    %4412 = vmatpush1.msra.mxu0 %v4294
    %4413 = vmatprep.subr.mxu0 %v4299
    %4414 = vmatpush1.msra.mxu0 %v4298
    %4415 = vmatprep.subr.mxu0 %v4303
    %4416 = vmatpush1.msra.mxu0 %v4302
    %4417 = vmatprep.subr.mxu0 %v4307
    %4418 = vmatpush1.msra.mxu0 %v4306
    %4419 = vmatprep.subr.mxu0 %v4311
    %4420 = vmatpush1.msra.mxu0 %v4310
    %4421 = vmatprep.subr.mxu0 %v4315
    %4422 = vmatpush1.msra.mxu0 %v4314
    %4423 = vmatprep.subr.mxu0 %v4319
    %4424 = vmatpush1.msra.mxu0 %v4318
    %4425 = vmatprep.subr.mxu0 %v4323
    %4426 = vmatpush1.msra.mxu0 %v4322
    %4427 = vmatprep.subr.mxu0 0.0
    %4428 = vmatpush1.msra.mxu0 0.0
    %4429 = vmatprep.subr.mxu0 0.0
    %4430 = vmatpush1.msra.mxu0 0.0
    %4431 = vmatprep.subr.mxu0 0.0
    %4432 = vmatpush1.msra.mxu0 0.0
    %4433 = vmatprep.subr.mxu0 0.0
    %4434 = vmatpush1.msra.mxu0 0.0
    %4435 = vmatprep.subr.mxu0 0.0
    %4436 = vmatpush1.msra.mxu0 0.0
    %4437 = vmatprep.subr.mxu0 0.0
    %4438 = vmatpush1.msra.mxu0 0.0
    %4439 = vmatprep.subr.mxu0 0.0
    %4440 = vmatpush1.msra.mxu0 0.0
    %4441 = vmatprep.subr.mxu0 0.0
    %4442 = vmatpush1.msra.mxu0 0.0
    %4443 = vmatprep.subr.mxu0 0.0
    %4444 = vmatpush1.msra.mxu0 0.0
    %4445 = vmatprep.subr.mxu0 0.0
    %4446 = vmatpush1.msra.mxu0 0.0
    %4447 = vmatprep.subr.mxu0 0.0
    %4448 = vmatpush1.msra.mxu0 0.0
    %4449 = vmatprep.subr.mxu0 0.0
    %4450 = vmatpush1.msra.mxu0 0.0
    %4451 = vmatprep.subr.mxu0 0.0
    %4452 = vmatpush1.msra.mxu0 0.0
    %4453 = vmatprep.subr.mxu0 0.0
    %4454 = vmatpush1.msra.mxu0 0.0
    %4455 = vmatprep.subr.mxu0 0.0
    %4456 = vmatpush1.msra.mxu0 0.0
    %4457 = vmatprep.subr.mxu0 0.0
    %4458 = vmatpush1.msra.mxu0 0.0
    %4459 = vmatprep.mubr.f32.mxu0 0.0
    %4460 = vmatmul.mubr.f32.gmra.mrb[0].mxu0 %v4254
    %v4461 = vpop.f32.mrb[0].mxu0
    %v4462 = vadd.f32 0.0, %v4461
    %v4463 = vpop.f32.mrb[0].mxu0
    %v4464 = vadd.f32 0.0, %v4463
    %4465 = vdwg.mxu0
    %v4466 = vadd.f32 %v4256, %v4391
    %v4467 = vadd.f32 %v4257, %v4393
    %v4468 = vadd.f32 %v4258, %v4462
    %v4469 = vadd.f32 %v4259, %v4464
    %v4470 = vmul.f32 %v4466, 0.5
    %v4471 = vmul.f32 %v4467, 0.5
    %v4472 = vmul.f32 %v4468, 0.5
    %v4473 = vtanh.pop %v4470
    %v4474 = vtanh.pop %v4471
    %v4475 = vtanh.pop %v4472
    %v4476 = vmul.f32 %v4473, 0.5
    %v4477 = vmul.f32 %v4474, 0.5
    %v4478 = vmul.f32 %v4475, 0.5
    %v4479 = vadd.f32 %v4476, 0.5
    %v4480 = vadd.f32 %v4477, 0.5
    %v4481 = vadd.f32 %v4478, 0.5
    %v4482 = vtanh.pop %v4469
    %v4483 = vmul.f32 %v4480, %v4252
    %v4484 = vmul.f32 %v4479, %v4482
    %v4485 = vadd.f32 %v4483, %v4484
    %v4486 = vtanh.pop %v4485
    %v4487 = vmul.f32 %v4481, %v4486
    %4488 = vst [vmem:[%s2044] sm:$0xff] %v4487
    %v4489 = vld [vmem:[%s821] sm:$0xff]
    %v4490 = vld [vmem:[%s821 + $0x8] sm:$0xff]
    %v4491 = vld [vmem:[%s821 + $0x10] sm:$0xff]
    %v4492 = vld [vmem:[%s821 + $0x18] sm:$0xff]
    %v4493 = vld [vmem:[%s2810] sm:$0xff]
    %v4494 = vld [vmem:[%s2810 + $0x8] sm:$0xff]
    %v4495 = vld [vmem:[%s2810 + $0x10] sm:$0xff]
    %v4496 = vld [vmem:[%s2810 + $0x18] sm:$0xff]
    %v4497 = vld [vmem:[%s2810 + $0x20] sm:$0xff]
    %v4498 = vld [vmem:[%s2810 + $0x28] sm:$0xff]
    %v4499 = vld [vmem:[%s2810 + $0x30] sm:$0xff]
    %v4500 = vld [vmem:[%s2810 + $0x38] sm:$0xff]
    %v4501 = vld [vmem:[%s2810 + $0x40] sm:$0xff]
    %v4502 = vld [vmem:[%s2810 + $0x48] sm:$0xff]
    %v4503 = vld [vmem:[%s2810 + $0x50] sm:$0xff]
    %v4504 = vld [vmem:[%s2810 + $0x58] sm:$0xff]
    %v4505 = vld [vmem:[%s2810 + $0x60] sm:$0xff]
    %v4506 = vld [vmem:[%s2810 + $0x68] sm:$0xff]
    %v4507 = vld [vmem:[%s2810 + $0x70] sm:$0xff]
    %v4508 = vld [vmem:[%s2810 + $0x78] sm:$0xff]
    %v4509 = vld [vmem:[%s2810 + $0x80] sm:$0xff]
    %v4510 = vld [vmem:[%s2810 + $0x88] sm:$0xff]
    %v4511 = vld [vmem:[%s2810 + $0x90] sm:$0xff]
    %v4512 = vld [vmem:[%s2810 + $0x98] sm:$0xff]
    %v4513 = vld [vmem:[%s2810 + $0xa0] sm:$0xff]
    %v4514 = vld [vmem:[%s2810 + $0xa8] sm:$0xff]
    %v4515 = vld [vmem:[%s2810 + $0xb0] sm:$0xff]
    %v4516 = vld [vmem:[%s2810 + $0xb8] sm:$0xff]
    %v4517 = vld [vmem:[%s2810 + $0xc0] sm:$0xff]
    %v4518 = vld [vmem:[%s2810 + $0xc8] sm:$0xff]
    %v4519 = vld [vmem:[%s2810 + $0xd0] sm:$0xff]
    %v4520 = vld [vmem:[%s2810 + $0xd8] sm:$0xff]
    %v4521 = vld [vmem:[%s2810 + $0xe0] sm:$0xff]
    %v4522 = vld [vmem:[%s2810 + $0xe8] sm:$0xff]
    %v4523 = vld [vmem:[%s2810 + $0xf0] sm:$0xff]
    %v4524 = vld [vmem:[%s2810 + $0xf8] sm:$0xff]
    %v4525 = vld [vmem:[%s2810 + $0x100] sm:$0xff]
    %v4526 = vld [vmem:[%s2810 + $0x108] sm:$0xff]
    %v4527 = vld [vmem:[%s2810 + $0x110] sm:$0xff]
    %v4528 = vld [vmem:[%s2810 + $0x118] sm:$0xff]
    %v4529 = vld [vmem:[%s2810 + $0x120] sm:$0xff]
    %v4530 = vld [vmem:[%s2810 + $0x128] sm:$0xff]
    %v4531 = vld [vmem:[%s2810 + $0x130] sm:$0xff]
    %v4532 = vld [vmem:[%s2810 + $0x138] sm:$0xff]
    %v4533 = vld [vmem:[%s2810 + $0x140] sm:$0xff]
    %v4534 = vld [vmem:[%s2810 + $0x148] sm:$0xff]
    %v4535 = vld [vmem:[%s2810 + $0x150] sm:$0xff]
    %v4536 = vld [vmem:[%s2810 + $0x158] sm:$0xff]
    %v4537 = vld [vmem:[%s2810 + $0x160] sm:$0xff]
    %v4538 = vld [vmem:[%s2810 + $0x168] sm:$0xff]
    %v4539 = vld [vmem:[%s2810 + $0x170] sm:$0xff]
    %v4540 = vld [vmem:[%s2810 + $0x178] sm:$0xff]
    %v4541 = vld [vmem:[%s2810 + $0x180] sm:$0xff]
    %v4542 = vld [vmem:[%s2810 + $0x188] sm:$0xff]
    %v4543 = vld [vmem:[%s2810 + $0x190] sm:$0xff]
    %v4544 = vld [vmem:[%s2810 + $0x198] sm:$0xff]
    %v4545 = vld [vmem:[%s2810 + $0x1a0] sm:$0xff]
    %v4546 = vld [vmem:[%s2810 + $0x1a8] sm:$0xff]
    %v4547 = vld [vmem:[%s2810 + $0x1b0] sm:$0xff]
    %v4548 = vld [vmem:[%s2810 + $0x1b8] sm:$0xff]
    %v4549 = vld [vmem:[%s2810 + $0x1c0] sm:$0xff]
    %v4550 = vld [vmem:[%s2810 + $0x1c8] sm:$0xff]
    %v4551 = vld [vmem:[%s2810 + $0x1d0] sm:$0xff]
    %v4552 = vld [vmem:[%s2810 + $0x1d8] sm:$0xff]
    %v4553 = vld [vmem:[%s2810 + $0x1e0] sm:$0xff]
    %v4554 = vld [vmem:[%s2810 + $0x1e8] sm:$0xff]
    %v4555 = vld [vmem:[%s2810 + $0x1f0] sm:$0xff]
    %v4556 = vld [vmem:[%s2810 + $0x1f8] sm:$0xff]
    %4557 = vmatprep.subr.mxu0 %v4494
    %4558 = vmatpush1.msra.mxu0 %v4493
    %4559 = vmatprep.subr.mxu0 %v4498
    %4560 = vmatpush1.msra.mxu0 %v4497
    %4561 = vmatprep.subr.mxu0 %v4502
    %4562 = vmatpush1.msra.mxu0 %v4501
    %4563 = vmatprep.subr.mxu0 %v4506
    %4564 = vmatpush1.msra.mxu0 %v4505
    %4565 = vmatprep.subr.mxu0 %v4510
    %4566 = vmatpush1.msra.mxu0 %v4509
    %4567 = vmatprep.subr.mxu0 %v4514
    %4568 = vmatpush1.msra.mxu0 %v4513
    %4569 = vmatprep.subr.mxu0 %v4518
    %4570 = vmatpush1.msra.mxu0 %v4517
    %4571 = vmatprep.subr.mxu0 %v4522
    %4572 = vmatpush1.msra.mxu0 %v4521
    %4573 = vmatprep.subr.mxu0 %v4526
    %4574 = vmatpush1.msra.mxu0 %v4525
    %4575 = vmatprep.subr.mxu0 %v4530
    %4576 = vmatpush1.msra.mxu0 %v4529
    %4577 = vmatprep.subr.mxu0 %v4534
    %4578 = vmatpush1.msra.mxu0 %v4533
    %4579 = vmatprep.subr.mxu0 %v4538
    %4580 = vmatpush1.msra.mxu0 %v4537
    %4581 = vmatprep.subr.mxu0 %v4542
    %4582 = vmatpush1.msra.mxu0 %v4541
    %4583 = vmatprep.subr.mxu0 %v4546
    %4584 = vmatpush1.msra.mxu0 %v4545
    %4585 = vmatprep.subr.mxu0 %v4550
    %4586 = vmatpush1.msra.mxu0 %v4549
    %4587 = vmatprep.subr.mxu0 %v4554
    %4588 = vmatpush1.msra.mxu0 %v4553
    %4589 = vmatprep.subr.mxu0 0.0
    %4590 = vmatpush1.msra.mxu0 0.0
    %4591 = vmatprep.subr.mxu0 0.0
    %4592 = vmatpush1.msra.mxu0 0.0
    %4593 = vmatprep.subr.mxu0 0.0
    %4594 = vmatpush1.msra.mxu0 0.0
    %4595 = vmatprep.subr.mxu0 0.0
    %4596 = vmatpush1.msra.mxu0 0.0
    %4597 = vmatprep.subr.mxu0 0.0
    %4598 = vmatpush1.msra.mxu0 0.0
    %4599 = vmatprep.subr.mxu0 0.0
    %4600 = vmatpush1.msra.mxu0 0.0
    %4601 = vmatprep.subr.mxu0 0.0
    %4602 = vmatpush1.msra.mxu0 0.0
    %4603 = vmatprep.subr.mxu0 0.0
    %4604 = vmatpush1.msra.mxu0 0.0
    %4605 = vmatprep.subr.mxu0 0.0
    %4606 = vmatpush1.msra.mxu0 0.0
    %4607 = vmatprep.subr.mxu0 0.0
    %4608 = vmatpush1.msra.mxu0 0.0
    %4609 = vmatprep.subr.mxu0 0.0
    %4610 = vmatpush1.msra.mxu0 0.0
    %4611 = vmatprep.subr.mxu0 0.0
    %4612 = vmatpush1.msra.mxu0 0.0
    %4613 = vmatprep.subr.mxu0 0.0
    %4614 = vmatpush1.msra.mxu0 0.0
    %4615 = vmatprep.subr.mxu0 0.0
    %4616 = vmatpush1.msra.mxu0 0.0
    %4617 = vmatprep.subr.mxu0 0.0
    %4618 = vmatpush1.msra.mxu0 0.0
    %4619 = vmatprep.subr.mxu0 0.0
    %4620 = vmatpush1.msra.mxu0 0.0
    %4621 = vmatprep.mubr.f32.mxu0 0.0
    %4622 = vmatmul.mubr.f32.gmra.mrb[0].mxu0 %v4487
    %v4623 = vpop.f32.mrb[0].mxu0
    %v4624 = vadd.f32 0.0, %v4623
    %v4625 = vpop.f32.mrb[0].mxu0
    %v4626 = vadd.f32 0.0, %v4625
    %4627 = vdwg.mxu0
    %4628 = vmatprep.subr.mxu0 %v4496
    %4629 = vmatpush1.msra.mxu0 %v4495
    %4630 = vmatprep.subr.mxu0 %v4500
    %4631 = vmatpush1.msra.mxu0 %v4499
    %4632 = vmatprep.subr.mxu0 %v4504
    %4633 = vmatpush1.msra.mxu0 %v4503
    %4634 = vmatprep.subr.mxu0 %v4508
    %4635 = vmatpush1.msra.mxu0 %v4507
    %4636 = vmatprep.subr.mxu0 %v4512
    %4637 = vmatpush1.msra.mxu0 %v4511
    %4638 = vmatprep.subr.mxu0 %v4516
    %4639 = vmatpush1.msra.mxu0 %v4515
    %4640 = vmatprep.subr.mxu0 %v4520
    %4641 = vmatpush1.msra.mxu0 %v4519
    %4642 = vmatprep.subr.mxu0 %v4524
    %4643 = vmatpush1.msra.mxu0 %v4523
    %4644 = vmatprep.subr.mxu0 %v4528
    %4645 = vmatpush1.msra.mxu0 %v4527
    %4646 = vmatprep.subr.mxu0 %v4532
    %4647 = vmatpush1.msra.mxu0 %v4531
    %4648 = vmatprep.subr.mxu0 %v4536
    %4649 = vmatpush1.msra.mxu0 %v4535
    %4650 = vmatprep.subr.mxu0 %v4540
    %4651 = vmatpush1.msra.mxu0 %v4539
    %4652 = vmatprep.subr.mxu0 %v4544
    %4653 = vmatpush1.msra.mxu0 %v4543
    %4654 = vmatprep.subr.mxu0 %v4548
    %4655 = vmatpush1.msra.mxu0 %v4547
    %4656 = vmatprep.subr.mxu0 %v4552
    %4657 = vmatpush1.msra.mxu0 %v4551
    %4658 = vmatprep.subr.mxu0 %v4556
    %4659 = vmatpush1.msra.mxu0 %v4555
    %4660 = vmatprep.subr.mxu0 0.0
    %4661 = vmatpush1.msra.mxu0 0.0
    %4662 = vmatprep.subr.mxu0 0.0
    %4663 = vmatpush1.msra.mxu0 0.0
    %4664 = vmatprep.subr.mxu0 0.0
    %4665 = vmatpush1.msra.mxu0 0.0
    %4666 = vmatprep.subr.mxu0 0.0
    %4667 = vmatpush1.msra.mxu0 0.0
    %4668 = vmatprep.subr.mxu0 0.0
    %4669 = vmatpush1.msra.mxu0 0.0
    %4670 = vmatprep.subr.mxu0 0.0
    %4671 = vmatpush1.msra.mxu0 0.0
    %4672 = vmatprep.subr.mxu0 0.0
    %4673 = vmatpush1.msra.mxu0 0.0
    %4674 = vmatprep.subr.mxu0 0.0
    %4675 = vmatpush1.msra.mxu0 0.0
    %4676 = vmatprep.subr.mxu0 0.0
    %4677 = vmatpush1.msra.mxu0 0.0
    %4678 = vmatprep.subr.mxu0 0.0
    %4679 = vmatpush1.msra.mxu0 0.0
    %4680 = vmatprep.subr.mxu0 0.0
    %4681 = vmatpush1.msra.mxu0 0.0
    %4682 = vmatprep.subr.mxu0 0.0
    %4683 = vmatpush1.msra.mxu0 0.0
    %4684 = vmatprep.subr.mxu0 0.0
    %4685 = vmatpush1.msra.mxu0 0.0
    %4686 = vmatprep.subr.mxu0 0.0
    %4687 = vmatpush1.msra.mxu0 0.0
    %4688 = vmatprep.subr.mxu0 0.0
    %4689 = vmatpush1.msra.mxu0 0.0
    %4690 = vmatprep.subr.mxu0 0.0
    %4691 = vmatpush1.msra.mxu0 0.0
    %4692 = vmatprep.mubr.f32.mxu0 0.0
    %4693 = vmatmul.mubr.f32.gmra.mrb[0].mxu0 %v4487
    %v4694 = vpop.f32.mrb[0].mxu0
    %v4695 = vadd.f32 0.0, %v4694
    %v4696 = vpop.f32.mrb[0].mxu0
    %v4697 = vadd.f32 0.0, %v4696
    %4698 = vdwg.mxu0
    %v4699 = vadd.f32 %v4489, %v4624
    %v4700 = vadd.f32 %v4490, %v4626
    %v4701 = vadd.f32 %v4491, %v4695
    %v4702 = vadd.f32 %v4492, %v4697
    %v4703 = vmul.f32 %v4699, 0.5
    %v4704 = vmul.f32 %v4700, 0.5
    %v4705 = vmul.f32 %v4701, 0.5
    %v4706 = vtanh.pop %v4703
    %v4707 = vtanh.pop %v4704
    %v4708 = vtanh.pop %v4705
    %v4709 = vmul.f32 %v4706, 0.5
    %v4710 = vmul.f32 %v4707, 0.5
    %v4711 = vmul.f32 %v4708, 0.5
    %v4712 = vadd.f32 %v4709, 0.5
    %v4713 = vadd.f32 %v4710, 0.5
    %v4714 = vadd.f32 %v4711, 0.5
    %v4715 = vtanh.pop %v4702
    %v4716 = vmul.f32 %v4713, %v4485
    %v4717 = vmul.f32 %v4712, %v4715
    %v4718 = vadd.f32 %v4716, %v4717
    %v4719 = vtanh.pop %v4718
    %v4720 = vmul.f32 %v4714, %v4719
    %4721 = vst [vmem:[%s2278] sm:$0xff] %v4720
    %v4722 = vld [vmem:[%s1058] sm:$0xff]
    %v4723 = vld [vmem:[%s1058 + $0x8] sm:$0xff]
    %v4724 = vld [vmem:[%s1058 + $0x10] sm:$0xff]
    %v4725 = vld [vmem:[%s1058 + $0x18] sm:$0xff]
    %v4726 = vld [vmem:[%s2810] sm:$0xff]
    %v4727 = vld [vmem:[%s2810 + $0x8] sm:$0xff]
    %v4728 = vld [vmem:[%s2810 + $0x10] sm:$0xff]
    %v4729 = vld [vmem:[%s2810 + $0x18] sm:$0xff]
    %v4730 = vld [vmem:[%s2810 + $0x20] sm:$0xff]
    %v4731 = vld [vmem:[%s2810 + $0x28] sm:$0xff]
    %v4732 = vld [vmem:[%s2810 + $0x30] sm:$0xff]
    %v4733 = vld [vmem:[%s2810 + $0x38] sm:$0xff]
    %v4734 = vld [vmem:[%s2810 + $0x40] sm:$0xff]
    %v4735 = vld [vmem:[%s2810 + $0x48] sm:$0xff]
    %v4736 = vld [vmem:[%s2810 + $0x50] sm:$0xff]
    %v4737 = vld [vmem:[%s2810 + $0x58] sm:$0xff]
    %v4738 = vld [vmem:[%s2810 + $0x60] sm:$0xff]
    %v4739 = vld [vmem:[%s2810 + $0x68] sm:$0xff]
    %v4740 = vld [vmem:[%s2810 + $0x70] sm:$0xff]
    %v4741 = vld [vmem:[%s2810 + $0x78] sm:$0xff]
    %v4742 = vld [vmem:[%s2810 + $0x80] sm:$0xff]
    %v4743 = vld [vmem:[%s2810 + $0x88] sm:$0xff]
    %v4744 = vld [vmem:[%s2810 + $0x90] sm:$0xff]
    %v4745 = vld [vmem:[%s2810 + $0x98] sm:$0xff]
    %v4746 = vld [vmem:[%s2810 + $0xa0] sm:$0xff]
    %v4747 = vld [vmem:[%s2810 + $0xa8] sm:$0xff]
    %v4748 = vld [vmem:[%s2810 + $0xb0] sm:$0xff]
    %v4749 = vld [vmem:[%s2810 + $0xb8] sm:$0xff]
    %v4750 = vld [vmem:[%s2810 + $0xc0] sm:$0xff]
    %v4751 = vld [vmem:[%s2810 + $0xc8] sm:$0xff]
    %v4752 = vld [vmem:[%s2810 + $0xd0] sm:$0xff]
    %v4753 = vld [vmem:[%s2810 + $0xd8] sm:$0xff]
    %v4754 = vld [vmem:[%s2810 + $0xe0] sm:$0xff]
    %v4755 = vld [vmem:[%s2810 + $0xe8] sm:$0xff]
    %v4756 = vld [vmem:[%s2810 + $0xf0] sm:$0xff]
    %v4757 = vld [vmem:[%s2810 + $0xf8] sm:$0xff]
    %v4758 = vld [vmem:[%s2810 + $0x100] sm:$0xff]
    %v4759 = vld [vmem:[%s2810 + $0x108] sm:$0xff]
    %v4760 = vld [vmem:[%s2810 + $0x110] sm:$0xff]
    %v4761 = vld [vmem:[%s2810 + $0x118] sm:$0xff]
    %v4762 = vld [vmem:[%s2810 + $0x120] sm:$0xff]
    %v4763 = vld [vmem:[%s2810 + $0x128] sm:$0xff]
    %v4764 = vld [vmem:[%s2810 + $0x130] sm:$0xff]
    %v4765 = vld [vmem:[%s2810 + $0x138] sm:$0xff]
    %v4766 = vld [vmem:[%s2810 + $0x140] sm:$0xff]
    %v4767 = vld [vmem:[%s2810 + $0x148] sm:$0xff]
    %v4768 = vld [vmem:[%s2810 + $0x150] sm:$0xff]
    %v4769 = vld [vmem:[%s2810 + $0x158] sm:$0xff]
    %v4770 = vld [vmem:[%s2810 + $0x160] sm:$0xff]
    %v4771 = vld [vmem:[%s2810 + $0x168] sm:$0xff]
    %v4772 = vld [vmem:[%s2810 + $0x170] sm:$0xff]
    %v4773 = vld [vmem:[%s2810 + $0x178] sm:$0xff]
    %v4774 = vld [vmem:[%s2810 + $0x180] sm:$0xff]
    %v4775 = vld [vmem:[%s2810 + $0x188] sm:$0xff]
    %v4776 = vld [vmem:[%s2810 + $0x190] sm:$0xff]
    %v4777 = vld [vmem:[%s2810 + $0x198] sm:$0xff]
    %v4778 = vld [vmem:[%s2810 + $0x1a0] sm:$0xff]
    %v4779 = vld [vmem:[%s2810 + $0x1a8] sm:$0xff]
    %v4780 = vld [vmem:[%s2810 + $0x1b0] sm:$0xff]
    %v4781 = vld [vmem:[%s2810 + $0x1b8] sm:$0xff]
    %v4782 = vld [vmem:[%s2810 + $0x1c0] sm:$0xff]
    %v4783 = vld [vmem:[%s2810 + $0x1c8] sm:$0xff]
    %v4784 = vld [vmem:[%s2810 + $0x1d0] sm:$0xff]
    %v4785 = vld [vmem:[%s2810 + $0x1d8] sm:$0xff]
    %v4786 = vld [vmem:[%s2810 + $0x1e0] sm:$0xff]
    %v4787 = vld [vmem:[%s2810 + $0x1e8] sm:$0xff]
    %v4788 = vld [vmem:[%s2810 + $0x1f0] sm:$0xff]
    %v4789 = vld [vmem:[%s2810 + $0x1f8] sm:$0xff]
    %4790 = vmatprep.subr.mxu0 %v4727
    %4791 = vmatpush1.msra.mxu0 %v4726
    %4792 = vmatprep.subr.mxu0 %v4731
    %4793 = vmatpush1.msra.mxu0 %v4730
    %4794 = vmatprep.subr.mxu0 %v4735
    %4795 = vmatpush1.msra.mxu0 %v4734
    %4796 = vmatprep.subr.mxu0 %v4739
    %4797 = vmatpush1.msra.mxu0 %v4738
    %4798 = vmatprep.subr.mxu0 %v4743
    %4799 = vmatpush1.msra.mxu0 %v4742
    %4800 = vmatprep.subr.mxu0 %v4747
    %4801 = vmatpush1.msra.mxu0 %v4746
    %4802 = vmatprep.subr.mxu0 %v4751
    %4803 = vmatpush1.msra.mxu0 %v4750
    %4804 = vmatprep.subr.mxu0 %v4755
    %4805 = vmatpush1.msra.mxu0 %v4754
    %4806 = vmatprep.subr.mxu0 %v4759
    %4807 = vmatpush1.msra.mxu0 %v4758
    %4808 = vmatprep.subr.mxu0 %v4763
    %4809 = vmatpush1.msra.mxu0 %v4762
    %4810 = vmatprep.subr.mxu0 %v4767
    %4811 = vmatpush1.msra.mxu0 %v4766
    %4812 = vmatprep.subr.mxu0 %v4771
    %4813 = vmatpush1.msra.mxu0 %v4770
    %4814 = vmatprep.subr.mxu0 %v4775
    %4815 = vmatpush1.msra.mxu0 %v4774
    %4816 = vmatprep.subr.mxu0 %v4779
    %4817 = vmatpush1.msra.mxu0 %v4778
    %4818 = vmatprep.subr.mxu0 %v4783
    %4819 = vmatpush1.msra.mxu0 %v4782
    %4820 = vmatprep.subr.mxu0 %v4787
    %4821 = vmatpush1.msra.mxu0 %v4786
    %4822 = vmatprep.subr.mxu0 0.0
    %4823 = vmatpush1.msra.mxu0 0.0
    %4824 = vmatprep.subr.mxu0 0.0
    %4825 = vmatpush1.msra.mxu0 0.0
    %4826 = vmatprep.subr.mxu0 0.0
    %4827 = vmatpush1.msra.mxu0 0.0
    %4828 = vmatprep.subr.mxu0 0.0
    %4829 = vmatpush1.msra.mxu0 0.0
    %4830 = vmatprep.subr.mxu0 0.0
    %4831 = vmatpush1.msra.mxu0 0.0
    %4832 = vmatprep.subr.mxu0 0.0
    %4833 = vmatpush1.msra.mxu0 0.0
    %4834 = vmatprep.subr.mxu0 0.0
    %4835 = vmatpush1.msra.mxu0 0.0
    %4836 = vmatprep.subr.mxu0 0.0
    %4837 = vmatpush1.msra.mxu0 0.0
    %4838 = vmatprep.subr.mxu0 0.0
    %4839 = vmatpush1.msra.mxu0 0.0
    %4840 = vmatprep.subr.mxu0 0.0
    %4841 = vmatpush1.msra.mxu0 0.0
    %4842 = vmatprep.subr.mxu0 0.0
    %4843 = vmatpush1.msra.mxu0 0.0
    %4844 = vmatprep.subr.mxu0 0.0
    %4845 = vmatpush1.msra.mxu0 0.0
    %4846 = vmatprep.subr.mxu0 0.0
    %4847 = vmatpush1.msra.mxu0 0.0
    %4848 = vmatprep.subr.mxu0 0.0
    %4849 = vmatpush1.msra.mxu0 0.0
    %4850 = vmatprep.subr.mxu0 0.0
    %4851 = vmatpush1.msra.mxu0 0.0
    %4852 = vmatprep.subr.mxu0 0.0
    %4853 = vmatpush1.msra.mxu0 0.0
    %4854 = vmatprep.mubr.f32.mxu0 0.0
    %4855 = vmatmul.mubr.f32.gmra.mrb[0].mxu0 %v4720
    %v4856 = vpop.f32.mrb[0].mxu0
    %v4857 = vadd.f32 0.0, %v4856
    %v4858 = vpop.f32.mrb[0].mxu0
    %v4859 = vadd.f32 0.0, %v4858
    %4860 = vdwg.mxu0
    %4861 = vmatprep.subr.mxu0 %v4729
    %4862 = vmatpush1.msra.mxu0 %v4728
    %4863 = vmatprep.subr.mxu0 %v4733
    %4864 = vmatpush1.msra.mxu0 %v4732
    %4865 = vmatprep.subr.mxu0 %v4737
    %4866 = vmatpush1.msra.mxu0 %v4736
    %4867 = vmatprep.subr.mxu0 %v4741
    %4868 = vmatpush1.msra.mxu0 %v4740
    %4869 = vmatprep.subr.mxu0 %v4745
    %4870 = vmatpush1.msra.mxu0 %v4744
    %4871 = vmatprep.subr.mxu0 %v4749
    %4872 = vmatpush1.msra.mxu0 %v4748
    %4873 = vmatprep.subr.mxu0 %v4753
    %4874 = vmatpush1.msra.mxu0 %v4752
    %4875 = vmatprep.subr.mxu0 %v4757
    %4876 = vmatpush1.msra.mxu0 %v4756
    %4877 = vmatprep.subr.mxu0 %v4761
    %4878 = vmatpush1.msra.mxu0 %v4760
    %4879 = vmatprep.subr.mxu0 %v4765
    %4880 = vmatpush1.msra.mxu0 %v4764
    %4881 = vmatprep.subr.mxu0 %v4769
    %4882 = vmatpush1.msra.mxu0 %v4768
    %4883 = vmatprep.subr.mxu0 %v4773
    %4884 = vmatpush1.msra.mxu0 %v4772
    %4885 = vmatprep.subr.mxu0 %v4777
    %4886 = vmatpush1.msra.mxu0 %v4776
    %4887 = vmatprep.subr.mxu0 %v4781
    %4888 = vmatpush1.msra.mxu0 %v4780
    %4889 = vmatprep.subr.mxu0 %v4785
    %4890 = vmatpush1.msra.mxu0 %v4784
    %4891 = vmatprep.subr.mxu0 %v4789
    %4892 = vmatpush1.msra.mxu0 %v4788
    %4893 = vmatprep.subr.mxu0 0.0
    %4894 = vmatpush1.msra.mxu0 0.0
    %4895 = vmatprep.subr.mxu0 0.0
    %4896 = vmatpush1.msra.mxu0 0.0
    %4897 = vmatprep.subr.mxu0 0.0
    %4898 = vmatpush1.msra.mxu0 0.0
    %4899 = vmatprep.subr.mxu0 0.0
    %4900 = vmatpush1.msra.mxu0 0.0
    %4901 = vmatprep.subr.mxu0 0.0
    %4902 = vmatpush1.msra.mxu0 0.0
    %4903 = vmatprep.subr.mxu0 0.0
    %4904 = vmatpush1.msra.mxu0 0.0
    %4905 = vmatprep.subr.mxu0 0.0
    %4906 = vmatpush1.msra.mxu0 0.0
    %4907 = vmatprep.subr.mxu0 0.0
    %4908 = vmatpush1.msra.mxu0 0.0
    %4909 = vmatprep.subr.mxu0 0.0
    %4910 = vmatpush1.msra.mxu0 0.0
    %4911 = vmatprep.subr.mxu0 0.0
    %4912 = vmatpush1.msra.mxu0 0.0
    %4913 = vmatprep.subr.mxu0 0.0
    %4914 = vmatpush1.msra.mxu0 0.0
    %4915 = vmatprep.subr.mxu0 0.0
    %4916 = vmatpush1.msra.mxu0 0.0
    %4917 = vmatprep.subr.mxu0 0.0
    %4918 = vmatpush1.msra.mxu0 0.0
    %4919 = vmatprep.subr.mxu0 0.0
    %4920 = vmatpush1.msra.mxu0 0.0
    %4921 = vmatprep.subr.mxu0 0.0
    %4922 = vmatpush1.msra.mxu0 0.0
    %4923 = vmatprep.subr.mxu0 0.0
    %4924 = vmatpush1.msra.mxu0 0.0
    %4925 = vmatprep.mubr.f32.mxu0 0.0
    %4926 = vmatmul.mubr.f32.gmra.mrb[0].mxu0 %v4720
    %v4927 = vpop.f32.mrb[0].mxu0
    %v4928 = vadd.f32 0.0, %v4927
    %v4929 = vpop.f32.mrb[0].mxu0
    %v4930 = vadd.f32 0.0, %v4929
    %4931 = vdwg.mxu0
    %v4932 = vadd.f32 %v4722, %v4857
    %v4933 = vadd.f32 %v4723, %v4859
    %v4934 = vadd.f32 %v4724, %v4928
    %v4935 = vadd.f32 %v4725, %v4930
    %v4936 = vmul.f32 %v4932, 0.5
    %v4937 = vmul.f32 %v4933, 0.5
    %v4938 = vmul.f32 %v4934, 0.5
    %v4939 = vtanh.pop %v4936
    %v4940 = vtanh.pop %v4937
    %v4941 = vtanh.pop %v4938
    %v4942 = vmul.f32 %v4939, 0.5
    %v4943 = vmul.f32 %v4940, 0.5
    %v4944 = vmul.f32 %v4941, 0.5
    %v4945 = vadd.f32 %v4942, 0.5
    %v4946 = vadd.f32 %v4943, 0.5
    %v4947 = vadd.f32 %v4944, 0.5
    %v4948 = vtanh.pop %v4935
    %v4949 = vmul.f32 %v4946, %v4718
    %v4950 = vmul.f32 %v4945, %v4948
    %v4951 = vadd.f32 %v4949, %v4950
    %v4952 = vtanh.pop %v4951
    %v4953 = vmul.f32 %v4947, %v4952
    %4954 = vst [vmem:[%s2512] sm:$0xff] %v4953
    %s4955 = scalar_lea.vmem %s9, 8
    %4956 = vst [vmem:[%s4955] sm:$0xff] %v4953
    %s4957 = scalar_lea.vmem %s10, 8
    %4958 = vst [vmem:[%s4957] sm:$0xff] %v4951
    %v4959 = vld [vmem:[#allocation2] sm:$0xff]
    %v4960 = vld [vmem:[#allocation2 + $0x8] sm:$0xff]
    %v4961 = vld [vmem:[#allocation2 + $0x10] sm:$0xff]
    %v4962 = vld [vmem:[#allocation2 + $0x18] sm:$0xff]
    %v4963 = vld [vmem:[#allocation2 + $0x20] sm:$0xff]
    %v4964 = vld [vmem:[#allocation2 + $0x28] sm:$0xff]
    %v4965 = vld [vmem:[#allocation2 + $0x30] sm:$0xff]
    %v4966 = vld [vmem:[#allocation2 + $0x38] sm:$0xff]
    %v4967 = vld [vmem:[%s6] sm:$0xff]
    %v4968 = vld [vmem:[%s6 + $0x8] sm:$0xff]
    %v4969 = vld [vmem:[%s6 + $0x10] sm:$0xff]
    %v4970 = vld [vmem:[%s6 + $0x18] sm:$0xff]
    %v4971 = vld [vmem:[%s6 + $0x20] sm:$0xff]
    %v4972 = vld [vmem:[%s6 + $0x28] sm:$0xff]
    %v4973 = vld [vmem:[%s6 + $0x30] sm:$0xff]
    %v4974 = vld [vmem:[%s6 + $0x38] sm:$0xff]
    %v4975 = vld [vmem:[%s6 + $0x40] sm:$0xff]
    %v4976 = vld [vmem:[%s6 + $0x48] sm:$0xff]
    %v4977 = vld [vmem:[%s6 + $0x50] sm:$0xff]
    %v4978 = vld [vmem:[%s6 + $0x58] sm:$0xff]
    %v4979 = vld [vmem:[%s6 + $0x60] sm:$0xff]
    %v4980 = vld [vmem:[%s6 + $0x68] sm:$0xff]
    %v4981 = vld [vmem:[%s6 + $0x70] sm:$0xff]
    %v4982 = vld [vmem:[%s6 + $0x78] sm:$0xff]
    %v4983 = vld [vmem:[%s7] sm:$0x1]
    %v4985 = vlaneseq
    %v4986 = vshrl.u32 %v4985, 7
    %v4987 = vsub.s32 0, %v4986
    %v4988 = vrot.slane %v4983, %v4987
    %4990 = vmatprep.subr.mxu0 0.0
    %4991 = vmatpush1.msra.mxu0 %v4967
    %4992 = vmatprep.subr.mxu0 0.0
    %4993 = vmatpush1.msra.mxu0 %v4968
    %4994 = vmatprep.subr.mxu0 0.0
    %4995 = vmatpush1.msra.mxu0 %v4969
    %4996 = vmatprep.subr.mxu0 0.0
    %4997 = vmatpush1.msra.mxu0 %v4970
    %4998 = vmatprep.subr.mxu0 0.0
    %4999 = vmatpush1.msra.mxu0 %v4971
    %5000 = vmatprep.subr.mxu0 0.0
    %5001 = vmatpush1.msra.mxu0 %v4972
    %5002 = vmatprep.subr.mxu0 0.0
    %5003 = vmatpush1.msra.mxu0 %v4973
    %5004 = vmatprep.subr.mxu0 0.0
    %5005 = vmatpush1.msra.mxu0 %v4974
    %5006 = vmatprep.subr.mxu0 0.0
    %5007 = vmatpush1.msra.mxu0 %v4975
    %5008 = vmatprep.subr.mxu0 0.0
    %5009 = vmatpush1.msra.mxu0 %v4976
    %5010 = vmatprep.subr.mxu0 0.0
    %5011 = vmatpush1.msra.mxu0 %v4977
    %5012 = vmatprep.subr.mxu0 0.0
    %5013 = vmatpush1.msra.mxu0 %v4978
    %5014 = vmatprep.subr.mxu0 0.0
    %5015 = vmatpush1.msra.mxu0 %v4979
    %5016 = vmatprep.subr.mxu0 0.0
    %5017 = vmatpush1.msra.mxu0 %v4980
    %5018 = vmatprep.subr.mxu0 0.0
    %5019 = vmatpush1.msra.mxu0 %v4981
    %5020 = vmatprep.subr.mxu0 0.0
    %5021 = vmatpush1.msra.mxu0 %v4982
    %5022 = vmatprep.subr.mxu0 0.0
    %5023 = vmatpush1.msra.mxu0 0.0
    %5024 = vmatprep.subr.mxu0 0.0
    %5025 = vmatpush1.msra.mxu0 0.0
    %5026 = vmatprep.subr.mxu0 0.0
    %5027 = vmatpush1.msra.mxu0 0.0
    %5028 = vmatprep.subr.mxu0 0.0
    %5029 = vmatpush1.msra.mxu0 0.0
    %5030 = vmatprep.subr.mxu0 0.0
    %5031 = vmatpush1.msra.mxu0 0.0
    %5032 = vmatprep.subr.mxu0 0.0
    %5033 = vmatpush1.msra.mxu0 0.0
    %5034 = vmatprep.subr.mxu0 0.0
    %5035 = vmatpush1.msra.mxu0 0.0
    %5036 = vmatprep.subr.mxu0 0.0
    %5037 = vmatpush1.msra.mxu0 0.0
    %5038 = vmatprep.subr.mxu0 0.0
    %5039 = vmatpush1.msra.mxu0 0.0
    %5040 = vmatprep.subr.mxu0 0.0
    %5041 = vmatpush1.msra.mxu0 0.0
    %5042 = vmatprep.subr.mxu0 0.0
    %5043 = vmatpush1.msra.mxu0 0.0
    %5044 = vmatprep.subr.mxu0 0.0
    %5045 = vmatpush1.msra.mxu0 0.0
    %5046 = vmatprep.subr.mxu0 0.0
    %5047 = vmatpush1.msra.mxu0 0.0
    %5048 = vmatprep.subr.mxu0 0.0
    %5049 = vmatpush1.msra.mxu0 0.0
    %5050 = vmatprep.subr.mxu0 0.0
    %5051 = vmatpush1.msra.mxu0 0.0
    %5052 = vmatprep.subr.mxu0 0.0
    %5053 = vmatpush1.msra.mxu0 0.0
    %5054 = vmatprep.mubr.f32.mxu0 0.0
    %5055 = vmatmul.mubr.f32.gmra.mrb[0].mxu0 %v4959
    %v5056 = vpop.f32.mrb[0].mxu0
    %v5057 = vadd.f32 %v4988, %v5056
    %v5058 = vpop.f32.mrb[0].mxu0
    %5059 = vmatprep.mubr.f32.mxu0 0.0
    %5060 = vmatmul.mubr.f32.gmra.mrb[0].mxu0 %v4960
    %v5061 = vpop.f32.mrb[0].mxu0
    %v5062 = vadd.f32 %v4988, %v5061
    %v5063 = vpop.f32.mrb[0].mxu0
    %5064 = vmatprep.mubr.f32.mxu0 0.0
    %5065 = vmatmul.mubr.f32.gmra.mrb[0].mxu0 %v4961
    %v5066 = vpop.f32.mrb[0].mxu0
    %v5067 = vadd.f32 %v4988, %v5066
    %v5068 = vpop.f32.mrb[0].mxu0
    %5069 = vmatprep.mubr.f32.mxu0 0.0
    %5070 = vmatmul.mubr.f32.gmra.mrb[0].mxu0 %v4962
    %v5071 = vpop.f32.mrb[0].mxu0
    %v5072 = vadd.f32 %v4988, %v5071
    %v5073 = vpop.f32.mrb[0].mxu0
    %5074 = vmatprep.mubr.f32.mxu0 0.0
    %5075 = vmatmul.mubr.f32.gmra.mrb[0].mxu0 %v4963
    %v5076 = vpop.f32.mrb[0].mxu0
    %v5077 = vadd.f32 %v4988, %v5076
    %v5078 = vpop.f32.mrb[0].mxu0
    %5079 = vmatprep.mubr.f32.mxu0 0.0
    %5080 = vmatmul.mubr.f32.gmra.mrb[0].mxu0 %v4964
    %v5081 = vpop.f32.mrb[0].mxu0
    %v5082 = vadd.f32 %v4988, %v5081
    %v5083 = vpop.f32.mrb[0].mxu0
    %5084 = vmatprep.mubr.f32.mxu0 0.0
    %5085 = vmatmul.mubr.f32.gmra.mrb[0].mxu0 %v4965
    %v5086 = vpop.f32.mrb[0].mxu0
    %v5087 = vadd.f32 %v4988, %v5086
    %v5088 = vpop.f32.mrb[0].mxu0
    %5089 = vmatprep.mubr.f32.mxu0 0.0
    %5090 = vmatmul.mubr.f32.gmra.mrb[0].mxu0 %v4966
    %v5091 = vpop.f32.mrb[0].mxu0
    %v5092 = vadd.f32 %v4988, %v5091
    %v5093 = vpop.f32.mrb[0].mxu0
    %5094 = vdwg.mxu0
    %5095 = vst [vmem:[%s8] sm:$0xff] %v5057
    %5096 = vst [vmem:[%s8 + $0x8] sm:$0xff] %v5062
    %5097 = vst [vmem:[%s8 + $0x10] sm:$0xff] %v5067
    %5098 = vst [vmem:[%s8 + $0x18] sm:$0xff] %v5072
    %5099 = vst [vmem:[%s8 + $0x20] sm:$0xff] %v5077
    %5100 = vst [vmem:[%s8 + $0x28] sm:$0xff] %v5082
    %5101 = vst [vmem:[%s8 + $0x30] sm:$0xff] %v5087
    %5102 = vst [vmem:[%s8 + $0x38] sm:$0xff] %v5092
    // Predicated region
    $region42: #{_forward_impl.1} parent=1 // pred_check
      _
    $region43: #{_forward_impl.1} parent=1 // pred_check_branch
      %5104 = sbr.rel (0) target = $region45
    $region44: #{_forward_impl.1} parent=1 // pred_region
      _
    $region45: #{_forward_impl.1} parent=1 // pred_fallthru
      _
    // Predicated region
    $region46: #{_forward_impl.1} parent=1 // pred_check
      _
    $region47: #{_forward_impl.1} parent=1 // pred_check_branch
      %5106 = sbr.rel (0) target = $region49
    $region48: #{_forward_impl.1} parent=1 // pred_region
      _
    $region49: #{_forward_impl.1} parent=1 // pred_fallthru
      _
    // Predicated region
    $region50: #{_forward_impl.1} parent=1 // pred_check
      _
    $region51: #{_forward_impl.1} parent=1 // pred_check_branch
      %5108 = sbr.rel (0) target = $region53
    $region52: #{_forward_impl.1} parent=1 // pred_region
      _
    $region53: #{_forward_impl.1} parent=1 // pred_fallthru
      _
    // Predicated region
    $region54: #{_forward_impl.1} parent=1 // pred_check
      _
    $region55: #{_forward_impl.1} parent=1 // pred_check_branch
      %5110 = sbr.rel (0) target = $region57
    $region56: #{_forward_impl.1} parent=1 // pred_region
      _
    $region57: #{_forward_impl.1} parent=1 // pred_fallthru
      _
    // Predicated region
    $region58: #{_forward_impl.1} parent=1 // pred_check
      _
    $region59: #{_forward_impl.1} parent=1 // pred_check_branch
      %5112 = sbr.rel (0) target = $region61
    $region60: #{_forward_impl.1} parent=1 // pred_region
      _
    $region61: #{_forward_impl.1} parent=1 // pred_fallthru
      _
    // Predicated region
    $region62: #{_forward_impl.1} parent=1 // pred_check
      _
    $region63: #{_forward_impl.1} parent=1 // pred_check_branch
      %5114 = sbr.rel (0) target = $region65
    $region64: #{_forward_impl.1} parent=1 // pred_region
      _
    $region65: #{_forward_impl.1} parent=1 // pred_fallthru
      _
    %5115 = vsyncpa [#allocation5], 1
    %5116 = vsyncpa [#allocation7], 1

</llo_original>
